<compile_context>
chip_gen: v6e
topology: v6e:2x2x1
jax: 0.10.0
libtpu: 0.0.40
codegen_flags: <defaults>
</compile_context>

<pallas_src>
import functools

import jax
import jax.numpy as jnp
from jax import lax
from jax.experimental import pallas as pl
from jax.experimental.pallas import tpu as pltpu


# --------------------------------------------------------------------------- #
# Hardware-aware sizing
# --------------------------------------------------------------------------- #
def _vmem_limit_bytes():
    cap = 128 * 1024 * 1024
    try:
        cap = int(getattr(pltpu.get_tpu_info(), "vmem_capacity_bytes", cap))
    except Exception:
        pass
    # Leave headroom for the compiler: v7x (64 MiB) -> 48 MiB, v5e/v6e -> 96 MiB.
    return int(min(cap * 3 // 4, 96 * 1024 * 1024))


def _pick_th(H, W, cin, cout, vmem_limit, cap=64):
    """Largest even row-band height dividing H whose working set fits VMEM."""
    Wp = W + 2
    best = 2
    for th in range(2, min(H, cap) + 1, 2):
        if H % th:
            continue
        band_in = 2 * (th + 2) * Wp * cin * 2        # double-buffered bf16 bands
        out_t = 2 * th * W * cout * 2                # double-buffered bf16 output
        live = th * W * (9 * cin * 2 + cout * 4) + (th + 2) * Wp * cin * 4
        if band_in + out_t + live <= vmem_limit // 2:
            best = th
    return best


# --------------------------------------------------------------------------- #
# Conv tile helpers (run inside kernels)
# --------------------------------------------------------------------------- #
def _im2col(band, th, w_out):
    """(th+2, w_out+2, Cin) band -> (th*w_out, 9*Cin) for a single MXU matmul."""
    cin = band.shape[-1]
    cols = []
    for dy in range(3):
        for dx in range(3):
            cols.append(band[dy:dy + th, dx:dx + w_out, :].reshape(th * w_out, cin))
    return jnp.concatenate(cols, axis=-1)


def _conv_tile(x0_ref, x1_ref, w9_ref, b_ref, th, w_out):
    """Conv output of one th-row band: (th*w_out, Cout) f32, bias included."""
    band = jnp.concatenate([x0_ref[...], x1_ref[...]], axis=0)       # (th+2, Wp, Cin)
    y = jnp.dot(_im2col(band, th, w_out), w9_ref[...],
                preferred_element_type=jnp.float32)
    return y + b_ref[...]


def _conv_tile_first(s0_ref, s1_ref, u0_ref, u1_ref, scale_ref,
                     wsk_ref, wup_ref, b_ref, th, w_out):
    """First conv: CCA gate+ReLU on the skip band + split-weight concat conv."""
    c = s0_ref.shape[-1]
    sband = jnp.concatenate([s0_ref[...], s1_ref[...]], axis=0).astype(jnp.float32)
    sband = jnp.maximum(sband * scale_ref[...].reshape(1, 1, c),
                        0.0).astype(jnp.bfloat16)                    # relu(skip*scale)
    uband = jnp.concatenate([u0_ref[...], u1_ref[...]], axis=0)
    y = jnp.dot(_im2col(sband, th, w_out), wsk_ref[...],
                preferred_element_type=jnp.float32)
    y = y + jnp.dot(_im2col(uband, th, w_out), wup_ref[...],
                    preferred_element_type=jnp.float32)
    return y + b_ref[...]


# --------------------------------------------------------------------------- #
# Kernels: BN-statistics pass (per-batch partial sums) and apply pass
# --------------------------------------------------------------------------- #
def _conv_stats_kernel(x0, x1, w9, b, part_ref, sum_sc, ssq_sc, *, th, w_out):
    i = pl.program_id(1)

    @pl.when(i == 0)
    def _():
        sum_sc[...] = jnp.zeros_like(sum_sc)
        ssq_sc[...] = jnp.zeros_like(ssq_sc)

    y = _conv_tile(x0, x1, w9, b, th, w_out)
    sum_sc[...] += jnp.sum(y, axis=0, keepdims=True)
    ssq_sc[...] += jnp.sum(y * y, axis=0, keepdims=True)

    @pl.when(i == pl.num_programs(1) - 1)
    def _():
        part_ref[...] = jnp.concatenate([sum_sc[...], ssq_sc[...]], axis=0)


def _conv_apply_kernel(x0, x1, w9, b, a_ref, sh_ref, out_ref, *, th, w_out):
    y = _conv_tile(x0, x1, w9, b, th, w_out)
    z = jnp.maximum(y * a_ref[...] + sh_ref[...], 0.0)
    out_ref[...] = z.reshape(th, w_out, -1).astype(out_ref.dtype)


def _conv_first_stats_kernel(s0, s1, u0, u1, scale, wsk, wup, b,
                             part_ref, sum_sc, ssq_sc, *, th, w_out):
    i = pl.program_id(1)

    @pl.when(i == 0)
    def _():
        sum_sc[...] = jnp.zeros_like(sum_sc)
        ssq_sc[...] = jnp.zeros_like(ssq_sc)

    y = _conv_tile_first(s0, s1, u0, u1, scale, wsk, wup, b, th, w_out)
    sum_sc[...] += jnp.sum(y, axis=0, keepdims=True)
    ssq_sc[...] += jnp.sum(y * y, axis=0, keepdims=True)

    @pl.when(i == pl.num_programs(1) - 1)
    def _():
        part_ref[...] = jnp.concatenate([sum_sc[...], ssq_sc[...]], axis=0)


def _conv_first_apply_kernel(s0, s1, u0, u1, scale, wsk, wup, b,
                             a_ref, sh_ref, out_ref, *, th, w_out):
    y = _conv_tile_first(s0, s1, u0, u1, scale, wsk, wup, b, th, w_out)
    z = jnp.maximum(y * a_ref[...] + sh_ref[...], 0.0)
    out_ref[...] = z.reshape(th, w_out, -1).astype(out_ref.dtype)


# --------------------------------------------------------------------------- #
# Wrappers
# --------------------------------------------------------------------------- #
def _bn_scale_shift(partials, gamma, beta, n_total, eps):
    # TODO(synk): training-mode batch statistics (PyTorch .train()); running
    # mean/var are not tracked or updated.
    tot = jnp.sum(partials, axis=0)                                  # (2, Cout)
    mean = tot[0] / n_total
    var = jnp.maximum(tot[1] / n_total - mean * mean, 0.0)
    a = gamma.reshape(-1) * lax.rsqrt(var + eps)
    shift = beta.reshape(-1) - mean * a
    return a.reshape(1, -1), shift.reshape(1, -1)


def _conv_specs(th, Wp, Cin, Cout):
    band0 = pl.BlockSpec((None, th, Wp, Cin), lambda bb, i: (bb, i, 0, 0))
    # 2-row halo band (element offset (i+1)*th); avoids DMA-ing a full extra band.
    band1 = pl.BlockSpec((None, 2, Wp, Cin),
                         lambda bb, i: (bb, (i + 1) * (th // 2), 0, 0))
    w_spec = pl.BlockSpec((9 * Cin, Cout), lambda bb, i: (0, 0))
    v_spec = pl.BlockSpec((1, Cout), lambda bb, i: (0, 0))
    return band0, band1, w_spec, v_spec


def conv_bn_relu(x_nhwc, w9, bias, gamma, beta, *, th, eps, vmem_limit):
    """3x3 conv -> training-mode BatchNorm -> ReLU (single input tensor)."""
    B, H, W, Cin = x_nhwc.shape
    Cout = w9.shape[-1]
    assert th >= 2 and th % 2 == 0 and H % th == 0, (H, th)
    n_tiles = H // th
    Wp = W + 2
    xp = jnp.pad(x_nhwc, ((0, 0), (1, th - 1), (1, 1), (0, 0)))
    band0, band1, w_spec, v_spec = _conv_specs(th, Wp, Cin, Cout)

    # Pass 1: per-batch partial (sum, sumsq) of the conv output.
    partials = pl.pallas_call(
        functools.partial(_conv_stats_kernel, th=th, w_out=W),
        grid=(B, n_tiles),
        in_specs=[band0, band1, w_spec, v_spec],
        out_specs=pl.BlockSpec((None, 2, Cout), lambda bb, i: (bb, 0, 0)),
        out_shape=jax.ShapeDtypeStruct((B, 2, Cout), jnp.float32),
        scratch_shapes=[pltpu.VMEM((1, Cout), jnp.float32),
                        pltpu.VMEM((1, Cout), jnp.float32)],
        compiler_params=pltpu.CompilerParams(
            dimension_semantics=("parallel", "arbitrary"),
            vmem_limit_bytes=vmem_limit),
    )(xp, xp, w9, bias)

    a, sh = _bn_scale_shift(partials, gamma, beta, float(B * H * W), eps)

    # Pass 2: recompute the conv band (cheaper than an HBM round trip of the raw
    # conv output in this memory-bound, small-C regime), normalize + affine + ReLU.
    out = pl.pallas_call(
        functools.partial(_conv_apply_kernel, th=th, w_out=W),
        grid=(B, n_tiles),
        in_specs=[band0, band1, w_spec, v_spec, v_spec, v_spec],
        out_specs=pl.BlockSpec((None, th, W, Cout), lambda bb, i: (bb, i, 0, 0)),
        out_shape=jax.ShapeDtypeStruct((B, H, W, Cout), jnp.bfloat16),
        compiler_params=pltpu.CompilerParams(
            dimension_semantics=("parallel", "parallel"),
            vmem_limit_bytes=vmem_limit),
    )(xp, xp, w9, bias, a, sh)
    return out


def conv_bn_relu_first(skip_nhwc, up_nhwc, scale3, wsk, wup, bias, gamma, beta,
                       *, th, eps, vmem_limit):
    """First ConvBatchNorm: CCA gate+ReLU on skip and the channel concat with the
    upsampled branch are fused into the conv via split weights."""
    B, H, W, C = skip_nhwc.shape
    Cout = wsk.shape[-1]
    assert th >= 2 and th % 2 == 0 and H % th == 0, (H, th)
    n_tiles = H // th
    Wp = W + 2
    pad = ((0, 0), (1, th - 1), (1, 1), (0, 0))
    skip_p = jnp.pad(skip_nhwc, pad)
    up_p = jnp.pad(up_nhwc, pad)
    band0, band1, w_spec, v_spec = _conv_specs(th, Wp, C, Cout)
    sc_spec = pl.BlockSpec((None, 1, C), lambda bb, i: (bb, 0, 0))

    partials = pl.pallas_call(
        functools.partial(_conv_first_stats_kernel, th=th, w_out=W),
        grid=(B, n_tiles),
        in_specs=[band0, band1, band0, band1, sc_spec, w_spec, w_spec, v_spec],
        out_specs=pl.BlockSpec((None, 2, Cout), lambda bb, i: (bb, 0, 0)),
        out_shape=jax.ShapeDtypeStruct((B, 2, Cout), jnp.float32),
        scratch_shapes=[pltpu.VMEM((1, Cout), jnp.float32),
                        pltpu.VMEM((1, Cout), jnp.float32)],
        compiler_params=pltpu.CompilerParams(
            dimension_semantics=("parallel", "arbitrary"),
            vmem_limit_bytes=vmem_limit),
    )(skip_p, skip_p, up_p, up_p, scale3, wsk, wup, bias)

    a, sh = _bn_scale_shift(partials, gamma, beta, float(B * H * W), eps)

    out = pl.pallas_call(
        functools.partial(_conv_first_apply_kernel, th=th, w_out=W),
        grid=(B, n_tiles),
        in_specs=[band0, band1, band0, band1, sc_spec, w_spec, w_spec, v_spec,
                  v_spec, v_spec],
        out_specs=pl.BlockSpec((None, th, W, Cout), lambda bb, i: (bb, i, 0, 0)),
        out_shape=jax.ShapeDtypeStruct((B, H, W, Cout), jnp.bfloat16),
        compiler_params=pltpu.CompilerParams(
            dimension_semantics=("parallel", "parallel"),
            vmem_limit_bytes=vmem_limit),
    )(skip_p, skip_p, up_p, up_p, scale3, wsk, wup, bias, a, sh)
    return out


# --------------------------------------------------------------------------- #
# Full UpBlock_attention forward
# --------------------------------------------------------------------------- #
def upblock_attention_forward(x, skip_x, params, *, conv_th=None, eps=1e-5):
    # x: (B, C_half, H, W); skip_x: (B, C_half, 2H, 2W)   (PyTorch NCHW, f32)
    B, C, H, W = x.shape
    H2, W2 = 2 * H, 2 * W
    vmem_limit = _vmem_limit_bytes()

    # --- CCA channel gate.  mean_hw(nearest2x(x)) == mean_hw(x), so the
    # full-resolution `up` tensor is never read here.  Tiny (B,C) math -> XLA.
    avg_x = jnp.mean(skip_x, axis=(2, 3))                            # (B, C)
    avg_g = jnp.mean(x, axis=(2, 3))                                 # (B, C)
    att = 0.5 * ((avg_x @ params["wx_t"] + params["bx"])
                 + (avg_g @ params["wg_t"] + params["bg"]))
    scale3 = jax.nn.sigmoid(att).reshape(B, 1, C)                    # (B, 1, C)

    # --- channels-last bf16 activations
    skip_nhwc = jnp.transpose(skip_x, (0, 2, 3, 1)).astype(jnp.bfloat16)
    x_nhwc = jnp.transpose(x, (0, 2, 3, 1))
    up_nhwc = jnp.broadcast_to(x_nhwc[:, :, None, :, None, :],
                               (B, H, 2, W, 2, C)).reshape(B, H2, W2, C)
    up_nhwc = up_nhwc.astype(jnp.bfloat16)
    # TODO(synk): fuse the nearest-2x upsample into the first conv's BlockSpecs
    # (read low-res rows via index_map) to remove this full-res bf16 round trip.

    convs = params["convs"]

    # --- first ConvBatchNorm: gate+ReLU + concat fused via split weights.
    w0, b0, g0, be0 = convs[0]
    Cout0 = w0.shape[-1]
    wsk = w0[:, :, :C, :].reshape(9 * C, Cout0).astype(jnp.bfloat16)
    wup = w0[:, :, C:, :].reshape(9 * C, Cout0).astype(jnp.bfloat16)
    th0 = conv_th or _pick_th(H2, W2, 2 * C, Cout0, vmem_limit)
    feat = conv_bn_relu_first(skip_nhwc, up_nhwc, scale3, wsk, wup, b0, g0, be0,
                              th=th0, eps=eps, vmem_limit=vmem_limit)

    # --- remaining ConvBatchNorms
    for (w, b, gamma, beta) in convs[1:]:
        Cin, Cout = w.shape[2], w.shape[3]
        w9 = w.reshape(9 * Cin, Cout).astype(jnp.bfloat16)
        th = conv_th or _pick_th(H2, W2, Cin, Cout, vmem_limit)
        feat = conv_bn_relu(feat, w9, b, gamma, beta,
                            th=th, eps=eps, vmem_limit=vmem_limit)

    return jnp.transpose(feat.astype(jnp.float32), (0, 3, 1, 2))     # back to NCHW


def init_params(key, in_channels, out_channels, nb_Conv):
    C = in_channels // 2
    ks = list(jax.random.split(key, 4 + 4 * nb_Conv))
    nk = lambda: ks.pop()
    params = {
        # Linear weights stored pre-transposed as (in, out); biases as (1, out)
        "wx_t": 0.1 * jax.random.normal(nk(), (C, C), jnp.float32),
        "bx": 0.1 * jax.random.normal(nk(), (1, C), jnp.float32),
        "wg_t": 0.1 * jax.random.normal(nk(), (C, C), jnp.float32),
        "bg": 0.1 * jax.random.normal(nk(), (1, C), jnp.float32),
    }
    convs = []
    cin = in_channels
    for _ in range(nb_Conv):
        w = 0.1 * jax.random.normal(nk(), (3, 3, cin, out_channels), jnp.float32)
        b = 0.1 * jax.random.normal(nk(), (1, out_channels), jnp.float32)
        gamma = 1.0 + 0.1 * jax.random.normal(nk(), (1, out_channels), jnp.float32)
        beta = 0.1 * jax.random.normal(nk(), (1, out_channels), jnp.float32)
        convs.append((w, b, gamma, beta))
        cin = out_channels
    params["convs"] = convs
    return params


if __name__ == "__main__":
    key = jax.random.PRNGKey(0)
    B, in_channels, out_channels, nb_Conv = 2, 8, 8, 2
    C_half = in_channels // 2
    H = W = 16

    kx, ks, kp = jax.random.split(key, 3)
    x = jax.random.normal(kx, (B, C_half, H, W), jnp.float32)
    skip_x = jax.random.normal(ks, (B, C_half, 2 * H, 2 * W), jnp.float32)
    params = init_params(kp, in_channels, out_channels, nb_Conv)

    out = upblock_attention_forward(x, skip_x, params)
    out = jax.block_until_ready(out)

    assert out.shape == (B, out_channels, 2 * H, 2 * W), out.shape
    assert bool(jnp.all(jnp.isfinite(out)))
    print("KERNEL_OK")
</pallas_src>

<mosaic_0001>
module attributes {stable_mosaic.version = 11 : i64} {
  func.func @_conv_first_stats_kernel(%arg0: i32, %arg1: i32, %arg2: memref<1x32x34x4xbf16, #tpu.memory_space<vmem>>, %arg3: memref<1x2x34x4xbf16, #tpu.memory_space<vmem>>, %arg4: memref<1x32x34x4xbf16, #tpu.memory_space<vmem>>, %arg5: memref<1x2x34x4xbf16, #tpu.memory_space<vmem>>, %arg6: memref<1x1x4xf32, #tpu.memory_space<vmem>>, %arg7: memref<36x8xbf16, #tpu.memory_space<vmem>>, %arg8: memref<36x8xbf16, #tpu.memory_space<vmem>>, %arg9: memref<1x8xf32, #tpu.memory_space<vmem>>, %arg10: memref<1x2x8xf32, #tpu.memory_space<vmem>>, %arg11: memref<1x8xf32, #tpu.memory_space<vmem>>, %arg12: memref<1x8xf32, #tpu.memory_space<vmem>>) attributes {dimension_semantics = [#tpu.dimension_semantics<parallel>, #tpu.dimension_semantics<arbitrary>], iteration_bounds = array<i64: 2, 1>, scalar_prefetch = 0 : i64, scratch_operands = 2 : i64, tpu.core_type = #tpu.core_type<tc>, window_params = [{transform_indices = @transform_0, window_bounds = array<i64: 1, 32, 34, 4>}, {transform_indices = @transform_1, window_bounds = array<i64: 1, 2, 34, 4>}, {transform_indices = @transform_2, window_bounds = array<i64: 1, 32, 34, 4>}, {transform_indices = @transform_3, window_bounds = array<i64: 1, 2, 34, 4>}, {transform_indices = @transform_4, window_bounds = array<i64: 1, 1, 4>}, {pipeline_mode = #tpu.pipeline_mode<synchronous>, transform_indices = @transform_5, window_bounds = array<i64: 36, 8>}, {pipeline_mode = #tpu.pipeline_mode<synchronous>, transform_indices = @transform_6, window_bounds = array<i64: 36, 8>}, {pipeline_mode = #tpu.pipeline_mode<synchronous>, transform_indices = @transform_7, window_bounds = array<i64: 1, 8>}, {transform_indices = @transform_8, window_bounds = array<i64: 1, 2, 8>}]} {
    %c0_i32 = arith.constant 0 : i32
    %0 = arith.cmpi eq, %arg1, %c0_i32 : i32
    %1 = arith.extui %0 : i1 to i32
    %c0_i32_0 = arith.constant 0 : i32
    %2 = arith.cmpi ne, %1, %c0_i32_0 : i32
    scf.if %2 {
      %cst_39 = arith.constant 0.000000e+00 : f32
      %82 = vector.broadcast %cst_39 : f32 to vector<1x8xf32>
      %c0_40 = arith.constant 0 : index
      %c0_41 = arith.constant 0 : index
      %83 = vector.load %arg11[%c0_40, %c0_41] : memref<1x8xf32, #tpu.memory_space<vmem>>, vector<1x8xf32>
      tpu.vector_store %arg11[%c0_40, %c0_41], %82 {strides = array<i32>} : memref<1x8xf32, #tpu.memory_space<vmem>>, vector<1x8xf32>,
      %cst_42 = arith.constant 0.000000e+00 : f32
      %84 = vector.broadcast %cst_42 : f32 to vector<1x8xf32>
      %c0_43 = arith.constant 0 : index
      %c0_44 = arith.constant 0 : index
      %85 = vector.load %arg12[%c0_43, %c0_44] : memref<1x8xf32, #tpu.memory_space<vmem>>, vector<1x8xf32>
      tpu.vector_store %arg12[%c0_43, %c0_44], %84 {strides = array<i32>} : memref<1x8xf32, #tpu.memory_space<vmem>>, vector<1x8xf32>,
    } else {
    }
    %c0 = arith.constant 0 : index
    %c0_1 = arith.constant 0 : index
    %c0_2 = arith.constant 0 : index
    %c0_3 = arith.constant 0 : index
    %3 = vector.load %arg2[%c0, %c0_1, %c0_2, %c0_3] : memref<1x32x34x4xbf16, #tpu.memory_space<vmem>>, vector<1x32x34x4xbf16>
    %4 = vector.shape_cast %3 : vector<1x32x34x4xbf16> to vector<32x34x4xbf16>
    %c0_4 = arith.constant 0 : index
    %c0_5 = arith.constant 0 : index
    %c0_6 = arith.constant 0 : index
    %c0_7 = arith.constant 0 : index
    %5 = vector.load %arg3[%c0_4, %c0_5, %c0_6, %c0_7] : memref<1x2x34x4xbf16, #tpu.memory_space<vmem>>, vector<1x2x34x4xbf16>
    %6 = vector.shape_cast %5 : vector<1x2x34x4xbf16> to vector<2x34x4xbf16>
    %7 = tpu.concatenate %4, %6 in 0 : vector<32x34x4xbf16>, vector<2x34x4xbf16> -> vector<34x34x4xbf16>
    %8 = arith.extf %7 : vector<34x34x4xbf16> to vector<34x34x4xf32>
    %c0_8 = arith.constant 0 : index
    %c0_9 = arith.constant 0 : index
    %c0_10 = arith.constant 0 : index
    %9 = vector.load %arg6[%c0_8, %c0_9, %c0_10] : memref<1x1x4xf32, #tpu.memory_space<vmem>>, vector<1x1x4xf32>
    %10 = vector.shape_cast %9 : vector<1x1x4xf32> to vector<1x4xf32>
    %11 = vector.shape_cast %10 : vector<1x4xf32> to vector<1x1x4xf32>
    %12 = vector.broadcast %11 : vector<1x1x4xf32> to vector<34x34x4xf32>
    %13 = arith.mulf %8, %12 : vector<34x34x4xf32>
    %cst = arith.constant 0.000000e+00 : f32
    %14 = vector.broadcast %cst : f32 to vector<34x34x4xf32>
    %15 = arith.maximumf %13, %14 : vector<34x34x4xf32>
    %16 = arith.truncf %15 : vector<34x34x4xf32> to vector<34x34x4xbf16>
    %c0_11 = arith.constant 0 : index
    %c0_12 = arith.constant 0 : index
    %c0_13 = arith.constant 0 : index
    %c0_14 = arith.constant 0 : index
    %17 = vector.load %arg4[%c0_11, %c0_12, %c0_13, %c0_14] : memref<1x32x34x4xbf16, #tpu.memory_space<vmem>>, vector<1x32x34x4xbf16>
    %18 = vector.shape_cast %17 : vector<1x32x34x4xbf16> to vector<32x34x4xbf16>
    %c0_15 = arith.constant 0 : index
    %c0_16 = arith.constant 0 : index
    %c0_17 = arith.constant 0 : index
    %c0_18 = arith.constant 0 : index
    %19 = vector.load %arg5[%c0_15, %c0_16, %c0_17, %c0_18] : memref<1x2x34x4xbf16, #tpu.memory_space<vmem>>, vector<1x2x34x4xbf16>
    %20 = vector.shape_cast %19 : vector<1x2x34x4xbf16> to vector<2x34x4xbf16>
    %21 = tpu.concatenate %18, %20 in 0 : vector<32x34x4xbf16>, vector<2x34x4xbf16> -> vector<34x34x4xbf16>
    %22 = vector.extract_strided_slice %16 {offsets = [0, 0, 0], sizes = [32, 32, 4], strides = [1, 1, 1]} : vector<34x34x4xbf16> to vector<32x32x4xbf16>
    %23 = vector.shape_cast %22 : vector<32x32x4xbf16> to vector<1024x4xbf16>
    %24 = vector.extract_strided_slice %16 {offsets = [0, 1, 0], sizes = [32, 32, 4], strides = [1, 1, 1]} : vector<34x34x4xbf16> to vector<32x32x4xbf16>
    %25 = vector.shape_cast %24 : vector<32x32x4xbf16> to vector<1024x4xbf16>
    %26 = vector.extract_strided_slice %16 {offsets = [0, 2, 0], sizes = [32, 32, 4], strides = [1, 1, 1]} : vector<34x34x4xbf16> to vector<32x32x4xbf16>
    %27 = vector.shape_cast %26 : vector<32x32x4xbf16> to vector<1024x4xbf16>
    %28 = vector.extract_strided_slice %16 {offsets = [1, 0, 0], sizes = [32, 32, 4], strides = [1, 1, 1]} : vector<34x34x4xbf16> to vector<32x32x4xbf16>
    %29 = vector.shape_cast %28 : vector<32x32x4xbf16> to vector<1024x4xbf16>
    %30 = vector.extract_strided_slice %16 {offsets = [1, 1, 0], sizes = [32, 32, 4], strides = [1, 1, 1]} : vector<34x34x4xbf16> to vector<32x32x4xbf16>
    %31 = vector.shape_cast %30 : vector<32x32x4xbf16> to vector<1024x4xbf16>
    %32 = vector.extract_strided_slice %16 {offsets = [1, 2, 0], sizes = [32, 32, 4], strides = [1, 1, 1]} : vector<34x34x4xbf16> to vector<32x32x4xbf16>
    %33 = vector.shape_cast %32 : vector<32x32x4xbf16> to vector<1024x4xbf16>
    %34 = vector.extract_strided_slice %16 {offsets = [2, 0, 0], sizes = [32, 32, 4], strides = [1, 1, 1]} : vector<34x34x4xbf16> to vector<32x32x4xbf16>
    %35 = vector.shape_cast %34 : vector<32x32x4xbf16> to vector<1024x4xbf16>
    %36 = vector.extract_strided_slice %16 {offsets = [2, 1, 0], sizes = [32, 32, 4], strides = [1, 1, 1]} : vector<34x34x4xbf16> to vector<32x32x4xbf16>
    %37 = vector.shape_cast %36 : vector<32x32x4xbf16> to vector<1024x4xbf16>
    %38 = vector.extract_strided_slice %16 {offsets = [2, 2, 0], sizes = [32, 32, 4], strides = [1, 1, 1]} : vector<34x34x4xbf16> to vector<32x32x4xbf16>
    %39 = vector.shape_cast %38 : vector<32x32x4xbf16> to vector<1024x4xbf16>
    %40 = tpu.concatenate %23, %25, %27, %29, %31, %33, %35, %37, %39 in 1 : vector<1024x4xbf16>, vector<1024x4xbf16>, vector<1024x4xbf16>, vector<1024x4xbf16>, vector<1024x4xbf16>, vector<1024x4xbf16>, vector<1024x4xbf16>, vector<1024x4xbf16>, vector<1024x4xbf16> -> vector<1024x36xbf16>
    %c0_19 = arith.constant 0 : index
    %c0_20 = arith.constant 0 : index
    %41 = vector.load %arg7[%c0_19, %c0_20] : memref<36x8xbf16, #tpu.memory_space<vmem>>, vector<36x8xbf16>
    %cst_21 = arith.constant dense<0.000000e+00> : vector<1024x8xf32>
    %42 = tpu.matmul %40, %41, %cst_21 {dimension_numbers = #tpu.dot_dimension_numbers<[1], [0], [0], [1], [0, 0, 1, 1], [], []>} : vector<1024x36xbf16>, vector<36x8xbf16>, vector<1024x8xf32> -> vector<1024x8xf32>
    %43 = vector.extract_strided_slice %21 {offsets = [0, 0, 0], sizes = [32, 32, 4], strides = [1, 1, 1]} : vector<34x34x4xbf16> to vector<32x32x4xbf16>
    %44 = vector.shape_cast %43 : vector<32x32x4xbf16> to vector<1024x4xbf16>
    %45 = vector.extract_strided_slice %21 {offsets = [0, 1, 0], sizes = [32, 32, 4], strides = [1, 1, 1]} : vector<34x34x4xbf16> to vector<32x32x4xbf16>
    %46 = vector.shape_cast %45 : vector<32x32x4xbf16> to vector<1024x4xbf16>
    %47 = vector.extract_strided_slice %21 {offsets = [0, 2, 0], sizes = [32, 32, 4], strides = [1, 1, 1]} : vector<34x34x4xbf16> to vector<32x32x4xbf16>
    %48 = vector.shape_cast %47 : vector<32x32x4xbf16> to vector<1024x4xbf16>
    %49 = vector.extract_strided_slice %21 {offsets = [1, 0, 0], sizes = [32, 32, 4], strides = [1, 1, 1]} : vector<34x34x4xbf16> to vector<32x32x4xbf16>
    %50 = vector.shape_cast %49 : vector<32x32x4xbf16> to vector<1024x4xbf16>
    %51 = vector.extract_strided_slice %21 {offsets = [1, 1, 0], sizes = [32, 32, 4], strides = [1, 1, 1]} : vector<34x34x4xbf16> to vector<32x32x4xbf16>
    %52 = vector.shape_cast %51 : vector<32x32x4xbf16> to vector<1024x4xbf16>
    %53 = vector.extract_strided_slice %21 {offsets = [1, 2, 0], sizes = [32, 32, 4], strides = [1, 1, 1]} : vector<34x34x4xbf16> to vector<32x32x4xbf16>
    %54 = vector.shape_cast %53 : vector<32x32x4xbf16> to vector<1024x4xbf16>
    %55 = vector.extract_strided_slice %21 {offsets = [2, 0, 0], sizes = [32, 32, 4], strides = [1, 1, 1]} : vector<34x34x4xbf16> to vector<32x32x4xbf16>
    %56 = vector.shape_cast %55 : vector<32x32x4xbf16> to vector<1024x4xbf16>
    %57 = vector.extract_strided_slice %21 {offsets = [2, 1, 0], sizes = [32, 32, 4], strides = [1, 1, 1]} : vector<34x34x4xbf16> to vector<32x32x4xbf16>
    %58 = vector.shape_cast %57 : vector<32x32x4xbf16> to vector<1024x4xbf16>
    %59 = vector.extract_strided_slice %21 {offsets = [2, 2, 0], sizes = [32, 32, 4], strides = [1, 1, 1]} : vector<34x34x4xbf16> to vector<32x32x4xbf16>
    %60 = vector.shape_cast %59 : vector<32x32x4xbf16> to vector<1024x4xbf16>
    %61 = tpu.concatenate %44, %46, %48, %50, %52, %54, %56, %58, %60 in 1 : vector<1024x4xbf16>, vector<1024x4xbf16>, vector<1024x4xbf16>, vector<1024x4xbf16>, vector<1024x4xbf16>, vector<1024x4xbf16>, vector<1024x4xbf16>, vector<1024x4xbf16>, vector<1024x4xbf16> -> vector<1024x36xbf16>
    %c0_22 = arith.constant 0 : index
    %c0_23 = arith.constant 0 : index
    %62 = vector.load %arg8[%c0_22, %c0_23] : memref<36x8xbf16, #tpu.memory_space<vmem>>, vector<36x8xbf16>
    %cst_24 = arith.constant dense<0.000000e+00> : vector<1024x8xf32>
    %63 = tpu.matmul %61, %62, %cst_24 {dimension_numbers = #tpu.dot_dimension_numbers<[1], [0], [0], [1], [0, 0, 1, 1], [], []>} : vector<1024x36xbf16>, vector<36x8xbf16>, vector<1024x8xf32> -> vector<1024x8xf32>
    %64 = arith.addf %42, %63 : vector<1024x8xf32>
    %c0_25 = arith.constant 0 : index
    %c0_26 = arith.constant 0 : index
    %65 = vector.load %arg9[%c0_25, %c0_26] : memref<1x8xf32, #tpu.memory_space<vmem>>, vector<1x8xf32>
    %66 = vector.broadcast %65 : vector<1x8xf32> to vector<1024x8xf32>
    %67 = arith.addf %64, %66 : vector<1024x8xf32>
    %c0_27 = arith.constant 0 : index
    %c0_28 = arith.constant 0 : index
    %68 = vector.load %arg11[%c0_27, %c0_28] : memref<1x8xf32, #tpu.memory_space<vmem>>, vector<1x8xf32>
    %cst_29 = arith.constant dense<0.000000e+00> : vector<8xf32>
    %69 = vector.multi_reduction <add>, %67, %cst_29 [0] : vector<1024x8xf32> to vector<8xf32>
    %70 = vector.shape_cast %69 : vector<8xf32> to vector<1x8xf32>
    %71 = arith.addf %68, %70 : vector<1x8xf32>
    %c0_30 = arith.constant 0 : index
    %c0_31 = arith.constant 0 : index
    %72 = vector.load %arg11[%c0_30, %c0_31] : memref<1x8xf32, #tpu.memory_space<vmem>>, vector<1x8xf32>
    tpu.vector_store %arg11[%c0_30, %c0_31], %71 {strides = array<i32>} : memref<1x8xf32, #tpu.memory_space<vmem>>, vector<1x8xf32>,
    %c0_32 = arith.constant 0 : index
    %c0_33 = arith.constant 0 : index
    %73 = vector.load %arg12[%c0_32, %c0_33] : memref<1x8xf32, #tpu.memory_space<vmem>>, vector<1x8xf32>
    %74 = arith.mulf %67, %67 : vector<1024x8xf32>
    %cst_34 = arith.constant dense<0.000000e+00> : vector<8xf32>
    %75 = vector.multi_reduction <add>, %74, %cst_34 [0] : vector<1024x8xf32> to vector<8xf32>
    %76 = vector.shape_cast %75 : vector<8xf32> to vector<1x8xf32>
    %77 = arith.addf %73, %76 : vector<1x8xf32>
    %c0_35 = arith.constant 0 : index
    %c0_36 = arith.constant 0 : index
    %78 = vector.load %arg12[%c0_35, %c0_36] : memref<1x8xf32, #tpu.memory_space<vmem>>, vector<1x8xf32>
    tpu.vector_store %arg12[%c0_35, %c0_36], %77 {strides = array<i32>} : memref<1x8xf32, #tpu.memory_space<vmem>>, vector<1x8xf32>,
    %c0_i32_37 = arith.constant 0 : i32
    %79 = arith.cmpi eq, %arg1, %c0_i32_37 : i32
    %80 = arith.extui %79 : i1 to i32
    %c0_i32_38 = arith.constant 0 : i32
    %81 = arith.cmpi ne, %80, %c0_i32_38 : i32
    scf.if %81 {
      %c0_39 = arith.constant 0 : index
      %c0_40 = arith.constant 0 : index
      %82 = vector.load %arg11[%c0_39, %c0_40] : memref<1x8xf32, #tpu.memory_space<vmem>>, vector<1x8xf32>
      %c0_41 = arith.constant 0 : index
      %c0_42 = arith.constant 0 : index
      %83 = vector.load %arg12[%c0_41, %c0_42] : memref<1x8xf32, #tpu.memory_space<vmem>>, vector<1x8xf32>
      %84 = tpu.concatenate %82, %83 in 0 : vector<1x8xf32>, vector<1x8xf32> -> vector<2x8xf32>
      %c0_43 = arith.constant 0 : index
      %c0_44 = arith.constant 0 : index
      %c0_45 = arith.constant 0 : index
      %85 = vector.load %arg10[%c0_43, %c0_44, %c0_45] : memref<1x2x8xf32, #tpu.memory_space<vmem>>, vector<1x2x8xf32>
      %86 = vector.shape_cast %85 : vector<1x2x8xf32> to vector<2x8xf32>
      %87 = vector.shape_cast %84 : vector<2x8xf32> to vector<1x2x8xf32>
      tpu.vector_store %arg10[%c0_43, %c0_44, %c0_45], %87 {strides = array<i32>} : memref<1x2x8xf32, #tpu.memory_space<vmem>>, vector<1x2x8xf32>,
    } else {
    }
    return
  }
  func.func @transform_0(%arg0: i32, %arg1: i32) -> (i32, i32, i32, i32) {
    %c0_i32 = arith.constant 0 : i32
    %c0_i32_0 = arith.constant 0 : i32
    %c0_i32_1 = arith.constant 0 : i32
    return %arg0, %arg1, %c0_i32, %c0_i32_0 : i32, i32, i32, i32
  }
  func.func @transform_1(%arg0: i32, %arg1: i32) -> (i32, i32, i32, i32) {
    %c1_i32 = arith.constant 1 : i32
    %0 = arith.addi %arg1, %c1_i32 : i32
    %c16_i32 = arith.constant 16 : i32
    %1 = arith.muli %0, %c16_i32 : i32
    %c0_i32 = arith.constant 0 : i32
    %c0_i32_0 = arith.constant 0 : i32
    %c0_i32_1 = arith.constant 0 : i32
    return %arg0, %1, %c0_i32, %c0_i32_0 : i32, i32, i32, i32
  }
  func.func @transform_2(%arg0: i32, %arg1: i32) -> (i32, i32, i32, i32) {
    %c0_i32 = arith.constant 0 : i32
    %c0_i32_0 = arith.constant 0 : i32
    %c0_i32_1 = arith.constant 0 : i32
    return %arg0, %arg1, %c0_i32, %c0_i32_0 : i32, i32, i32, i32
  }
  func.func @transform_3(%arg0: i32, %arg1: i32) -> (i32, i32, i32, i32) {
    %c1_i32 = arith.constant 1 : i32
    %0 = arith.addi %arg1, %c1_i32 : i32
    %c16_i32 = arith.constant 16 : i32
    %1 = arith.muli %0, %c16_i32 : i32
    %c0_i32 = arith.constant 0 : i32
    %c0_i32_0 = arith.constant 0 : i32
    %c0_i32_1 = arith.constant 0 : i32
    return %arg0, %1, %c0_i32, %c0_i32_0 : i32, i32, i32, i32
  }
  func.func @transform_4(%arg0: i32, %arg1: i32) -> (i32, i32, i32) {
    %c0_i32 = arith.constant 0 : i32
    %c0_i32_0 = arith.constant 0 : i32
    %c0_i32_1 = arith.constant 0 : i32
    return %arg0, %c0_i32, %c0_i32_0 : i32, i32, i32
  }
  func.func @transform_5(%arg0: i32, %arg1: i32) -> (i32, i32) {
    %c0_i32 = arith.constant 0 : i32
    %c0_i32_0 = arith.constant 0 : i32
    %c0_i32_1 = arith.constant 0 : i32
    return %c0_i32, %c0_i32_0 : i32, i32
  }
  func.func @transform_6(%arg0: i32, %arg1: i32) -> (i32, i32) {
    %c0_i32 = arith.constant 0 : i32
    %c0_i32_0 = arith.constant 0 : i32
    %c0_i32_1 = arith.constant 0 : i32
    return %c0_i32, %c0_i32_0 : i32, i32
  }
  func.func @transform_7(%arg0: i32, %arg1: i32) -> (i32, i32) {
    %c0_i32 = arith.constant 0 : i32
    %c0_i32_0 = arith.constant 0 : i32
    %c0_i32_1 = arith.constant 0 : i32
    return %c0_i32, %c0_i32_0 : i32, i32
  }
  func.func @transform_8(%arg0: i32, %arg1: i32) -> (i32, i32, i32) {
    %c0_i32 = arith.constant 0 : i32
    %c0_i32_0 = arith.constant 0 : i32
    %c0_i32_1 = arith.constant 0 : i32
    return %arg0, %c0_i32, %c0_i32_0 : i32, i32, i32
  }
}

</mosaic_0001>

<llo_original>
// kernel: tpu_custom_call.1
$region0: #{tpu_custom_call.1}
  #allocation0 [shape = 'u32[]', space=smem, size = 0x4, offset = 0x4, fixed_abs, tag = 'smem constant byte address 0x4 - core index']
  #allocation1 [shape = 'u32[144,128]{1,0:T(1,128)}', space=vmem, size = 0x12000, scoped, tag = 'internal scratch']
  #allocation2 [shape = 'f32[1,8]{1,0:T(1,128)}', space=vmem, size = 0x200, scoped, tag = 'scratch operand']
  #allocation3 [shape = 'f32[1,8]{1,0:T(1,128)}', space=vmem, size = 0x200, scoped, tag = 'scratch operand']
  %s0 = inlined_call_operand.vmem [shape: bf16[2,64,34,4], index: 0, kind: input, shape index: {}]
  %s1 = inlined_call_operand.vmem [shape: bf16[2,64,34,4], index: 1, kind: input, shape index: {}]
  %s2 = inlined_call_operand.vmem [shape: bf16[2,64,34,4], index: 2, kind: input, shape index: {}]
  %s3 = inlined_call_operand.vmem [shape: bf16[2,64,34,4], index: 3, kind: input, shape index: {}]
  %s4 = inlined_call_operand.vmem [shape: f32[2,1,4], index: 4, kind: input, shape index: {}]
  %s5 = inlined_call_operand.vmem [shape: bf16[36,8], index: 5, kind: input, shape index: {}]
  %s6 = inlined_call_operand.vmem [shape: bf16[36,8], index: 6, kind: input, shape index: {}]
  %s7 = inlined_call_operand.vmem [shape: f32[1,8], index: 7, kind: input, shape index: {}]
  %s8 = inlined_call_operand.hbm [shape: f32[2,2,8], index: 8, kind: output, shape index: {}]
  %s9 = sld [smem:[#allocation0]]
  $region73: #{tpu_custom_call.1} parent=0
    _
  %s11 = ssub.s32 1, %s9
  %s12 = scalar_select 0, %s11, %s9
  $region1: #{tpu_custom_call.1} parent=0
    #allocation4 [shape = 'u8[2048]{0}', space=vmem, size = 0x800, scoped, tag = 'output window, operand 0']
    #allocation5 [shape = 's32[2]{0}', space=sflag, size = 0x8, scoped, tag = 'scoped memory for tpu_custom_call.1']
    %13 = vsyncpa [#allocation5], 0
    %s14 = scalar_lea.sflag [#allocation5], 1
    %15 = vsyncpa %s14, 0
    loop: start=0, step=1, limit=4
    $region2: #{tpu_custom_call.1} parent=1 // loop_pre_header
      _
    $region3: #{tpu_custom_call.1} parent=1 // loop_header
      %s17 = sphi 0, %s21
      %p18 = scmp.ge.s32.totalorder %s17, 4
      %s24 = sphi 0, %s36
      %s25 = sphi 0, %s32
      %s26 = sphi 0, %s24
      %s27 = sphi 0, %s25
      %s28 = sphi 0, %s26
      %s29 = sphi 0, %s27
      %s41 = sphi 0, %s43
      %s44 = sphi 0, %s41
      %s45 = sphi 0, %s44
      %s61 = sphi 0, %s45
      %s73 = sphi 0, %s75
      %s76 = sphi 0, %s73
      %s77 = sphi 0, %s76
      %s93 = sphi 0, %s77
      %s101 = sphi 0, %s103
      %s104 = sphi 0, %s101
      %s105 = sphi 0, %s104
      %s121 = sphi 0, %s105
      %s133 = sphi 0, %s135
      %s136 = sphi 0, %s133
      %s137 = sphi 0, %s136
      %s153 = sphi 0, %s137
      %s159 = sphi 0, %s161
      %s162 = sphi 0, %s159
      %s163 = sphi 0, %s162
      %s179 = sphi 0, %s163
      %s183 = sphi 0, %s183
      %s185 = sphi 0, %s183
      %s186 = sphi 0, %s185
      %s200 = sphi 0, %s186
      %s204 = sphi 0, %s204
      %s206 = sphi 0, %s204
      %s207 = sphi 0, %s206
      %s221 = sphi 0, %s207
      %s225 = sphi 0, %s225
      %s227 = sphi 0, %s225
      %s228 = sphi 0, %s227
      %s242 = sphi 0, %s228
      %s248 = sphi 0, %s250
      %s251 = sphi 0, %s248
      %s252 = sphi 0, %s251
      %s268 = sphi 0, %s252
    $region4: #{tpu_custom_call.1} parent=1 // loop_header_branch
      %20 = sbr.rel (%p18) target = $region8
    $region5: #{tpu_custom_call.1} parent=1 // loop_body
      %s22 = ssub.s32 %s17, 1
      %s23 = ssub.s32 %s17, 2
      %s30 = sadd.s32 1, %s25
      %p31 = scmp.ge.s32.totalorder %s30, 1
      %s32 = scalar_select %p31, 0, %s30
      %s33 = sadd.s32 1, %s24
      %s34 = scalar_select %p31, %s33, %s24
      %p35 = scmp.ge.s32.totalorder %s34, 2
      %s36 = scalar_select %p35, 0, %s34
      %s37 = ssub.s32 %s24, %s36
      %s38 = ssub.s32 %s25, %s32
      %s39 = sor.u32 %s37, %s38
      %p40 = scmp.eq.s32.totalorder %s39, 0
      %s42 = sadd.s32 %s41, 1
      %s43 = scalar_select %p40, %s41, %s42
      %p46 = pneg %p40
      %p47 = scmp.eq.s32.totalorder %s17, 1
      %p48 = por %p46, %p47
      %p49 = scmp.ne.s32.totalorder %s41, %s44
      %p50 = scmp.eq.s32.totalorder %s17, 0
      %p51 = por %p49, %p50
      %p52 = scmp.ne.s32.totalorder %s41, %s44
      %p53 = scmp.eq.s32.totalorder %s22, 1
      %p54 = por %p52, %p53
      %p55 = scmp.ne.s32.totalorder %s44, %s45
      %p56 = scmp.eq.s32.totalorder %s22, 0
      %p57 = por %p55, %p56
      %p58 = scmp.ne.s32.totalorder %s44, %s45
      %p59 = scmp.eq.s32.totalorder %s23, 1
      %p60 = por %p58, %p59
      %p62 = scmp.ne.s32.totalorder %s45, %s61
      %p63 = scmp.eq.s32.totalorder %s23, 0
      %p64 = por %p62, %p63
      %s65 = sadd.s32 %s25, 1
      %s66 = smul.u32 %s65, 16
      %s67 = sadd.s32 %s32, 1
      %s68 = smul.u32 %s67, 16
      %s69 = ssub.s32 %s24, %s36
      %s70 = ssub.s32 %s66, %s68
      %s71 = sor.u32 %s69, %s70
      %p72 = scmp.eq.s32.totalorder %s71, 0
      %s74 = sadd.s32 %s73, 1
      %s75 = scalar_select %p72, %s73, %s74
      %p78 = pneg %p72
      %p79 = scmp.eq.s32.totalorder %s17, 1
      %p80 = por %p78, %p79
      %p81 = scmp.ne.s32.totalorder %s73, %s76
      %p82 = scmp.eq.s32.totalorder %s17, 0
      %p83 = por %p81, %p82
      %p84 = scmp.ne.s32.totalorder %s73, %s76
      %p85 = scmp.eq.s32.totalorder %s22, 1
      %p86 = por %p84, %p85
      %p87 = scmp.ne.s32.totalorder %s76, %s77
      %p88 = scmp.eq.s32.totalorder %s22, 0
      %p89 = por %p87, %p88
      %p90 = scmp.ne.s32.totalorder %s76, %s77
      %p91 = scmp.eq.s32.totalorder %s23, 1
      %p92 = por %p90, %p91
      %p94 = scmp.ne.s32.totalorder %s77, %s93
      %p95 = scmp.eq.s32.totalorder %s23, 0
      %p96 = por %p94, %p95
      %s97 = ssub.s32 %s24, %s36
      %s98 = ssub.s32 %s25, %s32
      %s99 = sor.u32 %s97, %s98
      %p100 = scmp.eq.s32.totalorder %s99, 0
      %s102 = sadd.s32 %s101, 1
      %s103 = scalar_select %p100, %s101, %s102
      %p106 = pneg %p100
      %p107 = scmp.eq.s32.totalorder %s17, 1
      %p108 = por %p106, %p107
      %p109 = scmp.ne.s32.totalorder %s101, %s104
      %p110 = scmp.eq.s32.totalorder %s17, 0
      %p111 = por %p109, %p110
      %p112 = scmp.ne.s32.totalorder %s101, %s104
      %p113 = scmp.eq.s32.totalorder %s22, 1
      %p114 = por %p112, %p113
      %p115 = scmp.ne.s32.totalorder %s104, %s105
      %p116 = scmp.eq.s32.totalorder %s22, 0
      %p117 = por %p115, %p116
      %p118 = scmp.ne.s32.totalorder %s104, %s105
      %p119 = scmp.eq.s32.totalorder %s23, 1
      %p120 = por %p118, %p119
      %p122 = scmp.ne.s32.totalorder %s105, %s121
      %p123 = scmp.eq.s32.totalorder %s23, 0
      %p124 = por %p122, %p123
      %s125 = sadd.s32 %s25, 1
      %s126 = smul.u32 %s125, 16
      %s127 = sadd.s32 %s32, 1
      %s128 = smul.u32 %s127, 16
      %s129 = ssub.s32 %s24, %s36
      %s130 = ssub.s32 %s126, %s128
      %s131 = sor.u32 %s129, %s130
      %p132 = scmp.eq.s32.totalorder %s131, 0
      %s134 = sadd.s32 %s133, 1
      %s135 = scalar_select %p132, %s133, %s134
      %p138 = pneg %p132
      %p139 = scmp.eq.s32.totalorder %s17, 1
      %p140 = por %p138, %p139
      %p141 = scmp.ne.s32.totalorder %s133, %s136
      %p142 = scmp.eq.s32.totalorder %s17, 0
      %p143 = por %p141, %p142
      %p144 = scmp.ne.s32.totalorder %s133, %s136
      %p145 = scmp.eq.s32.totalorder %s22, 1
      %p146 = por %p144, %p145
      %p147 = scmp.ne.s32.totalorder %s136, %s137
      %p148 = scmp.eq.s32.totalorder %s22, 0
      %p149 = por %p147, %p148
      %p150 = scmp.ne.s32.totalorder %s136, %s137
      %p151 = scmp.eq.s32.totalorder %s23, 1
      %p152 = por %p150, %p151
      %p154 = scmp.ne.s32.totalorder %s137, %s153
      %p155 = scmp.eq.s32.totalorder %s23, 0
      %p156 = por %p154, %p155
      %s157 = ssub.s32 %s24, %s36
      %p158 = scmp.eq.s32.totalorder %s157, 0
      %s160 = sadd.s32 %s159, 1
      %s161 = scalar_select %p158, %s159, %s160
      %p164 = pneg %p158
      %p165 = scmp.eq.s32.totalorder %s17, 1
      %p166 = por %p164, %p165
      %p167 = scmp.ne.s32.totalorder %s159, %s162
      %p168 = scmp.eq.s32.totalorder %s17, 0
      %p169 = por %p167, %p168
      %p170 = scmp.ne.s32.totalorder %s159, %s162
      %p171 = scmp.eq.s32.totalorder %s22, 1
      %p172 = por %p170, %p171
      %p173 = scmp.ne.s32.totalorder %s162, %s163
      %p174 = scmp.eq.s32.totalorder %s22, 0
      %p175 = por %p173, %p174
      %p176 = scmp.ne.s32.totalorder %s162, %s163
      %p177 = scmp.eq.s32.totalorder %s23, 1
      %p178 = por %p176, %p177
      %p180 = scmp.ne.s32.totalorder %s163, %s179
      %p181 = scmp.eq.s32.totalorder %s23, 0
      %p182 = por %p180, %p181
      %s184 = sadd.s32 %s183, 1
      %p187 = scmp.eq.s32.totalorder %s17, 1
      %p188 = scmp.ne.s32.totalorder %s183, %s185
      %p189 = scmp.eq.s32.totalorder %s17, 0
      %p190 = por %p188, %p189
      %p191 = scmp.ne.s32.totalorder %s183, %s185
      %p192 = scmp.eq.s32.totalorder %s22, 1
      %p193 = por %p191, %p192
      %p194 = scmp.ne.s32.totalorder %s185, %s186
      %p195 = scmp.eq.s32.totalorder %s22, 0
      %p196 = por %p194, %p195
      %p197 = scmp.ne.s32.totalorder %s185, %s186
      %p198 = scmp.eq.s32.totalorder %s23, 1
      %p199 = por %p197, %p198
      %p201 = scmp.ne.s32.totalorder %s186, %s200
      %p202 = scmp.eq.s32.totalorder %s23, 0
      %p203 = por %p201, %p202
      %s205 = sadd.s32 %s204, 1
      %p208 = scmp.eq.s32.totalorder %s17, 1
      %p209 = scmp.ne.s32.totalorder %s204, %s206
      %p210 = scmp.eq.s32.totalorder %s17, 0
      %p211 = por %p209, %p210
      %p212 = scmp.ne.s32.totalorder %s204, %s206
      %p213 = scmp.eq.s32.totalorder %s22, 1
      %p214 = por %p212, %p213
      %p215 = scmp.ne.s32.totalorder %s206, %s207
      %p216 = scmp.eq.s32.totalorder %s22, 0
      %p217 = por %p215, %p216
      %p218 = scmp.ne.s32.totalorder %s206, %s207
      %p219 = scmp.eq.s32.totalorder %s23, 1
      %p220 = por %p218, %p219
      %p222 = scmp.ne.s32.totalorder %s207, %s221
      %p223 = scmp.eq.s32.totalorder %s23, 0
      %p224 = por %p222, %p223
      %s226 = sadd.s32 %s225, 1
      %p229 = scmp.eq.s32.totalorder %s17, 1
      %p230 = scmp.ne.s32.totalorder %s225, %s227
      %p231 = scmp.eq.s32.totalorder %s17, 0
      %p232 = por %p230, %p231
      %p233 = scmp.ne.s32.totalorder %s225, %s227
      %p234 = scmp.eq.s32.totalorder %s22, 1
      %p235 = por %p233, %p234
      %p236 = scmp.ne.s32.totalorder %s227, %s228
      %p237 = scmp.eq.s32.totalorder %s22, 0
      %p238 = por %p236, %p237
      %p239 = scmp.ne.s32.totalorder %s227, %s228
      %p240 = scmp.eq.s32.totalorder %s23, 1
      %p241 = por %p239, %p240
      %p243 = scmp.ne.s32.totalorder %s228, %s242
      %p244 = scmp.eq.s32.totalorder %s23, 0
      %p245 = por %p243, %p244
      %s246 = ssub.s32 %s24, %s36
      %p247 = scmp.eq.s32.totalorder %s246, 0
      %s249 = sadd.s32 %s248, 1
      %s250 = scalar_select %p247, %s248, %s249
      %p253 = pneg %p247
      %p254 = scmp.eq.s32.totalorder %s17, 1
      %p255 = por %p253, %p254
      %p256 = scmp.ne.s32.totalorder %s248, %s251
      %p257 = scmp.eq.s32.totalorder %s17, 0
      %p258 = por %p256, %p257
      %p259 = scmp.ne.s32.totalorder %s248, %s251
      %p260 = scmp.eq.s32.totalorder %s22, 1
      %p261 = por %p259, %p260
      %p262 = scmp.ne.s32.totalorder %s251, %s252
      %p263 = scmp.eq.s32.totalorder %s22, 0
      %p264 = por %p262, %p263
      %p265 = scmp.ne.s32.totalorder %s251, %s252
      %p266 = scmp.eq.s32.totalorder %s23, 1
      %p267 = por %p265, %p266
      %p269 = scmp.ne.s32.totalorder %s252, %s268
      %p270 = scmp.eq.s32.totalorder %s23, 0
      %p271 = por %p269, %p270
      %p272 = scmp.le.s32.totalorder 1, %s17
      %p273 = scmp.lt.s32.totalorder %s17, 3
      %p274 = pnand %p272, %p273
      %p275 = pneg %p274
      // Predicated region
      $region9: #{tpu_custom_call.1} parent=5 // pred_check
        _
      $region10: #{tpu_custom_call.1} parent=5 // pred_check_branch
        %277 = sbr.rel (%p274) target = $region12
      $region11: #{tpu_custom_call.1} parent=5 // pred_region
        %s278 = ssub.s32 %s17, 1
        // Predicated region
        $region13: #{tpu_custom_call.1} parent=11 // pred_check
          %p279 = pneg %p196
        $region14: #{tpu_custom_call.1} parent=11 // pred_check_branch
          %281 = sbr.rel (%p279) target = $region16
        $region15: #{tpu_custom_call.1} parent=11 // pred_region
          _
        $region16: #{tpu_custom_call.1} parent=11 // pred_fallthru
          _
        // Predicated region
        $region17: #{tpu_custom_call.1} parent=11 // pred_check
          %p282 = pneg %p217
        $region18: #{tpu_custom_call.1} parent=11 // pred_check_branch
          %284 = sbr.rel (%p282) target = $region20
        $region19: #{tpu_custom_call.1} parent=11 // pred_region
          _
        $region20: #{tpu_custom_call.1} parent=11 // pred_fallthru
          _
        // Predicated region
        $region21: #{tpu_custom_call.1} parent=11 // pred_check
          %p285 = pneg %p238
        $region22: #{tpu_custom_call.1} parent=11 // pred_check_branch
          %287 = sbr.rel (%p285) target = $region24
        $region23: #{tpu_custom_call.1} parent=11 // pred_region
          _
        $region24: #{tpu_custom_call.1} parent=11 // pred_fallthru
          _
      $region12: #{tpu_custom_call.1} parent=5 // pred_fallthru
        _
      %p288 = scmp.lt.s32.totalorder %s17, 2
      // Predicated region
      $region25: #{tpu_custom_call.1} parent=5 // pred_check
        %p289 = pneg %p288
      $region26: #{tpu_custom_call.1} parent=5 // pred_check_branch
        %291 = sbr.rel (%p289) target = $region28
      $region27: #{tpu_custom_call.1} parent=5 // pred_region
        // Predicated region
        $region29: #{tpu_custom_call.1} parent=27 // pred_check
          %p292 = pneg %p51
        $region30: #{tpu_custom_call.1} parent=27 // pred_check_branch
          %294 = sbr.rel (%p292) target = $region32
        $region31: #{tpu_custom_call.1} parent=27 // pred_region
          %s295 = smul.u32 32, %s25
          %p296 = scmp.lt.s32.totalorder %s24, 1
          %s297 = scalar_select %p296, %s24, 1
          %p298 = scmp.lt.s32.totalorder %s295, 63
          %s299 = scalar_select %p298, %s295, 63
          %s300 = smul.addr %s299, 5
          %s301 = smul.addr %s297, 320
          %s302 = sadd.s32 %s300, %s301
          %s303 = smul.addr %s302, 4
          %s304 = scalar_lea.vmem %s0, %s303
          %s305 = smul.u32 32, %s25
        $region32: #{tpu_custom_call.1} parent=27 // pred_fallthru
          _
        // Predicated region
        $region33: #{tpu_custom_call.1} parent=27 // pred_check
          %p306 = pneg %p83
        $region34: #{tpu_custom_call.1} parent=27 // pred_check_branch
          %308 = sbr.rel (%p306) target = $region36
        $region35: #{tpu_custom_call.1} parent=27 // pred_region
          %s309 = sadd.s32 %s25, 1
          %s310 = smul.u32 %s309, 16
          %s311 = smul.u32 2, %s310
          %p312 = scmp.lt.s32.totalorder %s24, 1
          %s313 = scalar_select %p312, %s24, 1
          %p314 = scmp.lt.s32.totalorder %s311, 63
          %s315 = scalar_select %p314, %s311, 63
          %s316 = smul.addr %s315, 5
          %s317 = smul.addr %s313, 320
          %s318 = sadd.s32 %s316, %s317
          %s319 = smul.addr %s318, 4
          %s320 = scalar_lea.vmem %s1, %s319
          %s321 = sadd.s32 %s25, 1
          %s322 = smul.u32 %s321, 16
          %s323 = smul.u32 2, %s322
        $region36: #{tpu_custom_call.1} parent=27 // pred_fallthru
          _
        // Predicated region
        $region37: #{tpu_custom_call.1} parent=27 // pred_check
          %p324 = pneg %p111
        $region38: #{tpu_custom_call.1} parent=27 // pred_check_branch
          %326 = sbr.rel (%p324) target = $region40
        $region39: #{tpu_custom_call.1} parent=27 // pred_region
          %s327 = smul.u32 32, %s25
          %p328 = scmp.lt.s32.totalorder %s24, 1
          %s329 = scalar_select %p328, %s24, 1
          %p330 = scmp.lt.s32.totalorder %s327, 63
          %s331 = scalar_select %p330, %s327, 63
          %s332 = smul.addr %s331, 5
          %s333 = smul.addr %s329, 320
          %s334 = sadd.s32 %s332, %s333
          %s335 = smul.addr %s334, 4
          %s336 = scalar_lea.vmem %s2, %s335
          %s337 = smul.u32 32, %s25
        $region40: #{tpu_custom_call.1} parent=27 // pred_fallthru
          _
        // Predicated region
        $region41: #{tpu_custom_call.1} parent=27 // pred_check
          %p338 = pneg %p143
        $region42: #{tpu_custom_call.1} parent=27 // pred_check_branch
          %340 = sbr.rel (%p338) target = $region44
        $region43: #{tpu_custom_call.1} parent=27 // pred_region
          %s341 = sadd.s32 %s25, 1
          %s342 = smul.u32 %s341, 16
          %s343 = smul.u32 2, %s342
          %p344 = scmp.lt.s32.totalorder %s24, 1
          %s345 = scalar_select %p344, %s24, 1
          %p346 = scmp.lt.s32.totalorder %s343, 63
          %s347 = scalar_select %p346, %s343, 63
          %s348 = smul.addr %s347, 5
          %s349 = smul.addr %s345, 320
          %s350 = sadd.s32 %s348, %s349
          %s351 = smul.addr %s350, 4
          %s352 = scalar_lea.vmem %s3, %s351
          %s353 = sadd.s32 %s25, 1
          %s354 = smul.u32 %s353, 16
          %s355 = smul.u32 2, %s354
        $region44: #{tpu_custom_call.1} parent=27 // pred_fallthru
          _
        // Predicated region
        $region45: #{tpu_custom_call.1} parent=27 // pred_check
          %p356 = pneg %p169
        $region46: #{tpu_custom_call.1} parent=27 // pred_check_branch
          %358 = sbr.rel (%p356) target = $region48
        $region47: #{tpu_custom_call.1} parent=27 // pred_region
          %p359 = scmp.lt.s32.totalorder %s24, 1
          %s360 = scalar_select %p359, %s24, 1
          %s361 = scalar_lea.vmem %s4, %s360
        $region48: #{tpu_custom_call.1} parent=27 // pred_fallthru
          _
      $region28: #{tpu_custom_call.1} parent=5 // pred_fallthru
        _
      %p362 = scmp.le.s32.totalorder 1, %s17
      %p363 = scmp.lt.s32.totalorder %s17, 3
      %p364 = pnand %p362, %p363
      %p365 = pneg %p364
      // Predicated region
      $region49: #{tpu_custom_call.1} parent=5 // pred_check
        _
      $region50: #{tpu_custom_call.1} parent=5 // pred_check_branch
        %367 = sbr.rel (%p364) target = $region52
      $region51: #{tpu_custom_call.1} parent=5 // pred_region
        %s368 = ssub.s32 %s17, 1
        %s369 = smul.u32 32, %s27
        %p370 = scmp.lt.s32.totalorder %s26, 1
        %s371 = scalar_select %p370, %s26, 1
        %p372 = scmp.lt.s32.totalorder %s369, 63
        %s373 = scalar_select %p372, %s369, 63
        %s374 = smul.addr %s373, 5
        %s375 = smul.addr %s371, 320
        %s376 = sadd.s32 %s374, %s375
        %s377 = smul.addr %s376, 4
        %s378 = scalar_lea.vmem %s0, %s377
        %p379 = pneg %p57
        %p380 = pneg %p54
        %s381 = sadd.s32 %s27, 1
        %s382 = smul.u32 %s381, 16
        %s383 = smul.u32 2, %s382
        %p384 = scmp.lt.s32.totalorder %s26, 1
        %s385 = scalar_select %p384, %s26, 1
        %p386 = scmp.lt.s32.totalorder %s383, 63
        %s387 = scalar_select %p386, %s383, 63
        %s388 = smul.addr %s387, 5
        %s389 = smul.addr %s385, 320
        %s390 = sadd.s32 %s388, %s389
        %s391 = smul.addr %s390, 4
        %s392 = scalar_lea.vmem %s1, %s391
        %p393 = pneg %p89
        %p394 = pneg %p86
        %s395 = smul.u32 32, %s27
        %p396 = scmp.lt.s32.totalorder %s26, 1
        %s397 = scalar_select %p396, %s26, 1
        %p398 = scmp.lt.s32.totalorder %s395, 63
        %s399 = scalar_select %p398, %s395, 63
        %s400 = smul.addr %s399, 5
        %s401 = smul.addr %s397, 320
        %s402 = sadd.s32 %s400, %s401
        %s403 = smul.addr %s402, 4
        %s404 = scalar_lea.vmem %s2, %s403
        %p405 = pneg %p117
        %p406 = pneg %p114
        %s407 = sadd.s32 %s27, 1
        %s408 = smul.u32 %s407, 16
        %s409 = smul.u32 2, %s408
        %p410 = scmp.lt.s32.totalorder %s26, 1
        %s411 = scalar_select %p410, %s26, 1
        %p412 = scmp.lt.s32.totalorder %s409, 63
        %s413 = scalar_select %p412, %s409, 63
        %s414 = smul.addr %s413, 5
        %s415 = smul.addr %s411, 320
        %s416 = sadd.s32 %s414, %s415
        %s417 = smul.addr %s416, 4
        %s418 = scalar_lea.vmem %s3, %s417
        %p419 = pneg %p149
        %p420 = pneg %p146
        %p421 = scmp.lt.s32.totalorder %s26, 1
        %s422 = scalar_select %p421, %s26, 1
        %s423 = scalar_lea.vmem %s4, %s422
        %p424 = pneg %p175
        %p425 = pneg %p172
        %p426 = pneg %p196
        %p427 = pneg %p193
        %p428 = pneg %p217
        %p429 = pneg %p214
        %p430 = pneg %p238
        %p431 = pneg %p235
        %p432 = pneg %p264
        %p433 = pneg %p261
        %s434 = sand.u32 %s251, 1
        %s435 = scalar_lea.sflag [#allocation5], %s434
        %s436 = sand.u32 %s251, 1
        %s437 = smul.addr %s436, 2
        %s438 = scalar_lea.vmem [#allocation4], %s437
        %s439 = smul.u32 32, %s27
        %p440 = scmp.lt.s32.totalorder %s26, 1
        %s441 = scalar_select %p440, %s26, 1
        %p442 = scmp.lt.s32.totalorder %s439, 63
        %s443 = scalar_select %p442, %s439, 63
        %s444 = smul.addr %s443, 5
        %s445 = smul.addr %s441, 320
        %s446 = sadd.s32 %s444, %s445
        %s447 = smul.addr %s446, 4
        %s448 = scalar_lea.vmem %s0, %s447
        %s449 = smul.u32 32, %s27
        %s450 = sadd.s32 %s27, 1
        %s451 = smul.u32 %s450, 16
        %s452 = smul.u32 2, %s451
        %p453 = scmp.lt.s32.totalorder %s26, 1
        %s454 = scalar_select %p453, %s26, 1
        %p455 = scmp.lt.s32.totalorder %s452, 63
        %s456 = scalar_select %p455, %s452, 63
        %s457 = smul.addr %s456, 5
        %s458 = smul.addr %s454, 320
        %s459 = sadd.s32 %s457, %s458
        %s460 = smul.addr %s459, 4
        %s461 = scalar_lea.vmem %s1, %s460
        %s462 = sadd.s32 %s27, 1
        %s463 = smul.u32 %s462, 16
        %s464 = smul.u32 2, %s463
        %s465 = smul.u32 32, %s27
        %p466 = scmp.lt.s32.totalorder %s26, 1
        %s467 = scalar_select %p466, %s26, 1
        %p468 = scmp.lt.s32.totalorder %s465, 63
        %s469 = scalar_select %p468, %s465, 63
        %s470 = smul.addr %s469, 5
        %s471 = smul.addr %s467, 320
        %s472 = sadd.s32 %s470, %s471
        %s473 = smul.addr %s472, 4
        %s474 = scalar_lea.vmem %s2, %s473
        %s475 = smul.u32 32, %s27
        %s476 = sadd.s32 %s27, 1
        %s477 = smul.u32 %s476, 16
        %s478 = smul.u32 2, %s477
        %p479 = scmp.lt.s32.totalorder %s26, 1
        %s480 = scalar_select %p479, %s26, 1
        %p481 = scmp.lt.s32.totalorder %s478, 63
        %s482 = scalar_select %p481, %s478, 63
        %s483 = smul.addr %s482, 5
        %s484 = smul.addr %s480, 320
        %s485 = sadd.s32 %s483, %s484
        %s486 = smul.addr %s485, 4
        %s487 = scalar_lea.vmem %s3, %s486
        %s488 = sadd.s32 %s27, 1
        %s489 = smul.u32 %s488, 16
        %s490 = smul.u32 2, %s489
        %p491 = scmp.lt.s32.totalorder %s26, 1
        %s492 = scalar_select %p491, %s26, 1
        %s493 = scalar_lea.vmem %s4, %s492
        %p495 = scmp.eq.s32.totalorder %s27, 0
        // Predicated region
        $region53: #{tpu_custom_call.1} parent=51 // pred_check
          %p496 = pneg %p495
        $region54: #{tpu_custom_call.1} parent=51 // pred_check_branch
          %498 = sbr.rel (%p496) target = $region56
        $region55: #{tpu_custom_call.1} parent=51 // pred_region
          %vm499 = vcmask 57344
          %500 = vst.msk [vmem:[#allocation2] sm:$0x1] %vm499, 0.0
          %501 = vst.msk [vmem:[#allocation3] sm:$0x1] %vm499, 0.0
        $region56: #{tpu_custom_call.1} parent=51 // pred_fallthru
          _
        %v502 = vld [vmem:[%s448] sm:$0xf]
        %v503 = vld [vmem:[%s448 + $0x4] sm:$0xf]
        %v504 = vld [vmem:[%s448 + $0x8] sm:$0xf]
        %v505 = vld [vmem:[%s448 + $0xc] sm:$0xf]
        %v506 = vld [vmem:[%s448 + $0x10] sm:$0x1]
        %v507 = vld [vmem:[%s448 + $0x14] sm:$0xf]
        %v508 = vld [vmem:[%s448 + $0x18] sm:$0xf]
        %v509 = vld [vmem:[%s448 + $0x1c] sm:$0xf]
        %v510 = vld [vmem:[%s448 + $0x20] sm:$0xf]
        %v511 = vld [vmem:[%s448 + $0x24] sm:$0x1]
        %v512 = vld [vmem:[%s448 + $0x28] sm:$0xf]
        %v513 = vld [vmem:[%s448 + $0x2c] sm:$0xf]
        %v514 = vld [vmem:[%s448 + $0x30] sm:$0xf]
        %v515 = vld [vmem:[%s448 + $0x34] sm:$0xf]
        %v516 = vld [vmem:[%s448 + $0x38] sm:$0x1]
        %v517 = vld [vmem:[%s448 + $0x3c] sm:$0xf]
        %v518 = vld [vmem:[%s448 + $0x40] sm:$0xf]
        %v519 = vld [vmem:[%s448 + $0x44] sm:$0xf]
        %v520 = vld [vmem:[%s448 + $0x48] sm:$0xf]
        %v521 = vld [vmem:[%s448 + $0x4c] sm:$0x1]
        %v522 = vld [vmem:[%s448 + $0x50] sm:$0xf]
        %v523 = vld [vmem:[%s448 + $0x54] sm:$0xf]
        %v524 = vld [vmem:[%s448 + $0x58] sm:$0xf]
        %v525 = vld [vmem:[%s448 + $0x5c] sm:$0xf]
        %v526 = vld [vmem:[%s448 + $0x60] sm:$0x1]
        %v527 = vld [vmem:[%s448 + $0x64] sm:$0xf]
        %v528 = vld [vmem:[%s448 + $0x68] sm:$0xf]
        %v529 = vld [vmem:[%s448 + $0x6c] sm:$0xf]
        %v530 = vld [vmem:[%s448 + $0x70] sm:$0xf]
        %v531 = vld [vmem:[%s448 + $0x74] sm:$0x1]
        %v532 = vld [vmem:[%s448 + $0x78] sm:$0xf]
        %v533 = vld [vmem:[%s448 + $0x7c] sm:$0xf]
        %v534 = vld [vmem:[%s448 + $0x80] sm:$0xf]
        %v535 = vld [vmem:[%s448 + $0x84] sm:$0xf]
        %v536 = vld [vmem:[%s448 + $0x88] sm:$0x1]
        %v537 = vld [vmem:[%s448 + $0x8c] sm:$0xf]
        %v538 = vld [vmem:[%s448 + $0x90] sm:$0xf]
        %v539 = vld [vmem:[%s448 + $0x94] sm:$0xf]
        %v540 = vld [vmem:[%s448 + $0x98] sm:$0xf]
        %v541 = vld [vmem:[%s448 + $0x9c] sm:$0x1]
        %v542 = vld [vmem:[%s448 + $0xa0] sm:$0xf]
        %v543 = vld [vmem:[%s448 + $0xa4] sm:$0xf]
        %v544 = vld [vmem:[%s448 + $0xa8] sm:$0xf]
        %v545 = vld [vmem:[%s448 + $0xac] sm:$0xf]
        %v546 = vld [vmem:[%s448 + $0xb0] sm:$0x1]
        %v547 = vld [vmem:[%s448 + $0xb4] sm:$0xf]
        %v548 = vld [vmem:[%s448 + $0xb8] sm:$0xf]
        %v549 = vld [vmem:[%s448 + $0xbc] sm:$0xf]
        %v550 = vld [vmem:[%s448 + $0xc0] sm:$0xf]
        %v551 = vld [vmem:[%s448 + $0xc4] sm:$0x1]
        %v552 = vld [vmem:[%s448 + $0xc8] sm:$0xf]
        %v553 = vld [vmem:[%s448 + $0xcc] sm:$0xf]
        %v554 = vld [vmem:[%s448 + $0xd0] sm:$0xf]
        %v555 = vld [vmem:[%s448 + $0xd4] sm:$0xf]
        %v556 = vld [vmem:[%s448 + $0xd8] sm:$0x1]
        %v557 = vld [vmem:[%s448 + $0xdc] sm:$0xf]
        %v558 = vld [vmem:[%s448 + $0xe0] sm:$0xf]
        %v559 = vld [vmem:[%s448 + $0xe4] sm:$0xf]
        %v560 = vld [vmem:[%s448 + $0xe8] sm:$0xf]
        %v561 = vld [vmem:[%s448 + $0xec] sm:$0x1]
        %v562 = vld [vmem:[%s448 + $0xf0] sm:$0xf]
        %v563 = vld [vmem:[%s448 + $0xf4] sm:$0xf]
        %v564 = vld [vmem:[%s448 + $0xf8] sm:$0xf]
        %v565 = vld [vmem:[%s448 + $0xfc] sm:$0xf]
        %v566 = vld [vmem:[%s448 + $0x100] sm:$0x1]
        %v567 = vld [vmem:[%s448 + $0x104] sm:$0xf]
        %v568 = vld [vmem:[%s448 + $0x108] sm:$0xf]
        %v569 = vld [vmem:[%s448 + $0x10c] sm:$0xf]
        %v570 = vld [vmem:[%s448 + $0x110] sm:$0xf]
        %v571 = vld [vmem:[%s448 + $0x114] sm:$0x1]
        %v572 = vld [vmem:[%s448 + $0x118] sm:$0xf]
        %v573 = vld [vmem:[%s448 + $0x11c] sm:$0xf]
        %v574 = vld [vmem:[%s448 + $0x120] sm:$0xf]
        %v575 = vld [vmem:[%s448 + $0x124] sm:$0xf]
        %v576 = vld [vmem:[%s448 + $0x128] sm:$0x1]
        %v577 = vld [vmem:[%s448 + $0x12c] sm:$0xf]
        %v578 = vld [vmem:[%s448 + $0x130] sm:$0xf]
        %v579 = vld [vmem:[%s448 + $0x134] sm:$0xf]
        %v580 = vld [vmem:[%s448 + $0x138] sm:$0xf]
        %v581 = vld [vmem:[%s448 + $0x13c] sm:$0x1]
        %v582 = vld [vmem:[%s448 + $0x140] sm:$0xf]
        %v583 = vld [vmem:[%s448 + $0x144] sm:$0xf]
        %v584 = vld [vmem:[%s448 + $0x148] sm:$0xf]
        %v585 = vld [vmem:[%s448 + $0x14c] sm:$0xf]
        %v586 = vld [vmem:[%s448 + $0x150] sm:$0x1]
        %v587 = vld [vmem:[%s448 + $0x154] sm:$0xf]
        %v588 = vld [vmem:[%s448 + $0x158] sm:$0xf]
        %v589 = vld [vmem:[%s448 + $0x15c] sm:$0xf]
        %v590 = vld [vmem:[%s448 + $0x160] sm:$0xf]
        %v591 = vld [vmem:[%s448 + $0x164] sm:$0x1]
        %v592 = vld [vmem:[%s448 + $0x168] sm:$0xf]
        %v593 = vld [vmem:[%s448 + $0x16c] sm:$0xf]
        %v594 = vld [vmem:[%s448 + $0x170] sm:$0xf]
        %v595 = vld [vmem:[%s448 + $0x174] sm:$0xf]
        %v596 = vld [vmem:[%s448 + $0x178] sm:$0x1]
        %v597 = vld [vmem:[%s448 + $0x17c] sm:$0xf]
        %v598 = vld [vmem:[%s448 + $0x180] sm:$0xf]
        %v599 = vld [vmem:[%s448 + $0x184] sm:$0xf]
        %v600 = vld [vmem:[%s448 + $0x188] sm:$0xf]
        %v601 = vld [vmem:[%s448 + $0x18c] sm:$0x1]
        %v602 = vld [vmem:[%s448 + $0x190] sm:$0xf]
        %v603 = vld [vmem:[%s448 + $0x194] sm:$0xf]
        %v604 = vld [vmem:[%s448 + $0x198] sm:$0xf]
        %v605 = vld [vmem:[%s448 + $0x19c] sm:$0xf]
        %v606 = vld [vmem:[%s448 + $0x1a0] sm:$0x1]
        %v607 = vld [vmem:[%s448 + $0x1a4] sm:$0xf]
        %v608 = vld [vmem:[%s448 + $0x1a8] sm:$0xf]
        %v609 = vld [vmem:[%s448 + $0x1ac] sm:$0xf]
        %v610 = vld [vmem:[%s448 + $0x1b0] sm:$0xf]
        %v611 = vld [vmem:[%s448 + $0x1b4] sm:$0x1]
        %v612 = vld [vmem:[%s448 + $0x1b8] sm:$0xf]
        %v613 = vld [vmem:[%s448 + $0x1bc] sm:$0xf]
        %v614 = vld [vmem:[%s448 + $0x1c0] sm:$0xf]
        %v615 = vld [vmem:[%s448 + $0x1c4] sm:$0xf]
        %v616 = vld [vmem:[%s448 + $0x1c8] sm:$0x1]
        %v617 = vld [vmem:[%s448 + $0x1cc] sm:$0xf]
        %v618 = vld [vmem:[%s448 + $0x1d0] sm:$0xf]
        %v619 = vld [vmem:[%s448 + $0x1d4] sm:$0xf]
        %v620 = vld [vmem:[%s448 + $0x1d8] sm:$0xf]
        %v621 = vld [vmem:[%s448 + $0x1dc] sm:$0x1]
        %v622 = vld [vmem:[%s448 + $0x1e0] sm:$0xf]
        %v623 = vld [vmem:[%s448 + $0x1e4] sm:$0xf]
        %v624 = vld [vmem:[%s448 + $0x1e8] sm:$0xf]
        %v625 = vld [vmem:[%s448 + $0x1ec] sm:$0xf]
        %v626 = vld [vmem:[%s448 + $0x1f0] sm:$0x1]
        %v627 = vld [vmem:[%s448 + $0x1f4] sm:$0xf]
        %v628 = vld [vmem:[%s448 + $0x1f8] sm:$0xf]
        %v629 = vld [vmem:[%s448 + $0x1fc] sm:$0xf]
        %v630 = vld [vmem:[%s448 + $0x200] sm:$0xf]
        %v631 = vld [vmem:[%s448 + $0x204] sm:$0x1]
        %v632 = vld [vmem:[%s448 + $0x208] sm:$0xf]
        %v633 = vld [vmem:[%s448 + $0x20c] sm:$0xf]
        %v634 = vld [vmem:[%s448 + $0x210] sm:$0xf]
        %v635 = vld [vmem:[%s448 + $0x214] sm:$0xf]
        %v636 = vld [vmem:[%s448 + $0x218] sm:$0x1]
        %v637 = vld [vmem:[%s448 + $0x21c] sm:$0xf]
        %v638 = vld [vmem:[%s448 + $0x220] sm:$0xf]
        %v639 = vld [vmem:[%s448 + $0x224] sm:$0xf]
        %v640 = vld [vmem:[%s448 + $0x228] sm:$0xf]
        %v641 = vld [vmem:[%s448 + $0x22c] sm:$0x1]
        %v642 = vld [vmem:[%s448 + $0x230] sm:$0xf]
        %v643 = vld [vmem:[%s448 + $0x234] sm:$0xf]
        %v644 = vld [vmem:[%s448 + $0x238] sm:$0xf]
        %v645 = vld [vmem:[%s448 + $0x23c] sm:$0xf]
        %v646 = vld [vmem:[%s448 + $0x240] sm:$0x1]
        %v647 = vld [vmem:[%s448 + $0x244] sm:$0xf]
        %v648 = vld [vmem:[%s448 + $0x248] sm:$0xf]
        %v649 = vld [vmem:[%s448 + $0x24c] sm:$0xf]
        %v650 = vld [vmem:[%s448 + $0x250] sm:$0xf]
        %v651 = vld [vmem:[%s448 + $0x254] sm:$0x1]
        %v652 = vld [vmem:[%s448 + $0x258] sm:$0xf]
        %v653 = vld [vmem:[%s448 + $0x25c] sm:$0xf]
        %v654 = vld [vmem:[%s448 + $0x260] sm:$0xf]
        %v655 = vld [vmem:[%s448 + $0x264] sm:$0xf]
        %v656 = vld [vmem:[%s448 + $0x268] sm:$0x1]
        %v657 = vld [vmem:[%s448 + $0x26c] sm:$0xf]
        %v658 = vld [vmem:[%s448 + $0x270] sm:$0xf]
        %v659 = vld [vmem:[%s448 + $0x274] sm:$0xf]
        %v660 = vld [vmem:[%s448 + $0x278] sm:$0xf]
        %v661 = vld [vmem:[%s448 + $0x27c] sm:$0x1]
        %v662 = vld [vmem:[%s461] sm:$0xf]
        %v663 = vld [vmem:[%s461 + $0x4] sm:$0xf]
        %v664 = vld [vmem:[%s461 + $0x8] sm:$0xf]
        %v665 = vld [vmem:[%s461 + $0xc] sm:$0xf]
        %v666 = vld [vmem:[%s461 + $0x10] sm:$0x1]
        %v667 = vld [vmem:[%s461 + $0x14] sm:$0xf]
        %v668 = vld [vmem:[%s461 + $0x18] sm:$0xf]
        %v669 = vld [vmem:[%s461 + $0x1c] sm:$0xf]
        %v670 = vld [vmem:[%s461 + $0x20] sm:$0xf]
        %v671 = vld [vmem:[%s461 + $0x24] sm:$0x1]
        %v672 = vunpack.c.l.bf16 %v502
        %v673 = vunpack.c.l.bf16 %v503
        %v674 = vunpack.c.l.bf16 %v504
        %v675 = vunpack.c.l.bf16 %v505
        %v676 = vunpack.c.l.bf16 %v506
        %v677 = vunpack.c.l.bf16 %v507
        %v678 = vunpack.c.l.bf16 %v508
        %v679 = vunpack.c.l.bf16 %v509
        %v680 = vunpack.c.l.bf16 %v510
        %v681 = vunpack.c.l.bf16 %v511
        %v682 = vunpack.c.l.bf16 %v512
        %v683 = vunpack.c.l.bf16 %v513
        %v684 = vunpack.c.l.bf16 %v514
        %v685 = vunpack.c.l.bf16 %v515
        %v686 = vunpack.c.l.bf16 %v516
        %v687 = vunpack.c.l.bf16 %v517
        %v688 = vunpack.c.l.bf16 %v518
        %v689 = vunpack.c.l.bf16 %v519
        %v690 = vunpack.c.l.bf16 %v520
        %v691 = vunpack.c.l.bf16 %v521
        %v692 = vunpack.c.l.bf16 %v522
        %v693 = vunpack.c.l.bf16 %v523
        %v694 = vunpack.c.l.bf16 %v524
        %v695 = vunpack.c.l.bf16 %v525
        %v696 = vunpack.c.l.bf16 %v526
        %v697 = vunpack.c.l.bf16 %v527
        %v698 = vunpack.c.l.bf16 %v528
        %v699 = vunpack.c.l.bf16 %v529
        %v700 = vunpack.c.l.bf16 %v530
        %v701 = vunpack.c.l.bf16 %v531
        %v702 = vunpack.c.l.bf16 %v532
        %v703 = vunpack.c.l.bf16 %v533
        %v704 = vunpack.c.l.bf16 %v534
        %v705 = vunpack.c.l.bf16 %v535
        %v706 = vunpack.c.l.bf16 %v536
        %v707 = vunpack.c.l.bf16 %v537
        %v708 = vunpack.c.l.bf16 %v538
        %v709 = vunpack.c.l.bf16 %v539
        %v710 = vunpack.c.l.bf16 %v540
        %v711 = vunpack.c.l.bf16 %v541
        %v712 = vunpack.c.l.bf16 %v542
        %v713 = vunpack.c.l.bf16 %v543
        %v714 = vunpack.c.l.bf16 %v544
        %v715 = vunpack.c.l.bf16 %v545
        %v716 = vunpack.c.l.bf16 %v546
        %v717 = vunpack.c.l.bf16 %v547
        %v718 = vunpack.c.l.bf16 %v548
        %v719 = vunpack.c.l.bf16 %v549
        %v720 = vunpack.c.l.bf16 %v550
        %v721 = vunpack.c.l.bf16 %v551
        %v722 = vunpack.c.l.bf16 %v552
        %v723 = vunpack.c.l.bf16 %v553
        %v724 = vunpack.c.l.bf16 %v554
        %v725 = vunpack.c.l.bf16 %v555
        %v726 = vunpack.c.l.bf16 %v556
        %v727 = vunpack.c.l.bf16 %v557
        %v728 = vunpack.c.l.bf16 %v558
        %v729 = vunpack.c.l.bf16 %v559
        %v730 = vunpack.c.l.bf16 %v560
        %v731 = vunpack.c.l.bf16 %v561
        %v732 = vunpack.c.l.bf16 %v562
        %v733 = vunpack.c.l.bf16 %v563
        %v734 = vunpack.c.l.bf16 %v564
        %v735 = vunpack.c.l.bf16 %v565
        %v736 = vunpack.c.l.bf16 %v566
        %v737 = vunpack.c.l.bf16 %v567
        %v738 = vunpack.c.l.bf16 %v568
        %v739 = vunpack.c.l.bf16 %v569
        %v740 = vunpack.c.l.bf16 %v570
        %v741 = vunpack.c.l.bf16 %v571
        %v742 = vunpack.c.l.bf16 %v572
        %v743 = vunpack.c.l.bf16 %v573
        %v744 = vunpack.c.l.bf16 %v574
        %v745 = vunpack.c.l.bf16 %v575
        %v746 = vunpack.c.l.bf16 %v576
        %v747 = vunpack.c.l.bf16 %v577
        %v748 = vunpack.c.l.bf16 %v578
        %v749 = vunpack.c.l.bf16 %v579
        %v750 = vunpack.c.l.bf16 %v580
        %v751 = vunpack.c.l.bf16 %v581
        %v752 = vunpack.c.l.bf16 %v582
        %v753 = vunpack.c.l.bf16 %v583
        %v754 = vunpack.c.l.bf16 %v584
        %v755 = vunpack.c.l.bf16 %v585
        %v756 = vunpack.c.l.bf16 %v586
        %v757 = vunpack.c.l.bf16 %v587
        %v758 = vunpack.c.l.bf16 %v588
        %v759 = vunpack.c.l.bf16 %v589
        %v760 = vunpack.c.l.bf16 %v590
        %v761 = vunpack.c.l.bf16 %v591
        %v762 = vunpack.c.l.bf16 %v592
        %v763 = vunpack.c.l.bf16 %v593
        %v764 = vunpack.c.l.bf16 %v594
        %v765 = vunpack.c.l.bf16 %v595
        %v766 = vunpack.c.l.bf16 %v596
        %v767 = vunpack.c.l.bf16 %v597
        %v768 = vunpack.c.l.bf16 %v598
        %v769 = vunpack.c.l.bf16 %v599
        %v770 = vunpack.c.l.bf16 %v600
        %v771 = vunpack.c.l.bf16 %v601
        %v772 = vunpack.c.l.bf16 %v602
        %v773 = vunpack.c.l.bf16 %v603
        %v774 = vunpack.c.l.bf16 %v604
        %v775 = vunpack.c.l.bf16 %v605
        %v776 = vunpack.c.l.bf16 %v606
        %v777 = vunpack.c.l.bf16 %v607
        %v778 = vunpack.c.l.bf16 %v608
        %v779 = vunpack.c.l.bf16 %v609
        %v780 = vunpack.c.l.bf16 %v610
        %v781 = vunpack.c.l.bf16 %v611
        %v782 = vunpack.c.l.bf16 %v612
        %v783 = vunpack.c.l.bf16 %v613
        %v784 = vunpack.c.l.bf16 %v614
        %v785 = vunpack.c.l.bf16 %v615
        %v786 = vunpack.c.l.bf16 %v616
        %v787 = vunpack.c.l.bf16 %v617
        %v788 = vunpack.c.l.bf16 %v618
        %v789 = vunpack.c.l.bf16 %v619
        %v790 = vunpack.c.l.bf16 %v620
        %v791 = vunpack.c.l.bf16 %v621
        %v792 = vunpack.c.l.bf16 %v622
        %v793 = vunpack.c.l.bf16 %v623
        %v794 = vunpack.c.l.bf16 %v624
        %v795 = vunpack.c.l.bf16 %v625
        %v796 = vunpack.c.l.bf16 %v626
        %v797 = vunpack.c.l.bf16 %v627
        %v798 = vunpack.c.l.bf16 %v628
        %v799 = vunpack.c.l.bf16 %v629
        %v800 = vunpack.c.l.bf16 %v630
        %v801 = vunpack.c.l.bf16 %v631
        %v802 = vunpack.c.l.bf16 %v632
        %v803 = vunpack.c.l.bf16 %v633
        %v804 = vunpack.c.l.bf16 %v634
        %v805 = vunpack.c.l.bf16 %v635
        %v806 = vunpack.c.l.bf16 %v636
        %v807 = vunpack.c.l.bf16 %v637
        %v808 = vunpack.c.l.bf16 %v638
        %v809 = vunpack.c.l.bf16 %v639
        %v810 = vunpack.c.l.bf16 %v640
        %v811 = vunpack.c.l.bf16 %v641
        %v812 = vunpack.c.l.bf16 %v642
        %v813 = vunpack.c.l.bf16 %v643
        %v814 = vunpack.c.l.bf16 %v644
        %v815 = vunpack.c.l.bf16 %v645
        %v816 = vunpack.c.l.bf16 %v646
        %v817 = vunpack.c.l.bf16 %v647
        %v818 = vunpack.c.l.bf16 %v648
        %v819 = vunpack.c.l.bf16 %v649
        %v820 = vunpack.c.l.bf16 %v650
        %v821 = vunpack.c.l.bf16 %v651
        %v822 = vunpack.c.l.bf16 %v652
        %v823 = vunpack.c.l.bf16 %v653
        %v824 = vunpack.c.l.bf16 %v654
        %v825 = vunpack.c.l.bf16 %v655
        %v826 = vunpack.c.l.bf16 %v656
        %v827 = vunpack.c.l.bf16 %v657
        %v828 = vunpack.c.l.bf16 %v658
        %v829 = vunpack.c.l.bf16 %v659
        %v830 = vunpack.c.l.bf16 %v660
        %v831 = vunpack.c.l.bf16 %v661
        %v832 = vunpack.c.l.bf16 %v662
        %v833 = vunpack.c.l.bf16 %v663
        %v834 = vunpack.c.l.bf16 %v664
        %v835 = vunpack.c.l.bf16 %v665
        %v836 = vunpack.c.l.bf16 %v666
        %v837 = vunpack.c.l.bf16 %v667
        %v838 = vunpack.c.l.bf16 %v668
        %v839 = vunpack.c.l.bf16 %v669
        %v840 = vunpack.c.l.bf16 %v670
        %v841 = vunpack.c.l.bf16 %v671
        %v842 = vld [vmem:[%s493] sm:$0x1]
        %v844 = vlaneseq
        %v845 = vshrl.u32 %v844, 7
        %v846 = vsub.s32 0, %v845
        %v847 = vrot.slane %v842, %v846
        %v849 = vmul.f32 %v672, %v847
        %v850 = vmul.f32 %v673, %v847
        %v851 = vmul.f32 %v674, %v847
        %v852 = vmul.f32 %v675, %v847
        %v853 = vmul.f32 %v676, %v847
        %v854 = vmul.f32 %v677, %v847
        %v855 = vmul.f32 %v678, %v847
        %v856 = vmul.f32 %v679, %v847
        %v857 = vmul.f32 %v680, %v847
        %v858 = vmul.f32 %v681, %v847
        %v859 = vmul.f32 %v682, %v847
        %v860 = vmul.f32 %v683, %v847
        %v861 = vmul.f32 %v684, %v847
        %v862 = vmul.f32 %v685, %v847
        %v863 = vmul.f32 %v686, %v847
        %v864 = vmul.f32 %v687, %v847
        %v865 = vmul.f32 %v688, %v847
        %v866 = vmul.f32 %v689, %v847
        %v867 = vmul.f32 %v690, %v847
        %v868 = vmul.f32 %v691, %v847
        %v869 = vmul.f32 %v692, %v847
        %v870 = vmul.f32 %v693, %v847
        %v871 = vmul.f32 %v694, %v847
        %v872 = vmul.f32 %v695, %v847
        %v873 = vmul.f32 %v696, %v847
        %v874 = vmul.f32 %v697, %v847
        %v875 = vmul.f32 %v698, %v847
        %v876 = vmul.f32 %v699, %v847
        %v877 = vmul.f32 %v700, %v847
        %v878 = vmul.f32 %v701, %v847
        %v879 = vmul.f32 %v702, %v847
        %v880 = vmul.f32 %v703, %v847
        %v881 = vmul.f32 %v704, %v847
        %v882 = vmul.f32 %v705, %v847
        %v883 = vmul.f32 %v706, %v847
        %v884 = vmul.f32 %v707, %v847
        %v885 = vmul.f32 %v708, %v847
        %v886 = vmul.f32 %v709, %v847
        %v887 = vmul.f32 %v710, %v847
        %v888 = vmul.f32 %v711, %v847
        %v889 = vmul.f32 %v712, %v847
        %v890 = vmul.f32 %v713, %v847
        %v891 = vmul.f32 %v714, %v847
        %v892 = vmul.f32 %v715, %v847
        %v893 = vmul.f32 %v716, %v847
        %v894 = vmul.f32 %v717, %v847
        %v895 = vmul.f32 %v718, %v847
        %v896 = vmul.f32 %v719, %v847
        %v897 = vmul.f32 %v720, %v847
        %v898 = vmul.f32 %v721, %v847
        %v899 = vmul.f32 %v722, %v847
        %v900 = vmul.f32 %v723, %v847
        %v901 = vmul.f32 %v724, %v847
        %v902 = vmul.f32 %v725, %v847
        %v903 = vmul.f32 %v726, %v847
        %v904 = vmul.f32 %v727, %v847
        %v905 = vmul.f32 %v728, %v847
        %v906 = vmul.f32 %v729, %v847
        %v907 = vmul.f32 %v730, %v847
        %v908 = vmul.f32 %v731, %v847
        %v909 = vmul.f32 %v732, %v847
        %v910 = vmul.f32 %v733, %v847
        %v911 = vmul.f32 %v734, %v847
        %v912 = vmul.f32 %v735, %v847
        %v913 = vmul.f32 %v736, %v847
        %v914 = vmul.f32 %v737, %v847
        %v915 = vmul.f32 %v738, %v847
        %v916 = vmul.f32 %v739, %v847
        %v917 = vmul.f32 %v740, %v847
        %v918 = vmul.f32 %v741, %v847
        %v919 = vmul.f32 %v742, %v847
        %v920 = vmul.f32 %v743, %v847
        %v921 = vmul.f32 %v744, %v847
        %v922 = vmul.f32 %v745, %v847
        %v923 = vmul.f32 %v746, %v847
        %v924 = vmul.f32 %v747, %v847
        %v925 = vmul.f32 %v748, %v847
        %v926 = vmul.f32 %v749, %v847
        %v927 = vmul.f32 %v750, %v847
        %v928 = vmul.f32 %v751, %v847
        %v929 = vmul.f32 %v752, %v847
        %v930 = vmul.f32 %v753, %v847
        %v931 = vmul.f32 %v754, %v847
        %v932 = vmul.f32 %v755, %v847
        %v933 = vmul.f32 %v756, %v847
        %v934 = vmul.f32 %v757, %v847
        %v935 = vmul.f32 %v758, %v847
        %v936 = vmul.f32 %v759, %v847
        %v937 = vmul.f32 %v760, %v847
        %v938 = vmul.f32 %v761, %v847
        %v939 = vmul.f32 %v762, %v847
        %v940 = vmul.f32 %v763, %v847
        %v941 = vmul.f32 %v764, %v847
        %v942 = vmul.f32 %v765, %v847
        %v943 = vmul.f32 %v766, %v847
        %v944 = vmul.f32 %v767, %v847
        %v945 = vmul.f32 %v768, %v847
        %v946 = vmul.f32 %v769, %v847
        %v947 = vmul.f32 %v770, %v847
        %v948 = vmul.f32 %v771, %v847
        %v949 = vmul.f32 %v772, %v847
        %v950 = vmul.f32 %v773, %v847
        %v951 = vmul.f32 %v774, %v847
        %v952 = vmul.f32 %v775, %v847
        %v953 = vmul.f32 %v776, %v847
        %v954 = vmul.f32 %v777, %v847
        %v955 = vmul.f32 %v778, %v847
        %v956 = vmul.f32 %v779, %v847
        %v957 = vmul.f32 %v780, %v847
        %v958 = vmul.f32 %v781, %v847
        %v959 = vmul.f32 %v782, %v847
        %v960 = vmul.f32 %v783, %v847
        %v961 = vmul.f32 %v784, %v847
        %v962 = vmul.f32 %v785, %v847
        %v963 = vmul.f32 %v786, %v847
        %v964 = vmul.f32 %v787, %v847
        %v965 = vmul.f32 %v788, %v847
        %v966 = vmul.f32 %v789, %v847
        %v967 = vmul.f32 %v790, %v847
        %v968 = vmul.f32 %v791, %v847
        %v969 = vmul.f32 %v792, %v847
        %v970 = vmul.f32 %v793, %v847
        %v971 = vmul.f32 %v794, %v847
        %v972 = vmul.f32 %v795, %v847
        %v973 = vmul.f32 %v796, %v847
        %v974 = vmul.f32 %v797, %v847
        %v975 = vmul.f32 %v798, %v847
        %v976 = vmul.f32 %v799, %v847
        %v977 = vmul.f32 %v800, %v847
        %v978 = vmul.f32 %v801, %v847
        %v979 = vmul.f32 %v802, %v847
        %v980 = vmul.f32 %v803, %v847
        %v981 = vmul.f32 %v804, %v847
        %v982 = vmul.f32 %v805, %v847
        %v983 = vmul.f32 %v806, %v847
        %v984 = vmul.f32 %v807, %v847
        %v985 = vmul.f32 %v808, %v847
        %v986 = vmul.f32 %v809, %v847
        %v987 = vmul.f32 %v810, %v847
        %v988 = vmul.f32 %v811, %v847
        %v989 = vmul.f32 %v812, %v847
        %v990 = vmul.f32 %v813, %v847
        %v991 = vmul.f32 %v814, %v847
        %v992 = vmul.f32 %v815, %v847
        %v993 = vmul.f32 %v816, %v847
        %v994 = vmul.f32 %v817, %v847
        %v995 = vmul.f32 %v818, %v847
        %v996 = vmul.f32 %v819, %v847
        %v997 = vmul.f32 %v820, %v847
        %v998 = vmul.f32 %v821, %v847
        %v999 = vmul.f32 %v822, %v847
        %v1000 = vmul.f32 %v823, %v847
        %v1001 = vmul.f32 %v824, %v847
        %v1002 = vmul.f32 %v825, %v847
        %v1003 = vmul.f32 %v826, %v847
        %v1004 = vmul.f32 %v827, %v847
        %v1005 = vmul.f32 %v828, %v847
        %v1006 = vmul.f32 %v829, %v847
        %v1007 = vmul.f32 %v830, %v847
        %v1008 = vmul.f32 %v831, %v847
        %v1009 = vmul.f32 %v832, %v847
        %v1010 = vmul.f32 %v833, %v847
        %v1011 = vmul.f32 %v834, %v847
        %v1012 = vmul.f32 %v835, %v847
        %v1013 = vmul.f32 %v836, %v847
        %v1014 = vmul.f32 %v837, %v847
        %v1015 = vmul.f32 %v838, %v847
        %v1016 = vmul.f32 %v839, %v847
        %v1017 = vmul.f32 %v840, %v847
        %v1018 = vmul.f32 %v841, %v847
        %v1019 = vmax.f32 %v849, 0.0
        %v1020 = vmax.f32 %v850, 0.0
        %v1021 = vmax.f32 %v851, 0.0
        %v1022 = vmax.f32 %v852, 0.0
        %v1023 = vmax.f32 %v853, 0.0
        %v1024 = vmax.f32 %v854, 0.0
        %v1025 = vmax.f32 %v855, 0.0
        %v1026 = vmax.f32 %v856, 0.0
        %v1027 = vmax.f32 %v857, 0.0
        %v1028 = vmax.f32 %v858, 0.0
        %v1029 = vmax.f32 %v859, 0.0
        %v1030 = vmax.f32 %v860, 0.0
        %v1031 = vmax.f32 %v861, 0.0
        %v1032 = vmax.f32 %v862, 0.0
        %v1033 = vmax.f32 %v863, 0.0
        %v1034 = vmax.f32 %v864, 0.0
        %v1035 = vmax.f32 %v865, 0.0
        %v1036 = vmax.f32 %v866, 0.0
        %v1037 = vmax.f32 %v867, 0.0
        %v1038 = vmax.f32 %v868, 0.0
        %v1039 = vmax.f32 %v869, 0.0
        %v1040 = vmax.f32 %v870, 0.0
        %v1041 = vmax.f32 %v871, 0.0
        %v1042 = vmax.f32 %v872, 0.0
        %v1043 = vmax.f32 %v873, 0.0
        %v1044 = vmax.f32 %v874, 0.0
        %v1045 = vmax.f32 %v875, 0.0
        %v1046 = vmax.f32 %v876, 0.0
        %v1047 = vmax.f32 %v877, 0.0
        %v1048 = vmax.f32 %v878, 0.0
        %v1049 = vmax.f32 %v879, 0.0
        %v1050 = vmax.f32 %v880, 0.0
        %v1051 = vmax.f32 %v881, 0.0
        %v1052 = vmax.f32 %v882, 0.0
        %v1053 = vmax.f32 %v883, 0.0
        %v1054 = vmax.f32 %v884, 0.0
        %v1055 = vmax.f32 %v885, 0.0
        %v1056 = vmax.f32 %v886, 0.0
        %v1057 = vmax.f32 %v887, 0.0
        %v1058 = vmax.f32 %v888, 0.0
        %v1059 = vmax.f32 %v889, 0.0
        %v1060 = vmax.f32 %v890, 0.0
        %v1061 = vmax.f32 %v891, 0.0
        %v1062 = vmax.f32 %v892, 0.0
        %v1063 = vmax.f32 %v893, 0.0
        %v1064 = vmax.f32 %v894, 0.0
        %v1065 = vmax.f32 %v895, 0.0
        %v1066 = vmax.f32 %v896, 0.0
        %v1067 = vmax.f32 %v897, 0.0
        %v1068 = vmax.f32 %v898, 0.0
        %v1069 = vmax.f32 %v899, 0.0
        %v1070 = vmax.f32 %v900, 0.0
        %v1071 = vmax.f32 %v901, 0.0
        %v1072 = vmax.f32 %v902, 0.0
        %v1073 = vmax.f32 %v903, 0.0
        %v1074 = vmax.f32 %v904, 0.0
        %v1075 = vmax.f32 %v905, 0.0
        %v1076 = vmax.f32 %v906, 0.0
        %v1077 = vmax.f32 %v907, 0.0
        %v1078 = vmax.f32 %v908, 0.0
        %v1079 = vmax.f32 %v909, 0.0
        %v1080 = vmax.f32 %v910, 0.0
        %v1081 = vmax.f32 %v911, 0.0
        %v1082 = vmax.f32 %v912, 0.0
        %v1083 = vmax.f32 %v913, 0.0
        %v1084 = vmax.f32 %v914, 0.0
        %v1085 = vmax.f32 %v915, 0.0
        %v1086 = vmax.f32 %v916, 0.0
        %v1087 = vmax.f32 %v917, 0.0
        %v1088 = vmax.f32 %v918, 0.0
        %v1089 = vmax.f32 %v919, 0.0
        %v1090 = vmax.f32 %v920, 0.0
        %v1091 = vmax.f32 %v921, 0.0
        %v1092 = vmax.f32 %v922, 0.0
        %v1093 = vmax.f32 %v923, 0.0
        %v1094 = vmax.f32 %v924, 0.0
        %v1095 = vmax.f32 %v925, 0.0
        %v1096 = vmax.f32 %v926, 0.0
        %v1097 = vmax.f32 %v927, 0.0
        %v1098 = vmax.f32 %v928, 0.0
        %v1099 = vmax.f32 %v929, 0.0
        %v1100 = vmax.f32 %v930, 0.0
        %v1101 = vmax.f32 %v931, 0.0
        %v1102 = vmax.f32 %v932, 0.0
        %v1103 = vmax.f32 %v933, 0.0
        %v1104 = vmax.f32 %v934, 0.0
        %v1105 = vmax.f32 %v935, 0.0
        %v1106 = vmax.f32 %v936, 0.0
        %v1107 = vmax.f32 %v937, 0.0
        %v1108 = vmax.f32 %v938, 0.0
        %v1109 = vmax.f32 %v939, 0.0
        %v1110 = vmax.f32 %v940, 0.0
        %v1111 = vmax.f32 %v941, 0.0
        %v1112 = vmax.f32 %v942, 0.0
        %v1113 = vmax.f32 %v943, 0.0
        %v1114 = vmax.f32 %v944, 0.0
        %v1115 = vmax.f32 %v945, 0.0
        %v1116 = vmax.f32 %v946, 0.0
        %v1117 = vmax.f32 %v947, 0.0
        %v1118 = vmax.f32 %v948, 0.0
        %v1119 = vmax.f32 %v949, 0.0
        %v1120 = vmax.f32 %v950, 0.0
        %v1121 = vmax.f32 %v951, 0.0
        %v1122 = vmax.f32 %v952, 0.0
        %v1123 = vmax.f32 %v953, 0.0
        %v1124 = vmax.f32 %v954, 0.0
        %v1125 = vmax.f32 %v955, 0.0
        %v1126 = vmax.f32 %v956, 0.0
        %v1127 = vmax.f32 %v957, 0.0
        %v1128 = vmax.f32 %v958, 0.0
        %v1129 = vmax.f32 %v959, 0.0
        %v1130 = vmax.f32 %v960, 0.0
        %v1131 = vmax.f32 %v961, 0.0
        %v1132 = vmax.f32 %v962, 0.0
        %v1133 = vmax.f32 %v963, 0.0
        %v1134 = vmax.f32 %v964, 0.0
        %v1135 = vmax.f32 %v965, 0.0
        %v1136 = vmax.f32 %v966, 0.0
        %v1137 = vmax.f32 %v967, 0.0
        %v1138 = vmax.f32 %v968, 0.0
        %v1139 = vmax.f32 %v969, 0.0
        %v1140 = vmax.f32 %v970, 0.0
        %v1141 = vmax.f32 %v971, 0.0
        %v1142 = vmax.f32 %v972, 0.0
        %v1143 = vmax.f32 %v973, 0.0
        %v1144 = vmax.f32 %v974, 0.0
        %v1145 = vmax.f32 %v975, 0.0
        %v1146 = vmax.f32 %v976, 0.0
        %v1147 = vmax.f32 %v977, 0.0
        %v1148 = vmax.f32 %v978, 0.0
        %v1149 = vmax.f32 %v979, 0.0
        %v1150 = vmax.f32 %v980, 0.0
        %v1151 = vmax.f32 %v981, 0.0
        %v1152 = vmax.f32 %v982, 0.0
        %v1153 = vmax.f32 %v983, 0.0
        %v1154 = vmax.f32 %v984, 0.0
        %v1155 = vmax.f32 %v985, 0.0
        %v1156 = vmax.f32 %v986, 0.0
        %v1157 = vmax.f32 %v987, 0.0
        %v1158 = vmax.f32 %v988, 0.0
        %v1159 = vmax.f32 %v989, 0.0
        %v1160 = vmax.f32 %v990, 0.0
        %v1161 = vmax.f32 %v991, 0.0
        %v1162 = vmax.f32 %v992, 0.0
        %v1163 = vmax.f32 %v993, 0.0
        %v1164 = vmax.f32 %v994, 0.0
        %v1165 = vmax.f32 %v995, 0.0
        %v1166 = vmax.f32 %v996, 0.0
        %v1167 = vmax.f32 %v997, 0.0
        %v1168 = vmax.f32 %v998, 0.0
        %v1169 = vmax.f32 %v999, 0.0
        %v1170 = vmax.f32 %v1000, 0.0
        %v1171 = vmax.f32 %v1001, 0.0
        %v1172 = vmax.f32 %v1002, 0.0
        %v1173 = vmax.f32 %v1003, 0.0
        %v1174 = vmax.f32 %v1004, 0.0
        %v1175 = vmax.f32 %v1005, 0.0
        %v1176 = vmax.f32 %v1006, 0.0
        %v1177 = vmax.f32 %v1007, 0.0
        %v1178 = vmax.f32 %v1008, 0.0
        %v1179 = vmax.f32 %v1009, 0.0
        %v1180 = vmax.f32 %v1010, 0.0
        %v1181 = vmax.f32 %v1011, 0.0
        %v1182 = vmax.f32 %v1012, 0.0
        %v1183 = vmax.f32 %v1013, 0.0
        %v1184 = vmax.f32 %v1014, 0.0
        %v1185 = vmax.f32 %v1015, 0.0
        %v1186 = vmax.f32 %v1016, 0.0
        %v1187 = vmax.f32 %v1017, 0.0
        %v1188 = vmax.f32 %v1018, 0.0
        %v1189 = vpack.c.bf16 %v1020, %v1019
        %v1190 = vpack.c.bf16 %v1022, %v1021
        %v1191 = vpack.c.bf16 %v1023, %v1023
        %v1192 = vpack.c.bf16 %v1025, %v1024
        %v1193 = vpack.c.bf16 %v1027, %v1026
        %v1194 = vpack.c.bf16 %v1028, %v1028
        %v1195 = vpack.c.bf16 %v1030, %v1029
        %v1196 = vpack.c.bf16 %v1032, %v1031
        %v1197 = vpack.c.bf16 %v1033, %v1033
        %v1198 = vpack.c.bf16 %v1035, %v1034
        %v1199 = vpack.c.bf16 %v1037, %v1036
        %v1200 = vpack.c.bf16 %v1038, %v1038
        %v1201 = vpack.c.bf16 %v1040, %v1039
        %v1202 = vpack.c.bf16 %v1042, %v1041
        %v1203 = vpack.c.bf16 %v1043, %v1043
        %v1204 = vpack.c.bf16 %v1045, %v1044
        %v1205 = vpack.c.bf16 %v1047, %v1046
        %v1206 = vpack.c.bf16 %v1048, %v1048
        %v1207 = vpack.c.bf16 %v1050, %v1049
        %v1208 = vpack.c.bf16 %v1052, %v1051
        %v1209 = vpack.c.bf16 %v1053, %v1053
        %v1210 = vpack.c.bf16 %v1055, %v1054
        %v1211 = vpack.c.bf16 %v1057, %v1056
        %v1212 = vpack.c.bf16 %v1058, %v1058
        %v1213 = vpack.c.bf16 %v1060, %v1059
        %v1214 = vpack.c.bf16 %v1062, %v1061
        %v1215 = vpack.c.bf16 %v1063, %v1063
        %v1216 = vpack.c.bf16 %v1065, %v1064
        %v1217 = vpack.c.bf16 %v1067, %v1066
        %v1218 = vpack.c.bf16 %v1068, %v1068
        %v1219 = vpack.c.bf16 %v1070, %v1069
        %v1220 = vpack.c.bf16 %v1072, %v1071
        %v1221 = vpack.c.bf16 %v1073, %v1073
        %v1222 = vpack.c.bf16 %v1075, %v1074
        %v1223 = vpack.c.bf16 %v1077, %v1076
        %v1224 = vpack.c.bf16 %v1078, %v1078
        %v1225 = vpack.c.bf16 %v1080, %v1079
        %v1226 = vpack.c.bf16 %v1082, %v1081
        %v1227 = vpack.c.bf16 %v1083, %v1083
        %v1228 = vpack.c.bf16 %v1085, %v1084
        %v1229 = vpack.c.bf16 %v1087, %v1086
        %v1230 = vpack.c.bf16 %v1088, %v1088
        %v1231 = vpack.c.bf16 %v1090, %v1089
        %v1232 = vpack.c.bf16 %v1092, %v1091
        %v1233 = vpack.c.bf16 %v1093, %v1093
        %v1234 = vpack.c.bf16 %v1095, %v1094
        %v1235 = vpack.c.bf16 %v1097, %v1096
        %v1236 = vpack.c.bf16 %v1098, %v1098
        %v1237 = vpack.c.bf16 %v1100, %v1099
        %v1238 = vpack.c.bf16 %v1102, %v1101
        %v1239 = vpack.c.bf16 %v1103, %v1103
        %v1240 = vpack.c.bf16 %v1105, %v1104
        %v1241 = vpack.c.bf16 %v1107, %v1106
        %v1242 = vpack.c.bf16 %v1108, %v1108
        %v1243 = vpack.c.bf16 %v1110, %v1109
        %v1244 = vpack.c.bf16 %v1112, %v1111
        %v1245 = vpack.c.bf16 %v1113, %v1113
        %v1246 = vpack.c.bf16 %v1115, %v1114
        %v1247 = vpack.c.bf16 %v1117, %v1116
        %v1248 = vpack.c.bf16 %v1118, %v1118
        %v1249 = vpack.c.bf16 %v1120, %v1119
        %v1250 = vpack.c.bf16 %v1122, %v1121
        %v1251 = vpack.c.bf16 %v1123, %v1123
        %v1252 = vpack.c.bf16 %v1125, %v1124
        %v1253 = vpack.c.bf16 %v1127, %v1126
        %v1254 = vpack.c.bf16 %v1128, %v1128
        %v1255 = vpack.c.bf16 %v1130, %v1129
        %v1256 = vpack.c.bf16 %v1132, %v1131
        %v1257 = vpack.c.bf16 %v1133, %v1133
        %v1258 = vpack.c.bf16 %v1135, %v1134
        %v1259 = vpack.c.bf16 %v1137, %v1136
        %v1260 = vpack.c.bf16 %v1138, %v1138
        %v1261 = vpack.c.bf16 %v1140, %v1139
        %v1262 = vpack.c.bf16 %v1142, %v1141
        %v1263 = vpack.c.bf16 %v1143, %v1143
        %v1264 = vpack.c.bf16 %v1145, %v1144
        %v1265 = vpack.c.bf16 %v1147, %v1146
        %v1266 = vpack.c.bf16 %v1148, %v1148
        %v1267 = vpack.c.bf16 %v1150, %v1149
        %v1268 = vpack.c.bf16 %v1152, %v1151
        %v1269 = vpack.c.bf16 %v1153, %v1153
        %v1270 = vpack.c.bf16 %v1155, %v1154
        %v1271 = vpack.c.bf16 %v1157, %v1156
        %v1272 = vpack.c.bf16 %v1158, %v1158
        %v1273 = vpack.c.bf16 %v1160, %v1159
        %v1274 = vpack.c.bf16 %v1162, %v1161
        %v1275 = vpack.c.bf16 %v1163, %v1163
        %v1276 = vpack.c.bf16 %v1165, %v1164
        %v1277 = vpack.c.bf16 %v1167, %v1166
        %v1278 = vpack.c.bf16 %v1168, %v1168
        %v1279 = vpack.c.bf16 %v1170, %v1169
        %v1280 = vpack.c.bf16 %v1172, %v1171
        %v1281 = vpack.c.bf16 %v1173, %v1173
        %v1282 = vpack.c.bf16 %v1175, %v1174
        %v1283 = vpack.c.bf16 %v1177, %v1176
        %v1284 = vpack.c.bf16 %v1178, %v1178
        %v1285 = vpack.c.bf16 %v1180, %v1179
        %v1286 = vpack.c.bf16 %v1182, %v1181
        %v1287 = vpack.c.bf16 %v1183, %v1183
        %v1288 = vpack.c.bf16 %v1185, %v1184
        %v1289 = vpack.c.bf16 %v1187, %v1186
        %v1290 = vpack.c.bf16 %v1188, %v1188
        %v1291 = vld [vmem:[%s474] sm:$0xf]
        %v1292 = vld [vmem:[%s474 + $0x4] sm:$0xf]
        %v1293 = vld [vmem:[%s474 + $0x8] sm:$0xf]
        %v1294 = vld [vmem:[%s474 + $0xc] sm:$0xf]
        %v1295 = vld [vmem:[%s474 + $0x10] sm:$0x1]
        %v1296 = vld [vmem:[%s474 + $0x14] sm:$0xf]
        %v1297 = vld [vmem:[%s474 + $0x18] sm:$0xf]
        %v1298 = vld [vmem:[%s474 + $0x1c] sm:$0xf]
        %v1299 = vld [vmem:[%s474 + $0x20] sm:$0xf]
        %v1300 = vld [vmem:[%s474 + $0x24] sm:$0x1]
        %v1301 = vld [vmem:[%s474 + $0x28] sm:$0xf]
        %v1302 = vld [vmem:[%s474 + $0x2c] sm:$0xf]
        %v1303 = vld [vmem:[%s474 + $0x30] sm:$0xf]
        %v1304 = vld [vmem:[%s474 + $0x34] sm:$0xf]
        %v1305 = vld [vmem:[%s474 + $0x38] sm:$0x1]
        %v1306 = vld [vmem:[%s474 + $0x3c] sm:$0xf]
        %v1307 = vld [vmem:[%s474 + $0x40] sm:$0xf]
        %v1308 = vld [vmem:[%s474 + $0x44] sm:$0xf]
        %v1309 = vld [vmem:[%s474 + $0x48] sm:$0xf]
        %v1310 = vld [vmem:[%s474 + $0x4c] sm:$0x1]
        %v1311 = vld [vmem:[%s474 + $0x50] sm:$0xf]
        %v1312 = vld [vmem:[%s474 + $0x54] sm:$0xf]
        %v1313 = vld [vmem:[%s474 + $0x58] sm:$0xf]
        %v1314 = vld [vmem:[%s474 + $0x5c] sm:$0xf]
        %v1315 = vld [vmem:[%s474 + $0x60] sm:$0x1]
        %v1316 = vld [vmem:[%s474 + $0x64] sm:$0xf]
        %v1317 = vld [vmem:[%s474 + $0x68] sm:$0xf]
        %v1318 = vld [vmem:[%s474 + $0x6c] sm:$0xf]
        %v1319 = vld [vmem:[%s474 + $0x70] sm:$0xf]
        %v1320 = vld [vmem:[%s474 + $0x74] sm:$0x1]
        %v1321 = vld [vmem:[%s474 + $0x78] sm:$0xf]
        %v1322 = vld [vmem:[%s474 + $0x7c] sm:$0xf]
        %v1323 = vld [vmem:[%s474 + $0x80] sm:$0xf]
        %v1324 = vld [vmem:[%s474 + $0x84] sm:$0xf]
        %v1325 = vld [vmem:[%s474 + $0x88] sm:$0x1]
        %v1326 = vld [vmem:[%s474 + $0x8c] sm:$0xf]
        %v1327 = vld [vmem:[%s474 + $0x90] sm:$0xf]
        %v1328 = vld [vmem:[%s474 + $0x94] sm:$0xf]
        %v1329 = vld [vmem:[%s474 + $0x98] sm:$0xf]
        %v1330 = vld [vmem:[%s474 + $0x9c] sm:$0x1]
        %v1331 = vld [vmem:[%s474 + $0xa0] sm:$0xf]
        %v1332 = vld [vmem:[%s474 + $0xa4] sm:$0xf]
        %v1333 = vld [vmem:[%s474 + $0xa8] sm:$0xf]
        %v1334 = vld [vmem:[%s474 + $0xac] sm:$0xf]
        %v1335 = vld [vmem:[%s474 + $0xb0] sm:$0x1]
        %v1336 = vld [vmem:[%s474 + $0xb4] sm:$0xf]
        %v1337 = vld [vmem:[%s474 + $0xb8] sm:$0xf]
        %v1338 = vld [vmem:[%s474 + $0xbc] sm:$0xf]
        %v1339 = vld [vmem:[%s474 + $0xc0] sm:$0xf]
        %v1340 = vld [vmem:[%s474 + $0xc4] sm:$0x1]
        %v1341 = vld [vmem:[%s474 + $0xc8] sm:$0xf]
        %v1342 = vld [vmem:[%s474 + $0xcc] sm:$0xf]
        %v1343 = vld [vmem:[%s474 + $0xd0] sm:$0xf]
        %v1344 = vld [vmem:[%s474 + $0xd4] sm:$0xf]
        %v1345 = vld [vmem:[%s474 + $0xd8] sm:$0x1]
        %v1346 = vld [vmem:[%s474 + $0xdc] sm:$0xf]
        %v1347 = vld [vmem:[%s474 + $0xe0] sm:$0xf]
        %v1348 = vld [vmem:[%s474 + $0xe4] sm:$0xf]
        %v1349 = vld [vmem:[%s474 + $0xe8] sm:$0xf]
        %v1350 = vld [vmem:[%s474 + $0xec] sm:$0x1]
        %v1351 = vld [vmem:[%s474 + $0xf0] sm:$0xf]
        %v1352 = vld [vmem:[%s474 + $0xf4] sm:$0xf]
        %v1353 = vld [vmem:[%s474 + $0xf8] sm:$0xf]
        %v1354 = vld [vmem:[%s474 + $0xfc] sm:$0xf]
        %v1355 = vld [vmem:[%s474 + $0x100] sm:$0x1]
        %v1356 = vld [vmem:[%s474 + $0x104] sm:$0xf]
        %v1357 = vld [vmem:[%s474 + $0x108] sm:$0xf]
        %v1358 = vld [vmem:[%s474 + $0x10c] sm:$0xf]
        %v1359 = vld [vmem:[%s474 + $0x110] sm:$0xf]
        %v1360 = vld [vmem:[%s474 + $0x114] sm:$0x1]
        %v1361 = vld [vmem:[%s474 + $0x118] sm:$0xf]
        %v1362 = vld [vmem:[%s474 + $0x11c] sm:$0xf]
        %v1363 = vld [vmem:[%s474 + $0x120] sm:$0xf]
        %v1364 = vld [vmem:[%s474 + $0x124] sm:$0xf]
        %v1365 = vld [vmem:[%s474 + $0x128] sm:$0x1]
        %v1366 = vld [vmem:[%s474 + $0x12c] sm:$0xf]
        %v1367 = vld [vmem:[%s474 + $0x130] sm:$0xf]
        %v1368 = vld [vmem:[%s474 + $0x134] sm:$0xf]
        %v1369 = vld [vmem:[%s474 + $0x138] sm:$0xf]
        %v1370 = vld [vmem:[%s474 + $0x13c] sm:$0x1]
        %v1371 = vld [vmem:[%s474 + $0x140] sm:$0xf]
        %v1372 = vld [vmem:[%s474 + $0x144] sm:$0xf]
        %v1373 = vld [vmem:[%s474 + $0x148] sm:$0xf]
        %v1374 = vld [vmem:[%s474 + $0x14c] sm:$0xf]
        %v1375 = vld [vmem:[%s474 + $0x150] sm:$0x1]
        %v1376 = vld [vmem:[%s474 + $0x154] sm:$0xf]
        %v1377 = vld [vmem:[%s474 + $0x158] sm:$0xf]
        %v1378 = vld [vmem:[%s474 + $0x15c] sm:$0xf]
        %v1379 = vld [vmem:[%s474 + $0x160] sm:$0xf]
        %v1380 = vld [vmem:[%s474 + $0x164] sm:$0x1]
        %v1381 = vld [vmem:[%s474 + $0x168] sm:$0xf]
        %v1382 = vld [vmem:[%s474 + $0x16c] sm:$0xf]
        %v1383 = vld [vmem:[%s474 + $0x170] sm:$0xf]
        %v1384 = vld [vmem:[%s474 + $0x174] sm:$0xf]
        %v1385 = vld [vmem:[%s474 + $0x178] sm:$0x1]
        %v1386 = vld [vmem:[%s474 + $0x17c] sm:$0xf]
        %v1387 = vld [vmem:[%s474 + $0x180] sm:$0xf]
        %v1388 = vld [vmem:[%s474 + $0x184] sm:$0xf]
        %v1389 = vld [vmem:[%s474 + $0x188] sm:$0xf]
        %v1390 = vld [vmem:[%s474 + $0x18c] sm:$0x1]
        %v1391 = vld [vmem:[%s474 + $0x190] sm:$0xf]
        %v1392 = vld [vmem:[%s474 + $0x194] sm:$0xf]
        %v1393 = vld [vmem:[%s474 + $0x198] sm:$0xf]
        %v1394 = vld [vmem:[%s474 + $0x19c] sm:$0xf]
        %v1395 = vld [vmem:[%s474 + $0x1a0] sm:$0x1]
        %v1396 = vld [vmem:[%s474 + $0x1a4] sm:$0xf]
        %v1397 = vld [vmem:[%s474 + $0x1a8] sm:$0xf]
        %v1398 = vld [vmem:[%s474 + $0x1ac] sm:$0xf]
        %v1399 = vld [vmem:[%s474 + $0x1b0] sm:$0xf]
        %v1400 = vld [vmem:[%s474 + $0x1b4] sm:$0x1]
        %v1401 = vld [vmem:[%s474 + $0x1b8] sm:$0xf]
        %v1402 = vld [vmem:[%s474 + $0x1bc] sm:$0xf]
        %v1403 = vld [vmem:[%s474 + $0x1c0] sm:$0xf]
        %v1404 = vld [vmem:[%s474 + $0x1c4] sm:$0xf]
        %v1405 = vld [vmem:[%s474 + $0x1c8] sm:$0x1]
        %v1406 = vld [vmem:[%s474 + $0x1cc] sm:$0xf]
        %v1407 = vld [vmem:[%s474 + $0x1d0] sm:$0xf]
        %v1408 = vld [vmem:[%s474 + $0x1d4] sm:$0xf]
        %v1409 = vld [vmem:[%s474 + $0x1d8] sm:$0xf]
        %v1410 = vld [vmem:[%s474 + $0x1dc] sm:$0x1]
        %v1411 = vld [vmem:[%s474 + $0x1e0] sm:$0xf]
        %v1412 = vld [vmem:[%s474 + $0x1e4] sm:$0xf]
        %v1413 = vld [vmem:[%s474 + $0x1e8] sm:$0xf]
        %v1414 = vld [vmem:[%s474 + $0x1ec] sm:$0xf]
        %v1415 = vld [vmem:[%s474 + $0x1f0] sm:$0x1]
        %v1416 = vld [vmem:[%s474 + $0x1f4] sm:$0xf]
        %v1417 = vld [vmem:[%s474 + $0x1f8] sm:$0xf]
        %v1418 = vld [vmem:[%s474 + $0x1fc] sm:$0xf]
        %v1419 = vld [vmem:[%s474 + $0x200] sm:$0xf]
        %v1420 = vld [vmem:[%s474 + $0x204] sm:$0x1]
        %v1421 = vld [vmem:[%s474 + $0x208] sm:$0xf]
        %v1422 = vld [vmem:[%s474 + $0x20c] sm:$0xf]
        %v1423 = vld [vmem:[%s474 + $0x210] sm:$0xf]
        %v1424 = vld [vmem:[%s474 + $0x214] sm:$0xf]
        %v1425 = vld [vmem:[%s474 + $0x218] sm:$0x1]
        %v1426 = vld [vmem:[%s474 + $0x21c] sm:$0xf]
        %v1427 = vld [vmem:[%s474 + $0x220] sm:$0xf]
        %v1428 = vld [vmem:[%s474 + $0x224] sm:$0xf]
        %v1429 = vld [vmem:[%s474 + $0x228] sm:$0xf]
        %v1430 = vld [vmem:[%s474 + $0x22c] sm:$0x1]
        %v1431 = vld [vmem:[%s474 + $0x230] sm:$0xf]
        %v1432 = vld [vmem:[%s474 + $0x234] sm:$0xf]
        %v1433 = vld [vmem:[%s474 + $0x238] sm:$0xf]
        %v1434 = vld [vmem:[%s474 + $0x23c] sm:$0xf]
        %v1435 = vld [vmem:[%s474 + $0x240] sm:$0x1]
        %v1436 = vld [vmem:[%s474 + $0x244] sm:$0xf]
        %v1437 = vld [vmem:[%s474 + $0x248] sm:$0xf]
        %v1438 = vld [vmem:[%s474 + $0x24c] sm:$0xf]
        %v1439 = vld [vmem:[%s474 + $0x250] sm:$0xf]
        %v1440 = vld [vmem:[%s474 + $0x254] sm:$0x1]
        %v1441 = vld [vmem:[%s474 + $0x258] sm:$0xf]
        %v1442 = vld [vmem:[%s474 + $0x25c] sm:$0xf]
        %v1443 = vld [vmem:[%s474 + $0x260] sm:$0xf]
        %v1444 = vld [vmem:[%s474 + $0x264] sm:$0xf]
        %v1445 = vld [vmem:[%s474 + $0x268] sm:$0x1]
        %v1446 = vld [vmem:[%s474 + $0x26c] sm:$0xf]
        %v1447 = vld [vmem:[%s474 + $0x270] sm:$0xf]
        %v1448 = vld [vmem:[%s474 + $0x274] sm:$0xf]
        %v1449 = vld [vmem:[%s474 + $0x278] sm:$0xf]
        %v1450 = vld [vmem:[%s474 + $0x27c] sm:$0x1]
        %v1451 = vld [vmem:[%s487] sm:$0xf]
        %v1452 = vld [vmem:[%s487 + $0x4] sm:$0xf]
        %v1453 = vld [vmem:[%s487 + $0x8] sm:$0xf]
        %v1454 = vld [vmem:[%s487 + $0xc] sm:$0xf]
        %v1455 = vld [vmem:[%s487 + $0x10] sm:$0x1]
        %v1456 = vld [vmem:[%s487 + $0x14] sm:$0xf]
        %v1457 = vld [vmem:[%s487 + $0x18] sm:$0xf]
        %v1458 = vld [vmem:[%s487 + $0x1c] sm:$0xf]
        %v1459 = vld [vmem:[%s487 + $0x20] sm:$0xf]
        %v1460 = vld [vmem:[%s487 + $0x24] sm:$0x1]
        %vm1461 = vsmask.f32 7424
        %v1463 = vshrl.u32 %v1189, 16
        %v1465 = vshll.u32 %v1189, 16
        %v1467 = vrot.slane %v1465, 1
        %v1468 = vor.u32 %v1463, %v1467
        %v1470 = vshll.u32 %v1190, 16
        %v1472 = vrot.slane %v1470, 1
        %v1473 = vsel %vm1461, %v1468, %v1472
        %v1474 = vshrl.u32 %v1190, 16
        %v1476 = vor.u32 %v1474, %v1472
        %v1478 = vshll.u32 %v1191, 16
        %v1480 = vrot.slane %v1478, 1
        %v1481 = vsel %vm1461, %v1476, %v1480
        %v1483 = vshrl.u32 %v1192, 16
        %v1485 = vshll.u32 %v1192, 16
        %v1487 = vrot.slane %v1485, 1
        %v1488 = vor.u32 %v1483, %v1487
        %v1490 = vshll.u32 %v1193, 16
        %v1492 = vrot.slane %v1490, 1
        %v1493 = vsel %vm1461, %v1488, %v1492
        %v1494 = vshrl.u32 %v1193, 16
        %v1496 = vor.u32 %v1494, %v1492
        %v1498 = vshll.u32 %v1194, 16
        %v1500 = vrot.slane %v1498, 1
        %v1501 = vsel %vm1461, %v1496, %v1500
        %v1503 = vshrl.u32 %v1195, 16
        %v1505 = vshll.u32 %v1195, 16
        %v1507 = vrot.slane %v1505, 1
        %v1508 = vor.u32 %v1503, %v1507
        %v1510 = vshll.u32 %v1196, 16
        %v1512 = vrot.slane %v1510, 1
        %v1513 = vsel %vm1461, %v1508, %v1512
        %v1514 = vshrl.u32 %v1196, 16
        %v1516 = vor.u32 %v1514, %v1512
        %v1518 = vshll.u32 %v1197, 16
        %v1520 = vrot.slane %v1518, 1
        %v1521 = vsel %vm1461, %v1516, %v1520
        %v1523 = vshrl.u32 %v1198, 16
        %v1525 = vshll.u32 %v1198, 16
        %v1527 = vrot.slane %v1525, 1
        %v1528 = vor.u32 %v1523, %v1527
        %v1530 = vshll.u32 %v1199, 16
        %v1532 = vrot.slane %v1530, 1
        %v1533 = vsel %vm1461, %v1528, %v1532
        %v1534 = vshrl.u32 %v1199, 16
        %v1536 = vor.u32 %v1534, %v1532
        %v1538 = vshll.u32 %v1200, 16
        %v1540 = vrot.slane %v1538, 1
        %v1541 = vsel %vm1461, %v1536, %v1540
        %v1543 = vshrl.u32 %v1201, 16
        %v1545 = vshll.u32 %v1201, 16
        %v1547 = vrot.slane %v1545, 1
        %v1548 = vor.u32 %v1543, %v1547
        %v1550 = vshll.u32 %v1202, 16
        %v1552 = vrot.slane %v1550, 1
        %v1553 = vsel %vm1461, %v1548, %v1552
        %v1554 = vshrl.u32 %v1202, 16
        %v1556 = vor.u32 %v1554, %v1552
        %v1558 = vshll.u32 %v1203, 16
        %v1560 = vrot.slane %v1558, 1
        %v1561 = vsel %vm1461, %v1556, %v1560
        %v1563 = vshrl.u32 %v1204, 16
        %v1565 = vshll.u32 %v1204, 16
        %v1567 = vrot.slane %v1565, 1
        %v1568 = vor.u32 %v1563, %v1567
        %v1570 = vshll.u32 %v1205, 16
        %v1572 = vrot.slane %v1570, 1
        %v1573 = vsel %vm1461, %v1568, %v1572
        %v1574 = vshrl.u32 %v1205, 16
        %v1576 = vor.u32 %v1574, %v1572
        %v1578 = vshll.u32 %v1206, 16
        %v1580 = vrot.slane %v1578, 1
        %v1581 = vsel %vm1461, %v1576, %v1580
        %v1583 = vshrl.u32 %v1207, 16
        %v1585 = vshll.u32 %v1207, 16
        %v1587 = vrot.slane %v1585, 1
        %v1588 = vor.u32 %v1583, %v1587
        %v1590 = vshll.u32 %v1208, 16
        %v1592 = vrot.slane %v1590, 1
        %v1593 = vsel %vm1461, %v1588, %v1592
        %v1594 = vshrl.u32 %v1208, 16
        %v1596 = vor.u32 %v1594, %v1592
        %v1598 = vshll.u32 %v1209, 16
        %v1600 = vrot.slane %v1598, 1
        %v1601 = vsel %vm1461, %v1596, %v1600
        %v1603 = vshrl.u32 %v1210, 16
        %v1605 = vshll.u32 %v1210, 16
        %v1607 = vrot.slane %v1605, 1
        %v1608 = vor.u32 %v1603, %v1607
        %v1610 = vshll.u32 %v1211, 16
        %v1612 = vrot.slane %v1610, 1
        %v1613 = vsel %vm1461, %v1608, %v1612
        %v1614 = vshrl.u32 %v1211, 16
        %v1616 = vor.u32 %v1614, %v1612
        %v1618 = vshll.u32 %v1212, 16
        %v1620 = vrot.slane %v1618, 1
        %v1621 = vsel %vm1461, %v1616, %v1620
        %v1623 = vshrl.u32 %v1213, 16
        %v1625 = vshll.u32 %v1213, 16
        %v1627 = vrot.slane %v1625, 1
        %v1628 = vor.u32 %v1623, %v1627
        %v1630 = vshll.u32 %v1214, 16
        %v1632 = vrot.slane %v1630, 1
        %v1633 = vsel %vm1461, %v1628, %v1632
        %v1634 = vshrl.u32 %v1214, 16
        %v1636 = vor.u32 %v1634, %v1632
        %v1638 = vshll.u32 %v1215, 16
        %v1640 = vrot.slane %v1638, 1
        %v1641 = vsel %vm1461, %v1636, %v1640
        %v1643 = vshrl.u32 %v1216, 16
        %v1645 = vshll.u32 %v1216, 16
        %v1647 = vrot.slane %v1645, 1
        %v1648 = vor.u32 %v1643, %v1647
        %v1650 = vshll.u32 %v1217, 16
        %v1652 = vrot.slane %v1650, 1
        %v1653 = vsel %vm1461, %v1648, %v1652
        %v1654 = vshrl.u32 %v1217, 16
        %v1656 = vor.u32 %v1654, %v1652
        %v1658 = vshll.u32 %v1218, 16
        %v1660 = vrot.slane %v1658, 1
        %v1661 = vsel %vm1461, %v1656, %v1660
        %v1663 = vshrl.u32 %v1219, 16
        %v1665 = vshll.u32 %v1219, 16
        %v1667 = vrot.slane %v1665, 1
        %v1668 = vor.u32 %v1663, %v1667
        %v1670 = vshll.u32 %v1220, 16
        %v1672 = vrot.slane %v1670, 1
        %v1673 = vsel %vm1461, %v1668, %v1672
        %v1674 = vshrl.u32 %v1220, 16
        %v1676 = vor.u32 %v1674, %v1672
        %v1678 = vshll.u32 %v1221, 16
        %v1680 = vrot.slane %v1678, 1
        %v1681 = vsel %vm1461, %v1676, %v1680
        %v1683 = vshrl.u32 %v1222, 16
        %v1685 = vshll.u32 %v1222, 16
        %v1687 = vrot.slane %v1685, 1
        %v1688 = vor.u32 %v1683, %v1687
        %v1690 = vshll.u32 %v1223, 16
        %v1692 = vrot.slane %v1690, 1
        %v1693 = vsel %vm1461, %v1688, %v1692
        %v1694 = vshrl.u32 %v1223, 16
        %v1696 = vor.u32 %v1694, %v1692
        %v1698 = vshll.u32 %v1224, 16
        %v1700 = vrot.slane %v1698, 1
        %v1701 = vsel %vm1461, %v1696, %v1700
        %v1703 = vshrl.u32 %v1225, 16
        %v1705 = vshll.u32 %v1225, 16
        %v1707 = vrot.slane %v1705, 1
        %v1708 = vor.u32 %v1703, %v1707
        %v1710 = vshll.u32 %v1226, 16
        %v1712 = vrot.slane %v1710, 1
        %v1713 = vsel %vm1461, %v1708, %v1712
        %v1714 = vshrl.u32 %v1226, 16
        %v1716 = vor.u32 %v1714, %v1712
        %v1718 = vshll.u32 %v1227, 16
        %v1720 = vrot.slane %v1718, 1
        %v1721 = vsel %vm1461, %v1716, %v1720
        %v1723 = vshrl.u32 %v1228, 16
        %v1725 = vshll.u32 %v1228, 16
        %v1727 = vrot.slane %v1725, 1
        %v1728 = vor.u32 %v1723, %v1727
        %v1730 = vshll.u32 %v1229, 16
        %v1732 = vrot.slane %v1730, 1
        %v1733 = vsel %vm1461, %v1728, %v1732
        %v1734 = vshrl.u32 %v1229, 16
        %v1736 = vor.u32 %v1734, %v1732
        %v1738 = vshll.u32 %v1230, 16
        %v1740 = vrot.slane %v1738, 1
        %v1741 = vsel %vm1461, %v1736, %v1740
        %v1743 = vshrl.u32 %v1231, 16
        %v1745 = vshll.u32 %v1231, 16
        %v1747 = vrot.slane %v1745, 1
        %v1748 = vor.u32 %v1743, %v1747
        %v1750 = vshll.u32 %v1232, 16
        %v1752 = vrot.slane %v1750, 1
        %v1753 = vsel %vm1461, %v1748, %v1752
        %v1754 = vshrl.u32 %v1232, 16
        %v1756 = vor.u32 %v1754, %v1752
        %v1758 = vshll.u32 %v1233, 16
        %v1760 = vrot.slane %v1758, 1
        %v1761 = vsel %vm1461, %v1756, %v1760
        %v1763 = vshrl.u32 %v1234, 16
        %v1765 = vshll.u32 %v1234, 16
        %v1767 = vrot.slane %v1765, 1
        %v1768 = vor.u32 %v1763, %v1767
        %v1770 = vshll.u32 %v1235, 16
        %v1772 = vrot.slane %v1770, 1
        %v1773 = vsel %vm1461, %v1768, %v1772
        %v1774 = vshrl.u32 %v1235, 16
        %v1776 = vor.u32 %v1774, %v1772
        %v1778 = vshll.u32 %v1236, 16
        %v1780 = vrot.slane %v1778, 1
        %v1781 = vsel %vm1461, %v1776, %v1780
        %v1783 = vshrl.u32 %v1237, 16
        %v1785 = vshll.u32 %v1237, 16
        %v1787 = vrot.slane %v1785, 1
        %v1788 = vor.u32 %v1783, %v1787
        %v1790 = vshll.u32 %v1238, 16
        %v1792 = vrot.slane %v1790, 1
        %v1793 = vsel %vm1461, %v1788, %v1792
        %v1794 = vshrl.u32 %v1238, 16
        %v1796 = vor.u32 %v1794, %v1792
        %v1798 = vshll.u32 %v1239, 16
        %v1800 = vrot.slane %v1798, 1
        %v1801 = vsel %vm1461, %v1796, %v1800
        %v1803 = vshrl.u32 %v1240, 16
        %v1805 = vshll.u32 %v1240, 16
        %v1807 = vrot.slane %v1805, 1
        %v1808 = vor.u32 %v1803, %v1807
        %v1810 = vshll.u32 %v1241, 16
        %v1812 = vrot.slane %v1810, 1
        %v1813 = vsel %vm1461, %v1808, %v1812
        %v1814 = vshrl.u32 %v1241, 16
        %v1816 = vor.u32 %v1814, %v1812
        %v1818 = vshll.u32 %v1242, 16
        %v1820 = vrot.slane %v1818, 1
        %v1821 = vsel %vm1461, %v1816, %v1820
        %v1823 = vshrl.u32 %v1243, 16
        %v1825 = vshll.u32 %v1243, 16
        %v1827 = vrot.slane %v1825, 1
        %v1828 = vor.u32 %v1823, %v1827
        %v1830 = vshll.u32 %v1244, 16
        %v1832 = vrot.slane %v1830, 1
        %v1833 = vsel %vm1461, %v1828, %v1832
        %v1834 = vshrl.u32 %v1244, 16
        %v1836 = vor.u32 %v1834, %v1832
        %v1838 = vshll.u32 %v1245, 16
        %v1840 = vrot.slane %v1838, 1
        %v1841 = vsel %vm1461, %v1836, %v1840
        %v1843 = vshrl.u32 %v1246, 16
        %v1845 = vshll.u32 %v1246, 16
        %v1847 = vrot.slane %v1845, 1
        %v1848 = vor.u32 %v1843, %v1847
        %v1850 = vshll.u32 %v1247, 16
        %v1852 = vrot.slane %v1850, 1
        %v1853 = vsel %vm1461, %v1848, %v1852
        %v1854 = vshrl.u32 %v1247, 16
        %v1856 = vor.u32 %v1854, %v1852
        %v1858 = vshll.u32 %v1248, 16
        %v1860 = vrot.slane %v1858, 1
        %v1861 = vsel %vm1461, %v1856, %v1860
        %v1863 = vshrl.u32 %v1249, 16
        %v1865 = vshll.u32 %v1249, 16
        %v1867 = vrot.slane %v1865, 1
        %v1868 = vor.u32 %v1863, %v1867
        %v1870 = vshll.u32 %v1250, 16
        %v1872 = vrot.slane %v1870, 1
        %v1873 = vsel %vm1461, %v1868, %v1872
        %v1874 = vshrl.u32 %v1250, 16
        %v1876 = vor.u32 %v1874, %v1872
        %v1878 = vshll.u32 %v1251, 16
        %v1880 = vrot.slane %v1878, 1
        %v1881 = vsel %vm1461, %v1876, %v1880
        %v1883 = vshrl.u32 %v1252, 16
        %v1885 = vshll.u32 %v1252, 16
        %v1887 = vrot.slane %v1885, 1
        %v1888 = vor.u32 %v1883, %v1887
        %v1890 = vshll.u32 %v1253, 16
        %v1892 = vrot.slane %v1890, 1
        %v1893 = vsel %vm1461, %v1888, %v1892
        %v1894 = vshrl.u32 %v1253, 16
        %v1896 = vor.u32 %v1894, %v1892
        %v1898 = vshll.u32 %v1254, 16
        %v1900 = vrot.slane %v1898, 1
        %v1901 = vsel %vm1461, %v1896, %v1900
        %v1903 = vshrl.u32 %v1255, 16
        %v1905 = vshll.u32 %v1255, 16
        %v1907 = vrot.slane %v1905, 1
        %v1908 = vor.u32 %v1903, %v1907
        %v1910 = vshll.u32 %v1256, 16
        %v1912 = vrot.slane %v1910, 1
        %v1913 = vsel %vm1461, %v1908, %v1912
        %v1914 = vshrl.u32 %v1256, 16
        %v1916 = vor.u32 %v1914, %v1912
        %v1918 = vshll.u32 %v1257, 16
        %v1920 = vrot.slane %v1918, 1
        %v1921 = vsel %vm1461, %v1916, %v1920
        %v1923 = vshrl.u32 %v1258, 16
        %v1925 = vshll.u32 %v1258, 16
        %v1927 = vrot.slane %v1925, 1
        %v1928 = vor.u32 %v1923, %v1927
        %v1930 = vshll.u32 %v1259, 16
        %v1932 = vrot.slane %v1930, 1
        %v1933 = vsel %vm1461, %v1928, %v1932
        %v1934 = vshrl.u32 %v1259, 16
        %v1936 = vor.u32 %v1934, %v1932
        %v1938 = vshll.u32 %v1260, 16
        %v1940 = vrot.slane %v1938, 1
        %v1941 = vsel %vm1461, %v1936, %v1940
        %v1943 = vshrl.u32 %v1261, 16
        %v1945 = vshll.u32 %v1261, 16
        %v1947 = vrot.slane %v1945, 1
        %v1948 = vor.u32 %v1943, %v1947
        %v1950 = vshll.u32 %v1262, 16
        %v1952 = vrot.slane %v1950, 1
        %v1953 = vsel %vm1461, %v1948, %v1952
        %v1954 = vshrl.u32 %v1262, 16
        %v1956 = vor.u32 %v1954, %v1952
        %v1958 = vshll.u32 %v1263, 16
        %v1960 = vrot.slane %v1958, 1
        %v1961 = vsel %vm1461, %v1956, %v1960
        %v1963 = vshrl.u32 %v1264, 16
        %v1965 = vshll.u32 %v1264, 16
        %v1967 = vrot.slane %v1965, 1
        %v1968 = vor.u32 %v1963, %v1967
        %v1970 = vshll.u32 %v1265, 16
        %v1972 = vrot.slane %v1970, 1
        %v1973 = vsel %vm1461, %v1968, %v1972
        %v1974 = vshrl.u32 %v1265, 16
        %v1976 = vor.u32 %v1974, %v1972
        %v1978 = vshll.u32 %v1266, 16
        %v1980 = vrot.slane %v1978, 1
        %v1981 = vsel %vm1461, %v1976, %v1980
        %v1983 = vshrl.u32 %v1267, 16
        %v1985 = vshll.u32 %v1267, 16
        %v1987 = vrot.slane %v1985, 1
        %v1988 = vor.u32 %v1983, %v1987
        %v1990 = vshll.u32 %v1268, 16
        %v1992 = vrot.slane %v1990, 1
        %v1993 = vsel %vm1461, %v1988, %v1992
        %v1994 = vshrl.u32 %v1268, 16
        %v1996 = vor.u32 %v1994, %v1992
        %v1998 = vshll.u32 %v1269, 16
        %v2000 = vrot.slane %v1998, 1
        %v2001 = vsel %vm1461, %v1996, %v2000
        %v2003 = vshrl.u32 %v1270, 16
        %v2005 = vshll.u32 %v1270, 16
        %v2007 = vrot.slane %v2005, 1
        %v2008 = vor.u32 %v2003, %v2007
        %v2010 = vshll.u32 %v1271, 16
        %v2012 = vrot.slane %v2010, 1
        %v2013 = vsel %vm1461, %v2008, %v2012
        %v2014 = vshrl.u32 %v1271, 16
        %v2016 = vor.u32 %v2014, %v2012
        %v2018 = vshll.u32 %v1272, 16
        %v2020 = vrot.slane %v2018, 1
        %v2021 = vsel %vm1461, %v2016, %v2020
        %v2023 = vshrl.u32 %v1273, 16
        %v2025 = vshll.u32 %v1273, 16
        %v2027 = vrot.slane %v2025, 1
        %v2028 = vor.u32 %v2023, %v2027
        %v2030 = vshll.u32 %v1274, 16
        %v2032 = vrot.slane %v2030, 1
        %v2033 = vsel %vm1461, %v2028, %v2032
        %v2034 = vshrl.u32 %v1274, 16
        %v2036 = vor.u32 %v2034, %v2032
        %v2038 = vshll.u32 %v1275, 16
        %v2040 = vrot.slane %v2038, 1
        %v2041 = vsel %vm1461, %v2036, %v2040
        %v2043 = vshrl.u32 %v1276, 16
        %v2045 = vshll.u32 %v1276, 16
        %v2047 = vrot.slane %v2045, 1
        %v2048 = vor.u32 %v2043, %v2047
        %v2050 = vshll.u32 %v1277, 16
        %v2052 = vrot.slane %v2050, 1
        %v2053 = vsel %vm1461, %v2048, %v2052
        %v2054 = vshrl.u32 %v1277, 16
        %v2056 = vor.u32 %v2054, %v2052
        %v2058 = vshll.u32 %v1278, 16
        %v2060 = vrot.slane %v2058, 1
        %v2061 = vsel %vm1461, %v2056, %v2060
        %v2063 = vshrl.u32 %v1279, 16
        %v2065 = vshll.u32 %v1279, 16
        %v2067 = vrot.slane %v2065, 1
        %v2068 = vor.u32 %v2063, %v2067
        %v2070 = vshll.u32 %v1280, 16
        %v2072 = vrot.slane %v2070, 1
        %v2073 = vsel %vm1461, %v2068, %v2072
        %v2074 = vshrl.u32 %v1280, 16
        %v2076 = vor.u32 %v2074, %v2072
        %v2078 = vshll.u32 %v1281, 16
        %v2080 = vrot.slane %v2078, 1
        %v2081 = vsel %vm1461, %v2076, %v2080
        %v2083 = vshrl.u32 %v1282, 16
        %v2085 = vshll.u32 %v1282, 16
        %v2087 = vrot.slane %v2085, 1
        %v2088 = vor.u32 %v2083, %v2087
        %v2090 = vshll.u32 %v1283, 16
        %v2092 = vrot.slane %v2090, 1
        %v2093 = vsel %vm1461, %v2088, %v2092
        %v2094 = vshrl.u32 %v1283, 16
        %v2096 = vor.u32 %v2094, %v2092
        %v2098 = vshll.u32 %v1284, 16
        %v2100 = vrot.slane %v2098, 1
        %v2101 = vsel %vm1461, %v2096, %v2100
        %vm2198 = vcmask 1046528
        %v2199 = vrot.slane %v1189, 1
        %v2200 = vrot.slane %v1190, 1
        %v2201 = vsel %vm2198, %v2199, %v2200
        %v2202 = vrot.slane %v1191, 1
        %v2203 = vsel %vm2198, %v2200, %v2202
        %v2204 = vrot.slane %v1192, 1
        %v2205 = vrot.slane %v1193, 1
        %v2206 = vsel %vm2198, %v2204, %v2205
        %v2207 = vrot.slane %v1194, 1
        %v2208 = vsel %vm2198, %v2205, %v2207
        %v2209 = vrot.slane %v1195, 1
        %v2210 = vrot.slane %v1196, 1
        %v2211 = vsel %vm2198, %v2209, %v2210
        %v2212 = vrot.slane %v1197, 1
        %v2213 = vsel %vm2198, %v2210, %v2212
        %v2214 = vrot.slane %v1198, 1
        %v2215 = vrot.slane %v1199, 1
        %v2216 = vsel %vm2198, %v2214, %v2215
        %v2217 = vrot.slane %v1200, 1
        %v2218 = vsel %vm2198, %v2215, %v2217
        %v2219 = vrot.slane %v1201, 1
        %v2220 = vrot.slane %v1202, 1
        %v2221 = vsel %vm2198, %v2219, %v2220
        %v2222 = vrot.slane %v1203, 1
        %v2223 = vsel %vm2198, %v2220, %v2222
        %v2224 = vrot.slane %v1204, 1
        %v2225 = vrot.slane %v1205, 1
        %v2226 = vsel %vm2198, %v2224, %v2225
        %v2227 = vrot.slane %v1206, 1
        %v2228 = vsel %vm2198, %v2225, %v2227
        %v2229 = vrot.slane %v1207, 1
        %v2230 = vrot.slane %v1208, 1
        %v2231 = vsel %vm2198, %v2229, %v2230
        %v2232 = vrot.slane %v1209, 1
        %v2233 = vsel %vm2198, %v2230, %v2232
        %v2234 = vrot.slane %v1210, 1
        %v2235 = vrot.slane %v1211, 1
        %v2236 = vsel %vm2198, %v2234, %v2235
        %v2237 = vrot.slane %v1212, 1
        %v2238 = vsel %vm2198, %v2235, %v2237
        %v2239 = vrot.slane %v1213, 1
        %v2240 = vrot.slane %v1214, 1
        %v2241 = vsel %vm2198, %v2239, %v2240
        %v2242 = vrot.slane %v1215, 1
        %v2243 = vsel %vm2198, %v2240, %v2242
        %v2244 = vrot.slane %v1216, 1
        %v2245 = vrot.slane %v1217, 1
        %v2246 = vsel %vm2198, %v2244, %v2245
        %v2247 = vrot.slane %v1218, 1
        %v2248 = vsel %vm2198, %v2245, %v2247
        %v2249 = vrot.slane %v1219, 1
        %v2250 = vrot.slane %v1220, 1
        %v2251 = vsel %vm2198, %v2249, %v2250
        %v2252 = vrot.slane %v1221, 1
        %v2253 = vsel %vm2198, %v2250, %v2252
        %v2254 = vrot.slane %v1222, 1
        %v2255 = vrot.slane %v1223, 1
        %v2256 = vsel %vm2198, %v2254, %v2255
        %v2257 = vrot.slane %v1224, 1
        %v2258 = vsel %vm2198, %v2255, %v2257
        %v2259 = vrot.slane %v1225, 1
        %v2260 = vrot.slane %v1226, 1
        %v2261 = vsel %vm2198, %v2259, %v2260
        %v2262 = vrot.slane %v1227, 1
        %v2263 = vsel %vm2198, %v2260, %v2262
        %v2264 = vrot.slane %v1228, 1
        %v2265 = vrot.slane %v1229, 1
        %v2266 = vsel %vm2198, %v2264, %v2265
        %v2267 = vrot.slane %v1230, 1
        %v2268 = vsel %vm2198, %v2265, %v2267
        %v2269 = vrot.slane %v1231, 1
        %v2270 = vrot.slane %v1232, 1
        %v2271 = vsel %vm2198, %v2269, %v2270
        %v2272 = vrot.slane %v1233, 1
        %v2273 = vsel %vm2198, %v2270, %v2272
        %v2274 = vrot.slane %v1234, 1
        %v2275 = vrot.slane %v1235, 1
        %v2276 = vsel %vm2198, %v2274, %v2275
        %v2277 = vrot.slane %v1236, 1
        %v2278 = vsel %vm2198, %v2275, %v2277
        %v2279 = vrot.slane %v1237, 1
        %v2280 = vrot.slane %v1238, 1
        %v2281 = vsel %vm2198, %v2279, %v2280
        %v2282 = vrot.slane %v1239, 1
        %v2283 = vsel %vm2198, %v2280, %v2282
        %v2284 = vrot.slane %v1240, 1
        %v2285 = vrot.slane %v1241, 1
        %v2286 = vsel %vm2198, %v2284, %v2285
        %v2287 = vrot.slane %v1242, 1
        %v2288 = vsel %vm2198, %v2285, %v2287
        %v2289 = vrot.slane %v1243, 1
        %v2290 = vrot.slane %v1244, 1
        %v2291 = vsel %vm2198, %v2289, %v2290
        %v2292 = vrot.slane %v1245, 1
        %v2293 = vsel %vm2198, %v2290, %v2292
        %v2294 = vrot.slane %v1246, 1
        %v2295 = vrot.slane %v1247, 1
        %v2296 = vsel %vm2198, %v2294, %v2295
        %v2297 = vrot.slane %v1248, 1
        %v2298 = vsel %vm2198, %v2295, %v2297
        %v2299 = vrot.slane %v1249, 1
        %v2300 = vrot.slane %v1250, 1
        %v2301 = vsel %vm2198, %v2299, %v2300
        %v2302 = vrot.slane %v1251, 1
        %v2303 = vsel %vm2198, %v2300, %v2302
        %v2304 = vrot.slane %v1252, 1
        %v2305 = vrot.slane %v1253, 1
        %v2306 = vsel %vm2198, %v2304, %v2305
        %v2307 = vrot.slane %v1254, 1
        %v2308 = vsel %vm2198, %v2305, %v2307
        %v2309 = vrot.slane %v1255, 1
        %v2310 = vrot.slane %v1256, 1
        %v2311 = vsel %vm2198, %v2309, %v2310
        %v2312 = vrot.slane %v1257, 1
        %v2313 = vsel %vm2198, %v2310, %v2312
        %v2314 = vrot.slane %v1258, 1
        %v2315 = vrot.slane %v1259, 1
        %v2316 = vsel %vm2198, %v2314, %v2315
        %v2317 = vrot.slane %v1260, 1
        %v2318 = vsel %vm2198, %v2315, %v2317
        %v2319 = vrot.slane %v1261, 1
        %v2320 = vrot.slane %v1262, 1
        %v2321 = vsel %vm2198, %v2319, %v2320
        %v2322 = vrot.slane %v1263, 1
        %v2323 = vsel %vm2198, %v2320, %v2322
        %v2324 = vrot.slane %v1264, 1
        %v2325 = vrot.slane %v1265, 1
        %v2326 = vsel %vm2198, %v2324, %v2325
        %v2327 = vrot.slane %v1266, 1
        %v2328 = vsel %vm2198, %v2325, %v2327
        %v2329 = vrot.slane %v1267, 1
        %v2330 = vrot.slane %v1268, 1
        %v2331 = vsel %vm2198, %v2329, %v2330
        %v2332 = vrot.slane %v1269, 1
        %v2333 = vsel %vm2198, %v2330, %v2332
        %v2334 = vrot.slane %v1270, 1
        %v2335 = vrot.slane %v1271, 1
        %v2336 = vsel %vm2198, %v2334, %v2335
        %v2337 = vrot.slane %v1272, 1
        %v2338 = vsel %vm2198, %v2335, %v2337
        %v2339 = vrot.slane %v1273, 1
        %v2340 = vrot.slane %v1274, 1
        %v2341 = vsel %vm2198, %v2339, %v2340
        %v2342 = vrot.slane %v1275, 1
        %v2343 = vsel %vm2198, %v2340, %v2342
        %v2344 = vrot.slane %v1276, 1
        %v2345 = vrot.slane %v1277, 1
        %v2346 = vsel %vm2198, %v2344, %v2345
        %v2347 = vrot.slane %v1278, 1
        %v2348 = vsel %vm2198, %v2345, %v2347
        %v2349 = vrot.slane %v1279, 1
        %v2350 = vrot.slane %v1280, 1
        %v2351 = vsel %vm2198, %v2349, %v2350
        %v2352 = vrot.slane %v1281, 1
        %v2353 = vsel %vm2198, %v2350, %v2352
        %v2354 = vrot.slane %v1282, 1
        %v2355 = vrot.slane %v1283, 1
        %v2356 = vsel %vm2198, %v2354, %v2355
        %v2357 = vrot.slane %v1284, 1
        %v2358 = vsel %vm2198, %v2355, %v2357
        %v2360 = vshrl.u32 %v1285, 16
        %v2362 = vshll.u32 %v1285, 16
        %v2364 = vrot.slane %v2362, 1
        %v2365 = vor.u32 %v2360, %v2364
        %v2367 = vshll.u32 %v1286, 16
        %v2369 = vrot.slane %v2367, 1
        %v2370 = vsel %vm1461, %v2365, %v2369
        %v2371 = vshrl.u32 %v1286, 16
        %v2373 = vor.u32 %v2371, %v2369
        %v2375 = vshll.u32 %v1287, 16
        %v2377 = vrot.slane %v2375, 1
        %v2378 = vsel %vm1461, %v2373, %v2377
        %v2382 = vrot.slane %v1285, 1
        %v2383 = vrot.slane %v1286, 1
        %v2384 = vsel %vm2198, %v2382, %v2383
        %v2385 = vrot.slane %v1287, 1
        %v2386 = vsel %vm2198, %v2383, %v2385
        %v2388 = vshrl.u32 %v1288, 16
        %v2390 = vshll.u32 %v1288, 16
        %v2392 = vrot.slane %v2390, 1
        %v2393 = vor.u32 %v2388, %v2392
        %v2395 = vshll.u32 %v1289, 16
        %v2397 = vrot.slane %v2395, 1
        %v2398 = vsel %vm1461, %v2393, %v2397
        %v2399 = vshrl.u32 %v1289, 16
        %v2401 = vor.u32 %v2399, %v2397
        %v2403 = vshll.u32 %v1290, 16
        %v2405 = vrot.slane %v2403, 1
        %v2406 = vsel %vm1461, %v2401, %v2405
        %v2410 = vrot.slane %v1288, 1
        %v2411 = vrot.slane %v1289, 1
        %v2412 = vsel %vm2198, %v2410, %v2411
        %v2413 = vrot.slane %v1290, 1
        %v2414 = vsel %vm2198, %v2411, %v2413
        %2415 = vrot.lane.b32.xlu0 %v1473, 4
        %v2416 = vpop.permute.xlu0 %2415
        %2417 = vrot.lane.b32.xlu0 %v1481, 4
        %v2418 = vpop.permute.xlu0 %2417
        %2419 = vrot.lane.b32.xlu0 %v1493, 4
        %v2420 = vpop.permute.xlu0 %2419
        %2421 = vrot.lane.b32.xlu0 %v1501, 4
        %v2422 = vpop.permute.xlu0 %2421
        %2423 = vrot.lane.b32.xlu0 %v1513, 4
        %v2424 = vpop.permute.xlu0 %2423
        %2425 = vrot.lane.b32.xlu0 %v1521, 4
        %v2426 = vpop.permute.xlu0 %2425
        %2427 = vrot.lane.b32.xlu0 %v1533, 4
        %v2428 = vpop.permute.xlu0 %2427
        %2429 = vrot.lane.b32.xlu0 %v1541, 4
        %v2430 = vpop.permute.xlu0 %2429
        %2431 = vrot.lane.b32.xlu0 %v1553, 4
        %v2432 = vpop.permute.xlu0 %2431
        %2433 = vrot.lane.b32.xlu0 %v1561, 4
        %v2434 = vpop.permute.xlu0 %2433
        %2435 = vrot.lane.b32.xlu0 %v1573, 4
        %v2436 = vpop.permute.xlu0 %2435
        %2437 = vrot.lane.b32.xlu0 %v1581, 4
        %v2438 = vpop.permute.xlu0 %2437
        %2439 = vrot.lane.b32.xlu0 %v1593, 4
        %v2440 = vpop.permute.xlu0 %2439
        %2441 = vrot.lane.b32.xlu0 %v1601, 4
        %v2442 = vpop.permute.xlu0 %2441
        %2443 = vrot.lane.b32.xlu0 %v1613, 4
        %v2444 = vpop.permute.xlu0 %2443
        %2445 = vrot.lane.b32.xlu0 %v1621, 4
        %v2446 = vpop.permute.xlu0 %2445
        %2447 = vrot.lane.b32.xlu0 %v1633, 4
        %v2448 = vpop.permute.xlu0 %2447
        %2449 = vrot.lane.b32.xlu0 %v1641, 4
        %v2450 = vpop.permute.xlu0 %2449
        %2451 = vrot.lane.b32.xlu0 %v1653, 4
        %v2452 = vpop.permute.xlu0 %2451
        %2453 = vrot.lane.b32.xlu0 %v1661, 4
        %v2454 = vpop.permute.xlu0 %2453
        %2455 = vrot.lane.b32.xlu0 %v1673, 4
        %v2456 = vpop.permute.xlu0 %2455
        %2457 = vrot.lane.b32.xlu0 %v1681, 4
        %v2458 = vpop.permute.xlu0 %2457
        %2459 = vrot.lane.b32.xlu0 %v1693, 4
        %v2460 = vpop.permute.xlu0 %2459
        %2461 = vrot.lane.b32.xlu0 %v1701, 4
        %v2462 = vpop.permute.xlu0 %2461
        %2463 = vrot.lane.b32.xlu0 %v1713, 4
        %v2464 = vpop.permute.xlu0 %2463
        %2465 = vrot.lane.b32.xlu0 %v1721, 4
        %v2466 = vpop.permute.xlu0 %2465
        %2467 = vrot.lane.b32.xlu0 %v1733, 4
        %v2468 = vpop.permute.xlu0 %2467
        %2469 = vrot.lane.b32.xlu0 %v1741, 4
        %v2470 = vpop.permute.xlu0 %2469
        %2471 = vrot.lane.b32.xlu0 %v1753, 4
        %v2472 = vpop.permute.xlu0 %2471
        %2473 = vrot.lane.b32.xlu0 %v1761, 4
        %v2474 = vpop.permute.xlu0 %2473
        %2475 = vrot.lane.b32.xlu0 %v1773, 4
        %v2476 = vpop.permute.xlu0 %2475
        %2477 = vrot.lane.b32.xlu0 %v1781, 4
        %v2478 = vpop.permute.xlu0 %2477
        %2479 = vrot.lane.b32.xlu0 %v1793, 4
        %v2480 = vpop.permute.xlu0 %2479
        %2481 = vrot.lane.b32.xlu0 %v1801, 4
        %v2482 = vpop.permute.xlu0 %2481
        %2483 = vrot.lane.b32.xlu0 %v1813, 4
        %v2484 = vpop.permute.xlu0 %2483
        %2485 = vrot.lane.b32.xlu0 %v1821, 4
        %v2486 = vpop.permute.xlu0 %2485
        %2487 = vrot.lane.b32.xlu0 %v1833, 4
        %v2488 = vpop.permute.xlu0 %2487
        %2489 = vrot.lane.b32.xlu0 %v1841, 4
        %v2490 = vpop.permute.xlu0 %2489
        %2491 = vrot.lane.b32.xlu0 %v1853, 4
        %v2492 = vpop.permute.xlu0 %2491
        %2493 = vrot.lane.b32.xlu0 %v1861, 4
        %v2494 = vpop.permute.xlu0 %2493
        %2495 = vrot.lane.b32.xlu0 %v1873, 4
        %v2496 = vpop.permute.xlu0 %2495
        %2497 = vrot.lane.b32.xlu0 %v1881, 4
        %v2498 = vpop.permute.xlu0 %2497
        %2499 = vrot.lane.b32.xlu0 %v1893, 4
        %v2500 = vpop.permute.xlu0 %2499
        %2501 = vrot.lane.b32.xlu0 %v1901, 4
        %v2502 = vpop.permute.xlu0 %2501
        %2503 = vrot.lane.b32.xlu0 %v1913, 4
        %v2504 = vpop.permute.xlu0 %2503
        %2505 = vrot.lane.b32.xlu0 %v1921, 4
        %v2506 = vpop.permute.xlu0 %2505
        %2507 = vrot.lane.b32.xlu0 %v1933, 4
        %v2508 = vpop.permute.xlu0 %2507
        %2509 = vrot.lane.b32.xlu0 %v1941, 4
        %v2510 = vpop.permute.xlu0 %2509
        %2511 = vrot.lane.b32.xlu0 %v1953, 4
        %v2512 = vpop.permute.xlu0 %2511
        %2513 = vrot.lane.b32.xlu0 %v1961, 4
        %v2514 = vpop.permute.xlu0 %2513
        %2515 = vrot.lane.b32.xlu0 %v1973, 4
        %v2516 = vpop.permute.xlu0 %2515
        %2517 = vrot.lane.b32.xlu0 %v1981, 4
        %v2518 = vpop.permute.xlu0 %2517
        %2519 = vrot.lane.b32.xlu0 %v1993, 4
        %v2520 = vpop.permute.xlu0 %2519
        %2521 = vrot.lane.b32.xlu0 %v2001, 4
        %v2522 = vpop.permute.xlu0 %2521
        %2523 = vrot.lane.b32.xlu0 %v2013, 4
        %v2524 = vpop.permute.xlu0 %2523
        %2525 = vrot.lane.b32.xlu0 %v2021, 4
        %v2526 = vpop.permute.xlu0 %2525
        %2527 = vrot.lane.b32.xlu0 %v2033, 4
        %v2528 = vpop.permute.xlu0 %2527
        %2529 = vrot.lane.b32.xlu0 %v2041, 4
        %v2530 = vpop.permute.xlu0 %2529
        %2531 = vrot.lane.b32.xlu0 %v2053, 4
        %v2532 = vpop.permute.xlu0 %2531
        %2533 = vrot.lane.b32.xlu0 %v2061, 4
        %v2534 = vpop.permute.xlu0 %2533
        %2535 = vrot.lane.b32.xlu0 %v2073, 4
        %v2536 = vpop.permute.xlu0 %2535
        %2537 = vrot.lane.b32.xlu0 %v2081, 4
        %v2538 = vpop.permute.xlu0 %2537
        %2539 = vrot.lane.b32.xlu0 %v2093, 4
        %v2540 = vpop.permute.xlu0 %2539
        %2541 = vrot.lane.b32.xlu0 %v2101, 4
        %v2542 = vpop.permute.xlu0 %2541
        %2543 = vrot.lane.b32.xlu0 %v2201, 8
        %v2544 = vpop.permute.xlu0 %2543
        %2545 = vrot.lane.b32.xlu0 %v2203, 8
        %v2546 = vpop.permute.xlu0 %2545
        %2547 = vrot.lane.b32.xlu0 %v2206, 8
        %v2548 = vpop.permute.xlu0 %2547
        %2549 = vrot.lane.b32.xlu0 %v2208, 8
        %v2550 = vpop.permute.xlu0 %2549
        %2551 = vrot.lane.b32.xlu0 %v2211, 8
        %v2552 = vpop.permute.xlu0 %2551
        %2553 = vrot.lane.b32.xlu0 %v2213, 8
        %v2554 = vpop.permute.xlu0 %2553
        %2555 = vrot.lane.b32.xlu0 %v2216, 8
        %v2556 = vpop.permute.xlu0 %2555
        %2557 = vrot.lane.b32.xlu0 %v2218, 8
        %v2558 = vpop.permute.xlu0 %2557
        %2559 = vrot.lane.b32.xlu0 %v2221, 8
        %v2560 = vpop.permute.xlu0 %2559
        %2561 = vrot.lane.b32.xlu0 %v2223, 8
        %v2562 = vpop.permute.xlu0 %2561
        %2563 = vrot.lane.b32.xlu0 %v2226, 8
        %v2564 = vpop.permute.xlu0 %2563
        %2565 = vrot.lane.b32.xlu0 %v2228, 8
        %v2566 = vpop.permute.xlu0 %2565
        %2567 = vrot.lane.b32.xlu0 %v2231, 8
        %v2568 = vpop.permute.xlu0 %2567
        %2569 = vrot.lane.b32.xlu0 %v2233, 8
        %v2570 = vpop.permute.xlu0 %2569
        %2571 = vrot.lane.b32.xlu0 %v2236, 8
        %v2572 = vpop.permute.xlu0 %2571
        %2573 = vrot.lane.b32.xlu0 %v2238, 8
        %v2574 = vpop.permute.xlu0 %2573
        %2575 = vrot.lane.b32.xlu0 %v2241, 8
        %v2576 = vpop.permute.xlu0 %2575
        %2577 = vrot.lane.b32.xlu0 %v2243, 8
        %v2578 = vpop.permute.xlu0 %2577
        %2579 = vrot.lane.b32.xlu0 %v2246, 8
        %v2580 = vpop.permute.xlu0 %2579
        %2581 = vrot.lane.b32.xlu0 %v2248, 8
        %v2582 = vpop.permute.xlu0 %2581
        %2583 = vrot.lane.b32.xlu0 %v2251, 8
        %v2584 = vpop.permute.xlu0 %2583
        %2585 = vrot.lane.b32.xlu0 %v2253, 8
        %v2586 = vpop.permute.xlu0 %2585
        %2587 = vrot.lane.b32.xlu0 %v2256, 8
        %v2588 = vpop.permute.xlu0 %2587
        %2589 = vrot.lane.b32.xlu0 %v2258, 8
        %v2590 = vpop.permute.xlu0 %2589
        %2591 = vrot.lane.b32.xlu0 %v2261, 8
        %v2592 = vpop.permute.xlu0 %2591
        %2593 = vrot.lane.b32.xlu0 %v2263, 8
        %v2594 = vpop.permute.xlu0 %2593
        %2595 = vrot.lane.b32.xlu0 %v2266, 8
        %v2596 = vpop.permute.xlu0 %2595
        %2597 = vrot.lane.b32.xlu0 %v2268, 8
        %v2598 = vpop.permute.xlu0 %2597
        %2599 = vrot.lane.b32.xlu0 %v2271, 8
        %v2600 = vpop.permute.xlu0 %2599
        %2601 = vrot.lane.b32.xlu0 %v2273, 8
        %v2602 = vpop.permute.xlu0 %2601
        %2603 = vrot.lane.b32.xlu0 %v2276, 8
        %v2604 = vpop.permute.xlu0 %2603
        %2605 = vrot.lane.b32.xlu0 %v2278, 8
        %v2606 = vpop.permute.xlu0 %2605
        %2607 = vrot.lane.b32.xlu0 %v2281, 8
        %v2608 = vpop.permute.xlu0 %2607
        %2609 = vrot.lane.b32.xlu0 %v2283, 8
        %v2610 = vpop.permute.xlu0 %2609
        %2611 = vrot.lane.b32.xlu0 %v2286, 8
        %v2612 = vpop.permute.xlu0 %2611
        %2613 = vrot.lane.b32.xlu0 %v2288, 8
        %v2614 = vpop.permute.xlu0 %2613
        %2615 = vrot.lane.b32.xlu0 %v2291, 8
        %v2616 = vpop.permute.xlu0 %2615
        %2617 = vrot.lane.b32.xlu0 %v2293, 8
        %v2618 = vpop.permute.xlu0 %2617
        %2619 = vrot.lane.b32.xlu0 %v2296, 8
        %v2620 = vpop.permute.xlu0 %2619
        %2621 = vrot.lane.b32.xlu0 %v2298, 8
        %v2622 = vpop.permute.xlu0 %2621
        %2623 = vrot.lane.b32.xlu0 %v2301, 8
        %v2624 = vpop.permute.xlu0 %2623
        %2625 = vrot.lane.b32.xlu0 %v2303, 8
        %v2626 = vpop.permute.xlu0 %2625
        %2627 = vrot.lane.b32.xlu0 %v2306, 8
        %v2628 = vpop.permute.xlu0 %2627
        %2629 = vrot.lane.b32.xlu0 %v2308, 8
        %v2630 = vpop.permute.xlu0 %2629
        %2631 = vrot.lane.b32.xlu0 %v2311, 8
        %v2632 = vpop.permute.xlu0 %2631
        %2633 = vrot.lane.b32.xlu0 %v2313, 8
        %v2634 = vpop.permute.xlu0 %2633
        %2635 = vrot.lane.b32.xlu0 %v2316, 8
        %v2636 = vpop.permute.xlu0 %2635
        %2637 = vrot.lane.b32.xlu0 %v2318, 8
        %v2638 = vpop.permute.xlu0 %2637
        %2639 = vrot.lane.b32.xlu0 %v2321, 8
        %v2640 = vpop.permute.xlu0 %2639
        %2641 = vrot.lane.b32.xlu0 %v2323, 8
        %v2642 = vpop.permute.xlu0 %2641
        %2643 = vrot.lane.b32.xlu0 %v2326, 8
        %v2644 = vpop.permute.xlu0 %2643
        %2645 = vrot.lane.b32.xlu0 %v2328, 8
        %v2646 = vpop.permute.xlu0 %2645
        %2647 = vrot.lane.b32.xlu0 %v2331, 8
        %v2648 = vpop.permute.xlu0 %2647
        %2649 = vrot.lane.b32.xlu0 %v2333, 8
        %v2650 = vpop.permute.xlu0 %2649
        %2651 = vrot.lane.b32.xlu0 %v2336, 8
        %v2652 = vpop.permute.xlu0 %2651
        %2653 = vrot.lane.b32.xlu0 %v2338, 8
        %v2654 = vpop.permute.xlu0 %2653
        %2655 = vrot.lane.b32.xlu0 %v2341, 8
        %v2656 = vpop.permute.xlu0 %2655
        %2657 = vrot.lane.b32.xlu0 %v2343, 8
        %v2658 = vpop.permute.xlu0 %2657
        %2659 = vrot.lane.b32.xlu0 %v2346, 8
        %v2660 = vpop.permute.xlu0 %2659
        %2661 = vrot.lane.b32.xlu0 %v2348, 8
        %v2662 = vpop.permute.xlu0 %2661
        %2663 = vrot.lane.b32.xlu0 %v2351, 8
        %v2664 = vpop.permute.xlu0 %2663
        %2665 = vrot.lane.b32.xlu0 %v2353, 8
        %v2666 = vpop.permute.xlu0 %2665
        %2667 = vrot.lane.b32.xlu0 %v2356, 8
        %v2668 = vpop.permute.xlu0 %2667
        %2669 = vrot.lane.b32.xlu0 %v2358, 8
        %v2670 = vpop.permute.xlu0 %2669
        %2671 = vrot.lane.b32.xlu0 %v1192, 12
        %v2672 = vpop.permute.xlu0 %2671
        %2673 = vrot.lane.b32.xlu0 %v1193, 12
        %v2674 = vpop.permute.xlu0 %2673
        %2675 = vrot.lane.b32.xlu0 %v1195, 12
        %v2676 = vpop.permute.xlu0 %2675
        %2677 = vrot.lane.b32.xlu0 %v1196, 12
        %v2678 = vpop.permute.xlu0 %2677
        %2679 = vrot.lane.b32.xlu0 %v1198, 12
        %v2680 = vpop.permute.xlu0 %2679
        %2681 = vrot.lane.b32.xlu0 %v1199, 12
        %v2682 = vpop.permute.xlu0 %2681
        %2683 = vrot.lane.b32.xlu0 %v1201, 12
        %v2684 = vpop.permute.xlu0 %2683
        %2685 = vrot.lane.b32.xlu0 %v1202, 12
        %v2686 = vpop.permute.xlu0 %2685
        %2687 = vrot.lane.b32.xlu0 %v1204, 12
        %v2688 = vpop.permute.xlu0 %2687
        %2689 = vrot.lane.b32.xlu0 %v1205, 12
        %v2690 = vpop.permute.xlu0 %2689
        %2691 = vrot.lane.b32.xlu0 %v1207, 12
        %v2692 = vpop.permute.xlu0 %2691
        %2693 = vrot.lane.b32.xlu0 %v1208, 12
        %v2694 = vpop.permute.xlu0 %2693
        %2695 = vrot.lane.b32.xlu0 %v1210, 12
        %v2696 = vpop.permute.xlu0 %2695
        %2697 = vrot.lane.b32.xlu0 %v1211, 12
        %v2698 = vpop.permute.xlu0 %2697
        %2699 = vrot.lane.b32.xlu0 %v1213, 12
        %v2700 = vpop.permute.xlu0 %2699
        %2701 = vrot.lane.b32.xlu0 %v1214, 12
        %v2702 = vpop.permute.xlu0 %2701
        %2703 = vrot.lane.b32.xlu0 %v1216, 12
        %v2704 = vpop.permute.xlu0 %2703
        %2705 = vrot.lane.b32.xlu0 %v1217, 12
        %v2706 = vpop.permute.xlu0 %2705
        %2707 = vrot.lane.b32.xlu0 %v1219, 12
        %v2708 = vpop.permute.xlu0 %2707
        %2709 = vrot.lane.b32.xlu0 %v1220, 12
        %v2710 = vpop.permute.xlu0 %2709
        %2711 = vrot.lane.b32.xlu0 %v1222, 12
        %v2712 = vpop.permute.xlu0 %2711
        %2713 = vrot.lane.b32.xlu0 %v1223, 12
        %v2714 = vpop.permute.xlu0 %2713
        %2715 = vrot.lane.b32.xlu0 %v1225, 12
        %v2716 = vpop.permute.xlu0 %2715
        %2717 = vrot.lane.b32.xlu0 %v1226, 12
        %v2718 = vpop.permute.xlu0 %2717
        %2719 = vrot.lane.b32.xlu0 %v1228, 12
        %v2720 = vpop.permute.xlu0 %2719
        %2721 = vrot.lane.b32.xlu0 %v1229, 12
        %v2722 = vpop.permute.xlu0 %2721
        %2723 = vrot.lane.b32.xlu0 %v1231, 12
        %v2724 = vpop.permute.xlu0 %2723
        %2725 = vrot.lane.b32.xlu0 %v1232, 12
        %v2726 = vpop.permute.xlu0 %2725
        %2727 = vrot.lane.b32.xlu0 %v1234, 12
        %v2728 = vpop.permute.xlu0 %2727
        %2729 = vrot.lane.b32.xlu0 %v1235, 12
        %v2730 = vpop.permute.xlu0 %2729
        %2731 = vrot.lane.b32.xlu0 %v1237, 12
        %v2732 = vpop.permute.xlu0 %2731
        %2733 = vrot.lane.b32.xlu0 %v1238, 12
        %v2734 = vpop.permute.xlu0 %2733
        %2735 = vrot.lane.b32.xlu0 %v1240, 12
        %v2736 = vpop.permute.xlu0 %2735
        %2737 = vrot.lane.b32.xlu0 %v1241, 12
        %v2738 = vpop.permute.xlu0 %2737
        %2739 = vrot.lane.b32.xlu0 %v1243, 12
        %v2740 = vpop.permute.xlu0 %2739
        %2741 = vrot.lane.b32.xlu0 %v1244, 12
        %v2742 = vpop.permute.xlu0 %2741
        %2743 = vrot.lane.b32.xlu0 %v1246, 12
        %v2744 = vpop.permute.xlu0 %2743
        %2745 = vrot.lane.b32.xlu0 %v1247, 12
        %v2746 = vpop.permute.xlu0 %2745
        %2747 = vrot.lane.b32.xlu0 %v1249, 12
        %v2748 = vpop.permute.xlu0 %2747
        %2749 = vrot.lane.b32.xlu0 %v1250, 12
        %v2750 = vpop.permute.xlu0 %2749
        %2751 = vrot.lane.b32.xlu0 %v1252, 12
        %v2752 = vpop.permute.xlu0 %2751
        %2753 = vrot.lane.b32.xlu0 %v1253, 12
        %v2754 = vpop.permute.xlu0 %2753
        %2755 = vrot.lane.b32.xlu0 %v1255, 12
        %v2756 = vpop.permute.xlu0 %2755
        %2757 = vrot.lane.b32.xlu0 %v1256, 12
        %v2758 = vpop.permute.xlu0 %2757
        %2759 = vrot.lane.b32.xlu0 %v1258, 12
        %v2760 = vpop.permute.xlu0 %2759
        %2761 = vrot.lane.b32.xlu0 %v1259, 12
        %v2762 = vpop.permute.xlu0 %2761
        %2763 = vrot.lane.b32.xlu0 %v1261, 12
        %v2764 = vpop.permute.xlu0 %2763
        %2765 = vrot.lane.b32.xlu0 %v1262, 12
        %v2766 = vpop.permute.xlu0 %2765
        %2767 = vrot.lane.b32.xlu0 %v1264, 12
        %v2768 = vpop.permute.xlu0 %2767
        %2769 = vrot.lane.b32.xlu0 %v1265, 12
        %v2770 = vpop.permute.xlu0 %2769
        %2771 = vrot.lane.b32.xlu0 %v1267, 12
        %v2772 = vpop.permute.xlu0 %2771
        %2773 = vrot.lane.b32.xlu0 %v1268, 12
        %v2774 = vpop.permute.xlu0 %2773
        %2775 = vrot.lane.b32.xlu0 %v1270, 12
        %v2776 = vpop.permute.xlu0 %2775
        %2777 = vrot.lane.b32.xlu0 %v1271, 12
        %v2778 = vpop.permute.xlu0 %2777
        %2779 = vrot.lane.b32.xlu0 %v1273, 12
        %v2780 = vpop.permute.xlu0 %2779
        %2781 = vrot.lane.b32.xlu0 %v1274, 12
        %v2782 = vpop.permute.xlu0 %2781
        %2783 = vrot.lane.b32.xlu0 %v1276, 12
        %v2784 = vpop.permute.xlu0 %2783
        %2785 = vrot.lane.b32.xlu0 %v1277, 12
        %v2786 = vpop.permute.xlu0 %2785
        %2787 = vrot.lane.b32.xlu0 %v1279, 12
        %v2788 = vpop.permute.xlu0 %2787
        %2789 = vrot.lane.b32.xlu0 %v1280, 12
        %v2790 = vpop.permute.xlu0 %2789
        %2791 = vrot.lane.b32.xlu0 %v1282, 12
        %v2792 = vpop.permute.xlu0 %2791
        %2793 = vrot.lane.b32.xlu0 %v1283, 12
        %v2794 = vpop.permute.xlu0 %2793
        %2795 = vrot.lane.b32.xlu0 %v1285, 12
        %v2796 = vpop.permute.xlu0 %2795
        %2797 = vrot.lane.b32.xlu0 %v1286, 12
        %v2798 = vpop.permute.xlu0 %2797
        %2799 = vrot.lane.b32.xlu0 %v1493, 16
        %v2800 = vpop.permute.xlu0 %2799
        %2801 = vrot.lane.b32.xlu0 %v1501, 16
        %v2802 = vpop.permute.xlu0 %2801
        %2803 = vrot.lane.b32.xlu0 %v1513, 16
        %v2804 = vpop.permute.xlu0 %2803
        %2805 = vrot.lane.b32.xlu0 %v1521, 16
        %v2806 = vpop.permute.xlu0 %2805
        %2807 = vrot.lane.b32.xlu0 %v1533, 16
        %v2808 = vpop.permute.xlu0 %2807
        %2809 = vrot.lane.b32.xlu0 %v1541, 16
        %v2810 = vpop.permute.xlu0 %2809
        %2811 = vrot.lane.b32.xlu0 %v1553, 16
        %v2812 = vpop.permute.xlu0 %2811
        %2813 = vrot.lane.b32.xlu0 %v1561, 16
        %v2814 = vpop.permute.xlu0 %2813
        %2815 = vrot.lane.b32.xlu0 %v1573, 16
        %v2816 = vpop.permute.xlu0 %2815
        %2817 = vrot.lane.b32.xlu0 %v1581, 16
        %v2818 = vpop.permute.xlu0 %2817
        %2819 = vrot.lane.b32.xlu0 %v1593, 16
        %v2820 = vpop.permute.xlu0 %2819
        %2821 = vrot.lane.b32.xlu0 %v1601, 16
        %v2822 = vpop.permute.xlu0 %2821
        %2823 = vrot.lane.b32.xlu0 %v1613, 16
        %v2824 = vpop.permute.xlu0 %2823
        %2825 = vrot.lane.b32.xlu0 %v1621, 16
        %v2826 = vpop.permute.xlu0 %2825
        %2827 = vrot.lane.b32.xlu0 %v1633, 16
        %v2828 = vpop.permute.xlu0 %2827
        %2829 = vrot.lane.b32.xlu0 %v1641, 16
        %v2830 = vpop.permute.xlu0 %2829
        %2831 = vrot.lane.b32.xlu0 %v1653, 16
        %v2832 = vpop.permute.xlu0 %2831
        %2833 = vrot.lane.b32.xlu0 %v1661, 16
        %v2834 = vpop.permute.xlu0 %2833
        %2835 = vrot.lane.b32.xlu0 %v1673, 16
        %v2836 = vpop.permute.xlu0 %2835
        %2837 = vrot.lane.b32.xlu0 %v1681, 16
        %v2838 = vpop.permute.xlu0 %2837
        %2839 = vrot.lane.b32.xlu0 %v1693, 16
        %v2840 = vpop.permute.xlu0 %2839
        %2841 = vrot.lane.b32.xlu0 %v1701, 16
        %v2842 = vpop.permute.xlu0 %2841
        %2843 = vrot.lane.b32.xlu0 %v1713, 16
        %v2844 = vpop.permute.xlu0 %2843
        %2845 = vrot.lane.b32.xlu0 %v1721, 16
        %v2846 = vpop.permute.xlu0 %2845
        %2847 = vrot.lane.b32.xlu0 %v1733, 16
        %v2848 = vpop.permute.xlu0 %2847
        %2849 = vrot.lane.b32.xlu0 %v1741, 16
        %v2850 = vpop.permute.xlu0 %2849
        %2851 = vrot.lane.b32.xlu0 %v1753, 16
        %v2852 = vpop.permute.xlu0 %2851
        %2853 = vrot.lane.b32.xlu0 %v1761, 16
        %v2854 = vpop.permute.xlu0 %2853
        %2855 = vrot.lane.b32.xlu0 %v1773, 16
        %v2856 = vpop.permute.xlu0 %2855
        %2857 = vrot.lane.b32.xlu0 %v1781, 16
        %v2858 = vpop.permute.xlu0 %2857
        %2859 = vrot.lane.b32.xlu0 %v1793, 16
        %v2860 = vpop.permute.xlu0 %2859
        %2861 = vrot.lane.b32.xlu0 %v1801, 16
        %v2862 = vpop.permute.xlu0 %2861
        %2863 = vrot.lane.b32.xlu0 %v1813, 16
        %v2864 = vpop.permute.xlu0 %2863
        %2865 = vrot.lane.b32.xlu0 %v1821, 16
        %v2866 = vpop.permute.xlu0 %2865
        %2867 = vrot.lane.b32.xlu0 %v1833, 16
        %v2868 = vpop.permute.xlu0 %2867
        %2869 = vrot.lane.b32.xlu0 %v1841, 16
        %v2870 = vpop.permute.xlu0 %2869
        %2871 = vrot.lane.b32.xlu0 %v1853, 16
        %v2872 = vpop.permute.xlu0 %2871
        %2873 = vrot.lane.b32.xlu0 %v1861, 16
        %v2874 = vpop.permute.xlu0 %2873
        %2875 = vrot.lane.b32.xlu0 %v1873, 16
        %v2876 = vpop.permute.xlu0 %2875
        %2877 = vrot.lane.b32.xlu0 %v1881, 16
        %v2878 = vpop.permute.xlu0 %2877
        %2879 = vrot.lane.b32.xlu0 %v1893, 16
        %v2880 = vpop.permute.xlu0 %2879
        %2881 = vrot.lane.b32.xlu0 %v1901, 16
        %v2882 = vpop.permute.xlu0 %2881
        %2883 = vrot.lane.b32.xlu0 %v1913, 16
        %v2884 = vpop.permute.xlu0 %2883
        %2885 = vrot.lane.b32.xlu0 %v1921, 16
        %v2886 = vpop.permute.xlu0 %2885
        %2887 = vrot.lane.b32.xlu0 %v1933, 16
        %v2888 = vpop.permute.xlu0 %2887
        %2889 = vrot.lane.b32.xlu0 %v1941, 16
        %v2890 = vpop.permute.xlu0 %2889
        %2891 = vrot.lane.b32.xlu0 %v1953, 16
        %v2892 = vpop.permute.xlu0 %2891
        %2893 = vrot.lane.b32.xlu0 %v1961, 16
        %v2894 = vpop.permute.xlu0 %2893
        %2895 = vrot.lane.b32.xlu0 %v1973, 16
        %v2896 = vpop.permute.xlu0 %2895
        %2897 = vrot.lane.b32.xlu0 %v1981, 16
        %v2898 = vpop.permute.xlu0 %2897
        %2899 = vrot.lane.b32.xlu0 %v1993, 16
        %v2900 = vpop.permute.xlu0 %2899
        %2901 = vrot.lane.b32.xlu0 %v2001, 16
        %v2902 = vpop.permute.xlu0 %2901
        %2903 = vrot.lane.b32.xlu0 %v2013, 16
        %v2904 = vpop.permute.xlu0 %2903
        %2905 = vrot.lane.b32.xlu0 %v2021, 16
        %v2906 = vpop.permute.xlu0 %2905
        %2907 = vrot.lane.b32.xlu0 %v2033, 16
        %v2908 = vpop.permute.xlu0 %2907
        %2909 = vrot.lane.b32.xlu0 %v2041, 16
        %v2910 = vpop.permute.xlu0 %2909
        %2911 = vrot.lane.b32.xlu0 %v2053, 16
        %v2912 = vpop.permute.xlu0 %2911
        %2913 = vrot.lane.b32.xlu0 %v2061, 16
        %v2914 = vpop.permute.xlu0 %2913
        %2915 = vrot.lane.b32.xlu0 %v2073, 16
        %v2916 = vpop.permute.xlu0 %2915
        %2917 = vrot.lane.b32.xlu0 %v2081, 16
        %v2918 = vpop.permute.xlu0 %2917
        %2919 = vrot.lane.b32.xlu0 %v2093, 16
        %v2920 = vpop.permute.xlu0 %2919
        %2921 = vrot.lane.b32.xlu0 %v2101, 16
        %v2922 = vpop.permute.xlu0 %2921
        %2923 = vrot.lane.b32.xlu0 %v2370, 16
        %v2924 = vpop.permute.xlu0 %2923
        %2925 = vrot.lane.b32.xlu0 %v2378, 16
        %v2926 = vpop.permute.xlu0 %2925
        %2927 = vrot.lane.b32.xlu0 %v2206, 20
        %v2928 = vpop.permute.xlu0 %2927
        %2929 = vrot.lane.b32.xlu0 %v2208, 20
        %v2930 = vpop.permute.xlu0 %2929
        %2931 = vrot.lane.b32.xlu0 %v2211, 20
        %v2932 = vpop.permute.xlu0 %2931
        %2933 = vrot.lane.b32.xlu0 %v2213, 20
        %v2934 = vpop.permute.xlu0 %2933
        %2935 = vrot.lane.b32.xlu0 %v2216, 20
        %v2936 = vpop.permute.xlu0 %2935
        %2937 = vrot.lane.b32.xlu0 %v2218, 20
        %v2938 = vpop.permute.xlu0 %2937
        %2939 = vrot.lane.b32.xlu0 %v2221, 20
        %v2940 = vpop.permute.xlu0 %2939
        %2941 = vrot.lane.b32.xlu0 %v2223, 20
        %v2942 = vpop.permute.xlu0 %2941
        %2943 = vrot.lane.b32.xlu0 %v2226, 20
        %v2944 = vpop.permute.xlu0 %2943
        %2945 = vrot.lane.b32.xlu0 %v2228, 20
        %v2946 = vpop.permute.xlu0 %2945
        %2947 = vrot.lane.b32.xlu0 %v2231, 20
        %v2948 = vpop.permute.xlu0 %2947
        %2949 = vrot.lane.b32.xlu0 %v2233, 20
        %v2950 = vpop.permute.xlu0 %2949
        %2951 = vrot.lane.b32.xlu0 %v2236, 20
        %v2952 = vpop.permute.xlu0 %2951
        %2953 = vrot.lane.b32.xlu0 %v2238, 20
        %v2954 = vpop.permute.xlu0 %2953
        %2955 = vrot.lane.b32.xlu0 %v2241, 20
        %v2956 = vpop.permute.xlu0 %2955
        %2957 = vrot.lane.b32.xlu0 %v2243, 20
        %v2958 = vpop.permute.xlu0 %2957
        %2959 = vrot.lane.b32.xlu0 %v2246, 20
        %v2960 = vpop.permute.xlu0 %2959
        %2961 = vrot.lane.b32.xlu0 %v2248, 20
        %v2962 = vpop.permute.xlu0 %2961
        %2963 = vrot.lane.b32.xlu0 %v2251, 20
        %v2964 = vpop.permute.xlu0 %2963
        %2965 = vrot.lane.b32.xlu0 %v2253, 20
        %v2966 = vpop.permute.xlu0 %2965
        %2967 = vrot.lane.b32.xlu0 %v2256, 20
        %v2968 = vpop.permute.xlu0 %2967
        %2969 = vrot.lane.b32.xlu0 %v2258, 20
        %v2970 = vpop.permute.xlu0 %2969
        %2971 = vrot.lane.b32.xlu0 %v2261, 20
        %v2972 = vpop.permute.xlu0 %2971
        %2973 = vrot.lane.b32.xlu0 %v2263, 20
        %v2974 = vpop.permute.xlu0 %2973
        %2975 = vrot.lane.b32.xlu0 %v2266, 20
        %v2976 = vpop.permute.xlu0 %2975
        %2977 = vrot.lane.b32.xlu0 %v2268, 20
        %v2978 = vpop.permute.xlu0 %2977
        %2979 = vrot.lane.b32.xlu0 %v2271, 20
        %v2980 = vpop.permute.xlu0 %2979
        %2981 = vrot.lane.b32.xlu0 %v2273, 20
        %v2982 = vpop.permute.xlu0 %2981
        %2983 = vrot.lane.b32.xlu0 %v2276, 20
        %v2984 = vpop.permute.xlu0 %2983
        %2985 = vrot.lane.b32.xlu0 %v2278, 20
        %v2986 = vpop.permute.xlu0 %2985
        %2987 = vrot.lane.b32.xlu0 %v2281, 20
        %v2988 = vpop.permute.xlu0 %2987
        %2989 = vrot.lane.b32.xlu0 %v2283, 20
        %v2990 = vpop.permute.xlu0 %2989
        %2991 = vrot.lane.b32.xlu0 %v2286, 20
        %v2992 = vpop.permute.xlu0 %2991
        %2993 = vrot.lane.b32.xlu0 %v2288, 20
        %v2994 = vpop.permute.xlu0 %2993
        %2995 = vrot.lane.b32.xlu0 %v2291, 20
        %v2996 = vpop.permute.xlu0 %2995
        %2997 = vrot.lane.b32.xlu0 %v2293, 20
        %v2998 = vpop.permute.xlu0 %2997
        %2999 = vrot.lane.b32.xlu0 %v2296, 20
        %v3000 = vpop.permute.xlu0 %2999
        %3001 = vrot.lane.b32.xlu0 %v2298, 20
        %v3002 = vpop.permute.xlu0 %3001
        %3003 = vrot.lane.b32.xlu0 %v2301, 20
        %v3004 = vpop.permute.xlu0 %3003
        %3005 = vrot.lane.b32.xlu0 %v2303, 20
        %v3006 = vpop.permute.xlu0 %3005
        %3007 = vrot.lane.b32.xlu0 %v2306, 20
        %v3008 = vpop.permute.xlu0 %3007
        %3009 = vrot.lane.b32.xlu0 %v2308, 20
        %v3010 = vpop.permute.xlu0 %3009
        %3011 = vrot.lane.b32.xlu0 %v2311, 20
        %v3012 = vpop.permute.xlu0 %3011
        %3013 = vrot.lane.b32.xlu0 %v2313, 20
        %v3014 = vpop.permute.xlu0 %3013
        %3015 = vrot.lane.b32.xlu0 %v2316, 20
        %v3016 = vpop.permute.xlu0 %3015
        %3017 = vrot.lane.b32.xlu0 %v2318, 20
        %v3018 = vpop.permute.xlu0 %3017
        %3019 = vrot.lane.b32.xlu0 %v2321, 20
        %v3020 = vpop.permute.xlu0 %3019
        %3021 = vrot.lane.b32.xlu0 %v2323, 20
        %v3022 = vpop.permute.xlu0 %3021
        %3023 = vrot.lane.b32.xlu0 %v2326, 20
        %v3024 = vpop.permute.xlu0 %3023
        %3025 = vrot.lane.b32.xlu0 %v2328, 20
        %v3026 = vpop.permute.xlu0 %3025
        %3027 = vrot.lane.b32.xlu0 %v2331, 20
        %v3028 = vpop.permute.xlu0 %3027
        %3029 = vrot.lane.b32.xlu0 %v2333, 20
        %v3030 = vpop.permute.xlu0 %3029
        %3031 = vrot.lane.b32.xlu0 %v2336, 20
        %v3032 = vpop.permute.xlu0 %3031
        %3033 = vrot.lane.b32.xlu0 %v2338, 20
        %v3034 = vpop.permute.xlu0 %3033
        %3035 = vrot.lane.b32.xlu0 %v2341, 20
        %v3036 = vpop.permute.xlu0 %3035
        %3037 = vrot.lane.b32.xlu0 %v2343, 20
        %v3038 = vpop.permute.xlu0 %3037
        %3039 = vrot.lane.b32.xlu0 %v2346, 20
        %v3040 = vpop.permute.xlu0 %3039
        %3041 = vrot.lane.b32.xlu0 %v2348, 20
        %v3042 = vpop.permute.xlu0 %3041
        %3043 = vrot.lane.b32.xlu0 %v2351, 20
        %v3044 = vpop.permute.xlu0 %3043
        %3045 = vrot.lane.b32.xlu0 %v2353, 20
        %v3046 = vpop.permute.xlu0 %3045
        %3047 = vrot.lane.b32.xlu0 %v2356, 20
        %v3048 = vpop.permute.xlu0 %3047
        %3049 = vrot.lane.b32.xlu0 %v2358, 20
        %v3050 = vpop.permute.xlu0 %3049
        %3051 = vrot.lane.b32.xlu0 %v2384, 20
        %v3052 = vpop.permute.xlu0 %3051
        %3053 = vrot.lane.b32.xlu0 %v2386, 20
        %v3054 = vpop.permute.xlu0 %3053
        %3055 = vrot.lane.b32.xlu0 %v1195, 24
        %v3056 = vpop.permute.xlu0 %3055
        %3057 = vrot.lane.b32.xlu0 %v1196, 24
        %v3058 = vpop.permute.xlu0 %3057
        %3059 = vrot.lane.b32.xlu0 %v1198, 24
        %v3060 = vpop.permute.xlu0 %3059
        %3061 = vrot.lane.b32.xlu0 %v1199, 24
        %v3062 = vpop.permute.xlu0 %3061
        %3063 = vrot.lane.b32.xlu0 %v1201, 24
        %v3064 = vpop.permute.xlu0 %3063
        %3065 = vrot.lane.b32.xlu0 %v1202, 24
        %v3066 = vpop.permute.xlu0 %3065
        %3067 = vrot.lane.b32.xlu0 %v1204, 24
        %v3068 = vpop.permute.xlu0 %3067
        %3069 = vrot.lane.b32.xlu0 %v1205, 24
        %v3070 = vpop.permute.xlu0 %3069
        %3071 = vrot.lane.b32.xlu0 %v1207, 24
        %v3072 = vpop.permute.xlu0 %3071
        %3073 = vrot.lane.b32.xlu0 %v1208, 24
        %v3074 = vpop.permute.xlu0 %3073
        %3075 = vrot.lane.b32.xlu0 %v1210, 24
        %v3076 = vpop.permute.xlu0 %3075
        %3077 = vrot.lane.b32.xlu0 %v1211, 24
        %v3078 = vpop.permute.xlu0 %3077
        %3079 = vrot.lane.b32.xlu0 %v1213, 24
        %v3080 = vpop.permute.xlu0 %3079
        %3081 = vrot.lane.b32.xlu0 %v1214, 24
        %v3082 = vpop.permute.xlu0 %3081
        %3083 = vrot.lane.b32.xlu0 %v1216, 24
        %v3084 = vpop.permute.xlu0 %3083
        %3085 = vrot.lane.b32.xlu0 %v1217, 24
        %v3086 = vpop.permute.xlu0 %3085
        %3087 = vrot.lane.b32.xlu0 %v1219, 24
        %v3088 = vpop.permute.xlu0 %3087
        %3089 = vrot.lane.b32.xlu0 %v1220, 24
        %v3090 = vpop.permute.xlu0 %3089
        %3091 = vrot.lane.b32.xlu0 %v1222, 24
        %v3092 = vpop.permute.xlu0 %3091
        %3093 = vrot.lane.b32.xlu0 %v1223, 24
        %v3094 = vpop.permute.xlu0 %3093
        %3095 = vrot.lane.b32.xlu0 %v1225, 24
        %v3096 = vpop.permute.xlu0 %3095
        %3097 = vrot.lane.b32.xlu0 %v1226, 24
        %v3098 = vpop.permute.xlu0 %3097
        %3099 = vrot.lane.b32.xlu0 %v1228, 24
        %v3100 = vpop.permute.xlu0 %3099
        %3101 = vrot.lane.b32.xlu0 %v1229, 24
        %v3102 = vpop.permute.xlu0 %3101
        %3103 = vrot.lane.b32.xlu0 %v1231, 24
        %v3104 = vpop.permute.xlu0 %3103
        %3105 = vrot.lane.b32.xlu0 %v1232, 24
        %v3106 = vpop.permute.xlu0 %3105
        %3107 = vrot.lane.b32.xlu0 %v1234, 24
        %v3108 = vpop.permute.xlu0 %3107
        %3109 = vrot.lane.b32.xlu0 %v1235, 24
        %v3110 = vpop.permute.xlu0 %3109
        %3111 = vrot.lane.b32.xlu0 %v1237, 24
        %v3112 = vpop.permute.xlu0 %3111
        %3113 = vrot.lane.b32.xlu0 %v1238, 24
        %v3114 = vpop.permute.xlu0 %3113
        %3115 = vrot.lane.b32.xlu0 %v1240, 24
        %v3116 = vpop.permute.xlu0 %3115
        %3117 = vrot.lane.b32.xlu0 %v1241, 24
        %v3118 = vpop.permute.xlu0 %3117
        %3119 = vrot.lane.b32.xlu0 %v1243, 24
        %v3120 = vpop.permute.xlu0 %3119
        %3121 = vrot.lane.b32.xlu0 %v1244, 24
        %v3122 = vpop.permute.xlu0 %3121
        %3123 = vrot.lane.b32.xlu0 %v1246, 24
        %v3124 = vpop.permute.xlu0 %3123
        %3125 = vrot.lane.b32.xlu0 %v1247, 24
        %v3126 = vpop.permute.xlu0 %3125
        %3127 = vrot.lane.b32.xlu0 %v1249, 24
        %v3128 = vpop.permute.xlu0 %3127
        %3129 = vrot.lane.b32.xlu0 %v1250, 24
        %v3130 = vpop.permute.xlu0 %3129
        %3131 = vrot.lane.b32.xlu0 %v1252, 24
        %v3132 = vpop.permute.xlu0 %3131
        %3133 = vrot.lane.b32.xlu0 %v1253, 24
        %v3134 = vpop.permute.xlu0 %3133
        %3135 = vrot.lane.b32.xlu0 %v1255, 24
        %v3136 = vpop.permute.xlu0 %3135
        %3137 = vrot.lane.b32.xlu0 %v1256, 24
        %v3138 = vpop.permute.xlu0 %3137
        %3139 = vrot.lane.b32.xlu0 %v1258, 24
        %v3140 = vpop.permute.xlu0 %3139
        %3141 = vrot.lane.b32.xlu0 %v1259, 24
        %v3142 = vpop.permute.xlu0 %3141
        %3143 = vrot.lane.b32.xlu0 %v1261, 24
        %v3144 = vpop.permute.xlu0 %3143
        %3145 = vrot.lane.b32.xlu0 %v1262, 24
        %v3146 = vpop.permute.xlu0 %3145
        %3147 = vrot.lane.b32.xlu0 %v1264, 24
        %v3148 = vpop.permute.xlu0 %3147
        %3149 = vrot.lane.b32.xlu0 %v1265, 24
        %v3150 = vpop.permute.xlu0 %3149
        %3151 = vrot.lane.b32.xlu0 %v1267, 24
        %v3152 = vpop.permute.xlu0 %3151
        %3153 = vrot.lane.b32.xlu0 %v1268, 24
        %v3154 = vpop.permute.xlu0 %3153
        %3155 = vrot.lane.b32.xlu0 %v1270, 24
        %v3156 = vpop.permute.xlu0 %3155
        %3157 = vrot.lane.b32.xlu0 %v1271, 24
        %v3158 = vpop.permute.xlu0 %3157
        %3159 = vrot.lane.b32.xlu0 %v1273, 24
        %v3160 = vpop.permute.xlu0 %3159
        %3161 = vrot.lane.b32.xlu0 %v1274, 24
        %v3162 = vpop.permute.xlu0 %3161
        %3163 = vrot.lane.b32.xlu0 %v1276, 24
        %v3164 = vpop.permute.xlu0 %3163
        %3165 = vrot.lane.b32.xlu0 %v1277, 24
        %v3166 = vpop.permute.xlu0 %3165
        %3167 = vrot.lane.b32.xlu0 %v1279, 24
        %v3168 = vpop.permute.xlu0 %3167
        %3169 = vrot.lane.b32.xlu0 %v1280, 24
        %v3170 = vpop.permute.xlu0 %3169
        %3171 = vrot.lane.b32.xlu0 %v1282, 24
        %v3172 = vpop.permute.xlu0 %3171
        %3173 = vrot.lane.b32.xlu0 %v1283, 24
        %v3174 = vpop.permute.xlu0 %3173
        %3175 = vrot.lane.b32.xlu0 %v1285, 24
        %v3176 = vpop.permute.xlu0 %3175
        %3177 = vrot.lane.b32.xlu0 %v1286, 24
        %v3178 = vpop.permute.xlu0 %3177
        %3179 = vrot.lane.b32.xlu0 %v1288, 24
        %v3180 = vpop.permute.xlu0 %3179
        %3181 = vrot.lane.b32.xlu0 %v1289, 24
        %v3182 = vpop.permute.xlu0 %3181
        %3183 = vrot.lane.b32.xlu0 %v1513, 28
        %v3184 = vpop.permute.xlu0 %3183
        %3185 = vrot.lane.b32.xlu0 %v1521, 28
        %v3186 = vpop.permute.xlu0 %3185
        %3187 = vrot.lane.b32.xlu0 %v1533, 28
        %v3188 = vpop.permute.xlu0 %3187
        %3189 = vrot.lane.b32.xlu0 %v1541, 28
        %v3190 = vpop.permute.xlu0 %3189
        %3191 = vrot.lane.b32.xlu0 %v1553, 28
        %v3192 = vpop.permute.xlu0 %3191
        %3193 = vrot.lane.b32.xlu0 %v1561, 28
        %v3194 = vpop.permute.xlu0 %3193
        %3195 = vrot.lane.b32.xlu0 %v1573, 28
        %v3196 = vpop.permute.xlu0 %3195
        %3197 = vrot.lane.b32.xlu0 %v1581, 28
        %v3198 = vpop.permute.xlu0 %3197
        %3199 = vrot.lane.b32.xlu0 %v1593, 28
        %v3200 = vpop.permute.xlu0 %3199
        %3201 = vrot.lane.b32.xlu0 %v1601, 28
        %v3202 = vpop.permute.xlu0 %3201
        %3203 = vrot.lane.b32.xlu0 %v1613, 28
        %v3204 = vpop.permute.xlu0 %3203
        %3205 = vrot.lane.b32.xlu0 %v1621, 28
        %v3206 = vpop.permute.xlu0 %3205
        %3207 = vrot.lane.b32.xlu0 %v1633, 28
        %v3208 = vpop.permute.xlu0 %3207
        %3209 = vrot.lane.b32.xlu0 %v1641, 28
        %v3210 = vpop.permute.xlu0 %3209
        %3211 = vrot.lane.b32.xlu0 %v1653, 28
        %v3212 = vpop.permute.xlu0 %3211
        %3213 = vrot.lane.b32.xlu0 %v1661, 28
        %v3214 = vpop.permute.xlu0 %3213
        %3215 = vrot.lane.b32.xlu0 %v1673, 28
        %v3216 = vpop.permute.xlu0 %3215
        %3217 = vrot.lane.b32.xlu0 %v1681, 28
        %v3218 = vpop.permute.xlu0 %3217
        %3219 = vrot.lane.b32.xlu0 %v1693, 28
        %v3220 = vpop.permute.xlu0 %3219
        %3221 = vrot.lane.b32.xlu0 %v1701, 28
        %v3222 = vpop.permute.xlu0 %3221
        %3223 = vrot.lane.b32.xlu0 %v1713, 28
        %v3224 = vpop.permute.xlu0 %3223
        %3225 = vrot.lane.b32.xlu0 %v1721, 28
        %v3226 = vpop.permute.xlu0 %3225
        %3227 = vrot.lane.b32.xlu0 %v1733, 28
        %v3228 = vpop.permute.xlu0 %3227
        %3229 = vrot.lane.b32.xlu0 %v1741, 28
        %v3230 = vpop.permute.xlu0 %3229
        %3231 = vrot.lane.b32.xlu0 %v1753, 28
        %v3232 = vpop.permute.xlu0 %3231
        %3233 = vrot.lane.b32.xlu0 %v1761, 28
        %v3234 = vpop.permute.xlu0 %3233
        %3235 = vrot.lane.b32.xlu0 %v1773, 28
        %v3236 = vpop.permute.xlu0 %3235
        %3237 = vrot.lane.b32.xlu0 %v1781, 28
        %v3238 = vpop.permute.xlu0 %3237
        %3239 = vrot.lane.b32.xlu0 %v1793, 28
        %v3240 = vpop.permute.xlu0 %3239
        %3241 = vrot.lane.b32.xlu0 %v1801, 28
        %v3242 = vpop.permute.xlu0 %3241
        %3243 = vrot.lane.b32.xlu0 %v1813, 28
        %v3244 = vpop.permute.xlu0 %3243
        %3245 = vrot.lane.b32.xlu0 %v1821, 28
        %v3246 = vpop.permute.xlu0 %3245
        %3247 = vrot.lane.b32.xlu0 %v1833, 28
        %v3248 = vpop.permute.xlu0 %3247
        %3249 = vrot.lane.b32.xlu0 %v1841, 28
        %v3250 = vpop.permute.xlu0 %3249
        %3251 = vrot.lane.b32.xlu0 %v1853, 28
        %v3252 = vpop.permute.xlu0 %3251
        %3253 = vrot.lane.b32.xlu0 %v1861, 28
        %v3254 = vpop.permute.xlu0 %3253
        %3255 = vrot.lane.b32.xlu0 %v1873, 28
        %v3256 = vpop.permute.xlu0 %3255
        %3257 = vrot.lane.b32.xlu0 %v1881, 28
        %v3258 = vpop.permute.xlu0 %3257
        %3259 = vrot.lane.b32.xlu0 %v1893, 28
        %v3260 = vpop.permute.xlu0 %3259
        %3261 = vrot.lane.b32.xlu0 %v1901, 28
        %v3262 = vpop.permute.xlu0 %3261
        %3263 = vrot.lane.b32.xlu0 %v1913, 28
        %v3264 = vpop.permute.xlu0 %3263
        %3265 = vrot.lane.b32.xlu0 %v1921, 28
        %v3266 = vpop.permute.xlu0 %3265
        %3267 = vrot.lane.b32.xlu0 %v1933, 28
        %v3268 = vpop.permute.xlu0 %3267
        %3269 = vrot.lane.b32.xlu0 %v1941, 28
        %v3270 = vpop.permute.xlu0 %3269
        %3271 = vrot.lane.b32.xlu0 %v1953, 28
        %v3272 = vpop.permute.xlu0 %3271
        %3273 = vrot.lane.b32.xlu0 %v1961, 28
        %v3274 = vpop.permute.xlu0 %3273
        %3275 = vrot.lane.b32.xlu0 %v1973, 28
        %v3276 = vpop.permute.xlu0 %3275
        %3277 = vrot.lane.b32.xlu0 %v1981, 28
        %v3278 = vpop.permute.xlu0 %3277
        %3279 = vrot.lane.b32.xlu0 %v1993, 28
        %v3280 = vpop.permute.xlu0 %3279
        %3281 = vrot.lane.b32.xlu0 %v2001, 28
        %v3282 = vpop.permute.xlu0 %3281
        %3283 = vrot.lane.b32.xlu0 %v2013, 28
        %v3284 = vpop.permute.xlu0 %3283
        %3285 = vrot.lane.b32.xlu0 %v2021, 28
        %v3286 = vpop.permute.xlu0 %3285
        %3287 = vrot.lane.b32.xlu0 %v2033, 28
        %v3288 = vpop.permute.xlu0 %3287
        %3289 = vrot.lane.b32.xlu0 %v2041, 28
        %v3290 = vpop.permute.xlu0 %3289
        %3291 = vrot.lane.b32.xlu0 %v2053, 28
        %v3292 = vpop.permute.xlu0 %3291
        %3293 = vrot.lane.b32.xlu0 %v2061, 28
        %v3294 = vpop.permute.xlu0 %3293
        %3295 = vrot.lane.b32.xlu0 %v2073, 28
        %v3296 = vpop.permute.xlu0 %3295
        %3297 = vrot.lane.b32.xlu0 %v2081, 28
        %v3298 = vpop.permute.xlu0 %3297
        %3299 = vrot.lane.b32.xlu0 %v2093, 28
        %v3300 = vpop.permute.xlu0 %3299
        %3301 = vrot.lane.b32.xlu0 %v2101, 28
        %v3302 = vpop.permute.xlu0 %3301
        %3303 = vrot.lane.b32.xlu0 %v2370, 28
        %v3304 = vpop.permute.xlu0 %3303
        %3305 = vrot.lane.b32.xlu0 %v2378, 28
        %v3306 = vpop.permute.xlu0 %3305
        %3307 = vrot.lane.b32.xlu0 %v2398, 28
        %v3308 = vpop.permute.xlu0 %3307
        %3309 = vrot.lane.b32.xlu0 %v2406, 28
        %v3310 = vpop.permute.xlu0 %3309
        %3311 = vrot.lane.b32.xlu0 %v2211, 32
        %v3312 = vpop.permute.xlu0 %3311
        %3313 = vrot.lane.b32.xlu0 %v2213, 32
        %v3314 = vpop.permute.xlu0 %3313
        %3315 = vrot.lane.b32.xlu0 %v2216, 32
        %v3316 = vpop.permute.xlu0 %3315
        %3317 = vrot.lane.b32.xlu0 %v2218, 32
        %v3318 = vpop.permute.xlu0 %3317
        %3319 = vrot.lane.b32.xlu0 %v2221, 32
        %v3320 = vpop.permute.xlu0 %3319
        %3321 = vrot.lane.b32.xlu0 %v2223, 32
        %v3322 = vpop.permute.xlu0 %3321
        %3323 = vrot.lane.b32.xlu0 %v2226, 32
        %v3324 = vpop.permute.xlu0 %3323
        %3325 = vrot.lane.b32.xlu0 %v2228, 32
        %v3326 = vpop.permute.xlu0 %3325
        %3327 = vrot.lane.b32.xlu0 %v2231, 32
        %v3328 = vpop.permute.xlu0 %3327
        %3329 = vrot.lane.b32.xlu0 %v2233, 32
        %v3330 = vpop.permute.xlu0 %3329
        %3331 = vrot.lane.b32.xlu0 %v2236, 32
        %v3332 = vpop.permute.xlu0 %3331
        %3333 = vrot.lane.b32.xlu0 %v2238, 32
        %v3334 = vpop.permute.xlu0 %3333
        %3335 = vrot.lane.b32.xlu0 %v2241, 32
        %v3336 = vpop.permute.xlu0 %3335
        %3337 = vrot.lane.b32.xlu0 %v2243, 32
        %v3338 = vpop.permute.xlu0 %3337
        %3339 = vrot.lane.b32.xlu0 %v2246, 32
        %v3340 = vpop.permute.xlu0 %3339
        %3341 = vrot.lane.b32.xlu0 %v2248, 32
        %v3342 = vpop.permute.xlu0 %3341
        %3343 = vrot.lane.b32.xlu0 %v2251, 32
        %v3344 = vpop.permute.xlu0 %3343
        %3345 = vrot.lane.b32.xlu0 %v2253, 32
        %v3346 = vpop.permute.xlu0 %3345
        %3347 = vrot.lane.b32.xlu0 %v2256, 32
        %v3348 = vpop.permute.xlu0 %3347
        %3349 = vrot.lane.b32.xlu0 %v2258, 32
        %v3350 = vpop.permute.xlu0 %3349
        %3351 = vrot.lane.b32.xlu0 %v2261, 32
        %v3352 = vpop.permute.xlu0 %3351
        %3353 = vrot.lane.b32.xlu0 %v2263, 32
        %v3354 = vpop.permute.xlu0 %3353
        %3355 = vrot.lane.b32.xlu0 %v2266, 32
        %v3356 = vpop.permute.xlu0 %3355
        %3357 = vrot.lane.b32.xlu0 %v2268, 32
        %v3358 = vpop.permute.xlu0 %3357
        %3359 = vrot.lane.b32.xlu0 %v2271, 32
        %v3360 = vpop.permute.xlu0 %3359
        %3361 = vrot.lane.b32.xlu0 %v2273, 32
        %v3362 = vpop.permute.xlu0 %3361
        %3363 = vrot.lane.b32.xlu0 %v2276, 32
        %v3364 = vpop.permute.xlu0 %3363
        %3365 = vrot.lane.b32.xlu0 %v2278, 32
        %v3366 = vpop.permute.xlu0 %3365
        %3367 = vrot.lane.b32.xlu0 %v2281, 32
        %v3368 = vpop.permute.xlu0 %3367
        %3369 = vrot.lane.b32.xlu0 %v2283, 32
        %v3370 = vpop.permute.xlu0 %3369
        %3371 = vrot.lane.b32.xlu0 %v2286, 32
        %v3372 = vpop.permute.xlu0 %3371
        %3373 = vrot.lane.b32.xlu0 %v2288, 32
        %v3374 = vpop.permute.xlu0 %3373
        %3375 = vrot.lane.b32.xlu0 %v2291, 32
        %v3376 = vpop.permute.xlu0 %3375
        %3377 = vrot.lane.b32.xlu0 %v2293, 32
        %v3378 = vpop.permute.xlu0 %3377
        %3379 = vrot.lane.b32.xlu0 %v2296, 32
        %v3380 = vpop.permute.xlu0 %3379
        %3381 = vrot.lane.b32.xlu0 %v2298, 32
        %v3382 = vpop.permute.xlu0 %3381
        %3383 = vrot.lane.b32.xlu0 %v2301, 32
        %v3384 = vpop.permute.xlu0 %3383
        %3385 = vrot.lane.b32.xlu0 %v2303, 32
        %v3386 = vpop.permute.xlu0 %3385
        %3387 = vrot.lane.b32.xlu0 %v2306, 32
        %v3388 = vpop.permute.xlu0 %3387
        %3389 = vrot.lane.b32.xlu0 %v2308, 32
        %v3390 = vpop.permute.xlu0 %3389
        %3391 = vrot.lane.b32.xlu0 %v2311, 32
        %v3392 = vpop.permute.xlu0 %3391
        %3393 = vrot.lane.b32.xlu0 %v2313, 32
        %v3394 = vpop.permute.xlu0 %3393
        %3395 = vrot.lane.b32.xlu0 %v2316, 32
        %v3396 = vpop.permute.xlu0 %3395
        %3397 = vrot.lane.b32.xlu0 %v2318, 32
        %v3398 = vpop.permute.xlu0 %3397
        %3399 = vrot.lane.b32.xlu0 %v2321, 32
        %v3400 = vpop.permute.xlu0 %3399
        %3401 = vrot.lane.b32.xlu0 %v2323, 32
        %v3402 = vpop.permute.xlu0 %3401
        %3403 = vrot.lane.b32.xlu0 %v2326, 32
        %v3404 = vpop.permute.xlu0 %3403
        %3405 = vrot.lane.b32.xlu0 %v2328, 32
        %v3406 = vpop.permute.xlu0 %3405
        %3407 = vrot.lane.b32.xlu0 %v2331, 32
        %v3408 = vpop.permute.xlu0 %3407
        %3409 = vrot.lane.b32.xlu0 %v2333, 32
        %v3410 = vpop.permute.xlu0 %3409
        %3411 = vrot.lane.b32.xlu0 %v2336, 32
        %v3412 = vpop.permute.xlu0 %3411
        %3413 = vrot.lane.b32.xlu0 %v2338, 32
        %v3414 = vpop.permute.xlu0 %3413
        %3415 = vrot.lane.b32.xlu0 %v2341, 32
        %v3416 = vpop.permute.xlu0 %3415
        %3417 = vrot.lane.b32.xlu0 %v2343, 32
        %v3418 = vpop.permute.xlu0 %3417
        %3419 = vrot.lane.b32.xlu0 %v2346, 32
        %v3420 = vpop.permute.xlu0 %3419
        %3421 = vrot.lane.b32.xlu0 %v2348, 32
        %v3422 = vpop.permute.xlu0 %3421
        %3423 = vrot.lane.b32.xlu0 %v2351, 32
        %v3424 = vpop.permute.xlu0 %3423
        %3425 = vrot.lane.b32.xlu0 %v2353, 32
        %v3426 = vpop.permute.xlu0 %3425
        %3427 = vrot.lane.b32.xlu0 %v2356, 32
        %v3428 = vpop.permute.xlu0 %3427
        %3429 = vrot.lane.b32.xlu0 %v2358, 32
        %v3430 = vpop.permute.xlu0 %3429
        %3431 = vrot.lane.b32.xlu0 %v2384, 32
        %v3432 = vpop.permute.xlu0 %3431
        %3433 = vrot.lane.b32.xlu0 %v2386, 32
        %v3434 = vpop.permute.xlu0 %3433
        %3435 = vrot.lane.b32.xlu0 %v2412, 32
        %v3436 = vpop.permute.xlu0 %3435
        %3437 = vrot.lane.b32.xlu0 %v2414, 32
        %v3438 = vpop.permute.xlu0 %3437
        %vm3439 = vcmask 31744
        %v3441 = vsel %vm3439, %v1189, %v2416
        %v3443 = vsel %vm3439, %v1190, %v2418
        %v3445 = vsel %vm3439, %v1192, %v2420
        %v3447 = vsel %vm3439, %v1193, %v2422
        %v3449 = vsel %vm3439, %v1195, %v2424
        %v3451 = vsel %vm3439, %v1196, %v2426
        %v3453 = vsel %vm3439, %v1198, %v2428
        %v3455 = vsel %vm3439, %v1199, %v2430
        %v3457 = vsel %vm3439, %v1201, %v2432
        %v3459 = vsel %vm3439, %v1202, %v2434
        %v3461 = vsel %vm3439, %v1204, %v2436
        %v3463 = vsel %vm3439, %v1205, %v2438
        %v3465 = vsel %vm3439, %v1207, %v2440
        %v3467 = vsel %vm3439, %v1208, %v2442
        %v3469 = vsel %vm3439, %v1210, %v2444
        %v3471 = vsel %vm3439, %v1211, %v2446
        %v3473 = vsel %vm3439, %v1213, %v2448
        %v3475 = vsel %vm3439, %v1214, %v2450
        %v3477 = vsel %vm3439, %v1216, %v2452
        %v3479 = vsel %vm3439, %v1217, %v2454
        %v3481 = vsel %vm3439, %v1219, %v2456
        %v3483 = vsel %vm3439, %v1220, %v2458
        %v3485 = vsel %vm3439, %v1222, %v2460
        %v3487 = vsel %vm3439, %v1223, %v2462
        %v3489 = vsel %vm3439, %v1225, %v2464
        %v3491 = vsel %vm3439, %v1226, %v2466
        %v3493 = vsel %vm3439, %v1228, %v2468
        %v3495 = vsel %vm3439, %v1229, %v2470
        %v3497 = vsel %vm3439, %v1231, %v2472
        %v3499 = vsel %vm3439, %v1232, %v2474
        %v3501 = vsel %vm3439, %v1234, %v2476
        %v3503 = vsel %vm3439, %v1235, %v2478
        %v3505 = vsel %vm3439, %v1237, %v2480
        %v3507 = vsel %vm3439, %v1238, %v2482
        %v3509 = vsel %vm3439, %v1240, %v2484
        %v3511 = vsel %vm3439, %v1241, %v2486
        %v3513 = vsel %vm3439, %v1243, %v2488
        %v3515 = vsel %vm3439, %v1244, %v2490
        %v3517 = vsel %vm3439, %v1246, %v2492
        %v3519 = vsel %vm3439, %v1247, %v2494
        %v3521 = vsel %vm3439, %v1249, %v2496
        %v3523 = vsel %vm3439, %v1250, %v2498
        %v3525 = vsel %vm3439, %v1252, %v2500
        %v3527 = vsel %vm3439, %v1253, %v2502
        %v3529 = vsel %vm3439, %v1255, %v2504
        %v3531 = vsel %vm3439, %v1256, %v2506
        %v3533 = vsel %vm3439, %v1258, %v2508
        %v3535 = vsel %vm3439, %v1259, %v2510
        %v3537 = vsel %vm3439, %v1261, %v2512
        %v3539 = vsel %vm3439, %v1262, %v2514
        %v3541 = vsel %vm3439, %v1264, %v2516
        %v3543 = vsel %vm3439, %v1265, %v2518
        %v3545 = vsel %vm3439, %v1267, %v2520
        %v3547 = vsel %vm3439, %v1268, %v2522
        %v3549 = vsel %vm3439, %v1270, %v2524
        %v3551 = vsel %vm3439, %v1271, %v2526
        %v3553 = vsel %vm3439, %v1273, %v2528
        %v3555 = vsel %vm3439, %v1274, %v2530
        %v3557 = vsel %vm3439, %v1276, %v2532
        %v3559 = vsel %vm3439, %v1277, %v2534
        %v3561 = vsel %vm3439, %v1279, %v2536
        %v3563 = vsel %vm3439, %v1280, %v2538
        %v3565 = vsel %vm3439, %v1282, %v2540
        %v3567 = vsel %vm3439, %v1283, %v2542
        %vm3568 = vcmask 64512
        %v3570 = vsel %vm3568, %v3441, %v2544
        %v3572 = vsel %vm3568, %v3443, %v2546
        %v3574 = vsel %vm3568, %v3445, %v2548
        %v3576 = vsel %vm3568, %v3447, %v2550
        %v3578 = vsel %vm3568, %v3449, %v2552
        %v3580 = vsel %vm3568, %v3451, %v2554
        %v3582 = vsel %vm3568, %v3453, %v2556
        %v3584 = vsel %vm3568, %v3455, %v2558
        %v3586 = vsel %vm3568, %v3457, %v2560
        %v3588 = vsel %vm3568, %v3459, %v2562
        %v3590 = vsel %vm3568, %v3461, %v2564
        %v3592 = vsel %vm3568, %v3463, %v2566
        %v3594 = vsel %vm3568, %v3465, %v2568
        %v3596 = vsel %vm3568, %v3467, %v2570
        %v3598 = vsel %vm3568, %v3469, %v2572
        %v3600 = vsel %vm3568, %v3471, %v2574
        %v3602 = vsel %vm3568, %v3473, %v2576
        %v3604 = vsel %vm3568, %v3475, %v2578
        %v3606 = vsel %vm3568, %v3477, %v2580
        %v3608 = vsel %vm3568, %v3479, %v2582
        %v3610 = vsel %vm3568, %v3481, %v2584
        %v3612 = vsel %vm3568, %v3483, %v2586
        %v3614 = vsel %vm3568, %v3485, %v2588
        %v3616 = vsel %vm3568, %v3487, %v2590
        %v3618 = vsel %vm3568, %v3489, %v2592
        %v3620 = vsel %vm3568, %v3491, %v2594
        %v3622 = vsel %vm3568, %v3493, %v2596
        %v3624 = vsel %vm3568, %v3495, %v2598
        %v3626 = vsel %vm3568, %v3497, %v2600
        %v3628 = vsel %vm3568, %v3499, %v2602
        %v3630 = vsel %vm3568, %v3501, %v2604
        %v3632 = vsel %vm3568, %v3503, %v2606
        %v3634 = vsel %vm3568, %v3505, %v2608
        %v3636 = vsel %vm3568, %v3507, %v2610
        %v3638 = vsel %vm3568, %v3509, %v2612
        %v3640 = vsel %vm3568, %v3511, %v2614
        %v3642 = vsel %vm3568, %v3513, %v2616
        %v3644 = vsel %vm3568, %v3515, %v2618
        %v3646 = vsel %vm3568, %v3517, %v2620
        %v3648 = vsel %vm3568, %v3519, %v2622
        %v3650 = vsel %vm3568, %v3521, %v2624
        %v3652 = vsel %vm3568, %v3523, %v2626
        %v3654 = vsel %vm3568, %v3525, %v2628
        %v3656 = vsel %vm3568, %v3527, %v2630
        %v3658 = vsel %vm3568, %v3529, %v2632
        %v3660 = vsel %vm3568, %v3531, %v2634
        %v3662 = vsel %vm3568, %v3533, %v2636
        %v3664 = vsel %vm3568, %v3535, %v2638
        %v3666 = vsel %vm3568, %v3537, %v2640
        %v3668 = vsel %vm3568, %v3539, %v2642
        %v3670 = vsel %vm3568, %v3541, %v2644
        %v3672 = vsel %vm3568, %v3543, %v2646
        %v3674 = vsel %vm3568, %v3545, %v2648
        %v3676 = vsel %vm3568, %v3547, %v2650
        %v3678 = vsel %vm3568, %v3549, %v2652
        %v3680 = vsel %vm3568, %v3551, %v2654
        %v3682 = vsel %vm3568, %v3553, %v2656
        %v3684 = vsel %vm3568, %v3555, %v2658
        %v3686 = vsel %vm3568, %v3557, %v2660
        %v3688 = vsel %vm3568, %v3559, %v2662
        %v3690 = vsel %vm3568, %v3561, %v2664
        %v3692 = vsel %vm3568, %v3563, %v2666
        %v3694 = vsel %vm3568, %v3565, %v2668
        %v3696 = vsel %vm3568, %v3567, %v2670
        %vm3697 = vcmask 97280
        %v3699 = vsel %vm3697, %v3570, %v2672
        %v3701 = vsel %vm3697, %v3572, %v2674
        %v3703 = vsel %vm3697, %v3574, %v2676
        %v3705 = vsel %vm3697, %v3576, %v2678
        %v3707 = vsel %vm3697, %v3578, %v2680
        %v3709 = vsel %vm3697, %v3580, %v2682
        %v3711 = vsel %vm3697, %v3582, %v2684
        %v3713 = vsel %vm3697, %v3584, %v2686
        %v3715 = vsel %vm3697, %v3586, %v2688
        %v3717 = vsel %vm3697, %v3588, %v2690
        %v3719 = vsel %vm3697, %v3590, %v2692
        %v3721 = vsel %vm3697, %v3592, %v2694
        %v3723 = vsel %vm3697, %v3594, %v2696
        %v3725 = vsel %vm3697, %v3596, %v2698
        %v3727 = vsel %vm3697, %v3598, %v2700
        %v3729 = vsel %vm3697, %v3600, %v2702
        %v3731 = vsel %vm3697, %v3602, %v2704
        %v3733 = vsel %vm3697, %v3604, %v2706
        %v3735 = vsel %vm3697, %v3606, %v2708
        %v3737 = vsel %vm3697, %v3608, %v2710
        %v3739 = vsel %vm3697, %v3610, %v2712
        %v3741 = vsel %vm3697, %v3612, %v2714
        %v3743 = vsel %vm3697, %v3614, %v2716
        %v3745 = vsel %vm3697, %v3616, %v2718
        %v3747 = vsel %vm3697, %v3618, %v2720
        %v3749 = vsel %vm3697, %v3620, %v2722
        %v3751 = vsel %vm3697, %v3622, %v2724
        %v3753 = vsel %vm3697, %v3624, %v2726
        %v3755 = vsel %vm3697, %v3626, %v2728
        %v3757 = vsel %vm3697, %v3628, %v2730
        %v3759 = vsel %vm3697, %v3630, %v2732
        %v3761 = vsel %vm3697, %v3632, %v2734
        %v3763 = vsel %vm3697, %v3634, %v2736
        %v3765 = vsel %vm3697, %v3636, %v2738
        %v3767 = vsel %vm3697, %v3638, %v2740
        %v3769 = vsel %vm3697, %v3640, %v2742
        %v3771 = vsel %vm3697, %v3642, %v2744
        %v3773 = vsel %vm3697, %v3644, %v2746
        %v3775 = vsel %vm3697, %v3646, %v2748
        %v3777 = vsel %vm3697, %v3648, %v2750
        %v3779 = vsel %vm3697, %v3650, %v2752
        %v3781 = vsel %vm3697, %v3652, %v2754
        %v3783 = vsel %vm3697, %v3654, %v2756
        %v3785 = vsel %vm3697, %v3656, %v2758
        %v3787 = vsel %vm3697, %v3658, %v2760
        %v3789 = vsel %vm3697, %v3660, %v2762
        %v3791 = vsel %vm3697, %v3662, %v2764
        %v3793 = vsel %vm3697, %v3664, %v2766
        %v3795 = vsel %vm3697, %v3666, %v2768
        %v3797 = vsel %vm3697, %v3668, %v2770
        %v3799 = vsel %vm3697, %v3670, %v2772
        %v3801 = vsel %vm3697, %v3672, %v2774
        %v3803 = vsel %vm3697, %v3674, %v2776
        %v3805 = vsel %vm3697, %v3676, %v2778
        %v3807 = vsel %vm3697, %v3678, %v2780
        %v3809 = vsel %vm3697, %v3680, %v2782
        %v3811 = vsel %vm3697, %v3682, %v2784
        %v3813 = vsel %vm3697, %v3684, %v2786
        %v3815 = vsel %vm3697, %v3686, %v2788
        %v3817 = vsel %vm3697, %v3688, %v2790
        %v3819 = vsel %vm3697, %v3690, %v2792
        %v3821 = vsel %vm3697, %v3692, %v2794
        %v3823 = vsel %vm3697, %v3694, %v2796
        %v3825 = vsel %vm3697, %v3696, %v2798
        %vm3826 = vcmask 130048
        %v3828 = vsel %vm3826, %v3699, %v2800
        %v3830 = vsel %vm3826, %v3701, %v2802
        %v3832 = vsel %vm3826, %v3703, %v2804
        %v3834 = vsel %vm3826, %v3705, %v2806
        %v3836 = vsel %vm3826, %v3707, %v2808
        %v3838 = vsel %vm3826, %v3709, %v2810
        %v3840 = vsel %vm3826, %v3711, %v2812
        %v3842 = vsel %vm3826, %v3713, %v2814
        %v3844 = vsel %vm3826, %v3715, %v2816
        %v3846 = vsel %vm3826, %v3717, %v2818
        %v3848 = vsel %vm3826, %v3719, %v2820
        %v3850 = vsel %vm3826, %v3721, %v2822
        %v3852 = vsel %vm3826, %v3723, %v2824
        %v3854 = vsel %vm3826, %v3725, %v2826
        %v3856 = vsel %vm3826, %v3727, %v2828
        %v3858 = vsel %vm3826, %v3729, %v2830
        %v3860 = vsel %vm3826, %v3731, %v2832
        %v3862 = vsel %vm3826, %v3733, %v2834
        %v3864 = vsel %vm3826, %v3735, %v2836
        %v3866 = vsel %vm3826, %v3737, %v2838
        %v3868 = vsel %vm3826, %v3739, %v2840
        %v3870 = vsel %vm3826, %v3741, %v2842
        %v3872 = vsel %vm3826, %v3743, %v2844
        %v3874 = vsel %vm3826, %v3745, %v2846
        %v3876 = vsel %vm3826, %v3747, %v2848
        %v3878 = vsel %vm3826, %v3749, %v2850
        %v3880 = vsel %vm3826, %v3751, %v2852
        %v3882 = vsel %vm3826, %v3753, %v2854
        %v3884 = vsel %vm3826, %v3755, %v2856
        %v3886 = vsel %vm3826, %v3757, %v2858
        %v3888 = vsel %vm3826, %v3759, %v2860
        %v3890 = vsel %vm3826, %v3761, %v2862
        %v3892 = vsel %vm3826, %v3763, %v2864
        %v3894 = vsel %vm3826, %v3765, %v2866
        %v3896 = vsel %vm3826, %v3767, %v2868
        %v3898 = vsel %vm3826, %v3769, %v2870
        %v3900 = vsel %vm3826, %v3771, %v2872
        %v3902 = vsel %vm3826, %v3773, %v2874
        %v3904 = vsel %vm3826, %v3775, %v2876
        %v3906 = vsel %vm3826, %v3777, %v2878
        %v3908 = vsel %vm3826, %v3779, %v2880
        %v3910 = vsel %vm3826, %v3781, %v2882
        %v3912 = vsel %vm3826, %v3783, %v2884
        %v3914 = vsel %vm3826, %v3785, %v2886
        %v3916 = vsel %vm3826, %v3787, %v2888
        %v3918 = vsel %vm3826, %v3789, %v2890
        %v3920 = vsel %vm3826, %v3791, %v2892
        %v3922 = vsel %vm3826, %v3793, %v2894
        %v3924 = vsel %vm3826, %v3795, %v2896
        %v3926 = vsel %vm3826, %v3797, %v2898
        %v3928 = vsel %vm3826, %v3799, %v2900
        %v3930 = vsel %vm3826, %v3801, %v2902
        %v3932 = vsel %vm3826, %v3803, %v2904
        %v3934 = vsel %vm3826, %v3805, %v2906
        %v3936 = vsel %vm3826, %v3807, %v2908
        %v3938 = vsel %vm3826, %v3809, %v2910
        %v3940 = vsel %vm3826, %v3811, %v2912
        %v3942 = vsel %vm3826, %v3813, %v2914
        %v3944 = vsel %vm3826, %v3815, %v2916
        %v3946 = vsel %vm3826, %v3817, %v2918
        %v3948 = vsel %vm3826, %v3819, %v2920
        %v3950 = vsel %vm3826, %v3821, %v2922
        %v3952 = vsel %vm3826, %v3823, %v2924
        %v3954 = vsel %vm3826, %v3825, %v2926
        %vm3955 = vcmask 162816
        %v3957 = vsel %vm3955, %v3828, %v2928
        %v3959 = vsel %vm3955, %v3830, %v2930
        %v3961 = vsel %vm3955, %v3832, %v2932
        %v3963 = vsel %vm3955, %v3834, %v2934
        %v3965 = vsel %vm3955, %v3836, %v2936
        %v3967 = vsel %vm3955, %v3838, %v2938
        %v3969 = vsel %vm3955, %v3840, %v2940
        %v3971 = vsel %vm3955, %v3842, %v2942
        %v3973 = vsel %vm3955, %v3844, %v2944
        %v3975 = vsel %vm3955, %v3846, %v2946
        %v3977 = vsel %vm3955, %v3848, %v2948
        %v3979 = vsel %vm3955, %v3850, %v2950
        %v3981 = vsel %vm3955, %v3852, %v2952
        %v3983 = vsel %vm3955, %v3854, %v2954
        %v3985 = vsel %vm3955, %v3856, %v2956
        %v3987 = vsel %vm3955, %v3858, %v2958
        %v3989 = vsel %vm3955, %v3860, %v2960
        %v3991 = vsel %vm3955, %v3862, %v2962
        %v3993 = vsel %vm3955, %v3864, %v2964
        %v3995 = vsel %vm3955, %v3866, %v2966
        %v3997 = vsel %vm3955, %v3868, %v2968
        %v3999 = vsel %vm3955, %v3870, %v2970
        %v4001 = vsel %vm3955, %v3872, %v2972
        %v4003 = vsel %vm3955, %v3874, %v2974
        %v4005 = vsel %vm3955, %v3876, %v2976
        %v4007 = vsel %vm3955, %v3878, %v2978
        %v4009 = vsel %vm3955, %v3880, %v2980
        %v4011 = vsel %vm3955, %v3882, %v2982
        %v4013 = vsel %vm3955, %v3884, %v2984
        %v4015 = vsel %vm3955, %v3886, %v2986
        %v4017 = vsel %vm3955, %v3888, %v2988
        %v4019 = vsel %vm3955, %v3890, %v2990
        %v4021 = vsel %vm3955, %v3892, %v2992
        %v4023 = vsel %vm3955, %v3894, %v2994
        %v4025 = vsel %vm3955, %v3896, %v2996
        %v4027 = vsel %vm3955, %v3898, %v2998
        %v4029 = vsel %vm3955, %v3900, %v3000
        %v4031 = vsel %vm3955, %v3902, %v3002
        %v4033 = vsel %vm3955, %v3904, %v3004
        %v4035 = vsel %vm3955, %v3906, %v3006
        %v4037 = vsel %vm3955, %v3908, %v3008
        %v4039 = vsel %vm3955, %v3910, %v3010
        %v4041 = vsel %vm3955, %v3912, %v3012
        %v4043 = vsel %vm3955, %v3914, %v3014
        %v4045 = vsel %vm3955, %v3916, %v3016
        %v4047 = vsel %vm3955, %v3918, %v3018
        %v4049 = vsel %vm3955, %v3920, %v3020
        %v4051 = vsel %vm3955, %v3922, %v3022
        %v4053 = vsel %vm3955, %v3924, %v3024
        %v4055 = vsel %vm3955, %v3926, %v3026
        %v4057 = vsel %vm3955, %v3928, %v3028
        %v4059 = vsel %vm3955, %v3930, %v3030
        %v4061 = vsel %vm3955, %v3932, %v3032
        %v4063 = vsel %vm3955, %v3934, %v3034
        %v4065 = vsel %vm3955, %v3936, %v3036
        %v4067 = vsel %vm3955, %v3938, %v3038
        %v4069 = vsel %vm3955, %v3940, %v3040
        %v4071 = vsel %vm3955, %v3942, %v3042
        %v4073 = vsel %vm3955, %v3944, %v3044
        %v4075 = vsel %vm3955, %v3946, %v3046
        %v4077 = vsel %vm3955, %v3948, %v3048
        %v4079 = vsel %vm3955, %v3950, %v3050
        %v4081 = vsel %vm3955, %v3952, %v3052
        %v4083 = vsel %vm3955, %v3954, %v3054
        %vm4084 = vcmask 195584
        %v4086 = vsel %vm4084, %v3957, %v3056
        %v4088 = vsel %vm4084, %v3959, %v3058
        %v4090 = vsel %vm4084, %v3961, %v3060
        %v4092 = vsel %vm4084, %v3963, %v3062
        %v4094 = vsel %vm4084, %v3965, %v3064
        %v4096 = vsel %vm4084, %v3967, %v3066
        %v4098 = vsel %vm4084, %v3969, %v3068
        %v4100 = vsel %vm4084, %v3971, %v3070
        %v4102 = vsel %vm4084, %v3973, %v3072
        %v4104 = vsel %vm4084, %v3975, %v3074
        %v4106 = vsel %vm4084, %v3977, %v3076
        %v4108 = vsel %vm4084, %v3979, %v3078
        %v4110 = vsel %vm4084, %v3981, %v3080
        %v4112 = vsel %vm4084, %v3983, %v3082
        %v4114 = vsel %vm4084, %v3985, %v3084
        %v4116 = vsel %vm4084, %v3987, %v3086
        %v4118 = vsel %vm4084, %v3989, %v3088
        %v4120 = vsel %vm4084, %v3991, %v3090
        %v4122 = vsel %vm4084, %v3993, %v3092
        %v4124 = vsel %vm4084, %v3995, %v3094
        %v4126 = vsel %vm4084, %v3997, %v3096
        %v4128 = vsel %vm4084, %v3999, %v3098
        %v4130 = vsel %vm4084, %v4001, %v3100
        %v4132 = vsel %vm4084, %v4003, %v3102
        %v4134 = vsel %vm4084, %v4005, %v3104
        %v4136 = vsel %vm4084, %v4007, %v3106
        %v4138 = vsel %vm4084, %v4009, %v3108
        %v4140 = vsel %vm4084, %v4011, %v3110
        %v4142 = vsel %vm4084, %v4013, %v3112
        %v4144 = vsel %vm4084, %v4015, %v3114
        %v4146 = vsel %vm4084, %v4017, %v3116
        %v4148 = vsel %vm4084, %v4019, %v3118
        %v4150 = vsel %vm4084, %v4021, %v3120
        %v4152 = vsel %vm4084, %v4023, %v3122
        %v4154 = vsel %vm4084, %v4025, %v3124
        %v4156 = vsel %vm4084, %v4027, %v3126
        %v4158 = vsel %vm4084, %v4029, %v3128
        %v4160 = vsel %vm4084, %v4031, %v3130
        %v4162 = vsel %vm4084, %v4033, %v3132
        %v4164 = vsel %vm4084, %v4035, %v3134
        %v4166 = vsel %vm4084, %v4037, %v3136
        %v4168 = vsel %vm4084, %v4039, %v3138
        %v4170 = vsel %vm4084, %v4041, %v3140
        %v4172 = vsel %vm4084, %v4043, %v3142
        %v4174 = vsel %vm4084, %v4045, %v3144
        %v4176 = vsel %vm4084, %v4047, %v3146
        %v4178 = vsel %vm4084, %v4049, %v3148
        %v4180 = vsel %vm4084, %v4051, %v3150
        %v4182 = vsel %vm4084, %v4053, %v3152
        %v4184 = vsel %vm4084, %v4055, %v3154
        %v4186 = vsel %vm4084, %v4057, %v3156
        %v4188 = vsel %vm4084, %v4059, %v3158
        %v4190 = vsel %vm4084, %v4061, %v3160
        %v4192 = vsel %vm4084, %v4063, %v3162
        %v4194 = vsel %vm4084, %v4065, %v3164
        %v4196 = vsel %vm4084, %v4067, %v3166
        %v4198 = vsel %vm4084, %v4069, %v3168
        %v4200 = vsel %vm4084, %v4071, %v3170
        %v4202 = vsel %vm4084, %v4073, %v3172
        %v4204 = vsel %vm4084, %v4075, %v3174
        %v4206 = vsel %vm4084, %v4077, %v3176
        %v4208 = vsel %vm4084, %v4079, %v3178
        %v4210 = vsel %vm4084, %v4081, %v3180
        %v4212 = vsel %vm4084, %v4083, %v3182
        %vm4213 = vcmask 228352
        %v4215 = vsel %vm4213, %v4086, %v3184
        %v4217 = vsel %vm4213, %v4088, %v3186
        %v4219 = vsel %vm4213, %v4090, %v3188
        %v4221 = vsel %vm4213, %v4092, %v3190
        %v4223 = vsel %vm4213, %v4094, %v3192
        %v4225 = vsel %vm4213, %v4096, %v3194
        %v4227 = vsel %vm4213, %v4098, %v3196
        %v4229 = vsel %vm4213, %v4100, %v3198
        %v4231 = vsel %vm4213, %v4102, %v3200
        %v4233 = vsel %vm4213, %v4104, %v3202
        %v4235 = vsel %vm4213, %v4106, %v3204
        %v4237 = vsel %vm4213, %v4108, %v3206
        %v4239 = vsel %vm4213, %v4110, %v3208
        %v4241 = vsel %vm4213, %v4112, %v3210
        %v4243 = vsel %vm4213, %v4114, %v3212
        %v4245 = vsel %vm4213, %v4116, %v3214
        %v4247 = vsel %vm4213, %v4118, %v3216
        %v4249 = vsel %vm4213, %v4120, %v3218
        %v4251 = vsel %vm4213, %v4122, %v3220
        %v4253 = vsel %vm4213, %v4124, %v3222
        %v4255 = vsel %vm4213, %v4126, %v3224
        %v4257 = vsel %vm4213, %v4128, %v3226
        %v4259 = vsel %vm4213, %v4130, %v3228
        %v4261 = vsel %vm4213, %v4132, %v3230
        %v4263 = vsel %vm4213, %v4134, %v3232
        %v4265 = vsel %vm4213, %v4136, %v3234
        %v4267 = vsel %vm4213, %v4138, %v3236
        %v4269 = vsel %vm4213, %v4140, %v3238
        %v4271 = vsel %vm4213, %v4142, %v3240
        %v4273 = vsel %vm4213, %v4144, %v3242
        %v4275 = vsel %vm4213, %v4146, %v3244
        %v4277 = vsel %vm4213, %v4148, %v3246
        %v4279 = vsel %vm4213, %v4150, %v3248
        %v4281 = vsel %vm4213, %v4152, %v3250
        %v4283 = vsel %vm4213, %v4154, %v3252
        %v4285 = vsel %vm4213, %v4156, %v3254
        %v4287 = vsel %vm4213, %v4158, %v3256
        %v4289 = vsel %vm4213, %v4160, %v3258
        %v4291 = vsel %vm4213, %v4162, %v3260
        %v4293 = vsel %vm4213, %v4164, %v3262
        %v4295 = vsel %vm4213, %v4166, %v3264
        %v4297 = vsel %vm4213, %v4168, %v3266
        %v4299 = vsel %vm4213, %v4170, %v3268
        %v4301 = vsel %vm4213, %v4172, %v3270
        %v4303 = vsel %vm4213, %v4174, %v3272
        %v4305 = vsel %vm4213, %v4176, %v3274
        %v4307 = vsel %vm4213, %v4178, %v3276
        %v4309 = vsel %vm4213, %v4180, %v3278
        %v4311 = vsel %vm4213, %v4182, %v3280
        %v4313 = vsel %vm4213, %v4184, %v3282
        %v4315 = vsel %vm4213, %v4186, %v3284
        %v4317 = vsel %vm4213, %v4188, %v3286
        %v4319 = vsel %vm4213, %v4190, %v3288
        %v4321 = vsel %vm4213, %v4192, %v3290
        %v4323 = vsel %vm4213, %v4194, %v3292
        %v4325 = vsel %vm4213, %v4196, %v3294
        %v4327 = vsel %vm4213, %v4198, %v3296
        %v4329 = vsel %vm4213, %v4200, %v3298
        %v4331 = vsel %vm4213, %v4202, %v3300
        %v4333 = vsel %vm4213, %v4204, %v3302
        %v4335 = vsel %vm4213, %v4206, %v3304
        %v4337 = vsel %vm4213, %v4208, %v3306
        %v4339 = vsel %vm4213, %v4210, %v3308
        %v4341 = vsel %vm4213, %v4212, %v3310
        %vm4342 = vcmask 261120
        %v4344 = vsel %vm4342, %v4215, %v3312
        %v4346 = vsel %vm4342, %v4217, %v3314
        %v4348 = vsel %vm4342, %v4219, %v3316
        %v4350 = vsel %vm4342, %v4221, %v3318
        %v4352 = vsel %vm4342, %v4223, %v3320
        %v4354 = vsel %vm4342, %v4225, %v3322
        %v4356 = vsel %vm4342, %v4227, %v3324
        %v4358 = vsel %vm4342, %v4229, %v3326
        %v4360 = vsel %vm4342, %v4231, %v3328
        %v4362 = vsel %vm4342, %v4233, %v3330
        %v4364 = vsel %vm4342, %v4235, %v3332
        %v4366 = vsel %vm4342, %v4237, %v3334
        %v4368 = vsel %vm4342, %v4239, %v3336
        %v4370 = vsel %vm4342, %v4241, %v3338
        %v4372 = vsel %vm4342, %v4243, %v3340
        %v4374 = vsel %vm4342, %v4245, %v3342
        %v4376 = vsel %vm4342, %v4247, %v3344
        %v4378 = vsel %vm4342, %v4249, %v3346
        %v4380 = vsel %vm4342, %v4251, %v3348
        %v4382 = vsel %vm4342, %v4253, %v3350
        %v4384 = vsel %vm4342, %v4255, %v3352
        %v4386 = vsel %vm4342, %v4257, %v3354
        %v4388 = vsel %vm4342, %v4259, %v3356
        %v4390 = vsel %vm4342, %v4261, %v3358
        %v4392 = vsel %vm4342, %v4263, %v3360
        %v4394 = vsel %vm4342, %v4265, %v3362
        %v4396 = vsel %vm4342, %v4267, %v3364
        %v4398 = vsel %vm4342, %v4269, %v3366
        %v4400 = vsel %vm4342, %v4271, %v3368
        %v4402 = vsel %vm4342, %v4273, %v3370
        %v4404 = vsel %vm4342, %v4275, %v3372
        %v4406 = vsel %vm4342, %v4277, %v3374
        %v4408 = vsel %vm4342, %v4279, %v3376
        %v4410 = vsel %vm4342, %v4281, %v3378
        %v4412 = vsel %vm4342, %v4283, %v3380
        %v4414 = vsel %vm4342, %v4285, %v3382
        %v4416 = vsel %vm4342, %v4287, %v3384
        %v4418 = vsel %vm4342, %v4289, %v3386
        %v4420 = vsel %vm4342, %v4291, %v3388
        %v4422 = vsel %vm4342, %v4293, %v3390
        %v4424 = vsel %vm4342, %v4295, %v3392
        %v4426 = vsel %vm4342, %v4297, %v3394
        %v4428 = vsel %vm4342, %v4299, %v3396
        %v4430 = vsel %vm4342, %v4301, %v3398
        %v4432 = vsel %vm4342, %v4303, %v3400
        %v4434 = vsel %vm4342, %v4305, %v3402
        %v4436 = vsel %vm4342, %v4307, %v3404
        %v4438 = vsel %vm4342, %v4309, %v3406
        %v4440 = vsel %vm4342, %v4311, %v3408
        %v4442 = vsel %vm4342, %v4313, %v3410
        %v4444 = vsel %vm4342, %v4315, %v3412
        %v4446 = vsel %vm4342, %v4317, %v3414
        %v4448 = vsel %vm4342, %v4319, %v3416
        %v4450 = vsel %vm4342, %v4321, %v3418
        %v4452 = vsel %vm4342, %v4323, %v3420
        %v4454 = vsel %vm4342, %v4325, %v3422
        %v4456 = vsel %vm4342, %v4327, %v3424
        %v4458 = vsel %vm4342, %v4329, %v3426
        %v4460 = vsel %vm4342, %v4331, %v3428
        %v4462 = vsel %vm4342, %v4333, %v3430
        %v4464 = vsel %vm4342, %v4335, %v3432
        %v4466 = vsel %vm4342, %v4337, %v3434
        %v4468 = vsel %vm4342, %v4339, %v3436
        %v4470 = vsel %vm4342, %v4341, %v3438
        %v4471 = vld [vmem:[%s5] sm:$0xf]
        %v4472 = vld [vmem:[%s5 + $0x4] sm:$0xf]
        %v4473 = vld [vmem:[%s5 + $0x8] sm:$0xf]
        %v4474 = vld [vmem:[%s5 + $0xc] sm:$0xf]
        %v4475 = vld [vmem:[%s5 + $0x10] sm:$0x3]
        %vm4476 = vsmask.f32 3328
        %vm4477 = vsmask.f32 7440
        %vm4478 = vmor %vm4476, %vm4477
        %v4480 = vshrl.u32 %v1291, 16
        %v4482 = vrot.slane %v4480, 4
        %v4483 = vshll.u32 %v1291, 16
        %v4485 = vrot.slane %v4483, 5
        %v4486 = vor.u32 %v4482, %v4485
        %v4487 = vrot.slane %v4486, 4
        %v4489 = vshll.u32 %v1292, 16
        %v4491 = vrot.slane %v4489, 5
        %v4492 = vsel %vm4478, %v4487, %v4491
        %v4493 = vshrl.u32 %v1292, 16
        %v4495 = vrot.slane %v4493, 4
        %v4496 = vor.u32 %v4495, %v4491
        %v4497 = vrot.slane %v4496, 4
        %v4499 = vshll.u32 %v1293, 16
        %v4501 = vrot.slane %v4499, 5
        %v4502 = vsel %vm4478, %v4497, %v4501
        %v4503 = vshrl.u32 %v1293, 16
        %v4505 = vrot.slane %v4503, 4
        %v4506 = vor.u32 %v4505, %v4501
        %v4507 = vrot.slane %v4506, 4
        %v4509 = vshll.u32 %v1294, 16
        %v4511 = vrot.slane %v4509, 5
        %v4512 = vsel %vm4478, %v4507, %v4511
        %v4513 = vshrl.u32 %v1294, 16
        %v4515 = vrot.slane %v4513, 4
        %v4516 = vor.u32 %v4515, %v4511
        %v4517 = vrot.slane %v4516, 4
        %v4519 = vshll.u32 %v1295, 16
        %v4521 = vrot.slane %v4519, 5
        %v4522 = vsel %vm4478, %v4517, %v4521
        %v4524 = vshrl.u32 %v1296, 16
        %v4526 = vrot.slane %v4524, 4
        %v4527 = vshll.u32 %v1296, 16
        %v4529 = vrot.slane %v4527, 5
        %v4530 = vor.u32 %v4526, %v4529
        %v4531 = vrot.slane %v4530, 4
        %v4533 = vshll.u32 %v1297, 16
        %v4535 = vrot.slane %v4533, 5
        %v4536 = vsel %vm4478, %v4531, %v4535
        %v4537 = vshrl.u32 %v1297, 16
        %v4539 = vrot.slane %v4537, 4
        %v4540 = vor.u32 %v4539, %v4535
        %v4541 = vrot.slane %v4540, 4
        %v4543 = vshll.u32 %v1298, 16
        %v4545 = vrot.slane %v4543, 5
        %v4546 = vsel %vm4478, %v4541, %v4545
        %v4547 = vshrl.u32 %v1298, 16
        %v4549 = vrot.slane %v4547, 4
        %v4550 = vor.u32 %v4549, %v4545
        %v4551 = vrot.slane %v4550, 4
        %v4553 = vshll.u32 %v1299, 16
        %v4555 = vrot.slane %v4553, 5
        %v4556 = vsel %vm4478, %v4551, %v4555
        %v4557 = vshrl.u32 %v1299, 16
        %v4559 = vrot.slane %v4557, 4
        %v4560 = vor.u32 %v4559, %v4555
        %v4561 = vrot.slane %v4560, 4
        %v4563 = vshll.u32 %v1300, 16
        %v4565 = vrot.slane %v4563, 5
        %v4566 = vsel %vm4478, %v4561, %v4565
        %v4568 = vshrl.u32 %v1301, 16
        %v4570 = vrot.slane %v4568, 4
        %v4571 = vshll.u32 %v1301, 16
        %v4573 = vrot.slane %v4571, 5
        %v4574 = vor.u32 %v4570, %v4573
        %v4575 = vrot.slane %v4574, 4
        %v4577 = vshll.u32 %v1302, 16
        %v4579 = vrot.slane %v4577, 5
        %v4580 = vsel %vm4478, %v4575, %v4579
        %v4581 = vshrl.u32 %v1302, 16
        %v4583 = vrot.slane %v4581, 4
        %v4584 = vor.u32 %v4583, %v4579
        %v4585 = vrot.slane %v4584, 4
        %v4587 = vshll.u32 %v1303, 16
        %v4589 = vrot.slane %v4587, 5
        %v4590 = vsel %vm4478, %v4585, %v4589
        %v4591 = vshrl.u32 %v1303, 16
        %v4593 = vrot.slane %v4591, 4
        %v4594 = vor.u32 %v4593, %v4589
        %v4595 = vrot.slane %v4594, 4
        %v4597 = vshll.u32 %v1304, 16
        %v4599 = vrot.slane %v4597, 5
        %v4600 = vsel %vm4478, %v4595, %v4599
        %v4601 = vshrl.u32 %v1304, 16
        %v4603 = vrot.slane %v4601, 4
        %v4604 = vor.u32 %v4603, %v4599
        %v4605 = vrot.slane %v4604, 4
        %v4607 = vshll.u32 %v1305, 16
        %v4609 = vrot.slane %v4607, 5
        %v4610 = vsel %vm4478, %v4605, %v4609
        %v4612 = vshrl.u32 %v1306, 16
        %v4614 = vrot.slane %v4612, 4
        %v4615 = vshll.u32 %v1306, 16
        %v4617 = vrot.slane %v4615, 5
        %v4618 = vor.u32 %v4614, %v4617
        %v4619 = vrot.slane %v4618, 4
        %v4621 = vshll.u32 %v1307, 16
        %v4623 = vrot.slane %v4621, 5
        %v4624 = vsel %vm4478, %v4619, %v4623
        %v4625 = vshrl.u32 %v1307, 16
        %v4627 = vrot.slane %v4625, 4
        %v4628 = vor.u32 %v4627, %v4623
        %v4629 = vrot.slane %v4628, 4
        %v4631 = vshll.u32 %v1308, 16
        %v4633 = vrot.slane %v4631, 5
        %v4634 = vsel %vm4478, %v4629, %v4633
        %v4635 = vshrl.u32 %v1308, 16
        %v4637 = vrot.slane %v4635, 4
        %v4638 = vor.u32 %v4637, %v4633
        %v4639 = vrot.slane %v4638, 4
        %v4641 = vshll.u32 %v1309, 16
        %v4643 = vrot.slane %v4641, 5
        %v4644 = vsel %vm4478, %v4639, %v4643
        %v4645 = vshrl.u32 %v1309, 16
        %v4647 = vrot.slane %v4645, 4
        %v4648 = vor.u32 %v4647, %v4643
        %v4649 = vrot.slane %v4648, 4
        %v4651 = vshll.u32 %v1310, 16
        %v4653 = vrot.slane %v4651, 5
        %v4654 = vsel %vm4478, %v4649, %v4653
        %v4656 = vshrl.u32 %v1311, 16
        %v4658 = vrot.slane %v4656, 4
        %v4659 = vshll.u32 %v1311, 16
        %v4661 = vrot.slane %v4659, 5
        %v4662 = vor.u32 %v4658, %v4661
        %v4663 = vrot.slane %v4662, 4
        %v4665 = vshll.u32 %v1312, 16
        %v4667 = vrot.slane %v4665, 5
        %v4668 = vsel %vm4478, %v4663, %v4667
        %v4669 = vshrl.u32 %v1312, 16
        %v4671 = vrot.slane %v4669, 4
        %v4672 = vor.u32 %v4671, %v4667
        %v4673 = vrot.slane %v4672, 4
        %v4675 = vshll.u32 %v1313, 16
        %v4677 = vrot.slane %v4675, 5
        %v4678 = vsel %vm4478, %v4673, %v4677
        %v4679 = vshrl.u32 %v1313, 16
        %v4681 = vrot.slane %v4679, 4
        %v4682 = vor.u32 %v4681, %v4677
        %v4683 = vrot.slane %v4682, 4
        %v4685 = vshll.u32 %v1314, 16
        %v4687 = vrot.slane %v4685, 5
        %v4688 = vsel %vm4478, %v4683, %v4687
        %v4689 = vshrl.u32 %v1314, 16
        %v4691 = vrot.slane %v4689, 4
        %v4692 = vor.u32 %v4691, %v4687
        %v4693 = vrot.slane %v4692, 4
        %v4695 = vshll.u32 %v1315, 16
        %v4697 = vrot.slane %v4695, 5
        %v4698 = vsel %vm4478, %v4693, %v4697
        %v4700 = vshrl.u32 %v1316, 16
        %v4702 = vrot.slane %v4700, 4
        %v4703 = vshll.u32 %v1316, 16
        %v4705 = vrot.slane %v4703, 5
        %v4706 = vor.u32 %v4702, %v4705
        %v4707 = vrot.slane %v4706, 4
        %v4709 = vshll.u32 %v1317, 16
        %v4711 = vrot.slane %v4709, 5
        %v4712 = vsel %vm4478, %v4707, %v4711
        %v4713 = vshrl.u32 %v1317, 16
        %v4715 = vrot.slane %v4713, 4
        %v4716 = vor.u32 %v4715, %v4711
        %v4717 = vrot.slane %v4716, 4
        %v4719 = vshll.u32 %v1318, 16
        %v4721 = vrot.slane %v4719, 5
        %v4722 = vsel %vm4478, %v4717, %v4721
        %v4723 = vshrl.u32 %v1318, 16
        %v4725 = vrot.slane %v4723, 4
        %v4726 = vor.u32 %v4725, %v4721
        %v4727 = vrot.slane %v4726, 4
        %v4729 = vshll.u32 %v1319, 16
        %v4731 = vrot.slane %v4729, 5
        %v4732 = vsel %vm4478, %v4727, %v4731
        %v4733 = vshrl.u32 %v1319, 16
        %v4735 = vrot.slane %v4733, 4
        %v4736 = vor.u32 %v4735, %v4731
        %v4737 = vrot.slane %v4736, 4
        %v4739 = vshll.u32 %v1320, 16
        %v4741 = vrot.slane %v4739, 5
        %v4742 = vsel %vm4478, %v4737, %v4741
        %v4744 = vshrl.u32 %v1321, 16
        %v4746 = vrot.slane %v4744, 4
        %v4747 = vshll.u32 %v1321, 16
        %v4749 = vrot.slane %v4747, 5
        %v4750 = vor.u32 %v4746, %v4749
        %v4751 = vrot.slane %v4750, 4
        %v4753 = vshll.u32 %v1322, 16
        %v4755 = vrot.slane %v4753, 5
        %v4756 = vsel %vm4478, %v4751, %v4755
        %v4757 = vshrl.u32 %v1322, 16
        %v4759 = vrot.slane %v4757, 4
        %v4760 = vor.u32 %v4759, %v4755
        %v4761 = vrot.slane %v4760, 4
        %v4763 = vshll.u32 %v1323, 16
        %v4765 = vrot.slane %v4763, 5
        %v4766 = vsel %vm4478, %v4761, %v4765
        %v4767 = vshrl.u32 %v1323, 16
        %v4769 = vrot.slane %v4767, 4
        %v4770 = vor.u32 %v4769, %v4765
        %v4771 = vrot.slane %v4770, 4
        %v4773 = vshll.u32 %v1324, 16
        %v4775 = vrot.slane %v4773, 5
        %v4776 = vsel %vm4478, %v4771, %v4775
        %v4777 = vshrl.u32 %v1324, 16
        %v4779 = vrot.slane %v4777, 4
        %v4780 = vor.u32 %v4779, %v4775
        %v4781 = vrot.slane %v4780, 4
        %v4783 = vshll.u32 %v1325, 16
        %v4785 = vrot.slane %v4783, 5
        %v4786 = vsel %vm4478, %v4781, %v4785
        %v4788 = vshrl.u32 %v1326, 16
        %v4790 = vrot.slane %v4788, 4
        %v4791 = vshll.u32 %v1326, 16
        %v4793 = vrot.slane %v4791, 5
        %v4794 = vor.u32 %v4790, %v4793
        %v4795 = vrot.slane %v4794, 4
        %v4797 = vshll.u32 %v1327, 16
        %v4799 = vrot.slane %v4797, 5
        %v4800 = vsel %vm4478, %v4795, %v4799
        %v4801 = vshrl.u32 %v1327, 16
        %v4803 = vrot.slane %v4801, 4
        %v4804 = vor.u32 %v4803, %v4799
        %v4805 = vrot.slane %v4804, 4
        %v4807 = vshll.u32 %v1328, 16
        %v4809 = vrot.slane %v4807, 5
        %v4810 = vsel %vm4478, %v4805, %v4809
        %v4811 = vshrl.u32 %v1328, 16
        %v4813 = vrot.slane %v4811, 4
        %v4814 = vor.u32 %v4813, %v4809
        %v4815 = vrot.slane %v4814, 4
        %v4817 = vshll.u32 %v1329, 16
        %v4819 = vrot.slane %v4817, 5
        %v4820 = vsel %vm4478, %v4815, %v4819
        %v4821 = vshrl.u32 %v1329, 16
        %v4823 = vrot.slane %v4821, 4
        %v4824 = vor.u32 %v4823, %v4819
        %v4825 = vrot.slane %v4824, 4
        %v4827 = vshll.u32 %v1330, 16
        %v4829 = vrot.slane %v4827, 5
        %v4830 = vsel %vm4478, %v4825, %v4829
        %v4832 = vshrl.u32 %v1331, 16
        %v4834 = vrot.slane %v4832, 4
        %v4835 = vshll.u32 %v1331, 16
        %v4837 = vrot.slane %v4835, 5
        %v4838 = vor.u32 %v4834, %v4837
        %v4839 = vrot.slane %v4838, 4
        %v4841 = vshll.u32 %v1332, 16
        %v4843 = vrot.slane %v4841, 5
        %v4844 = vsel %vm4478, %v4839, %v4843
        %v4845 = vshrl.u32 %v1332, 16
        %v4847 = vrot.slane %v4845, 4
        %v4848 = vor.u32 %v4847, %v4843
        %v4849 = vrot.slane %v4848, 4
        %v4851 = vshll.u32 %v1333, 16
        %v4853 = vrot.slane %v4851, 5
        %v4854 = vsel %vm4478, %v4849, %v4853
        %v4855 = vshrl.u32 %v1333, 16
        %v4857 = vrot.slane %v4855, 4
        %v4858 = vor.u32 %v4857, %v4853
        %v4859 = vrot.slane %v4858, 4
        %v4861 = vshll.u32 %v1334, 16
        %v4863 = vrot.slane %v4861, 5
        %v4864 = vsel %vm4478, %v4859, %v4863
        %v4865 = vshrl.u32 %v1334, 16
        %v4867 = vrot.slane %v4865, 4
        %v4868 = vor.u32 %v4867, %v4863
        %v4869 = vrot.slane %v4868, 4
        %v4871 = vshll.u32 %v1335, 16
        %v4873 = vrot.slane %v4871, 5
        %v4874 = vsel %vm4478, %v4869, %v4873
        %v4876 = vshrl.u32 %v1336, 16
        %v4878 = vrot.slane %v4876, 4
        %v4879 = vshll.u32 %v1336, 16
        %v4881 = vrot.slane %v4879, 5
        %v4882 = vor.u32 %v4878, %v4881
        %v4883 = vrot.slane %v4882, 4
        %v4885 = vshll.u32 %v1337, 16
        %v4887 = vrot.slane %v4885, 5
        %v4888 = vsel %vm4478, %v4883, %v4887
        %v4889 = vshrl.u32 %v1337, 16
        %v4891 = vrot.slane %v4889, 4
        %v4892 = vor.u32 %v4891, %v4887
        %v4893 = vrot.slane %v4892, 4
        %v4895 = vshll.u32 %v1338, 16
        %v4897 = vrot.slane %v4895, 5
        %v4898 = vsel %vm4478, %v4893, %v4897
        %v4899 = vshrl.u32 %v1338, 16
        %v4901 = vrot.slane %v4899, 4
        %v4902 = vor.u32 %v4901, %v4897
        %v4903 = vrot.slane %v4902, 4
        %v4905 = vshll.u32 %v1339, 16
        %v4907 = vrot.slane %v4905, 5
        %v4908 = vsel %vm4478, %v4903, %v4907
        %v4909 = vshrl.u32 %v1339, 16
        %v4911 = vrot.slane %v4909, 4
        %v4912 = vor.u32 %v4911, %v4907
        %v4913 = vrot.slane %v4912, 4
        %v4915 = vshll.u32 %v1340, 16
        %v4917 = vrot.slane %v4915, 5
        %v4918 = vsel %vm4478, %v4913, %v4917
        %v4920 = vshrl.u32 %v1341, 16
        %v4922 = vrot.slane %v4920, 4
        %v4923 = vshll.u32 %v1341, 16
        %v4925 = vrot.slane %v4923, 5
        %v4926 = vor.u32 %v4922, %v4925
        %v4927 = vrot.slane %v4926, 4
        %v4929 = vshll.u32 %v1342, 16
        %v4931 = vrot.slane %v4929, 5
        %v4932 = vsel %vm4478, %v4927, %v4931
        %v4933 = vshrl.u32 %v1342, 16
        %v4935 = vrot.slane %v4933, 4
        %v4936 = vor.u32 %v4935, %v4931
        %v4937 = vrot.slane %v4936, 4
        %v4939 = vshll.u32 %v1343, 16
        %v4941 = vrot.slane %v4939, 5
        %v4942 = vsel %vm4478, %v4937, %v4941
        %v4943 = vshrl.u32 %v1343, 16
        %v4945 = vrot.slane %v4943, 4
        %v4946 = vor.u32 %v4945, %v4941
        %v4947 = vrot.slane %v4946, 4
        %v4949 = vshll.u32 %v1344, 16
        %v4951 = vrot.slane %v4949, 5
        %v4952 = vsel %vm4478, %v4947, %v4951
        %v4953 = vshrl.u32 %v1344, 16
        %v4955 = vrot.slane %v4953, 4
        %v4956 = vor.u32 %v4955, %v4951
        %v4957 = vrot.slane %v4956, 4
        %v4959 = vshll.u32 %v1345, 16
        %v4961 = vrot.slane %v4959, 5
        %v4962 = vsel %vm4478, %v4957, %v4961
        %v4964 = vshrl.u32 %v1346, 16
        %v4966 = vrot.slane %v4964, 4
        %v4967 = vshll.u32 %v1346, 16
        %v4969 = vrot.slane %v4967, 5
        %v4970 = vor.u32 %v4966, %v4969
        %v4971 = vrot.slane %v4970, 4
        %v4973 = vshll.u32 %v1347, 16
        %v4975 = vrot.slane %v4973, 5
        %v4976 = vsel %vm4478, %v4971, %v4975
        %v4977 = vshrl.u32 %v1347, 16
        %v4979 = vrot.slane %v4977, 4
        %v4980 = vor.u32 %v4979, %v4975
        %v4981 = vrot.slane %v4980, 4
        %v4983 = vshll.u32 %v1348, 16
        %v4985 = vrot.slane %v4983, 5
        %v4986 = vsel %vm4478, %v4981, %v4985
        %v4987 = vshrl.u32 %v1348, 16
        %v4989 = vrot.slane %v4987, 4
        %v4990 = vor.u32 %v4989, %v4985
        %v4991 = vrot.slane %v4990, 4
        %v4993 = vshll.u32 %v1349, 16
        %v4995 = vrot.slane %v4993, 5
        %v4996 = vsel %vm4478, %v4991, %v4995
        %v4997 = vshrl.u32 %v1349, 16
        %v4999 = vrot.slane %v4997, 4
        %v5000 = vor.u32 %v4999, %v4995
        %v5001 = vrot.slane %v5000, 4
        %v5003 = vshll.u32 %v1350, 16
        %v5005 = vrot.slane %v5003, 5
        %v5006 = vsel %vm4478, %v5001, %v5005
        %v5008 = vshrl.u32 %v1351, 16
        %v5010 = vrot.slane %v5008, 4
        %v5011 = vshll.u32 %v1351, 16
        %v5013 = vrot.slane %v5011, 5
        %v5014 = vor.u32 %v5010, %v5013
        %v5015 = vrot.slane %v5014, 4
        %v5017 = vshll.u32 %v1352, 16
        %v5019 = vrot.slane %v5017, 5
        %v5020 = vsel %vm4478, %v5015, %v5019
        %v5021 = vshrl.u32 %v1352, 16
        %v5023 = vrot.slane %v5021, 4
        %v5024 = vor.u32 %v5023, %v5019
        %v5025 = vrot.slane %v5024, 4
        %v5027 = vshll.u32 %v1353, 16
        %v5029 = vrot.slane %v5027, 5
        %v5030 = vsel %vm4478, %v5025, %v5029
        %v5031 = vshrl.u32 %v1353, 16
        %v5033 = vrot.slane %v5031, 4
        %v5034 = vor.u32 %v5033, %v5029
        %v5035 = vrot.slane %v5034, 4
        %v5037 = vshll.u32 %v1354, 16
        %v5039 = vrot.slane %v5037, 5
        %v5040 = vsel %vm4478, %v5035, %v5039
        %v5041 = vshrl.u32 %v1354, 16
        %v5043 = vrot.slane %v5041, 4
        %v5044 = vor.u32 %v5043, %v5039
        %v5045 = vrot.slane %v5044, 4
        %v5047 = vshll.u32 %v1355, 16
        %v5049 = vrot.slane %v5047, 5
        %v5050 = vsel %vm4478, %v5045, %v5049
        %v5052 = vshrl.u32 %v1356, 16
        %v5054 = vrot.slane %v5052, 4
        %v5055 = vshll.u32 %v1356, 16
        %v5057 = vrot.slane %v5055, 5
        %v5058 = vor.u32 %v5054, %v5057
        %v5059 = vrot.slane %v5058, 4
        %v5061 = vshll.u32 %v1357, 16
        %v5063 = vrot.slane %v5061, 5
        %v5064 = vsel %vm4478, %v5059, %v5063
        %v5065 = vshrl.u32 %v1357, 16
        %v5067 = vrot.slane %v5065, 4
        %v5068 = vor.u32 %v5067, %v5063
        %v5069 = vrot.slane %v5068, 4
        %v5071 = vshll.u32 %v1358, 16
        %v5073 = vrot.slane %v5071, 5
        %v5074 = vsel %vm4478, %v5069, %v5073
        %v5075 = vshrl.u32 %v1358, 16
        %v5077 = vrot.slane %v5075, 4
        %v5078 = vor.u32 %v5077, %v5073
        %v5079 = vrot.slane %v5078, 4
        %v5081 = vshll.u32 %v1359, 16
        %v5083 = vrot.slane %v5081, 5
        %v5084 = vsel %vm4478, %v5079, %v5083
        %v5085 = vshrl.u32 %v1359, 16
        %v5087 = vrot.slane %v5085, 4
        %v5088 = vor.u32 %v5087, %v5083
        %v5089 = vrot.slane %v5088, 4
        %v5091 = vshll.u32 %v1360, 16
        %v5093 = vrot.slane %v5091, 5
        %v5094 = vsel %vm4478, %v5089, %v5093
        %v5096 = vshrl.u32 %v1361, 16
        %v5098 = vrot.slane %v5096, 4
        %v5099 = vshll.u32 %v1361, 16
        %v5101 = vrot.slane %v5099, 5
        %v5102 = vor.u32 %v5098, %v5101
        %v5103 = vrot.slane %v5102, 4
        %v5105 = vshll.u32 %v1362, 16
        %v5107 = vrot.slane %v5105, 5
        %v5108 = vsel %vm4478, %v5103, %v5107
        %v5109 = vshrl.u32 %v1362, 16
        %v5111 = vrot.slane %v5109, 4
        %v5112 = vor.u32 %v5111, %v5107
        %v5113 = vrot.slane %v5112, 4
        %v5115 = vshll.u32 %v1363, 16
        %v5117 = vrot.slane %v5115, 5
        %v5118 = vsel %vm4478, %v5113, %v5117
        %v5119 = vshrl.u32 %v1363, 16
        %v5121 = vrot.slane %v5119, 4
        %v5122 = vor.u32 %v5121, %v5117
        %v5123 = vrot.slane %v5122, 4
        %v5125 = vshll.u32 %v1364, 16
        %v5127 = vrot.slane %v5125, 5
        %v5128 = vsel %vm4478, %v5123, %v5127
        %v5129 = vshrl.u32 %v1364, 16
        %v5131 = vrot.slane %v5129, 4
        %v5132 = vor.u32 %v5131, %v5127
        %v5133 = vrot.slane %v5132, 4
        %v5135 = vshll.u32 %v1365, 16
        %v5137 = vrot.slane %v5135, 5
        %v5138 = vsel %vm4478, %v5133, %v5137
        %v5140 = vshrl.u32 %v1366, 16
        %v5142 = vrot.slane %v5140, 4
        %v5143 = vshll.u32 %v1366, 16
        %v5145 = vrot.slane %v5143, 5
        %v5146 = vor.u32 %v5142, %v5145
        %v5147 = vrot.slane %v5146, 4
        %v5149 = vshll.u32 %v1367, 16
        %v5151 = vrot.slane %v5149, 5
        %v5152 = vsel %vm4478, %v5147, %v5151
        %v5153 = vshrl.u32 %v1367, 16
        %v5155 = vrot.slane %v5153, 4
        %v5156 = vor.u32 %v5155, %v5151
        %v5157 = vrot.slane %v5156, 4
        %v5159 = vshll.u32 %v1368, 16
        %v5161 = vrot.slane %v5159, 5
        %v5162 = vsel %vm4478, %v5157, %v5161
        %v5163 = vshrl.u32 %v1368, 16
        %v5165 = vrot.slane %v5163, 4
        %v5166 = vor.u32 %v5165, %v5161
        %v5167 = vrot.slane %v5166, 4
        %v5169 = vshll.u32 %v1369, 16
        %v5171 = vrot.slane %v5169, 5
        %v5172 = vsel %vm4478, %v5167, %v5171
        %v5173 = vshrl.u32 %v1369, 16
        %v5175 = vrot.slane %v5173, 4
        %v5176 = vor.u32 %v5175, %v5171
        %v5177 = vrot.slane %v5176, 4
        %v5179 = vshll.u32 %v1370, 16
        %v5181 = vrot.slane %v5179, 5
        %v5182 = vsel %vm4478, %v5177, %v5181
        %v5184 = vshrl.u32 %v1371, 16
        %v5186 = vrot.slane %v5184, 4
        %v5187 = vshll.u32 %v1371, 16
        %v5189 = vrot.slane %v5187, 5
        %v5190 = vor.u32 %v5186, %v5189
        %v5191 = vrot.slane %v5190, 4
        %v5193 = vshll.u32 %v1372, 16
        %v5195 = vrot.slane %v5193, 5
        %v5196 = vsel %vm4478, %v5191, %v5195
        %v5197 = vshrl.u32 %v1372, 16
        %v5199 = vrot.slane %v5197, 4
        %v5200 = vor.u32 %v5199, %v5195
        %v5201 = vrot.slane %v5200, 4
        %v5203 = vshll.u32 %v1373, 16
        %v5205 = vrot.slane %v5203, 5
        %v5206 = vsel %vm4478, %v5201, %v5205
        %v5207 = vshrl.u32 %v1373, 16
        %v5209 = vrot.slane %v5207, 4
        %v5210 = vor.u32 %v5209, %v5205
        %v5211 = vrot.slane %v5210, 4
        %v5213 = vshll.u32 %v1374, 16
        %v5215 = vrot.slane %v5213, 5
        %v5216 = vsel %vm4478, %v5211, %v5215
        %v5217 = vshrl.u32 %v1374, 16
        %v5219 = vrot.slane %v5217, 4
        %v5220 = vor.u32 %v5219, %v5215
        %v5221 = vrot.slane %v5220, 4
        %v5223 = vshll.u32 %v1375, 16
        %v5225 = vrot.slane %v5223, 5
        %v5226 = vsel %vm4478, %v5221, %v5225
        %v5228 = vshrl.u32 %v1376, 16
        %v5230 = vrot.slane %v5228, 4
        %v5231 = vshll.u32 %v1376, 16
        %v5233 = vrot.slane %v5231, 5
        %v5234 = vor.u32 %v5230, %v5233
        %v5235 = vrot.slane %v5234, 4
        %v5237 = vshll.u32 %v1377, 16
        %v5239 = vrot.slane %v5237, 5
        %v5240 = vsel %vm4478, %v5235, %v5239
        %v5241 = vshrl.u32 %v1377, 16
        %v5243 = vrot.slane %v5241, 4
        %v5244 = vor.u32 %v5243, %v5239
        %v5245 = vrot.slane %v5244, 4
        %v5247 = vshll.u32 %v1378, 16
        %v5249 = vrot.slane %v5247, 5
        %v5250 = vsel %vm4478, %v5245, %v5249
        %v5251 = vshrl.u32 %v1378, 16
        %v5253 = vrot.slane %v5251, 4
        %v5254 = vor.u32 %v5253, %v5249
        %v5255 = vrot.slane %v5254, 4
        %v5257 = vshll.u32 %v1379, 16
        %v5259 = vrot.slane %v5257, 5
        %v5260 = vsel %vm4478, %v5255, %v5259
        %v5261 = vshrl.u32 %v1379, 16
        %v5263 = vrot.slane %v5261, 4
        %v5264 = vor.u32 %v5263, %v5259
        %v5265 = vrot.slane %v5264, 4
        %v5267 = vshll.u32 %v1380, 16
        %v5269 = vrot.slane %v5267, 5
        %v5270 = vsel %vm4478, %v5265, %v5269
        %v5272 = vshrl.u32 %v1381, 16
        %v5274 = vrot.slane %v5272, 4
        %v5275 = vshll.u32 %v1381, 16
        %v5277 = vrot.slane %v5275, 5
        %v5278 = vor.u32 %v5274, %v5277
        %v5279 = vrot.slane %v5278, 4
        %v5281 = vshll.u32 %v1382, 16
        %v5283 = vrot.slane %v5281, 5
        %v5284 = vsel %vm4478, %v5279, %v5283
        %v5285 = vshrl.u32 %v1382, 16
        %v5287 = vrot.slane %v5285, 4
        %v5288 = vor.u32 %v5287, %v5283
        %v5289 = vrot.slane %v5288, 4
        %v5291 = vshll.u32 %v1383, 16
        %v5293 = vrot.slane %v5291, 5
        %v5294 = vsel %vm4478, %v5289, %v5293
        %v5295 = vshrl.u32 %v1383, 16
        %v5297 = vrot.slane %v5295, 4
        %v5298 = vor.u32 %v5297, %v5293
        %v5299 = vrot.slane %v5298, 4
        %v5301 = vshll.u32 %v1384, 16
        %v5303 = vrot.slane %v5301, 5
        %v5304 = vsel %vm4478, %v5299, %v5303
        %v5305 = vshrl.u32 %v1384, 16
        %v5307 = vrot.slane %v5305, 4
        %v5308 = vor.u32 %v5307, %v5303
        %v5309 = vrot.slane %v5308, 4
        %v5311 = vshll.u32 %v1385, 16
        %v5313 = vrot.slane %v5311, 5
        %v5314 = vsel %vm4478, %v5309, %v5313
        %v5316 = vshrl.u32 %v1386, 16
        %v5318 = vrot.slane %v5316, 4
        %v5319 = vshll.u32 %v1386, 16
        %v5321 = vrot.slane %v5319, 5
        %v5322 = vor.u32 %v5318, %v5321
        %v5323 = vrot.slane %v5322, 4
        %v5325 = vshll.u32 %v1387, 16
        %v5327 = vrot.slane %v5325, 5
        %v5328 = vsel %vm4478, %v5323, %v5327
        %v5329 = vshrl.u32 %v1387, 16
        %v5331 = vrot.slane %v5329, 4
        %v5332 = vor.u32 %v5331, %v5327
        %v5333 = vrot.slane %v5332, 4
        %v5335 = vshll.u32 %v1388, 16
        %v5337 = vrot.slane %v5335, 5
        %v5338 = vsel %vm4478, %v5333, %v5337
        %v5339 = vshrl.u32 %v1388, 16
        %v5341 = vrot.slane %v5339, 4
        %v5342 = vor.u32 %v5341, %v5337
        %v5343 = vrot.slane %v5342, 4
        %v5345 = vshll.u32 %v1389, 16
        %v5347 = vrot.slane %v5345, 5
        %v5348 = vsel %vm4478, %v5343, %v5347
        %v5349 = vshrl.u32 %v1389, 16
        %v5351 = vrot.slane %v5349, 4
        %v5352 = vor.u32 %v5351, %v5347
        %v5353 = vrot.slane %v5352, 4
        %v5355 = vshll.u32 %v1390, 16
        %v5357 = vrot.slane %v5355, 5
        %v5358 = vsel %vm4478, %v5353, %v5357
        %v5360 = vshrl.u32 %v1391, 16
        %v5362 = vrot.slane %v5360, 4
        %v5363 = vshll.u32 %v1391, 16
        %v5365 = vrot.slane %v5363, 5
        %v5366 = vor.u32 %v5362, %v5365
        %v5367 = vrot.slane %v5366, 4
        %v5369 = vshll.u32 %v1392, 16
        %v5371 = vrot.slane %v5369, 5
        %v5372 = vsel %vm4478, %v5367, %v5371
        %v5373 = vshrl.u32 %v1392, 16
        %v5375 = vrot.slane %v5373, 4
        %v5376 = vor.u32 %v5375, %v5371
        %v5377 = vrot.slane %v5376, 4
        %v5379 = vshll.u32 %v1393, 16
        %v5381 = vrot.slane %v5379, 5
        %v5382 = vsel %vm4478, %v5377, %v5381
        %v5383 = vshrl.u32 %v1393, 16
        %v5385 = vrot.slane %v5383, 4
        %v5386 = vor.u32 %v5385, %v5381
        %v5387 = vrot.slane %v5386, 4
        %v5389 = vshll.u32 %v1394, 16
        %v5391 = vrot.slane %v5389, 5
        %v5392 = vsel %vm4478, %v5387, %v5391
        %v5393 = vshrl.u32 %v1394, 16
        %v5395 = vrot.slane %v5393, 4
        %v5396 = vor.u32 %v5395, %v5391
        %v5397 = vrot.slane %v5396, 4
        %v5399 = vshll.u32 %v1395, 16
        %v5401 = vrot.slane %v5399, 5
        %v5402 = vsel %vm4478, %v5397, %v5401
        %v5404 = vshrl.u32 %v1396, 16
        %v5406 = vrot.slane %v5404, 4
        %v5407 = vshll.u32 %v1396, 16
        %v5409 = vrot.slane %v5407, 5
        %v5410 = vor.u32 %v5406, %v5409
        %v5411 = vrot.slane %v5410, 4
        %v5413 = vshll.u32 %v1397, 16
        %v5415 = vrot.slane %v5413, 5
        %v5416 = vsel %vm4478, %v5411, %v5415
        %v5417 = vshrl.u32 %v1397, 16
        %v5419 = vrot.slane %v5417, 4
        %v5420 = vor.u32 %v5419, %v5415
        %v5421 = vrot.slane %v5420, 4
        %v5423 = vshll.u32 %v1398, 16
        %v5425 = vrot.slane %v5423, 5
        %v5426 = vsel %vm4478, %v5421, %v5425
        %v5427 = vshrl.u32 %v1398, 16
        %v5429 = vrot.slane %v5427, 4
        %v5430 = vor.u32 %v5429, %v5425
        %v5431 = vrot.slane %v5430, 4
        %v5433 = vshll.u32 %v1399, 16
        %v5435 = vrot.slane %v5433, 5
        %v5436 = vsel %vm4478, %v5431, %v5435
        %v5437 = vshrl.u32 %v1399, 16
        %v5439 = vrot.slane %v5437, 4
        %v5440 = vor.u32 %v5439, %v5435
        %v5441 = vrot.slane %v5440, 4
        %v5443 = vshll.u32 %v1400, 16
        %v5445 = vrot.slane %v5443, 5
        %v5446 = vsel %vm4478, %v5441, %v5445
        %v5448 = vshrl.u32 %v1401, 16
        %v5450 = vrot.slane %v5448, 4
        %v5451 = vshll.u32 %v1401, 16
        %v5453 = vrot.slane %v5451, 5
        %v5454 = vor.u32 %v5450, %v5453
        %v5455 = vrot.slane %v5454, 4
        %v5457 = vshll.u32 %v1402, 16
        %v5459 = vrot.slane %v5457, 5
        %v5460 = vsel %vm4478, %v5455, %v5459
        %v5461 = vshrl.u32 %v1402, 16
        %v5463 = vrot.slane %v5461, 4
        %v5464 = vor.u32 %v5463, %v5459
        %v5465 = vrot.slane %v5464, 4
        %v5467 = vshll.u32 %v1403, 16
        %v5469 = vrot.slane %v5467, 5
        %v5470 = vsel %vm4478, %v5465, %v5469
        %v5471 = vshrl.u32 %v1403, 16
        %v5473 = vrot.slane %v5471, 4
        %v5474 = vor.u32 %v5473, %v5469
        %v5475 = vrot.slane %v5474, 4
        %v5477 = vshll.u32 %v1404, 16
        %v5479 = vrot.slane %v5477, 5
        %v5480 = vsel %vm4478, %v5475, %v5479
        %v5481 = vshrl.u32 %v1404, 16
        %v5483 = vrot.slane %v5481, 4
        %v5484 = vor.u32 %v5483, %v5479
        %v5485 = vrot.slane %v5484, 4
        %v5487 = vshll.u32 %v1405, 16
        %v5489 = vrot.slane %v5487, 5
        %v5490 = vsel %vm4478, %v5485, %v5489
        %v5492 = vshrl.u32 %v1406, 16
        %v5494 = vrot.slane %v5492, 4
        %v5495 = vshll.u32 %v1406, 16
        %v5497 = vrot.slane %v5495, 5
        %v5498 = vor.u32 %v5494, %v5497
        %v5499 = vrot.slane %v5498, 4
        %v5501 = vshll.u32 %v1407, 16
        %v5503 = vrot.slane %v5501, 5
        %v5504 = vsel %vm4478, %v5499, %v5503
        %v5505 = vshrl.u32 %v1407, 16
        %v5507 = vrot.slane %v5505, 4
        %v5508 = vor.u32 %v5507, %v5503
        %v5509 = vrot.slane %v5508, 4
        %v5511 = vshll.u32 %v1408, 16
        %v5513 = vrot.slane %v5511, 5
        %v5514 = vsel %vm4478, %v5509, %v5513
        %v5515 = vshrl.u32 %v1408, 16
        %v5517 = vrot.slane %v5515, 4
        %v5518 = vor.u32 %v5517, %v5513
        %v5519 = vrot.slane %v5518, 4
        %v5521 = vshll.u32 %v1409, 16
        %v5523 = vrot.slane %v5521, 5
        %v5524 = vsel %vm4478, %v5519, %v5523
        %v5525 = vshrl.u32 %v1409, 16
        %v5527 = vrot.slane %v5525, 4
        %v5528 = vor.u32 %v5527, %v5523
        %v5529 = vrot.slane %v5528, 4
        %v5531 = vshll.u32 %v1410, 16
        %v5533 = vrot.slane %v5531, 5
        %v5534 = vsel %vm4478, %v5529, %v5533
        %v5536 = vshrl.u32 %v1411, 16
        %v5538 = vrot.slane %v5536, 4
        %v5539 = vshll.u32 %v1411, 16
        %v5541 = vrot.slane %v5539, 5
        %v5542 = vor.u32 %v5538, %v5541
        %v5543 = vrot.slane %v5542, 4
        %v5545 = vshll.u32 %v1412, 16
        %v5547 = vrot.slane %v5545, 5
        %v5548 = vsel %vm4478, %v5543, %v5547
        %v5549 = vshrl.u32 %v1412, 16
        %v5551 = vrot.slane %v5549, 4
        %v5552 = vor.u32 %v5551, %v5547
        %v5553 = vrot.slane %v5552, 4
        %v5555 = vshll.u32 %v1413, 16
        %v5557 = vrot.slane %v5555, 5
        %v5558 = vsel %vm4478, %v5553, %v5557
        %v5559 = vshrl.u32 %v1413, 16
        %v5561 = vrot.slane %v5559, 4
        %v5562 = vor.u32 %v5561, %v5557
        %v5563 = vrot.slane %v5562, 4
        %v5565 = vshll.u32 %v1414, 16
        %v5567 = vrot.slane %v5565, 5
        %v5568 = vsel %vm4478, %v5563, %v5567
        %v5569 = vshrl.u32 %v1414, 16
        %v5571 = vrot.slane %v5569, 4
        %v5572 = vor.u32 %v5571, %v5567
        %v5573 = vrot.slane %v5572, 4
        %v5575 = vshll.u32 %v1415, 16
        %v5577 = vrot.slane %v5575, 5
        %v5578 = vsel %vm4478, %v5573, %v5577
        %v5580 = vshrl.u32 %v1416, 16
        %v5582 = vrot.slane %v5580, 4
        %v5583 = vshll.u32 %v1416, 16
        %v5585 = vrot.slane %v5583, 5
        %v5586 = vor.u32 %v5582, %v5585
        %v5587 = vrot.slane %v5586, 4
        %v5589 = vshll.u32 %v1417, 16
        %v5591 = vrot.slane %v5589, 5
        %v5592 = vsel %vm4478, %v5587, %v5591
        %v5593 = vshrl.u32 %v1417, 16
        %v5595 = vrot.slane %v5593, 4
        %v5596 = vor.u32 %v5595, %v5591
        %v5597 = vrot.slane %v5596, 4
        %v5599 = vshll.u32 %v1418, 16
        %v5601 = vrot.slane %v5599, 5
        %v5602 = vsel %vm4478, %v5597, %v5601
        %v5603 = vshrl.u32 %v1418, 16
        %v5605 = vrot.slane %v5603, 4
        %v5606 = vor.u32 %v5605, %v5601
        %v5607 = vrot.slane %v5606, 4
        %v5609 = vshll.u32 %v1419, 16
        %v5611 = vrot.slane %v5609, 5
        %v5612 = vsel %vm4478, %v5607, %v5611
        %v5613 = vshrl.u32 %v1419, 16
        %v5615 = vrot.slane %v5613, 4
        %v5616 = vor.u32 %v5615, %v5611
        %v5617 = vrot.slane %v5616, 4
        %v5619 = vshll.u32 %v1420, 16
        %v5621 = vrot.slane %v5619, 5
        %v5622 = vsel %vm4478, %v5617, %v5621
        %v5624 = vshrl.u32 %v1421, 16
        %v5626 = vrot.slane %v5624, 4
        %v5627 = vshll.u32 %v1421, 16
        %v5629 = vrot.slane %v5627, 5
        %v5630 = vor.u32 %v5626, %v5629
        %v5631 = vrot.slane %v5630, 4
        %v5633 = vshll.u32 %v1422, 16
        %v5635 = vrot.slane %v5633, 5
        %v5636 = vsel %vm4478, %v5631, %v5635
        %v5637 = vshrl.u32 %v1422, 16
        %v5639 = vrot.slane %v5637, 4
        %v5640 = vor.u32 %v5639, %v5635
        %v5641 = vrot.slane %v5640, 4
        %v5643 = vshll.u32 %v1423, 16
        %v5645 = vrot.slane %v5643, 5
        %v5646 = vsel %vm4478, %v5641, %v5645
        %v5647 = vshrl.u32 %v1423, 16
        %v5649 = vrot.slane %v5647, 4
        %v5650 = vor.u32 %v5649, %v5645
        %v5651 = vrot.slane %v5650, 4
        %v5653 = vshll.u32 %v1424, 16
        %v5655 = vrot.slane %v5653, 5
        %v5656 = vsel %vm4478, %v5651, %v5655
        %v5657 = vshrl.u32 %v1424, 16
        %v5659 = vrot.slane %v5657, 4
        %v5660 = vor.u32 %v5659, %v5655
        %v5661 = vrot.slane %v5660, 4
        %v5663 = vshll.u32 %v1425, 16
        %v5665 = vrot.slane %v5663, 5
        %v5666 = vsel %vm4478, %v5661, %v5665
        %v5668 = vshrl.u32 %v1426, 16
        %v5670 = vrot.slane %v5668, 4
        %v5671 = vshll.u32 %v1426, 16
        %v5673 = vrot.slane %v5671, 5
        %v5674 = vor.u32 %v5670, %v5673
        %v5675 = vrot.slane %v5674, 4
        %v5677 = vshll.u32 %v1427, 16
        %v5679 = vrot.slane %v5677, 5
        %v5680 = vsel %vm4478, %v5675, %v5679
        %v5681 = vshrl.u32 %v1427, 16
        %v5683 = vrot.slane %v5681, 4
        %v5684 = vor.u32 %v5683, %v5679
        %v5685 = vrot.slane %v5684, 4
        %v5687 = vshll.u32 %v1428, 16
        %v5689 = vrot.slane %v5687, 5
        %v5690 = vsel %vm4478, %v5685, %v5689
        %v5691 = vshrl.u32 %v1428, 16
        %v5693 = vrot.slane %v5691, 4
        %v5694 = vor.u32 %v5693, %v5689
        %v5695 = vrot.slane %v5694, 4
        %v5697 = vshll.u32 %v1429, 16
        %v5699 = vrot.slane %v5697, 5
        %v5700 = vsel %vm4478, %v5695, %v5699
        %v5701 = vshrl.u32 %v1429, 16
        %v5703 = vrot.slane %v5701, 4
        %v5704 = vor.u32 %v5703, %v5699
        %v5705 = vrot.slane %v5704, 4
        %v5707 = vshll.u32 %v1430, 16
        %v5709 = vrot.slane %v5707, 5
        %v5710 = vsel %vm4478, %v5705, %v5709
        %v5712 = vshrl.u32 %v1431, 16
        %v5714 = vrot.slane %v5712, 4
        %v5715 = vshll.u32 %v1431, 16
        %v5717 = vrot.slane %v5715, 5
        %v5718 = vor.u32 %v5714, %v5717
        %v5719 = vrot.slane %v5718, 4
        %v5721 = vshll.u32 %v1432, 16
        %v5723 = vrot.slane %v5721, 5
        %v5724 = vsel %vm4478, %v5719, %v5723
        %v5725 = vshrl.u32 %v1432, 16
        %v5727 = vrot.slane %v5725, 4
        %v5728 = vor.u32 %v5727, %v5723
        %v5729 = vrot.slane %v5728, 4
        %v5731 = vshll.u32 %v1433, 16
        %v5733 = vrot.slane %v5731, 5
        %v5734 = vsel %vm4478, %v5729, %v5733
        %v5735 = vshrl.u32 %v1433, 16
        %v5737 = vrot.slane %v5735, 4
        %v5738 = vor.u32 %v5737, %v5733
        %v5739 = vrot.slane %v5738, 4
        %v5741 = vshll.u32 %v1434, 16
        %v5743 = vrot.slane %v5741, 5
        %v5744 = vsel %vm4478, %v5739, %v5743
        %v5745 = vshrl.u32 %v1434, 16
        %v5747 = vrot.slane %v5745, 4
        %v5748 = vor.u32 %v5747, %v5743
        %v5749 = vrot.slane %v5748, 4
        %v5751 = vshll.u32 %v1435, 16
        %v5753 = vrot.slane %v5751, 5
        %v5754 = vsel %vm4478, %v5749, %v5753
        %v5756 = vshrl.u32 %v1436, 16
        %v5758 = vrot.slane %v5756, 4
        %v5759 = vshll.u32 %v1436, 16
        %v5761 = vrot.slane %v5759, 5
        %v5762 = vor.u32 %v5758, %v5761
        %v5763 = vrot.slane %v5762, 4
        %v5765 = vshll.u32 %v1437, 16
        %v5767 = vrot.slane %v5765, 5
        %v5768 = vsel %vm4478, %v5763, %v5767
        %v5769 = vshrl.u32 %v1437, 16
        %v5771 = vrot.slane %v5769, 4
        %v5772 = vor.u32 %v5771, %v5767
        %v5773 = vrot.slane %v5772, 4
        %v5775 = vshll.u32 %v1438, 16
        %v5777 = vrot.slane %v5775, 5
        %v5778 = vsel %vm4478, %v5773, %v5777
        %v5779 = vshrl.u32 %v1438, 16
        %v5781 = vrot.slane %v5779, 4
        %v5782 = vor.u32 %v5781, %v5777
        %v5783 = vrot.slane %v5782, 4
        %v5785 = vshll.u32 %v1439, 16
        %v5787 = vrot.slane %v5785, 5
        %v5788 = vsel %vm4478, %v5783, %v5787
        %v5789 = vshrl.u32 %v1439, 16
        %v5791 = vrot.slane %v5789, 4
        %v5792 = vor.u32 %v5791, %v5787
        %v5793 = vrot.slane %v5792, 4
        %v5795 = vshll.u32 %v1440, 16
        %v5797 = vrot.slane %v5795, 5
        %v5798 = vsel %vm4478, %v5793, %v5797
        %v5800 = vshrl.u32 %v1441, 16
        %v5802 = vrot.slane %v5800, 4
        %v5803 = vshll.u32 %v1441, 16
        %v5805 = vrot.slane %v5803, 5
        %v5806 = vor.u32 %v5802, %v5805
        %v5807 = vrot.slane %v5806, 4
        %v5809 = vshll.u32 %v1442, 16
        %v5811 = vrot.slane %v5809, 5
        %v5812 = vsel %vm4478, %v5807, %v5811
        %v5813 = vshrl.u32 %v1442, 16
        %v5815 = vrot.slane %v5813, 4
        %v5816 = vor.u32 %v5815, %v5811
        %v5817 = vrot.slane %v5816, 4
        %v5819 = vshll.u32 %v1443, 16
        %v5821 = vrot.slane %v5819, 5
        %v5822 = vsel %vm4478, %v5817, %v5821
        %v5823 = vshrl.u32 %v1443, 16
        %v5825 = vrot.slane %v5823, 4
        %v5826 = vor.u32 %v5825, %v5821
        %v5827 = vrot.slane %v5826, 4
        %v5829 = vshll.u32 %v1444, 16
        %v5831 = vrot.slane %v5829, 5
        %v5832 = vsel %vm4478, %v5827, %v5831
        %v5833 = vshrl.u32 %v1444, 16
        %v5835 = vrot.slane %v5833, 4
        %v5836 = vor.u32 %v5835, %v5831
        %v5837 = vrot.slane %v5836, 4
        %v5839 = vshll.u32 %v1445, 16
        %v5841 = vrot.slane %v5839, 5
        %v5842 = vsel %vm4478, %v5837, %v5841
        %v5844 = vshrl.u32 %v1446, 16
        %v5846 = vrot.slane %v5844, 4
        %v5847 = vshll.u32 %v1446, 16
        %v5849 = vrot.slane %v5847, 5
        %v5850 = vor.u32 %v5846, %v5849
        %v5851 = vrot.slane %v5850, 4
        %v5853 = vshll.u32 %v1447, 16
        %v5855 = vrot.slane %v5853, 5
        %v5856 = vsel %vm4478, %v5851, %v5855
        %v5857 = vshrl.u32 %v1447, 16
        %v5859 = vrot.slane %v5857, 4
        %v5860 = vor.u32 %v5859, %v5855
        %v5861 = vrot.slane %v5860, 4
        %v5863 = vshll.u32 %v1448, 16
        %v5865 = vrot.slane %v5863, 5
        %v5866 = vsel %vm4478, %v5861, %v5865
        %v5867 = vshrl.u32 %v1448, 16
        %v5869 = vrot.slane %v5867, 4
        %v5870 = vor.u32 %v5869, %v5865
        %v5871 = vrot.slane %v5870, 4
        %v5873 = vshll.u32 %v1449, 16
        %v5875 = vrot.slane %v5873, 5
        %v5876 = vsel %vm4478, %v5871, %v5875
        %v5877 = vshrl.u32 %v1449, 16
        %v5879 = vrot.slane %v5877, 4
        %v5880 = vor.u32 %v5879, %v5875
        %v5881 = vrot.slane %v5880, 4
        %v5883 = vshll.u32 %v1450, 16
        %v5885 = vrot.slane %v5883, 5
        %v5886 = vsel %vm4478, %v5881, %v5885
        %vm6047 = vcmask 1042432
        %vm6048 = vcmask 1046532
        %vm6049 = vmor %vm6047, %vm6048
        %v6050 = vrot.slane %v1291, 5
        %v6051 = vrot.slane %v6050, 4
        %v6052 = vrot.slane %v1292, 5
        %v6053 = vsel %vm6049, %v6051, %v6052
        %v6054 = vrot.slane %v6052, 4
        %v6055 = vrot.slane %v1293, 5
        %v6056 = vsel %vm6049, %v6054, %v6055
        %v6057 = vrot.slane %v6055, 4
        %v6058 = vrot.slane %v1294, 5
        %v6059 = vsel %vm6049, %v6057, %v6058
        %v6060 = vrot.slane %v6058, 4
        %v6061 = vrot.slane %v1295, 5
        %v6062 = vsel %vm6049, %v6060, %v6061
        %v6063 = vrot.slane %v1296, 5
        %v6064 = vrot.slane %v6063, 4
        %v6065 = vrot.slane %v1297, 5
        %v6066 = vsel %vm6049, %v6064, %v6065
        %v6067 = vrot.slane %v6065, 4
        %v6068 = vrot.slane %v1298, 5
        %v6069 = vsel %vm6049, %v6067, %v6068
        %v6070 = vrot.slane %v6068, 4
        %v6071 = vrot.slane %v1299, 5
        %v6072 = vsel %vm6049, %v6070, %v6071
        %v6073 = vrot.slane %v6071, 4
        %v6074 = vrot.slane %v1300, 5
        %v6075 = vsel %vm6049, %v6073, %v6074
        %v6076 = vrot.slane %v1301, 5
        %v6077 = vrot.slane %v6076, 4
        %v6078 = vrot.slane %v1302, 5
        %v6079 = vsel %vm6049, %v6077, %v6078
        %v6080 = vrot.slane %v6078, 4
        %v6081 = vrot.slane %v1303, 5
        %v6082 = vsel %vm6049, %v6080, %v6081
        %v6083 = vrot.slane %v6081, 4
        %v6084 = vrot.slane %v1304, 5
        %v6085 = vsel %vm6049, %v6083, %v6084
        %v6086 = vrot.slane %v6084, 4
        %v6087 = vrot.slane %v1305, 5
        %v6088 = vsel %vm6049, %v6086, %v6087
        %v6089 = vrot.slane %v1306, 5
        %v6090 = vrot.slane %v6089, 4
        %v6091 = vrot.slane %v1307, 5
        %v6092 = vsel %vm6049, %v6090, %v6091
        %v6093 = vrot.slane %v6091, 4
        %v6094 = vrot.slane %v1308, 5
        %v6095 = vsel %vm6049, %v6093, %v6094
        %v6096 = vrot.slane %v6094, 4
        %v6097 = vrot.slane %v1309, 5
        %v6098 = vsel %vm6049, %v6096, %v6097
        %v6099 = vrot.slane %v6097, 4
        %v6100 = vrot.slane %v1310, 5
        %v6101 = vsel %vm6049, %v6099, %v6100
        %v6102 = vrot.slane %v1311, 5
        %v6103 = vrot.slane %v6102, 4
        %v6104 = vrot.slane %v1312, 5
        %v6105 = vsel %vm6049, %v6103, %v6104
        %v6106 = vrot.slane %v6104, 4
        %v6107 = vrot.slane %v1313, 5
        %v6108 = vsel %vm6049, %v6106, %v6107
        %v6109 = vrot.slane %v6107, 4
        %v6110 = vrot.slane %v1314, 5
        %v6111 = vsel %vm6049, %v6109, %v6110
        %v6112 = vrot.slane %v6110, 4
        %v6113 = vrot.slane %v1315, 5
        %v6114 = vsel %vm6049, %v6112, %v6113
        %v6115 = vrot.slane %v1316, 5
        %v6116 = vrot.slane %v6115, 4
        %v6117 = vrot.slane %v1317, 5
        %v6118 = vsel %vm6049, %v6116, %v6117
        %v6119 = vrot.slane %v6117, 4
        %v6120 = vrot.slane %v1318, 5
        %v6121 = vsel %vm6049, %v6119, %v6120
        %v6122 = vrot.slane %v6120, 4
        %v6123 = vrot.slane %v1319, 5
        %v6124 = vsel %vm6049, %v6122, %v6123
        %v6125 = vrot.slane %v6123, 4
        %v6126 = vrot.slane %v1320, 5
        %v6127 = vsel %vm6049, %v6125, %v6126
        %v6128 = vrot.slane %v1321, 5
        %v6129 = vrot.slane %v6128, 4
        %v6130 = vrot.slane %v1322, 5
        %v6131 = vsel %vm6049, %v6129, %v6130
        %v6132 = vrot.slane %v6130, 4
        %v6133 = vrot.slane %v1323, 5
        %v6134 = vsel %vm6049, %v6132, %v6133
        %v6135 = vrot.slane %v6133, 4
        %v6136 = vrot.slane %v1324, 5
        %v6137 = vsel %vm6049, %v6135, %v6136
        %v6138 = vrot.slane %v6136, 4
        %v6139 = vrot.slane %v1325, 5
        %v6140 = vsel %vm6049, %v6138, %v6139
        %v6141 = vrot.slane %v1326, 5
        %v6142 = vrot.slane %v6141, 4
        %v6143 = vrot.slane %v1327, 5
        %v6144 = vsel %vm6049, %v6142, %v6143
        %v6145 = vrot.slane %v6143, 4
        %v6146 = vrot.slane %v1328, 5
        %v6147 = vsel %vm6049, %v6145, %v6146
        %v6148 = vrot.slane %v6146, 4
        %v6149 = vrot.slane %v1329, 5
        %v6150 = vsel %vm6049, %v6148, %v6149
        %v6151 = vrot.slane %v6149, 4
        %v6152 = vrot.slane %v1330, 5
        %v6153 = vsel %vm6049, %v6151, %v6152
        %v6154 = vrot.slane %v1331, 5
        %v6155 = vrot.slane %v6154, 4
        %v6156 = vrot.slane %v1332, 5
        %v6157 = vsel %vm6049, %v6155, %v6156
        %v6158 = vrot.slane %v6156, 4
        %v6159 = vrot.slane %v1333, 5
        %v6160 = vsel %vm6049, %v6158, %v6159
        %v6161 = vrot.slane %v6159, 4
        %v6162 = vrot.slane %v1334, 5
        %v6163 = vsel %vm6049, %v6161, %v6162
        %v6164 = vrot.slane %v6162, 4
        %v6165 = vrot.slane %v1335, 5
        %v6166 = vsel %vm6049, %v6164, %v6165
        %v6167 = vrot.slane %v1336, 5
        %v6168 = vrot.slane %v6167, 4
        %v6169 = vrot.slane %v1337, 5
        %v6170 = vsel %vm6049, %v6168, %v6169
        %v6171 = vrot.slane %v6169, 4
        %v6172 = vrot.slane %v1338, 5
        %v6173 = vsel %vm6049, %v6171, %v6172
        %v6174 = vrot.slane %v6172, 4
        %v6175 = vrot.slane %v1339, 5
        %v6176 = vsel %vm6049, %v6174, %v6175
        %v6177 = vrot.slane %v6175, 4
        %v6178 = vrot.slane %v1340, 5
        %v6179 = vsel %vm6049, %v6177, %v6178
        %v6180 = vrot.slane %v1341, 5
        %v6181 = vrot.slane %v6180, 4
        %v6182 = vrot.slane %v1342, 5
        %v6183 = vsel %vm6049, %v6181, %v6182
        %v6184 = vrot.slane %v6182, 4
        %v6185 = vrot.slane %v1343, 5
        %v6186 = vsel %vm6049, %v6184, %v6185
        %v6187 = vrot.slane %v6185, 4
        %v6188 = vrot.slane %v1344, 5
        %v6189 = vsel %vm6049, %v6187, %v6188
        %v6190 = vrot.slane %v6188, 4
        %v6191 = vrot.slane %v1345, 5
        %v6192 = vsel %vm6049, %v6190, %v6191
        %v6193 = vrot.slane %v1346, 5
        %v6194 = vrot.slane %v6193, 4
        %v6195 = vrot.slane %v1347, 5
        %v6196 = vsel %vm6049, %v6194, %v6195
        %v6197 = vrot.slane %v6195, 4
        %v6198 = vrot.slane %v1348, 5
        %v6199 = vsel %vm6049, %v6197, %v6198
        %v6200 = vrot.slane %v6198, 4
        %v6201 = vrot.slane %v1349, 5
        %v6202 = vsel %vm6049, %v6200, %v6201
        %v6203 = vrot.slane %v6201, 4
        %v6204 = vrot.slane %v1350, 5
        %v6205 = vsel %vm6049, %v6203, %v6204
        %v6206 = vrot.slane %v1351, 5
        %v6207 = vrot.slane %v6206, 4
        %v6208 = vrot.slane %v1352, 5
        %v6209 = vsel %vm6049, %v6207, %v6208
        %v6210 = vrot.slane %v6208, 4
        %v6211 = vrot.slane %v1353, 5
        %v6212 = vsel %vm6049, %v6210, %v6211
        %v6213 = vrot.slane %v6211, 4
        %v6214 = vrot.slane %v1354, 5
        %v6215 = vsel %vm6049, %v6213, %v6214
        %v6216 = vrot.slane %v6214, 4
        %v6217 = vrot.slane %v1355, 5
        %v6218 = vsel %vm6049, %v6216, %v6217
        %v6219 = vrot.slane %v1356, 5
        %v6220 = vrot.slane %v6219, 4
        %v6221 = vrot.slane %v1357, 5
        %v6222 = vsel %vm6049, %v6220, %v6221
        %v6223 = vrot.slane %v6221, 4
        %v6224 = vrot.slane %v1358, 5
        %v6225 = vsel %vm6049, %v6223, %v6224
        %v6226 = vrot.slane %v6224, 4
        %v6227 = vrot.slane %v1359, 5
        %v6228 = vsel %vm6049, %v6226, %v6227
        %v6229 = vrot.slane %v6227, 4
        %v6230 = vrot.slane %v1360, 5
        %v6231 = vsel %vm6049, %v6229, %v6230
        %v6232 = vrot.slane %v1361, 5
        %v6233 = vrot.slane %v6232, 4
        %v6234 = vrot.slane %v1362, 5
        %v6235 = vsel %vm6049, %v6233, %v6234
        %v6236 = vrot.slane %v6234, 4
        %v6237 = vrot.slane %v1363, 5
        %v6238 = vsel %vm6049, %v6236, %v6237
        %v6239 = vrot.slane %v6237, 4
        %v6240 = vrot.slane %v1364, 5
        %v6241 = vsel %vm6049, %v6239, %v6240
        %v6242 = vrot.slane %v6240, 4
        %v6243 = vrot.slane %v1365, 5
        %v6244 = vsel %vm6049, %v6242, %v6243
        %v6245 = vrot.slane %v1366, 5
        %v6246 = vrot.slane %v6245, 4
        %v6247 = vrot.slane %v1367, 5
        %v6248 = vsel %vm6049, %v6246, %v6247
        %v6249 = vrot.slane %v6247, 4
        %v6250 = vrot.slane %v1368, 5
        %v6251 = vsel %vm6049, %v6249, %v6250
        %v6252 = vrot.slane %v6250, 4
        %v6253 = vrot.slane %v1369, 5
        %v6254 = vsel %vm6049, %v6252, %v6253
        %v6255 = vrot.slane %v6253, 4
        %v6256 = vrot.slane %v1370, 5
        %v6257 = vsel %vm6049, %v6255, %v6256
        %v6258 = vrot.slane %v1371, 5
        %v6259 = vrot.slane %v6258, 4
        %v6260 = vrot.slane %v1372, 5
        %v6261 = vsel %vm6049, %v6259, %v6260
        %v6262 = vrot.slane %v6260, 4
        %v6263 = vrot.slane %v1373, 5
        %v6264 = vsel %vm6049, %v6262, %v6263
        %v6265 = vrot.slane %v6263, 4
        %v6266 = vrot.slane %v1374, 5
        %v6267 = vsel %vm6049, %v6265, %v6266
        %v6268 = vrot.slane %v6266, 4
        %v6269 = vrot.slane %v1375, 5
        %v6270 = vsel %vm6049, %v6268, %v6269
        %v6271 = vrot.slane %v1376, 5
        %v6272 = vrot.slane %v6271, 4
        %v6273 = vrot.slane %v1377, 5
        %v6274 = vsel %vm6049, %v6272, %v6273
        %v6275 = vrot.slane %v6273, 4
        %v6276 = vrot.slane %v1378, 5
        %v6277 = vsel %vm6049, %v6275, %v6276
        %v6278 = vrot.slane %v6276, 4
        %v6279 = vrot.slane %v1379, 5
        %v6280 = vsel %vm6049, %v6278, %v6279
        %v6281 = vrot.slane %v6279, 4
        %v6282 = vrot.slane %v1380, 5
        %v6283 = vsel %vm6049, %v6281, %v6282
        %v6284 = vrot.slane %v1381, 5
        %v6285 = vrot.slane %v6284, 4
        %v6286 = vrot.slane %v1382, 5
        %v6287 = vsel %vm6049, %v6285, %v6286
        %v6288 = vrot.slane %v6286, 4
        %v6289 = vrot.slane %v1383, 5
        %v6290 = vsel %vm6049, %v6288, %v6289
        %v6291 = vrot.slane %v6289, 4
        %v6292 = vrot.slane %v1384, 5
        %v6293 = vsel %vm6049, %v6291, %v6292
        %v6294 = vrot.slane %v6292, 4
        %v6295 = vrot.slane %v1385, 5
        %v6296 = vsel %vm6049, %v6294, %v6295
        %v6297 = vrot.slane %v1386, 5
        %v6298 = vrot.slane %v6297, 4
        %v6299 = vrot.slane %v1387, 5
        %v6300 = vsel %vm6049, %v6298, %v6299
        %v6301 = vrot.slane %v6299, 4
        %v6302 = vrot.slane %v1388, 5
        %v6303 = vsel %vm6049, %v6301, %v6302
        %v6304 = vrot.slane %v6302, 4
        %v6305 = vrot.slane %v1389, 5
        %v6306 = vsel %vm6049, %v6304, %v6305
        %v6307 = vrot.slane %v6305, 4
        %v6308 = vrot.slane %v1390, 5
        %v6309 = vsel %vm6049, %v6307, %v6308
        %v6310 = vrot.slane %v1391, 5
        %v6311 = vrot.slane %v6310, 4
        %v6312 = vrot.slane %v1392, 5
        %v6313 = vsel %vm6049, %v6311, %v6312
        %v6314 = vrot.slane %v6312, 4
        %v6315 = vrot.slane %v1393, 5
        %v6316 = vsel %vm6049, %v6314, %v6315
        %v6317 = vrot.slane %v6315, 4
        %v6318 = vrot.slane %v1394, 5
        %v6319 = vsel %vm6049, %v6317, %v6318
        %v6320 = vrot.slane %v6318, 4
        %v6321 = vrot.slane %v1395, 5
        %v6322 = vsel %vm6049, %v6320, %v6321
        %v6323 = vrot.slane %v1396, 5
        %v6324 = vrot.slane %v6323, 4
        %v6325 = vrot.slane %v1397, 5
        %v6326 = vsel %vm6049, %v6324, %v6325
        %v6327 = vrot.slane %v6325, 4
        %v6328 = vrot.slane %v1398, 5
        %v6329 = vsel %vm6049, %v6327, %v6328
        %v6330 = vrot.slane %v6328, 4
        %v6331 = vrot.slane %v1399, 5
        %v6332 = vsel %vm6049, %v6330, %v6331
        %v6333 = vrot.slane %v6331, 4
        %v6334 = vrot.slane %v1400, 5
        %v6335 = vsel %vm6049, %v6333, %v6334
        %v6336 = vrot.slane %v1401, 5
        %v6337 = vrot.slane %v6336, 4
        %v6338 = vrot.slane %v1402, 5
        %v6339 = vsel %vm6049, %v6337, %v6338
        %v6340 = vrot.slane %v6338, 4
        %v6341 = vrot.slane %v1403, 5
        %v6342 = vsel %vm6049, %v6340, %v6341
        %v6343 = vrot.slane %v6341, 4
        %v6344 = vrot.slane %v1404, 5
        %v6345 = vsel %vm6049, %v6343, %v6344
        %v6346 = vrot.slane %v6344, 4
        %v6347 = vrot.slane %v1405, 5
        %v6348 = vsel %vm6049, %v6346, %v6347
        %v6349 = vrot.slane %v1406, 5
        %v6350 = vrot.slane %v6349, 4
        %v6351 = vrot.slane %v1407, 5
        %v6352 = vsel %vm6049, %v6350, %v6351
        %v6353 = vrot.slane %v6351, 4
        %v6354 = vrot.slane %v1408, 5
        %v6355 = vsel %vm6049, %v6353, %v6354
        %v6356 = vrot.slane %v6354, 4
        %v6357 = vrot.slane %v1409, 5
        %v6358 = vsel %vm6049, %v6356, %v6357
        %v6359 = vrot.slane %v6357, 4
        %v6360 = vrot.slane %v1410, 5
        %v6361 = vsel %vm6049, %v6359, %v6360
        %v6362 = vrot.slane %v1411, 5
        %v6363 = vrot.slane %v6362, 4
        %v6364 = vrot.slane %v1412, 5
        %v6365 = vsel %vm6049, %v6363, %v6364
        %v6366 = vrot.slane %v6364, 4
        %v6367 = vrot.slane %v1413, 5
        %v6368 = vsel %vm6049, %v6366, %v6367
        %v6369 = vrot.slane %v6367, 4
        %v6370 = vrot.slane %v1414, 5
        %v6371 = vsel %vm6049, %v6369, %v6370
        %v6372 = vrot.slane %v6370, 4
        %v6373 = vrot.slane %v1415, 5
        %v6374 = vsel %vm6049, %v6372, %v6373
        %v6375 = vrot.slane %v1416, 5
        %v6376 = vrot.slane %v6375, 4
        %v6377 = vrot.slane %v1417, 5
        %v6378 = vsel %vm6049, %v6376, %v6377
        %v6379 = vrot.slane %v6377, 4
        %v6380 = vrot.slane %v1418, 5
        %v6381 = vsel %vm6049, %v6379, %v6380
        %v6382 = vrot.slane %v6380, 4
        %v6383 = vrot.slane %v1419, 5
        %v6384 = vsel %vm6049, %v6382, %v6383
        %v6385 = vrot.slane %v6383, 4
        %v6386 = vrot.slane %v1420, 5
        %v6387 = vsel %vm6049, %v6385, %v6386
        %v6388 = vrot.slane %v1421, 5
        %v6389 = vrot.slane %v6388, 4
        %v6390 = vrot.slane %v1422, 5
        %v6391 = vsel %vm6049, %v6389, %v6390
        %v6392 = vrot.slane %v6390, 4
        %v6393 = vrot.slane %v1423, 5
        %v6394 = vsel %vm6049, %v6392, %v6393
        %v6395 = vrot.slane %v6393, 4
        %v6396 = vrot.slane %v1424, 5
        %v6397 = vsel %vm6049, %v6395, %v6396
        %v6398 = vrot.slane %v6396, 4
        %v6399 = vrot.slane %v1425, 5
        %v6400 = vsel %vm6049, %v6398, %v6399
        %v6401 = vrot.slane %v1426, 5
        %v6402 = vrot.slane %v6401, 4
        %v6403 = vrot.slane %v1427, 5
        %v6404 = vsel %vm6049, %v6402, %v6403
        %v6405 = vrot.slane %v6403, 4
        %v6406 = vrot.slane %v1428, 5
        %v6407 = vsel %vm6049, %v6405, %v6406
        %v6408 = vrot.slane %v6406, 4
        %v6409 = vrot.slane %v1429, 5
        %v6410 = vsel %vm6049, %v6408, %v6409
        %v6411 = vrot.slane %v6409, 4
        %v6412 = vrot.slane %v1430, 5
        %v6413 = vsel %vm6049, %v6411, %v6412
        %v6414 = vrot.slane %v1431, 5
        %v6415 = vrot.slane %v6414, 4
        %v6416 = vrot.slane %v1432, 5
        %v6417 = vsel %vm6049, %v6415, %v6416
        %v6418 = vrot.slane %v6416, 4
        %v6419 = vrot.slane %v1433, 5
        %v6420 = vsel %vm6049, %v6418, %v6419
        %v6421 = vrot.slane %v6419, 4
        %v6422 = vrot.slane %v1434, 5
        %v6423 = vsel %vm6049, %v6421, %v6422
        %v6424 = vrot.slane %v6422, 4
        %v6425 = vrot.slane %v1435, 5
        %v6426 = vsel %vm6049, %v6424, %v6425
        %v6427 = vrot.slane %v1436, 5
        %v6428 = vrot.slane %v6427, 4
        %v6429 = vrot.slane %v1437, 5
        %v6430 = vsel %vm6049, %v6428, %v6429
        %v6431 = vrot.slane %v6429, 4
        %v6432 = vrot.slane %v1438, 5
        %v6433 = vsel %vm6049, %v6431, %v6432
        %v6434 = vrot.slane %v6432, 4
        %v6435 = vrot.slane %v1439, 5
        %v6436 = vsel %vm6049, %v6434, %v6435
        %v6437 = vrot.slane %v6435, 4
        %v6438 = vrot.slane %v1440, 5
        %v6439 = vsel %vm6049, %v6437, %v6438
        %v6440 = vrot.slane %v1441, 5
        %v6441 = vrot.slane %v6440, 4
        %v6442 = vrot.slane %v1442, 5
        %v6443 = vsel %vm6049, %v6441, %v6442
        %v6444 = vrot.slane %v6442, 4
        %v6445 = vrot.slane %v1443, 5
        %v6446 = vsel %vm6049, %v6444, %v6445
        %v6447 = vrot.slane %v6445, 4
        %v6448 = vrot.slane %v1444, 5
        %v6449 = vsel %vm6049, %v6447, %v6448
        %v6450 = vrot.slane %v6448, 4
        %v6451 = vrot.slane %v1445, 5
        %v6452 = vsel %vm6049, %v6450, %v6451
        %v6453 = vrot.slane %v1446, 5
        %v6454 = vrot.slane %v6453, 4
        %v6455 = vrot.slane %v1447, 5
        %v6456 = vsel %vm6049, %v6454, %v6455
        %v6457 = vrot.slane %v6455, 4
        %v6458 = vrot.slane %v1448, 5
        %v6459 = vsel %vm6049, %v6457, %v6458
        %v6460 = vrot.slane %v6458, 4
        %v6461 = vrot.slane %v1449, 5
        %v6462 = vsel %vm6049, %v6460, %v6461
        %v6463 = vrot.slane %v6461, 4
        %v6464 = vrot.slane %v1450, 5
        %v6465 = vsel %vm6049, %v6463, %v6464
        %v6467 = vshrl.u32 %v1451, 16
        %v6469 = vrot.slane %v6467, 4
        %v6470 = vshll.u32 %v1451, 16
        %v6472 = vrot.slane %v6470, 5
        %v6473 = vor.u32 %v6469, %v6472
        %v6474 = vrot.slane %v6473, 4
        %v6476 = vshll.u32 %v1452, 16
        %v6478 = vrot.slane %v6476, 5
        %v6479 = vsel %vm4478, %v6474, %v6478
        %v6480 = vshrl.u32 %v1452, 16
        %v6482 = vrot.slane %v6480, 4
        %v6483 = vor.u32 %v6482, %v6478
        %v6484 = vrot.slane %v6483, 4
        %v6486 = vshll.u32 %v1453, 16
        %v6488 = vrot.slane %v6486, 5
        %v6489 = vsel %vm4478, %v6484, %v6488
        %v6490 = vshrl.u32 %v1453, 16
        %v6492 = vrot.slane %v6490, 4
        %v6493 = vor.u32 %v6492, %v6488
        %v6494 = vrot.slane %v6493, 4
        %v6496 = vshll.u32 %v1454, 16
        %v6498 = vrot.slane %v6496, 5
        %v6499 = vsel %vm4478, %v6494, %v6498
        %v6500 = vshrl.u32 %v1454, 16
        %v6502 = vrot.slane %v6500, 4
        %v6503 = vor.u32 %v6502, %v6498
        %v6504 = vrot.slane %v6503, 4
        %v6506 = vshll.u32 %v1455, 16
        %v6508 = vrot.slane %v6506, 5
        %v6509 = vsel %vm4478, %v6504, %v6508
        %v6515 = vrot.slane %v1451, 5
        %v6516 = vrot.slane %v6515, 4
        %v6517 = vrot.slane %v1452, 5
        %v6518 = vsel %vm6049, %v6516, %v6517
        %v6519 = vrot.slane %v6517, 4
        %v6520 = vrot.slane %v1453, 5
        %v6521 = vsel %vm6049, %v6519, %v6520
        %v6522 = vrot.slane %v6520, 4
        %v6523 = vrot.slane %v1454, 5
        %v6524 = vsel %vm6049, %v6522, %v6523
        %v6525 = vrot.slane %v6523, 4
        %v6526 = vrot.slane %v1455, 5
        %v6527 = vsel %vm6049, %v6525, %v6526
        %v6529 = vshrl.u32 %v1456, 16
        %v6531 = vrot.slane %v6529, 4
        %v6532 = vshll.u32 %v1456, 16
        %v6534 = vrot.slane %v6532, 5
        %v6535 = vor.u32 %v6531, %v6534
        %v6536 = vrot.slane %v6535, 4
        %v6538 = vshll.u32 %v1457, 16
        %v6540 = vrot.slane %v6538, 5
        %v6541 = vsel %vm4478, %v6536, %v6540
        %v6542 = vshrl.u32 %v1457, 16
        %v6544 = vrot.slane %v6542, 4
        %v6545 = vor.u32 %v6544, %v6540
        %v6546 = vrot.slane %v6545, 4
        %v6548 = vshll.u32 %v1458, 16
        %v6550 = vrot.slane %v6548, 5
        %v6551 = vsel %vm4478, %v6546, %v6550
        %v6552 = vshrl.u32 %v1458, 16
        %v6554 = vrot.slane %v6552, 4
        %v6555 = vor.u32 %v6554, %v6550
        %v6556 = vrot.slane %v6555, 4
        %v6558 = vshll.u32 %v1459, 16
        %v6560 = vrot.slane %v6558, 5
        %v6561 = vsel %vm4478, %v6556, %v6560
        %v6562 = vshrl.u32 %v1459, 16
        %v6564 = vrot.slane %v6562, 4
        %v6565 = vor.u32 %v6564, %v6560
        %v6566 = vrot.slane %v6565, 4
        %v6568 = vshll.u32 %v1460, 16
        %v6570 = vrot.slane %v6568, 5
        %v6571 = vsel %vm4478, %v6566, %v6570
        %v6577 = vrot.slane %v1456, 5
        %v6578 = vrot.slane %v6577, 4
        %v6579 = vrot.slane %v1457, 5
        %v6580 = vsel %vm6049, %v6578, %v6579
        %v6581 = vrot.slane %v6579, 4
        %v6582 = vrot.slane %v1458, 5
        %v6583 = vsel %vm6049, %v6581, %v6582
        %v6584 = vrot.slane %v6582, 4
        %v6585 = vrot.slane %v1459, 5
        %v6586 = vsel %vm6049, %v6584, %v6585
        %v6587 = vrot.slane %v6585, 4
        %v6588 = vrot.slane %v1460, 5
        %v6589 = vsel %vm6049, %v6587, %v6588
        %v6590 = vunpack.c.l.b16 %v1291
        %v6591 = vunpack.c.l.b16 %v1292
        %v6592 = vunpack.c.l.b16 %v1293
        %v6593 = vunpack.c.l.b16 %v1294
        %v6594 = vunpack.c.l.b16 %v1296
        %v6595 = vunpack.c.l.b16 %v1297
        %v6596 = vunpack.c.l.b16 %v1298
        %v6597 = vunpack.c.l.b16 %v1299
        %v6598 = vunpack.c.l.b16 %v1301
        %v6599 = vunpack.c.l.b16 %v1302
        %v6600 = vunpack.c.l.b16 %v1303
        %v6601 = vunpack.c.l.b16 %v1304
        %v6602 = vunpack.c.l.b16 %v1306
        %v6603 = vunpack.c.l.b16 %v1307
        %v6604 = vunpack.c.l.b16 %v1308
        %v6605 = vunpack.c.l.b16 %v1309
        %v6606 = vunpack.c.l.b16 %v1311
        %v6607 = vunpack.c.l.b16 %v1312
        %v6608 = vunpack.c.l.b16 %v1313
        %v6609 = vunpack.c.l.b16 %v1314
        %v6610 = vunpack.c.l.b16 %v1316
        %v6611 = vunpack.c.l.b16 %v1317
        %v6612 = vunpack.c.l.b16 %v1318
        %v6613 = vunpack.c.l.b16 %v1319
        %v6614 = vunpack.c.l.b16 %v1321
        %v6615 = vunpack.c.l.b16 %v1322
        %v6616 = vunpack.c.l.b16 %v1323
        %v6617 = vunpack.c.l.b16 %v1324
        %v6618 = vunpack.c.l.b16 %v1326
        %v6619 = vunpack.c.l.b16 %v1327
        %v6620 = vunpack.c.l.b16 %v1328
        %v6621 = vunpack.c.l.b16 %v1329
        %v6622 = vunpack.c.l.b16 %v1331
        %v6623 = vunpack.c.l.b16 %v1332
        %v6624 = vunpack.c.l.b16 %v1333
        %v6625 = vunpack.c.l.b16 %v1334
        %v6626 = vunpack.c.l.b16 %v1336
        %v6627 = vunpack.c.l.b16 %v1337
        %v6628 = vunpack.c.l.b16 %v1338
        %v6629 = vunpack.c.l.b16 %v1339
        %v6630 = vunpack.c.l.b16 %v1341
        %v6631 = vunpack.c.l.b16 %v1342
        %v6632 = vunpack.c.l.b16 %v1343
        %v6633 = vunpack.c.l.b16 %v1344
        %v6634 = vunpack.c.l.b16 %v1346
        %v6635 = vunpack.c.l.b16 %v1347
        %v6636 = vunpack.c.l.b16 %v1348
        %v6637 = vunpack.c.l.b16 %v1349
        %v6638 = vunpack.c.l.b16 %v1351
        %v6639 = vunpack.c.l.b16 %v1352
        %v6640 = vunpack.c.l.b16 %v1353
        %v6641 = vunpack.c.l.b16 %v1354
        %v6642 = vunpack.c.l.b16 %v1356
        %v6643 = vunpack.c.l.b16 %v1357
        %v6644 = vunpack.c.l.b16 %v1358
        %v6645 = vunpack.c.l.b16 %v1359
        %v6646 = vunpack.c.l.b16 %v1361
        %v6647 = vunpack.c.l.b16 %v1362
        %v6648 = vunpack.c.l.b16 %v1363
        %v6649 = vunpack.c.l.b16 %v1364
        %v6650 = vunpack.c.l.b16 %v1366
        %v6651 = vunpack.c.l.b16 %v1367
        %v6652 = vunpack.c.l.b16 %v1368
        %v6653 = vunpack.c.l.b16 %v1369
        %v6654 = vunpack.c.l.b16 %v1371
        %v6655 = vunpack.c.l.b16 %v1372
        %v6656 = vunpack.c.l.b16 %v1373
        %v6657 = vunpack.c.l.b16 %v1374
        %v6658 = vunpack.c.l.b16 %v1376
        %v6659 = vunpack.c.l.b16 %v1377
        %v6660 = vunpack.c.l.b16 %v1378
        %v6661 = vunpack.c.l.b16 %v1379
        %v6662 = vunpack.c.l.b16 %v1381
        %v6663 = vunpack.c.l.b16 %v1382
        %v6664 = vunpack.c.l.b16 %v1383
        %v6665 = vunpack.c.l.b16 %v1384
        %v6666 = vunpack.c.l.b16 %v1386
        %v6667 = vunpack.c.l.b16 %v1387
        %v6668 = vunpack.c.l.b16 %v1388
        %v6669 = vunpack.c.l.b16 %v1389
        %v6670 = vunpack.c.l.b16 %v1391
        %v6671 = vunpack.c.l.b16 %v1392
        %v6672 = vunpack.c.l.b16 %v1393
        %v6673 = vunpack.c.l.b16 %v1394
        %v6674 = vunpack.c.l.b16 %v1396
        %v6675 = vunpack.c.l.b16 %v1397
        %v6676 = vunpack.c.l.b16 %v1398
        %v6677 = vunpack.c.l.b16 %v1399
        %v6678 = vunpack.c.l.b16 %v1401
        %v6679 = vunpack.c.l.b16 %v1402
        %v6680 = vunpack.c.l.b16 %v1403
        %v6681 = vunpack.c.l.b16 %v1404
        %v6682 = vunpack.c.l.b16 %v1406
        %v6683 = vunpack.c.l.b16 %v1407
        %v6684 = vunpack.c.l.b16 %v1408
        %v6685 = vunpack.c.l.b16 %v1409
        %v6686 = vunpack.c.l.b16 %v1411
        %v6687 = vunpack.c.l.b16 %v1412
        %v6688 = vunpack.c.l.b16 %v1413
        %v6689 = vunpack.c.l.b16 %v1414
        %v6690 = vunpack.c.l.b16 %v1416
        %v6691 = vunpack.c.l.b16 %v1417
        %v6692 = vunpack.c.l.b16 %v1418
        %v6693 = vunpack.c.l.b16 %v1419
        %v6694 = vunpack.c.l.b16 %v1421
        %v6695 = vunpack.c.l.b16 %v1422
        %v6696 = vunpack.c.l.b16 %v1423
        %v6697 = vunpack.c.l.b16 %v1424
        %v6698 = vunpack.c.l.b16 %v1426
        %v6699 = vunpack.c.l.b16 %v1427
        %v6700 = vunpack.c.l.b16 %v1428
        %v6701 = vunpack.c.l.b16 %v1429
        %v6702 = vunpack.c.l.b16 %v1431
        %v6703 = vunpack.c.l.b16 %v1432
        %v6704 = vunpack.c.l.b16 %v1433
        %v6705 = vunpack.c.l.b16 %v1434
        %v6706 = vunpack.c.l.b16 %v1436
        %v6707 = vunpack.c.l.b16 %v1437
        %v6708 = vunpack.c.l.b16 %v1438
        %v6709 = vunpack.c.l.b16 %v1439
        %v6710 = vunpack.c.l.b16 %v1441
        %v6711 = vunpack.c.l.b16 %v1442
        %v6712 = vunpack.c.l.b16 %v1443
        %v6713 = vunpack.c.l.b16 %v1444
        %v6714 = vunpack.c.l.b16 %v1446
        %v6715 = vunpack.c.l.b16 %v1447
        %v6716 = vunpack.c.l.b16 %v1448
        %v6717 = vunpack.c.l.b16 %v1449
        %v6718 = vpack.c.b16 %v6591, %v6590
        %v6719 = vpack.c.b16 %v6593, %v6592
        %v6720 = vpack.c.b16 %v6595, %v6594
        %v6721 = vpack.c.b16 %v6597, %v6596
        %v6722 = vpack.c.b16 %v6599, %v6598
        %v6723 = vpack.c.b16 %v6601, %v6600
        %v6724 = vpack.c.b16 %v6603, %v6602
        %v6725 = vpack.c.b16 %v6605, %v6604
        %v6726 = vpack.c.b16 %v6607, %v6606
        %v6727 = vpack.c.b16 %v6609, %v6608
        %v6728 = vpack.c.b16 %v6611, %v6610
        %v6729 = vpack.c.b16 %v6613, %v6612
        %v6730 = vpack.c.b16 %v6615, %v6614
        %v6731 = vpack.c.b16 %v6617, %v6616
        %v6732 = vpack.c.b16 %v6619, %v6618
        %v6733 = vpack.c.b16 %v6621, %v6620
        %v6734 = vpack.c.b16 %v6623, %v6622
        %v6735 = vpack.c.b16 %v6625, %v6624
        %v6736 = vpack.c.b16 %v6627, %v6626
        %v6737 = vpack.c.b16 %v6629, %v6628
        %v6738 = vpack.c.b16 %v6631, %v6630
        %v6739 = vpack.c.b16 %v6633, %v6632
        %v6740 = vpack.c.b16 %v6635, %v6634
        %v6741 = vpack.c.b16 %v6637, %v6636
        %v6742 = vpack.c.b16 %v6639, %v6638
        %v6743 = vpack.c.b16 %v6641, %v6640
        %v6744 = vpack.c.b16 %v6643, %v6642
        %v6745 = vpack.c.b16 %v6645, %v6644
        %v6746 = vpack.c.b16 %v6647, %v6646
        %v6747 = vpack.c.b16 %v6649, %v6648
        %v6748 = vpack.c.b16 %v6651, %v6650
        %v6749 = vpack.c.b16 %v6653, %v6652
        %v6750 = vpack.c.b16 %v6655, %v6654
        %v6751 = vpack.c.b16 %v6657, %v6656
        %v6752 = vpack.c.b16 %v6659, %v6658
        %v6753 = vpack.c.b16 %v6661, %v6660
        %v6754 = vpack.c.b16 %v6663, %v6662
        %v6755 = vpack.c.b16 %v6665, %v6664
        %v6756 = vpack.c.b16 %v6667, %v6666
        %v6757 = vpack.c.b16 %v6669, %v6668
        %v6758 = vpack.c.b16 %v6671, %v6670
        %v6759 = vpack.c.b16 %v6673, %v6672
        %v6760 = vpack.c.b16 %v6675, %v6674
        %v6761 = vpack.c.b16 %v6677, %v6676
        %v6762 = vpack.c.b16 %v6679, %v6678
        %v6763 = vpack.c.b16 %v6681, %v6680
        %v6764 = vpack.c.b16 %v6683, %v6682
        %v6765 = vpack.c.b16 %v6685, %v6684
        %v6766 = vpack.c.b16 %v6687, %v6686
        %v6767 = vpack.c.b16 %v6689, %v6688
        %v6768 = vpack.c.b16 %v6691, %v6690
        %v6769 = vpack.c.b16 %v6693, %v6692
        %v6770 = vpack.c.b16 %v6695, %v6694
        %v6771 = vpack.c.b16 %v6697, %v6696
        %v6772 = vpack.c.b16 %v6699, %v6698
        %v6773 = vpack.c.b16 %v6701, %v6700
        %v6774 = vpack.c.b16 %v6703, %v6702
        %v6775 = vpack.c.b16 %v6705, %v6704
        %v6776 = vpack.c.b16 %v6707, %v6706
        %v6777 = vpack.c.b16 %v6709, %v6708
        %v6778 = vpack.c.b16 %v6711, %v6710
        %v6779 = vpack.c.b16 %v6713, %v6712
        %v6780 = vpack.c.b16 %v6715, %v6714
        %v6781 = vpack.c.b16 %v6717, %v6716
        %v6782 = vunpack.c.l.b16 %v4492
        %v6783 = vunpack.c.l.b16 %v4502
        %v6784 = vunpack.c.l.b16 %v4512
        %v6785 = vunpack.c.l.b16 %v4522
        %v6786 = vunpack.c.l.b16 %v4536
        %v6787 = vunpack.c.l.b16 %v4546
        %v6788 = vunpack.c.l.b16 %v4556
        %v6789 = vunpack.c.l.b16 %v4566
        %v6790 = vunpack.c.l.b16 %v4580
        %v6791 = vunpack.c.l.b16 %v4590
        %v6792 = vunpack.c.l.b16 %v4600
        %v6793 = vunpack.c.l.b16 %v4610
        %v6794 = vunpack.c.l.b16 %v4624
        %v6795 = vunpack.c.l.b16 %v4634
        %v6796 = vunpack.c.l.b16 %v4644
        %v6797 = vunpack.c.l.b16 %v4654
        %v6798 = vunpack.c.l.b16 %v4668
        %v6799 = vunpack.c.l.b16 %v4678
        %v6800 = vunpack.c.l.b16 %v4688
        %v6801 = vunpack.c.l.b16 %v4698
        %v6802 = vunpack.c.l.b16 %v4712
        %v6803 = vunpack.c.l.b16 %v4722
        %v6804 = vunpack.c.l.b16 %v4732
        %v6805 = vunpack.c.l.b16 %v4742
        %v6806 = vunpack.c.l.b16 %v4756
        %v6807 = vunpack.c.l.b16 %v4766
        %v6808 = vunpack.c.l.b16 %v4776
        %v6809 = vunpack.c.l.b16 %v4786
        %v6810 = vunpack.c.l.b16 %v4800
        %v6811 = vunpack.c.l.b16 %v4810
        %v6812 = vunpack.c.l.b16 %v4820
        %v6813 = vunpack.c.l.b16 %v4830
        %v6814 = vunpack.c.l.b16 %v4844
        %v6815 = vunpack.c.l.b16 %v4854
        %v6816 = vunpack.c.l.b16 %v4864
        %v6817 = vunpack.c.l.b16 %v4874
        %v6818 = vunpack.c.l.b16 %v4888
        %v6819 = vunpack.c.l.b16 %v4898
        %v6820 = vunpack.c.l.b16 %v4908
        %v6821 = vunpack.c.l.b16 %v4918
        %v6822 = vunpack.c.l.b16 %v4932
        %v6823 = vunpack.c.l.b16 %v4942
        %v6824 = vunpack.c.l.b16 %v4952
        %v6825 = vunpack.c.l.b16 %v4962
        %v6826 = vunpack.c.l.b16 %v4976
        %v6827 = vunpack.c.l.b16 %v4986
        %v6828 = vunpack.c.l.b16 %v4996
        %v6829 = vunpack.c.l.b16 %v5006
        %v6830 = vunpack.c.l.b16 %v5020
        %v6831 = vunpack.c.l.b16 %v5030
        %v6832 = vunpack.c.l.b16 %v5040
        %v6833 = vunpack.c.l.b16 %v5050
        %v6834 = vunpack.c.l.b16 %v5064
        %v6835 = vunpack.c.l.b16 %v5074
        %v6836 = vunpack.c.l.b16 %v5084
        %v6837 = vunpack.c.l.b16 %v5094
        %v6838 = vunpack.c.l.b16 %v5108
        %v6839 = vunpack.c.l.b16 %v5118
        %v6840 = vunpack.c.l.b16 %v5128
        %v6841 = vunpack.c.l.b16 %v5138
        %v6842 = vunpack.c.l.b16 %v5152
        %v6843 = vunpack.c.l.b16 %v5162
        %v6844 = vunpack.c.l.b16 %v5172
        %v6845 = vunpack.c.l.b16 %v5182
        %v6846 = vunpack.c.l.b16 %v5196
        %v6847 = vunpack.c.l.b16 %v5206
        %v6848 = vunpack.c.l.b16 %v5216
        %v6849 = vunpack.c.l.b16 %v5226
        %v6850 = vunpack.c.l.b16 %v5240
        %v6851 = vunpack.c.l.b16 %v5250
        %v6852 = vunpack.c.l.b16 %v5260
        %v6853 = vunpack.c.l.b16 %v5270
        %v6854 = vunpack.c.l.b16 %v5284
        %v6855 = vunpack.c.l.b16 %v5294
        %v6856 = vunpack.c.l.b16 %v5304
        %v6857 = vunpack.c.l.b16 %v5314
        %v6858 = vunpack.c.l.b16 %v5328
        %v6859 = vunpack.c.l.b16 %v5338
        %v6860 = vunpack.c.l.b16 %v5348
        %v6861 = vunpack.c.l.b16 %v5358
        %v6862 = vunpack.c.l.b16 %v5372
        %v6863 = vunpack.c.l.b16 %v5382
        %v6864 = vunpack.c.l.b16 %v5392
        %v6865 = vunpack.c.l.b16 %v5402
        %v6866 = vunpack.c.l.b16 %v5416
        %v6867 = vunpack.c.l.b16 %v5426
        %v6868 = vunpack.c.l.b16 %v5436
        %v6869 = vunpack.c.l.b16 %v5446
        %v6870 = vunpack.c.l.b16 %v5460
        %v6871 = vunpack.c.l.b16 %v5470
        %v6872 = vunpack.c.l.b16 %v5480
        %v6873 = vunpack.c.l.b16 %v5490
        %v6874 = vunpack.c.l.b16 %v5504
        %v6875 = vunpack.c.l.b16 %v5514
        %v6876 = vunpack.c.l.b16 %v5524
        %v6877 = vunpack.c.l.b16 %v5534
        %v6878 = vunpack.c.l.b16 %v5548
        %v6879 = vunpack.c.l.b16 %v5558
        %v6880 = vunpack.c.l.b16 %v5568
        %v6881 = vunpack.c.l.b16 %v5578
        %v6882 = vunpack.c.l.b16 %v5592
        %v6883 = vunpack.c.l.b16 %v5602
        %v6884 = vunpack.c.l.b16 %v5612
        %v6885 = vunpack.c.l.b16 %v5622
        %v6886 = vunpack.c.l.b16 %v5636
        %v6887 = vunpack.c.l.b16 %v5646
        %v6888 = vunpack.c.l.b16 %v5656
        %v6889 = vunpack.c.l.b16 %v5666
        %v6890 = vunpack.c.l.b16 %v5680
        %v6891 = vunpack.c.l.b16 %v5690
        %v6892 = vunpack.c.l.b16 %v5700
        %v6893 = vunpack.c.l.b16 %v5710
        %v6894 = vunpack.c.l.b16 %v5724
        %v6895 = vunpack.c.l.b16 %v5734
        %v6896 = vunpack.c.l.b16 %v5744
        %v6897 = vunpack.c.l.b16 %v5754
        %v6898 = vunpack.c.l.b16 %v5768
        %v6899 = vunpack.c.l.b16 %v5778
        %v6900 = vunpack.c.l.b16 %v5788
        %v6901 = vunpack.c.l.b16 %v5798
        %v6902 = vunpack.c.l.b16 %v5812
        %v6903 = vunpack.c.l.b16 %v5822
        %v6904 = vunpack.c.l.b16 %v5832
        %v6905 = vunpack.c.l.b16 %v5842
        %v6906 = vunpack.c.l.b16 %v5856
        %v6907 = vunpack.c.l.b16 %v5866
        %v6908 = vunpack.c.l.b16 %v5876
        %v6909 = vunpack.c.l.b16 %v5886
        %v6910 = vpack.c.b16 %v6783, %v6782
        %v6911 = vpack.c.b16 %v6785, %v6784
        %v6912 = vpack.c.b16 %v6787, %v6786
        %v6913 = vpack.c.b16 %v6789, %v6788
        %v6914 = vpack.c.b16 %v6791, %v6790
        %v6915 = vpack.c.b16 %v6793, %v6792
        %v6916 = vpack.c.b16 %v6795, %v6794
        %v6917 = vpack.c.b16 %v6797, %v6796
        %v6918 = vpack.c.b16 %v6799, %v6798
        %v6919 = vpack.c.b16 %v6801, %v6800
        %v6920 = vpack.c.b16 %v6803, %v6802
        %v6921 = vpack.c.b16 %v6805, %v6804
        %v6922 = vpack.c.b16 %v6807, %v6806
        %v6923 = vpack.c.b16 %v6809, %v6808
        %v6924 = vpack.c.b16 %v6811, %v6810
        %v6925 = vpack.c.b16 %v6813, %v6812
        %v6926 = vpack.c.b16 %v6815, %v6814
        %v6927 = vpack.c.b16 %v6817, %v6816
        %v6928 = vpack.c.b16 %v6819, %v6818
        %v6929 = vpack.c.b16 %v6821, %v6820
        %v6930 = vpack.c.b16 %v6823, %v6822
        %v6931 = vpack.c.b16 %v6825, %v6824
        %v6932 = vpack.c.b16 %v6827, %v6826
        %v6933 = vpack.c.b16 %v6829, %v6828
        %v6934 = vpack.c.b16 %v6831, %v6830
        %v6935 = vpack.c.b16 %v6833, %v6832
        %v6936 = vpack.c.b16 %v6835, %v6834
        %v6937 = vpack.c.b16 %v6837, %v6836
        %v6938 = vpack.c.b16 %v6839, %v6838
        %v6939 = vpack.c.b16 %v6841, %v6840
        %v6940 = vpack.c.b16 %v6843, %v6842
        %v6941 = vpack.c.b16 %v6845, %v6844
        %v6942 = vpack.c.b16 %v6847, %v6846
        %v6943 = vpack.c.b16 %v6849, %v6848
        %v6944 = vpack.c.b16 %v6851, %v6850
        %v6945 = vpack.c.b16 %v6853, %v6852
        %v6946 = vpack.c.b16 %v6855, %v6854
        %v6947 = vpack.c.b16 %v6857, %v6856
        %v6948 = vpack.c.b16 %v6859, %v6858
        %v6949 = vpack.c.b16 %v6861, %v6860
        %v6950 = vpack.c.b16 %v6863, %v6862
        %v6951 = vpack.c.b16 %v6865, %v6864
        %v6952 = vpack.c.b16 %v6867, %v6866
        %v6953 = vpack.c.b16 %v6869, %v6868
        %v6954 = vpack.c.b16 %v6871, %v6870
        %v6955 = vpack.c.b16 %v6873, %v6872
        %v6956 = vpack.c.b16 %v6875, %v6874
        %v6957 = vpack.c.b16 %v6877, %v6876
        %v6958 = vpack.c.b16 %v6879, %v6878
        %v6959 = vpack.c.b16 %v6881, %v6880
        %v6960 = vpack.c.b16 %v6883, %v6882
        %v6961 = vpack.c.b16 %v6885, %v6884
        %v6962 = vpack.c.b16 %v6887, %v6886
        %v6963 = vpack.c.b16 %v6889, %v6888
        %v6964 = vpack.c.b16 %v6891, %v6890
        %v6965 = vpack.c.b16 %v6893, %v6892
        %v6966 = vpack.c.b16 %v6895, %v6894
        %v6967 = vpack.c.b16 %v6897, %v6896
        %v6968 = vpack.c.b16 %v6899, %v6898
        %v6969 = vpack.c.b16 %v6901, %v6900
        %v6970 = vpack.c.b16 %v6903, %v6902
        %v6971 = vpack.c.b16 %v6905, %v6904
        %v6972 = vpack.c.b16 %v6907, %v6906
        %v6973 = vpack.c.b16 %v6909, %v6908
        %6974 = vrot.lane.b32.xlu0 %v6910, 4
        %v6975 = vpop.permute.xlu0 %6974
        %6976 = vrot.lane.b32.xlu0 %v6911, 4
        %v6977 = vpop.permute.xlu0 %6976
        %6978 = vrot.lane.b32.xlu0 %v6912, 4
        %v6979 = vpop.permute.xlu0 %6978
        %6980 = vrot.lane.b32.xlu0 %v6913, 4
        %v6981 = vpop.permute.xlu0 %6980
        %6982 = vrot.lane.b32.xlu0 %v6914, 4
        %v6983 = vpop.permute.xlu0 %6982
        %6984 = vrot.lane.b32.xlu0 %v6915, 4
        %v6985 = vpop.permute.xlu0 %6984
        %6986 = vrot.lane.b32.xlu0 %v6916, 4
        %v6987 = vpop.permute.xlu0 %6986
        %6988 = vrot.lane.b32.xlu0 %v6917, 4
        %v6989 = vpop.permute.xlu0 %6988
        %6990 = vrot.lane.b32.xlu0 %v6918, 4
        %v6991 = vpop.permute.xlu0 %6990
        %6992 = vrot.lane.b32.xlu0 %v6919, 4
        %v6993 = vpop.permute.xlu0 %6992
        %6994 = vrot.lane.b32.xlu0 %v6920, 4
        %v6995 = vpop.permute.xlu0 %6994
        %6996 = vrot.lane.b32.xlu0 %v6921, 4
        %v6997 = vpop.permute.xlu0 %6996
        %6998 = vrot.lane.b32.xlu0 %v6922, 4
        %v6999 = vpop.permute.xlu0 %6998
        %7000 = vrot.lane.b32.xlu0 %v6923, 4
        %v7001 = vpop.permute.xlu0 %7000
        %7002 = vrot.lane.b32.xlu0 %v6924, 4
        %v7003 = vpop.permute.xlu0 %7002
        %7004 = vrot.lane.b32.xlu0 %v6925, 4
        %v7005 = vpop.permute.xlu0 %7004
        %7006 = vrot.lane.b32.xlu0 %v6926, 4
        %v7007 = vpop.permute.xlu0 %7006
        %7008 = vrot.lane.b32.xlu0 %v6927, 4
        %v7009 = vpop.permute.xlu0 %7008
        %7010 = vrot.lane.b32.xlu0 %v6928, 4
        %v7011 = vpop.permute.xlu0 %7010
        %7012 = vrot.lane.b32.xlu0 %v6929, 4
        %v7013 = vpop.permute.xlu0 %7012
        %7014 = vrot.lane.b32.xlu0 %v6930, 4
        %v7015 = vpop.permute.xlu0 %7014
        %7016 = vrot.lane.b32.xlu0 %v6931, 4
        %v7017 = vpop.permute.xlu0 %7016
        %7018 = vrot.lane.b32.xlu0 %v6932, 4
        %v7019 = vpop.permute.xlu0 %7018
        %7020 = vrot.lane.b32.xlu0 %v6933, 4
        %v7021 = vpop.permute.xlu0 %7020
        %7022 = vrot.lane.b32.xlu0 %v6934, 4
        %v7023 = vpop.permute.xlu0 %7022
        %7024 = vrot.lane.b32.xlu0 %v6935, 4
        %v7025 = vpop.permute.xlu0 %7024
        %7026 = vrot.lane.b32.xlu0 %v6936, 4
        %v7027 = vpop.permute.xlu0 %7026
        %7028 = vrot.lane.b32.xlu0 %v6937, 4
        %v7029 = vpop.permute.xlu0 %7028
        %7030 = vrot.lane.b32.xlu0 %v6938, 4
        %v7031 = vpop.permute.xlu0 %7030
        %7032 = vrot.lane.b32.xlu0 %v6939, 4
        %v7033 = vpop.permute.xlu0 %7032
        %7034 = vrot.lane.b32.xlu0 %v6940, 4
        %v7035 = vpop.permute.xlu0 %7034
        %7036 = vrot.lane.b32.xlu0 %v6941, 4
        %v7037 = vpop.permute.xlu0 %7036
        %7038 = vrot.lane.b32.xlu0 %v6942, 4
        %v7039 = vpop.permute.xlu0 %7038
        %7040 = vrot.lane.b32.xlu0 %v6943, 4
        %v7041 = vpop.permute.xlu0 %7040
        %7042 = vrot.lane.b32.xlu0 %v6944, 4
        %v7043 = vpop.permute.xlu0 %7042
        %7044 = vrot.lane.b32.xlu0 %v6945, 4
        %v7045 = vpop.permute.xlu0 %7044
        %7046 = vrot.lane.b32.xlu0 %v6946, 4
        %v7047 = vpop.permute.xlu0 %7046
        %7048 = vrot.lane.b32.xlu0 %v6947, 4
        %v7049 = vpop.permute.xlu0 %7048
        %7050 = vrot.lane.b32.xlu0 %v6948, 4
        %v7051 = vpop.permute.xlu0 %7050
        %7052 = vrot.lane.b32.xlu0 %v6949, 4
        %v7053 = vpop.permute.xlu0 %7052
        %7054 = vrot.lane.b32.xlu0 %v6950, 4
        %v7055 = vpop.permute.xlu0 %7054
        %7056 = vrot.lane.b32.xlu0 %v6951, 4
        %v7057 = vpop.permute.xlu0 %7056
        %7058 = vrot.lane.b32.xlu0 %v6952, 4
        %v7059 = vpop.permute.xlu0 %7058
        %7060 = vrot.lane.b32.xlu0 %v6953, 4
        %v7061 = vpop.permute.xlu0 %7060
        %7062 = vrot.lane.b32.xlu0 %v6954, 4
        %v7063 = vpop.permute.xlu0 %7062
        %7064 = vrot.lane.b32.xlu0 %v6955, 4
        %v7065 = vpop.permute.xlu0 %7064
        %7066 = vrot.lane.b32.xlu0 %v6956, 4
        %v7067 = vpop.permute.xlu0 %7066
        %7068 = vrot.lane.b32.xlu0 %v6957, 4
        %v7069 = vpop.permute.xlu0 %7068
        %7070 = vrot.lane.b32.xlu0 %v6958, 4
        %v7071 = vpop.permute.xlu0 %7070
        %7072 = vrot.lane.b32.xlu0 %v6959, 4
        %v7073 = vpop.permute.xlu0 %7072
        %7074 = vrot.lane.b32.xlu0 %v6960, 4
        %v7075 = vpop.permute.xlu0 %7074
        %7076 = vrot.lane.b32.xlu0 %v6961, 4
        %v7077 = vpop.permute.xlu0 %7076
        %7078 = vrot.lane.b32.xlu0 %v6962, 4
        %v7079 = vpop.permute.xlu0 %7078
        %7080 = vrot.lane.b32.xlu0 %v6963, 4
        %v7081 = vpop.permute.xlu0 %7080
        %7082 = vrot.lane.b32.xlu0 %v6964, 4
        %v7083 = vpop.permute.xlu0 %7082
        %7084 = vrot.lane.b32.xlu0 %v6965, 4
        %v7085 = vpop.permute.xlu0 %7084
        %7086 = vrot.lane.b32.xlu0 %v6966, 4
        %v7087 = vpop.permute.xlu0 %7086
        %7088 = vrot.lane.b32.xlu0 %v6967, 4
        %v7089 = vpop.permute.xlu0 %7088
        %7090 = vrot.lane.b32.xlu0 %v6968, 4
        %v7091 = vpop.permute.xlu0 %7090
        %7092 = vrot.lane.b32.xlu0 %v6969, 4
        %v7093 = vpop.permute.xlu0 %7092
        %7094 = vrot.lane.b32.xlu0 %v6970, 4
        %v7095 = vpop.permute.xlu0 %7094
        %7096 = vrot.lane.b32.xlu0 %v6971, 4
        %v7097 = vpop.permute.xlu0 %7096
        %7098 = vrot.lane.b32.xlu0 %v6972, 4
        %v7099 = vpop.permute.xlu0 %7098
        %7100 = vrot.lane.b32.xlu0 %v6973, 4
        %v7101 = vpop.permute.xlu0 %7100
        %v7102 = vunpack.c.l.b16 %v6053
        %v7103 = vunpack.c.l.b16 %v6056
        %v7104 = vunpack.c.l.b16 %v6059
        %v7105 = vunpack.c.l.b16 %v6062
        %v7106 = vunpack.c.l.b16 %v6066
        %v7107 = vunpack.c.l.b16 %v6069
        %v7108 = vunpack.c.l.b16 %v6072
        %v7109 = vunpack.c.l.b16 %v6075
        %v7110 = vunpack.c.l.b16 %v6079
        %v7111 = vunpack.c.l.b16 %v6082
        %v7112 = vunpack.c.l.b16 %v6085
        %v7113 = vunpack.c.l.b16 %v6088
        %v7114 = vunpack.c.l.b16 %v6092
        %v7115 = vunpack.c.l.b16 %v6095
        %v7116 = vunpack.c.l.b16 %v6098
        %v7117 = vunpack.c.l.b16 %v6101
        %v7118 = vunpack.c.l.b16 %v6105
        %v7119 = vunpack.c.l.b16 %v6108
        %v7120 = vunpack.c.l.b16 %v6111
        %v7121 = vunpack.c.l.b16 %v6114
        %v7122 = vunpack.c.l.b16 %v6118
        %v7123 = vunpack.c.l.b16 %v6121
        %v7124 = vunpack.c.l.b16 %v6124
        %v7125 = vunpack.c.l.b16 %v6127
        %v7126 = vunpack.c.l.b16 %v6131
        %v7127 = vunpack.c.l.b16 %v6134
        %v7128 = vunpack.c.l.b16 %v6137
        %v7129 = vunpack.c.l.b16 %v6140
        %v7130 = vunpack.c.l.b16 %v6144
        %v7131 = vunpack.c.l.b16 %v6147
        %v7132 = vunpack.c.l.b16 %v6150
        %v7133 = vunpack.c.l.b16 %v6153
        %v7134 = vunpack.c.l.b16 %v6157
        %v7135 = vunpack.c.l.b16 %v6160
        %v7136 = vunpack.c.l.b16 %v6163
        %v7137 = vunpack.c.l.b16 %v6166
        %v7138 = vunpack.c.l.b16 %v6170
        %v7139 = vunpack.c.l.b16 %v6173
        %v7140 = vunpack.c.l.b16 %v6176
        %v7141 = vunpack.c.l.b16 %v6179
        %v7142 = vunpack.c.l.b16 %v6183
        %v7143 = vunpack.c.l.b16 %v6186
        %v7144 = vunpack.c.l.b16 %v6189
        %v7145 = vunpack.c.l.b16 %v6192
        %v7146 = vunpack.c.l.b16 %v6196
        %v7147 = vunpack.c.l.b16 %v6199
        %v7148 = vunpack.c.l.b16 %v6202
        %v7149 = vunpack.c.l.b16 %v6205
        %v7150 = vunpack.c.l.b16 %v6209
        %v7151 = vunpack.c.l.b16 %v6212
        %v7152 = vunpack.c.l.b16 %v6215
        %v7153 = vunpack.c.l.b16 %v6218
        %v7154 = vunpack.c.l.b16 %v6222
        %v7155 = vunpack.c.l.b16 %v6225
        %v7156 = vunpack.c.l.b16 %v6228
        %v7157 = vunpack.c.l.b16 %v6231
        %v7158 = vunpack.c.l.b16 %v6235
        %v7159 = vunpack.c.l.b16 %v6238
        %v7160 = vunpack.c.l.b16 %v6241
        %v7161 = vunpack.c.l.b16 %v6244
        %v7162 = vunpack.c.l.b16 %v6248
        %v7163 = vunpack.c.l.b16 %v6251
        %v7164 = vunpack.c.l.b16 %v6254
        %v7165 = vunpack.c.l.b16 %v6257
        %v7166 = vunpack.c.l.b16 %v6261
        %v7167 = vunpack.c.l.b16 %v6264
        %v7168 = vunpack.c.l.b16 %v6267
        %v7169 = vunpack.c.l.b16 %v6270
        %v7170 = vunpack.c.l.b16 %v6274
        %v7171 = vunpack.c.l.b16 %v6277
        %v7172 = vunpack.c.l.b16 %v6280
        %v7173 = vunpack.c.l.b16 %v6283
        %v7174 = vunpack.c.l.b16 %v6287
        %v7175 = vunpack.c.l.b16 %v6290
        %v7176 = vunpack.c.l.b16 %v6293
        %v7177 = vunpack.c.l.b16 %v6296
        %v7178 = vunpack.c.l.b16 %v6300
        %v7179 = vunpack.c.l.b16 %v6303
        %v7180 = vunpack.c.l.b16 %v6306
        %v7181 = vunpack.c.l.b16 %v6309
        %v7182 = vunpack.c.l.b16 %v6313
        %v7183 = vunpack.c.l.b16 %v6316
        %v7184 = vunpack.c.l.b16 %v6319
        %v7185 = vunpack.c.l.b16 %v6322
        %v7186 = vunpack.c.l.b16 %v6326
        %v7187 = vunpack.c.l.b16 %v6329
        %v7188 = vunpack.c.l.b16 %v6332
        %v7189 = vunpack.c.l.b16 %v6335
        %v7190 = vunpack.c.l.b16 %v6339
        %v7191 = vunpack.c.l.b16 %v6342
        %v7192 = vunpack.c.l.b16 %v6345
        %v7193 = vunpack.c.l.b16 %v6348
        %v7194 = vunpack.c.l.b16 %v6352
        %v7195 = vunpack.c.l.b16 %v6355
        %v7196 = vunpack.c.l.b16 %v6358
        %v7197 = vunpack.c.l.b16 %v6361
        %v7198 = vunpack.c.l.b16 %v6365
        %v7199 = vunpack.c.l.b16 %v6368
        %v7200 = vunpack.c.l.b16 %v6371
        %v7201 = vunpack.c.l.b16 %v6374
        %v7202 = vunpack.c.l.b16 %v6378
        %v7203 = vunpack.c.l.b16 %v6381
        %v7204 = vunpack.c.l.b16 %v6384
        %v7205 = vunpack.c.l.b16 %v6387
        %v7206 = vunpack.c.l.b16 %v6391
        %v7207 = vunpack.c.l.b16 %v6394
        %v7208 = vunpack.c.l.b16 %v6397
        %v7209 = vunpack.c.l.b16 %v6400
        %v7210 = vunpack.c.l.b16 %v6404
        %v7211 = vunpack.c.l.b16 %v6407
        %v7212 = vunpack.c.l.b16 %v6410
        %v7213 = vunpack.c.l.b16 %v6413
        %v7214 = vunpack.c.l.b16 %v6417
        %v7215 = vunpack.c.l.b16 %v6420
        %v7216 = vunpack.c.l.b16 %v6423
        %v7217 = vunpack.c.l.b16 %v6426
        %v7218 = vunpack.c.l.b16 %v6430
        %v7219 = vunpack.c.l.b16 %v6433
        %v7220 = vunpack.c.l.b16 %v6436
        %v7221 = vunpack.c.l.b16 %v6439
        %v7222 = vunpack.c.l.b16 %v6443
        %v7223 = vunpack.c.l.b16 %v6446
        %v7224 = vunpack.c.l.b16 %v6449
        %v7225 = vunpack.c.l.b16 %v6452
        %v7226 = vunpack.c.l.b16 %v6456
        %v7227 = vunpack.c.l.b16 %v6459
        %v7228 = vunpack.c.l.b16 %v6462
        %v7229 = vunpack.c.l.b16 %v6465
        %v7230 = vpack.c.b16 %v7103, %v7102
        %v7231 = vpack.c.b16 %v7105, %v7104
        %v7232 = vpack.c.b16 %v7107, %v7106
        %v7233 = vpack.c.b16 %v7109, %v7108
        %v7234 = vpack.c.b16 %v7111, %v7110
        %v7235 = vpack.c.b16 %v7113, %v7112
        %v7236 = vpack.c.b16 %v7115, %v7114
        %v7237 = vpack.c.b16 %v7117, %v7116
        %v7238 = vpack.c.b16 %v7119, %v7118
        %v7239 = vpack.c.b16 %v7121, %v7120
        %v7240 = vpack.c.b16 %v7123, %v7122
        %v7241 = vpack.c.b16 %v7125, %v7124
        %v7242 = vpack.c.b16 %v7127, %v7126
        %v7243 = vpack.c.b16 %v7129, %v7128
        %v7244 = vpack.c.b16 %v7131, %v7130
        %v7245 = vpack.c.b16 %v7133, %v7132
        %v7246 = vpack.c.b16 %v7135, %v7134
        %v7247 = vpack.c.b16 %v7137, %v7136
        %v7248 = vpack.c.b16 %v7139, %v7138
        %v7249 = vpack.c.b16 %v7141, %v7140
        %v7250 = vpack.c.b16 %v7143, %v7142
        %v7251 = vpack.c.b16 %v7145, %v7144
        %v7252 = vpack.c.b16 %v7147, %v7146
        %v7253 = vpack.c.b16 %v7149, %v7148
        %v7254 = vpack.c.b16 %v7151, %v7150
        %v7255 = vpack.c.b16 %v7153, %v7152
        %v7256 = vpack.c.b16 %v7155, %v7154
        %v7257 = vpack.c.b16 %v7157, %v7156
        %v7258 = vpack.c.b16 %v7159, %v7158
        %v7259 = vpack.c.b16 %v7161, %v7160
        %v7260 = vpack.c.b16 %v7163, %v7162
        %v7261 = vpack.c.b16 %v7165, %v7164
        %v7262 = vpack.c.b16 %v7167, %v7166
        %v7263 = vpack.c.b16 %v7169, %v7168
        %v7264 = vpack.c.b16 %v7171, %v7170
        %v7265 = vpack.c.b16 %v7173, %v7172
        %v7266 = vpack.c.b16 %v7175, %v7174
        %v7267 = vpack.c.b16 %v7177, %v7176
        %v7268 = vpack.c.b16 %v7179, %v7178
        %v7269 = vpack.c.b16 %v7181, %v7180
        %v7270 = vpack.c.b16 %v7183, %v7182
        %v7271 = vpack.c.b16 %v7185, %v7184
        %v7272 = vpack.c.b16 %v7187, %v7186
        %v7273 = vpack.c.b16 %v7189, %v7188
        %v7274 = vpack.c.b16 %v7191, %v7190
        %v7275 = vpack.c.b16 %v7193, %v7192
        %v7276 = vpack.c.b16 %v7195, %v7194
        %v7277 = vpack.c.b16 %v7197, %v7196
        %v7278 = vpack.c.b16 %v7199, %v7198
        %v7279 = vpack.c.b16 %v7201, %v7200
        %v7280 = vpack.c.b16 %v7203, %v7202
        %v7281 = vpack.c.b16 %v7205, %v7204
        %v7282 = vpack.c.b16 %v7207, %v7206
        %v7283 = vpack.c.b16 %v7209, %v7208
        %v7284 = vpack.c.b16 %v7211, %v7210
        %v7285 = vpack.c.b16 %v7213, %v7212
        %v7286 = vpack.c.b16 %v7215, %v7214
        %v7287 = vpack.c.b16 %v7217, %v7216
        %v7288 = vpack.c.b16 %v7219, %v7218
        %v7289 = vpack.c.b16 %v7221, %v7220
        %v7290 = vpack.c.b16 %v7223, %v7222
        %v7291 = vpack.c.b16 %v7225, %v7224
        %v7292 = vpack.c.b16 %v7227, %v7226
        %v7293 = vpack.c.b16 %v7229, %v7228
        %7294 = vrot.lane.b32.xlu0 %v7230, 8
        %v7295 = vpop.permute.xlu0 %7294
        %7296 = vrot.lane.b32.xlu0 %v7231, 8
        %v7297 = vpop.permute.xlu0 %7296
        %7298 = vrot.lane.b32.xlu0 %v7232, 8
        %v7299 = vpop.permute.xlu0 %7298
        %7300 = vrot.lane.b32.xlu0 %v7233, 8
        %v7301 = vpop.permute.xlu0 %7300
        %7302 = vrot.lane.b32.xlu0 %v7234, 8
        %v7303 = vpop.permute.xlu0 %7302
        %7304 = vrot.lane.b32.xlu0 %v7235, 8
        %v7305 = vpop.permute.xlu0 %7304
        %7306 = vrot.lane.b32.xlu0 %v7236, 8
        %v7307 = vpop.permute.xlu0 %7306
        %7308 = vrot.lane.b32.xlu0 %v7237, 8
        %v7309 = vpop.permute.xlu0 %7308
        %7310 = vrot.lane.b32.xlu0 %v7238, 8
        %v7311 = vpop.permute.xlu0 %7310
        %7312 = vrot.lane.b32.xlu0 %v7239, 8
        %v7313 = vpop.permute.xlu0 %7312
        %7314 = vrot.lane.b32.xlu0 %v7240, 8
        %v7315 = vpop.permute.xlu0 %7314
        %7316 = vrot.lane.b32.xlu0 %v7241, 8
        %v7317 = vpop.permute.xlu0 %7316
        %7318 = vrot.lane.b32.xlu0 %v7242, 8
        %v7319 = vpop.permute.xlu0 %7318
        %7320 = vrot.lane.b32.xlu0 %v7243, 8
        %v7321 = vpop.permute.xlu0 %7320
        %7322 = vrot.lane.b32.xlu0 %v7244, 8
        %v7323 = vpop.permute.xlu0 %7322
        %7324 = vrot.lane.b32.xlu0 %v7245, 8
        %v7325 = vpop.permute.xlu0 %7324
        %7326 = vrot.lane.b32.xlu0 %v7246, 8
        %v7327 = vpop.permute.xlu0 %7326
        %7328 = vrot.lane.b32.xlu0 %v7247, 8
        %v7329 = vpop.permute.xlu0 %7328
        %7330 = vrot.lane.b32.xlu0 %v7248, 8
        %v7331 = vpop.permute.xlu0 %7330
        %7332 = vrot.lane.b32.xlu0 %v7249, 8
        %v7333 = vpop.permute.xlu0 %7332
        %7334 = vrot.lane.b32.xlu0 %v7250, 8
        %v7335 = vpop.permute.xlu0 %7334
        %7336 = vrot.lane.b32.xlu0 %v7251, 8
        %v7337 = vpop.permute.xlu0 %7336
        %7338 = vrot.lane.b32.xlu0 %v7252, 8
        %v7339 = vpop.permute.xlu0 %7338
        %7340 = vrot.lane.b32.xlu0 %v7253, 8
        %v7341 = vpop.permute.xlu0 %7340
        %7342 = vrot.lane.b32.xlu0 %v7254, 8
        %v7343 = vpop.permute.xlu0 %7342
        %7344 = vrot.lane.b32.xlu0 %v7255, 8
        %v7345 = vpop.permute.xlu0 %7344
        %7346 = vrot.lane.b32.xlu0 %v7256, 8
        %v7347 = vpop.permute.xlu0 %7346
        %7348 = vrot.lane.b32.xlu0 %v7257, 8
        %v7349 = vpop.permute.xlu0 %7348
        %7350 = vrot.lane.b32.xlu0 %v7258, 8
        %v7351 = vpop.permute.xlu0 %7350
        %7352 = vrot.lane.b32.xlu0 %v7259, 8
        %v7353 = vpop.permute.xlu0 %7352
        %7354 = vrot.lane.b32.xlu0 %v7260, 8
        %v7355 = vpop.permute.xlu0 %7354
        %7356 = vrot.lane.b32.xlu0 %v7261, 8
        %v7357 = vpop.permute.xlu0 %7356
        %7358 = vrot.lane.b32.xlu0 %v7262, 8
        %v7359 = vpop.permute.xlu0 %7358
        %7360 = vrot.lane.b32.xlu0 %v7263, 8
        %v7361 = vpop.permute.xlu0 %7360
        %7362 = vrot.lane.b32.xlu0 %v7264, 8
        %v7363 = vpop.permute.xlu0 %7362
        %7364 = vrot.lane.b32.xlu0 %v7265, 8
        %v7365 = vpop.permute.xlu0 %7364
        %7366 = vrot.lane.b32.xlu0 %v7266, 8
        %v7367 = vpop.permute.xlu0 %7366
        %7368 = vrot.lane.b32.xlu0 %v7267, 8
        %v7369 = vpop.permute.xlu0 %7368
        %7370 = vrot.lane.b32.xlu0 %v7268, 8
        %v7371 = vpop.permute.xlu0 %7370
        %7372 = vrot.lane.b32.xlu0 %v7269, 8
        %v7373 = vpop.permute.xlu0 %7372
        %7374 = vrot.lane.b32.xlu0 %v7270, 8
        %v7375 = vpop.permute.xlu0 %7374
        %7376 = vrot.lane.b32.xlu0 %v7271, 8
        %v7377 = vpop.permute.xlu0 %7376
        %7378 = vrot.lane.b32.xlu0 %v7272, 8
        %v7379 = vpop.permute.xlu0 %7378
        %7380 = vrot.lane.b32.xlu0 %v7273, 8
        %v7381 = vpop.permute.xlu0 %7380
        %7382 = vrot.lane.b32.xlu0 %v7274, 8
        %v7383 = vpop.permute.xlu0 %7382
        %7384 = vrot.lane.b32.xlu0 %v7275, 8
        %v7385 = vpop.permute.xlu0 %7384
        %7386 = vrot.lane.b32.xlu0 %v7276, 8
        %v7387 = vpop.permute.xlu0 %7386
        %7388 = vrot.lane.b32.xlu0 %v7277, 8
        %v7389 = vpop.permute.xlu0 %7388
        %7390 = vrot.lane.b32.xlu0 %v7278, 8
        %v7391 = vpop.permute.xlu0 %7390
        %7392 = vrot.lane.b32.xlu0 %v7279, 8
        %v7393 = vpop.permute.xlu0 %7392
        %7394 = vrot.lane.b32.xlu0 %v7280, 8
        %v7395 = vpop.permute.xlu0 %7394
        %7396 = vrot.lane.b32.xlu0 %v7281, 8
        %v7397 = vpop.permute.xlu0 %7396
        %7398 = vrot.lane.b32.xlu0 %v7282, 8
        %v7399 = vpop.permute.xlu0 %7398
        %7400 = vrot.lane.b32.xlu0 %v7283, 8
        %v7401 = vpop.permute.xlu0 %7400
        %7402 = vrot.lane.b32.xlu0 %v7284, 8
        %v7403 = vpop.permute.xlu0 %7402
        %7404 = vrot.lane.b32.xlu0 %v7285, 8
        %v7405 = vpop.permute.xlu0 %7404
        %7406 = vrot.lane.b32.xlu0 %v7286, 8
        %v7407 = vpop.permute.xlu0 %7406
        %7408 = vrot.lane.b32.xlu0 %v7287, 8
        %v7409 = vpop.permute.xlu0 %7408
        %7410 = vrot.lane.b32.xlu0 %v7288, 8
        %v7411 = vpop.permute.xlu0 %7410
        %7412 = vrot.lane.b32.xlu0 %v7289, 8
        %v7413 = vpop.permute.xlu0 %7412
        %7414 = vrot.lane.b32.xlu0 %v7290, 8
        %v7415 = vpop.permute.xlu0 %7414
        %7416 = vrot.lane.b32.xlu0 %v7291, 8
        %v7417 = vpop.permute.xlu0 %7416
        %7418 = vrot.lane.b32.xlu0 %v7292, 8
        %v7419 = vpop.permute.xlu0 %7418
        %7420 = vrot.lane.b32.xlu0 %v7293, 8
        %v7421 = vpop.permute.xlu0 %7420
        %v7422 = vunpack.c.l.b16 %v1451
        %v7423 = vunpack.c.l.b16 %v1452
        %v7424 = vunpack.c.l.b16 %v1453
        %v7425 = vunpack.c.l.b16 %v1454
        %v7426 = vpack.c.b16 %v7423, %v7422
        %v7427 = vpack.c.b16 %v7425, %v7424
        %7428 = vrot.lane.b32.xlu0 %v6720, 12
        %v7429 = vpop.permute.xlu0 %7428
        %7430 = vrot.lane.b32.xlu0 %v6721, 12
        %v7431 = vpop.permute.xlu0 %7430
        %7432 = vrot.lane.b32.xlu0 %v6722, 12
        %v7433 = vpop.permute.xlu0 %7432
        %7434 = vrot.lane.b32.xlu0 %v6723, 12
        %v7435 = vpop.permute.xlu0 %7434
        %7436 = vrot.lane.b32.xlu0 %v6724, 12
        %v7437 = vpop.permute.xlu0 %7436
        %7438 = vrot.lane.b32.xlu0 %v6725, 12
        %v7439 = vpop.permute.xlu0 %7438
        %7440 = vrot.lane.b32.xlu0 %v6726, 12
        %v7441 = vpop.permute.xlu0 %7440
        %7442 = vrot.lane.b32.xlu0 %v6727, 12
        %v7443 = vpop.permute.xlu0 %7442
        %7444 = vrot.lane.b32.xlu0 %v6728, 12
        %v7445 = vpop.permute.xlu0 %7444
        %7446 = vrot.lane.b32.xlu0 %v6729, 12
        %v7447 = vpop.permute.xlu0 %7446
        %7448 = vrot.lane.b32.xlu0 %v6730, 12
        %v7449 = vpop.permute.xlu0 %7448
        %7450 = vrot.lane.b32.xlu0 %v6731, 12
        %v7451 = vpop.permute.xlu0 %7450
        %7452 = vrot.lane.b32.xlu0 %v6732, 12
        %v7453 = vpop.permute.xlu0 %7452
        %7454 = vrot.lane.b32.xlu0 %v6733, 12
        %v7455 = vpop.permute.xlu0 %7454
        %7456 = vrot.lane.b32.xlu0 %v6734, 12
        %v7457 = vpop.permute.xlu0 %7456
        %7458 = vrot.lane.b32.xlu0 %v6735, 12
        %v7459 = vpop.permute.xlu0 %7458
        %7460 = vrot.lane.b32.xlu0 %v6736, 12
        %v7461 = vpop.permute.xlu0 %7460
        %7462 = vrot.lane.b32.xlu0 %v6737, 12
        %v7463 = vpop.permute.xlu0 %7462
        %7464 = vrot.lane.b32.xlu0 %v6738, 12
        %v7465 = vpop.permute.xlu0 %7464
        %7466 = vrot.lane.b32.xlu0 %v6739, 12
        %v7467 = vpop.permute.xlu0 %7466
        %7468 = vrot.lane.b32.xlu0 %v6740, 12
        %v7469 = vpop.permute.xlu0 %7468
        %7470 = vrot.lane.b32.xlu0 %v6741, 12
        %v7471 = vpop.permute.xlu0 %7470
        %7472 = vrot.lane.b32.xlu0 %v6742, 12
        %v7473 = vpop.permute.xlu0 %7472
        %7474 = vrot.lane.b32.xlu0 %v6743, 12
        %v7475 = vpop.permute.xlu0 %7474
        %7476 = vrot.lane.b32.xlu0 %v6744, 12
        %v7477 = vpop.permute.xlu0 %7476
        %7478 = vrot.lane.b32.xlu0 %v6745, 12
        %v7479 = vpop.permute.xlu0 %7478
        %7480 = vrot.lane.b32.xlu0 %v6746, 12
        %v7481 = vpop.permute.xlu0 %7480
        %7482 = vrot.lane.b32.xlu0 %v6747, 12
        %v7483 = vpop.permute.xlu0 %7482
        %7484 = vrot.lane.b32.xlu0 %v6748, 12
        %v7485 = vpop.permute.xlu0 %7484
        %7486 = vrot.lane.b32.xlu0 %v6749, 12
        %v7487 = vpop.permute.xlu0 %7486
        %7488 = vrot.lane.b32.xlu0 %v6750, 12
        %v7489 = vpop.permute.xlu0 %7488
        %7490 = vrot.lane.b32.xlu0 %v6751, 12
        %v7491 = vpop.permute.xlu0 %7490
        %7492 = vrot.lane.b32.xlu0 %v6752, 12
        %v7493 = vpop.permute.xlu0 %7492
        %7494 = vrot.lane.b32.xlu0 %v6753, 12
        %v7495 = vpop.permute.xlu0 %7494
        %7496 = vrot.lane.b32.xlu0 %v6754, 12
        %v7497 = vpop.permute.xlu0 %7496
        %7498 = vrot.lane.b32.xlu0 %v6755, 12
        %v7499 = vpop.permute.xlu0 %7498
        %7500 = vrot.lane.b32.xlu0 %v6756, 12
        %v7501 = vpop.permute.xlu0 %7500
        %7502 = vrot.lane.b32.xlu0 %v6757, 12
        %v7503 = vpop.permute.xlu0 %7502
        %7504 = vrot.lane.b32.xlu0 %v6758, 12
        %v7505 = vpop.permute.xlu0 %7504
        %7506 = vrot.lane.b32.xlu0 %v6759, 12
        %v7507 = vpop.permute.xlu0 %7506
        %7508 = vrot.lane.b32.xlu0 %v6760, 12
        %v7509 = vpop.permute.xlu0 %7508
        %7510 = vrot.lane.b32.xlu0 %v6761, 12
        %v7511 = vpop.permute.xlu0 %7510
        %7512 = vrot.lane.b32.xlu0 %v6762, 12
        %v7513 = vpop.permute.xlu0 %7512
        %7514 = vrot.lane.b32.xlu0 %v6763, 12
        %v7515 = vpop.permute.xlu0 %7514
        %7516 = vrot.lane.b32.xlu0 %v6764, 12
        %v7517 = vpop.permute.xlu0 %7516
        %7518 = vrot.lane.b32.xlu0 %v6765, 12
        %v7519 = vpop.permute.xlu0 %7518
        %7520 = vrot.lane.b32.xlu0 %v6766, 12
        %v7521 = vpop.permute.xlu0 %7520
        %7522 = vrot.lane.b32.xlu0 %v6767, 12
        %v7523 = vpop.permute.xlu0 %7522
        %7524 = vrot.lane.b32.xlu0 %v6768, 12
        %v7525 = vpop.permute.xlu0 %7524
        %7526 = vrot.lane.b32.xlu0 %v6769, 12
        %v7527 = vpop.permute.xlu0 %7526
        %7528 = vrot.lane.b32.xlu0 %v6770, 12
        %v7529 = vpop.permute.xlu0 %7528
        %7530 = vrot.lane.b32.xlu0 %v6771, 12
        %v7531 = vpop.permute.xlu0 %7530
        %7532 = vrot.lane.b32.xlu0 %v6772, 12
        %v7533 = vpop.permute.xlu0 %7532
        %7534 = vrot.lane.b32.xlu0 %v6773, 12
        %v7535 = vpop.permute.xlu0 %7534
        %7536 = vrot.lane.b32.xlu0 %v6774, 12
        %v7537 = vpop.permute.xlu0 %7536
        %7538 = vrot.lane.b32.xlu0 %v6775, 12
        %v7539 = vpop.permute.xlu0 %7538
        %7540 = vrot.lane.b32.xlu0 %v6776, 12
        %v7541 = vpop.permute.xlu0 %7540
        %7542 = vrot.lane.b32.xlu0 %v6777, 12
        %v7543 = vpop.permute.xlu0 %7542
        %7544 = vrot.lane.b32.xlu0 %v6778, 12
        %v7545 = vpop.permute.xlu0 %7544
        %7546 = vrot.lane.b32.xlu0 %v6779, 12
        %v7547 = vpop.permute.xlu0 %7546
        %7548 = vrot.lane.b32.xlu0 %v6780, 12
        %v7549 = vpop.permute.xlu0 %7548
        %7550 = vrot.lane.b32.xlu0 %v6781, 12
        %v7551 = vpop.permute.xlu0 %7550
        %7552 = vrot.lane.b32.xlu0 %v7426, 12
        %v7553 = vpop.permute.xlu0 %7552
        %7554 = vrot.lane.b32.xlu0 %v7427, 12
        %v7555 = vpop.permute.xlu0 %7554
        %v7556 = vunpack.c.l.b16 %v6479
        %v7557 = vunpack.c.l.b16 %v6489
        %v7558 = vunpack.c.l.b16 %v6499
        %v7559 = vunpack.c.l.b16 %v6509
        %v7560 = vpack.c.b16 %v7557, %v7556
        %v7561 = vpack.c.b16 %v7559, %v7558
        %7562 = vrot.lane.b32.xlu0 %v6912, 16
        %v7563 = vpop.permute.xlu0 %7562
        %7564 = vrot.lane.b32.xlu0 %v6913, 16
        %v7565 = vpop.permute.xlu0 %7564
        %7566 = vrot.lane.b32.xlu0 %v6914, 16
        %v7567 = vpop.permute.xlu0 %7566
        %7568 = vrot.lane.b32.xlu0 %v6915, 16
        %v7569 = vpop.permute.xlu0 %7568
        %7570 = vrot.lane.b32.xlu0 %v6916, 16
        %v7571 = vpop.permute.xlu0 %7570
        %7572 = vrot.lane.b32.xlu0 %v6917, 16
        %v7573 = vpop.permute.xlu0 %7572
        %7574 = vrot.lane.b32.xlu0 %v6918, 16
        %v7575 = vpop.permute.xlu0 %7574
        %7576 = vrot.lane.b32.xlu0 %v6919, 16
        %v7577 = vpop.permute.xlu0 %7576
        %7578 = vrot.lane.b32.xlu0 %v6920, 16
        %v7579 = vpop.permute.xlu0 %7578
        %7580 = vrot.lane.b32.xlu0 %v6921, 16
        %v7581 = vpop.permute.xlu0 %7580
        %7582 = vrot.lane.b32.xlu0 %v6922, 16
        %v7583 = vpop.permute.xlu0 %7582
        %7584 = vrot.lane.b32.xlu0 %v6923, 16
        %v7585 = vpop.permute.xlu0 %7584
        %7586 = vrot.lane.b32.xlu0 %v6924, 16
        %v7587 = vpop.permute.xlu0 %7586
        %7588 = vrot.lane.b32.xlu0 %v6925, 16
        %v7589 = vpop.permute.xlu0 %7588
        %7590 = vrot.lane.b32.xlu0 %v6926, 16
        %v7591 = vpop.permute.xlu0 %7590
        %7592 = vrot.lane.b32.xlu0 %v6927, 16
        %v7593 = vpop.permute.xlu0 %7592
        %7594 = vrot.lane.b32.xlu0 %v6928, 16
        %v7595 = vpop.permute.xlu0 %7594
        %7596 = vrot.lane.b32.xlu0 %v6929, 16
        %v7597 = vpop.permute.xlu0 %7596
        %7598 = vrot.lane.b32.xlu0 %v6930, 16
        %v7599 = vpop.permute.xlu0 %7598
        %7600 = vrot.lane.b32.xlu0 %v6931, 16
        %v7601 = vpop.permute.xlu0 %7600
        %7602 = vrot.lane.b32.xlu0 %v6932, 16
        %v7603 = vpop.permute.xlu0 %7602
        %7604 = vrot.lane.b32.xlu0 %v6933, 16
        %v7605 = vpop.permute.xlu0 %7604
        %7606 = vrot.lane.b32.xlu0 %v6934, 16
        %v7607 = vpop.permute.xlu0 %7606
        %7608 = vrot.lane.b32.xlu0 %v6935, 16
        %v7609 = vpop.permute.xlu0 %7608
        %7610 = vrot.lane.b32.xlu0 %v6936, 16
        %v7611 = vpop.permute.xlu0 %7610
        %7612 = vrot.lane.b32.xlu0 %v6937, 16
        %v7613 = vpop.permute.xlu0 %7612
        %7614 = vrot.lane.b32.xlu0 %v6938, 16
        %v7615 = vpop.permute.xlu0 %7614
        %7616 = vrot.lane.b32.xlu0 %v6939, 16
        %v7617 = vpop.permute.xlu0 %7616
        %7618 = vrot.lane.b32.xlu0 %v6940, 16
        %v7619 = vpop.permute.xlu0 %7618
        %7620 = vrot.lane.b32.xlu0 %v6941, 16
        %v7621 = vpop.permute.xlu0 %7620
        %7622 = vrot.lane.b32.xlu0 %v6942, 16
        %v7623 = vpop.permute.xlu0 %7622
        %7624 = vrot.lane.b32.xlu0 %v6943, 16
        %v7625 = vpop.permute.xlu0 %7624
        %7626 = vrot.lane.b32.xlu0 %v6944, 16
        %v7627 = vpop.permute.xlu0 %7626
        %7628 = vrot.lane.b32.xlu0 %v6945, 16
        %v7629 = vpop.permute.xlu0 %7628
        %7630 = vrot.lane.b32.xlu0 %v6946, 16
        %v7631 = vpop.permute.xlu0 %7630
        %7632 = vrot.lane.b32.xlu0 %v6947, 16
        %v7633 = vpop.permute.xlu0 %7632
        %7634 = vrot.lane.b32.xlu0 %v6948, 16
        %v7635 = vpop.permute.xlu0 %7634
        %7636 = vrot.lane.b32.xlu0 %v6949, 16
        %v7637 = vpop.permute.xlu0 %7636
        %7638 = vrot.lane.b32.xlu0 %v6950, 16
        %v7639 = vpop.permute.xlu0 %7638
        %7640 = vrot.lane.b32.xlu0 %v6951, 16
        %v7641 = vpop.permute.xlu0 %7640
        %7642 = vrot.lane.b32.xlu0 %v6952, 16
        %v7643 = vpop.permute.xlu0 %7642
        %7644 = vrot.lane.b32.xlu0 %v6953, 16
        %v7645 = vpop.permute.xlu0 %7644
        %7646 = vrot.lane.b32.xlu0 %v6954, 16
        %v7647 = vpop.permute.xlu0 %7646
        %7648 = vrot.lane.b32.xlu0 %v6955, 16
        %v7649 = vpop.permute.xlu0 %7648
        %7650 = vrot.lane.b32.xlu0 %v6956, 16
        %v7651 = vpop.permute.xlu0 %7650
        %7652 = vrot.lane.b32.xlu0 %v6957, 16
        %v7653 = vpop.permute.xlu0 %7652
        %7654 = vrot.lane.b32.xlu0 %v6958, 16
        %v7655 = vpop.permute.xlu0 %7654
        %7656 = vrot.lane.b32.xlu0 %v6959, 16
        %v7657 = vpop.permute.xlu0 %7656
        %7658 = vrot.lane.b32.xlu0 %v6960, 16
        %v7659 = vpop.permute.xlu0 %7658
        %7660 = vrot.lane.b32.xlu0 %v6961, 16
        %v7661 = vpop.permute.xlu0 %7660
        %7662 = vrot.lane.b32.xlu0 %v6962, 16
        %v7663 = vpop.permute.xlu0 %7662
        %7664 = vrot.lane.b32.xlu0 %v6963, 16
        %v7665 = vpop.permute.xlu0 %7664
        %7666 = vrot.lane.b32.xlu0 %v6964, 16
        %v7667 = vpop.permute.xlu0 %7666
        %7668 = vrot.lane.b32.xlu0 %v6965, 16
        %v7669 = vpop.permute.xlu0 %7668
        %7670 = vrot.lane.b32.xlu0 %v6966, 16
        %v7671 = vpop.permute.xlu0 %7670
        %7672 = vrot.lane.b32.xlu0 %v6967, 16
        %v7673 = vpop.permute.xlu0 %7672
        %7674 = vrot.lane.b32.xlu0 %v6968, 16
        %v7675 = vpop.permute.xlu0 %7674
        %7676 = vrot.lane.b32.xlu0 %v6969, 16
        %v7677 = vpop.permute.xlu0 %7676
        %7678 = vrot.lane.b32.xlu0 %v6970, 16
        %v7679 = vpop.permute.xlu0 %7678
        %7680 = vrot.lane.b32.xlu0 %v6971, 16
        %v7681 = vpop.permute.xlu0 %7680
        %7682 = vrot.lane.b32.xlu0 %v6972, 16
        %v7683 = vpop.permute.xlu0 %7682
        %7684 = vrot.lane.b32.xlu0 %v6973, 16
        %v7685 = vpop.permute.xlu0 %7684
        %7686 = vrot.lane.b32.xlu0 %v7560, 16
        %v7687 = vpop.permute.xlu0 %7686
        %7688 = vrot.lane.b32.xlu0 %v7561, 16
        %v7689 = vpop.permute.xlu0 %7688
        %v7690 = vunpack.c.l.b16 %v6518
        %v7691 = vunpack.c.l.b16 %v6521
        %v7692 = vunpack.c.l.b16 %v6524
        %v7693 = vunpack.c.l.b16 %v6527
        %v7694 = vpack.c.b16 %v7691, %v7690
        %v7695 = vpack.c.b16 %v7693, %v7692
        %7696 = vrot.lane.b32.xlu0 %v7232, 20
        %v7697 = vpop.permute.xlu0 %7696
        %7698 = vrot.lane.b32.xlu0 %v7233, 20
        %v7699 = vpop.permute.xlu0 %7698
        %7700 = vrot.lane.b32.xlu0 %v7234, 20
        %v7701 = vpop.permute.xlu0 %7700
        %7702 = vrot.lane.b32.xlu0 %v7235, 20
        %v7703 = vpop.permute.xlu0 %7702
        %7704 = vrot.lane.b32.xlu0 %v7236, 20
        %v7705 = vpop.permute.xlu0 %7704
        %7706 = vrot.lane.b32.xlu0 %v7237, 20
        %v7707 = vpop.permute.xlu0 %7706
        %7708 = vrot.lane.b32.xlu0 %v7238, 20
        %v7709 = vpop.permute.xlu0 %7708
        %7710 = vrot.lane.b32.xlu0 %v7239, 20
        %v7711 = vpop.permute.xlu0 %7710
        %7712 = vrot.lane.b32.xlu0 %v7240, 20
        %v7713 = vpop.permute.xlu0 %7712
        %7714 = vrot.lane.b32.xlu0 %v7241, 20
        %v7715 = vpop.permute.xlu0 %7714
        %7716 = vrot.lane.b32.xlu0 %v7242, 20
        %v7717 = vpop.permute.xlu0 %7716
        %7718 = vrot.lane.b32.xlu0 %v7243, 20
        %v7719 = vpop.permute.xlu0 %7718
        %7720 = vrot.lane.b32.xlu0 %v7244, 20
        %v7721 = vpop.permute.xlu0 %7720
        %7722 = vrot.lane.b32.xlu0 %v7245, 20
        %v7723 = vpop.permute.xlu0 %7722
        %7724 = vrot.lane.b32.xlu0 %v7246, 20
        %v7725 = vpop.permute.xlu0 %7724
        %7726 = vrot.lane.b32.xlu0 %v7247, 20
        %v7727 = vpop.permute.xlu0 %7726
        %7728 = vrot.lane.b32.xlu0 %v7248, 20
        %v7729 = vpop.permute.xlu0 %7728
        %7730 = vrot.lane.b32.xlu0 %v7249, 20
        %v7731 = vpop.permute.xlu0 %7730
        %7732 = vrot.lane.b32.xlu0 %v7250, 20
        %v7733 = vpop.permute.xlu0 %7732
        %7734 = vrot.lane.b32.xlu0 %v7251, 20
        %v7735 = vpop.permute.xlu0 %7734
        %7736 = vrot.lane.b32.xlu0 %v7252, 20
        %v7737 = vpop.permute.xlu0 %7736
        %7738 = vrot.lane.b32.xlu0 %v7253, 20
        %v7739 = vpop.permute.xlu0 %7738
        %7740 = vrot.lane.b32.xlu0 %v7254, 20
        %v7741 = vpop.permute.xlu0 %7740
        %7742 = vrot.lane.b32.xlu0 %v7255, 20
        %v7743 = vpop.permute.xlu0 %7742
        %7744 = vrot.lane.b32.xlu0 %v7256, 20
        %v7745 = vpop.permute.xlu0 %7744
        %7746 = vrot.lane.b32.xlu0 %v7257, 20
        %v7747 = vpop.permute.xlu0 %7746
        %7748 = vrot.lane.b32.xlu0 %v7258, 20
        %v7749 = vpop.permute.xlu0 %7748
        %7750 = vrot.lane.b32.xlu0 %v7259, 20
        %v7751 = vpop.permute.xlu0 %7750
        %7752 = vrot.lane.b32.xlu0 %v7260, 20
        %v7753 = vpop.permute.xlu0 %7752
        %7754 = vrot.lane.b32.xlu0 %v7261, 20
        %v7755 = vpop.permute.xlu0 %7754
        %7756 = vrot.lane.b32.xlu0 %v7262, 20
        %v7757 = vpop.permute.xlu0 %7756
        %7758 = vrot.lane.b32.xlu0 %v7263, 20
        %v7759 = vpop.permute.xlu0 %7758
        %7760 = vrot.lane.b32.xlu0 %v7264, 20
        %v7761 = vpop.permute.xlu0 %7760
        %7762 = vrot.lane.b32.xlu0 %v7265, 20
        %v7763 = vpop.permute.xlu0 %7762
        %7764 = vrot.lane.b32.xlu0 %v7266, 20
        %v7765 = vpop.permute.xlu0 %7764
        %7766 = vrot.lane.b32.xlu0 %v7267, 20
        %v7767 = vpop.permute.xlu0 %7766
        %7768 = vrot.lane.b32.xlu0 %v7268, 20
        %v7769 = vpop.permute.xlu0 %7768
        %7770 = vrot.lane.b32.xlu0 %v7269, 20
        %v7771 = vpop.permute.xlu0 %7770
        %7772 = vrot.lane.b32.xlu0 %v7270, 20
        %v7773 = vpop.permute.xlu0 %7772
        %7774 = vrot.lane.b32.xlu0 %v7271, 20
        %v7775 = vpop.permute.xlu0 %7774
        %7776 = vrot.lane.b32.xlu0 %v7272, 20
        %v7777 = vpop.permute.xlu0 %7776
        %7778 = vrot.lane.b32.xlu0 %v7273, 20
        %v7779 = vpop.permute.xlu0 %7778
        %7780 = vrot.lane.b32.xlu0 %v7274, 20
        %v7781 = vpop.permute.xlu0 %7780
        %7782 = vrot.lane.b32.xlu0 %v7275, 20
        %v7783 = vpop.permute.xlu0 %7782
        %7784 = vrot.lane.b32.xlu0 %v7276, 20
        %v7785 = vpop.permute.xlu0 %7784
        %7786 = vrot.lane.b32.xlu0 %v7277, 20
        %v7787 = vpop.permute.xlu0 %7786
        %7788 = vrot.lane.b32.xlu0 %v7278, 20
        %v7789 = vpop.permute.xlu0 %7788
        %7790 = vrot.lane.b32.xlu0 %v7279, 20
        %v7791 = vpop.permute.xlu0 %7790
        %7792 = vrot.lane.b32.xlu0 %v7280, 20
        %v7793 = vpop.permute.xlu0 %7792
        %7794 = vrot.lane.b32.xlu0 %v7281, 20
        %v7795 = vpop.permute.xlu0 %7794
        %7796 = vrot.lane.b32.xlu0 %v7282, 20
        %v7797 = vpop.permute.xlu0 %7796
        %7798 = vrot.lane.b32.xlu0 %v7283, 20
        %v7799 = vpop.permute.xlu0 %7798
        %7800 = vrot.lane.b32.xlu0 %v7284, 20
        %v7801 = vpop.permute.xlu0 %7800
        %7802 = vrot.lane.b32.xlu0 %v7285, 20
        %v7803 = vpop.permute.xlu0 %7802
        %7804 = vrot.lane.b32.xlu0 %v7286, 20
        %v7805 = vpop.permute.xlu0 %7804
        %7806 = vrot.lane.b32.xlu0 %v7287, 20
        %v7807 = vpop.permute.xlu0 %7806
        %7808 = vrot.lane.b32.xlu0 %v7288, 20
        %v7809 = vpop.permute.xlu0 %7808
        %7810 = vrot.lane.b32.xlu0 %v7289, 20
        %v7811 = vpop.permute.xlu0 %7810
        %7812 = vrot.lane.b32.xlu0 %v7290, 20
        %v7813 = vpop.permute.xlu0 %7812
        %7814 = vrot.lane.b32.xlu0 %v7291, 20
        %v7815 = vpop.permute.xlu0 %7814
        %7816 = vrot.lane.b32.xlu0 %v7292, 20
        %v7817 = vpop.permute.xlu0 %7816
        %7818 = vrot.lane.b32.xlu0 %v7293, 20
        %v7819 = vpop.permute.xlu0 %7818
        %7820 = vrot.lane.b32.xlu0 %v7694, 20
        %v7821 = vpop.permute.xlu0 %7820
        %7822 = vrot.lane.b32.xlu0 %v7695, 20
        %v7823 = vpop.permute.xlu0 %7822
        %v7824 = vunpack.c.l.b16 %v1456
        %v7825 = vunpack.c.l.b16 %v1457
        %v7826 = vunpack.c.l.b16 %v1458
        %v7827 = vunpack.c.l.b16 %v1459
        %v7828 = vpack.c.b16 %v7825, %v7824
        %v7829 = vpack.c.b16 %v7827, %v7826
        %7830 = vrot.lane.b32.xlu0 %v6722, 24
        %v7831 = vpop.permute.xlu0 %7830
        %7832 = vrot.lane.b32.xlu0 %v6723, 24
        %v7833 = vpop.permute.xlu0 %7832
        %7834 = vrot.lane.b32.xlu0 %v6724, 24
        %v7835 = vpop.permute.xlu0 %7834
        %7836 = vrot.lane.b32.xlu0 %v6725, 24
        %v7837 = vpop.permute.xlu0 %7836
        %7838 = vrot.lane.b32.xlu0 %v6726, 24
        %v7839 = vpop.permute.xlu0 %7838
        %7840 = vrot.lane.b32.xlu0 %v6727, 24
        %v7841 = vpop.permute.xlu0 %7840
        %7842 = vrot.lane.b32.xlu0 %v6728, 24
        %v7843 = vpop.permute.xlu0 %7842
        %7844 = vrot.lane.b32.xlu0 %v6729, 24
        %v7845 = vpop.permute.xlu0 %7844
        %7846 = vrot.lane.b32.xlu0 %v6730, 24
        %v7847 = vpop.permute.xlu0 %7846
        %7848 = vrot.lane.b32.xlu0 %v6731, 24
        %v7849 = vpop.permute.xlu0 %7848
        %7850 = vrot.lane.b32.xlu0 %v6732, 24
        %v7851 = vpop.permute.xlu0 %7850
        %7852 = vrot.lane.b32.xlu0 %v6733, 24
        %v7853 = vpop.permute.xlu0 %7852
        %7854 = vrot.lane.b32.xlu0 %v6734, 24
        %v7855 = vpop.permute.xlu0 %7854
        %7856 = vrot.lane.b32.xlu0 %v6735, 24
        %v7857 = vpop.permute.xlu0 %7856
        %7858 = vrot.lane.b32.xlu0 %v6736, 24
        %v7859 = vpop.permute.xlu0 %7858
        %7860 = vrot.lane.b32.xlu0 %v6737, 24
        %v7861 = vpop.permute.xlu0 %7860
        %7862 = vrot.lane.b32.xlu0 %v6738, 24
        %v7863 = vpop.permute.xlu0 %7862
        %7864 = vrot.lane.b32.xlu0 %v6739, 24
        %v7865 = vpop.permute.xlu0 %7864
        %7866 = vrot.lane.b32.xlu0 %v6740, 24
        %v7867 = vpop.permute.xlu0 %7866
        %7868 = vrot.lane.b32.xlu0 %v6741, 24
        %v7869 = vpop.permute.xlu0 %7868
        %7870 = vrot.lane.b32.xlu0 %v6742, 24
        %v7871 = vpop.permute.xlu0 %7870
        %7872 = vrot.lane.b32.xlu0 %v6743, 24
        %v7873 = vpop.permute.xlu0 %7872
        %7874 = vrot.lane.b32.xlu0 %v6744, 24
        %v7875 = vpop.permute.xlu0 %7874
        %7876 = vrot.lane.b32.xlu0 %v6745, 24
        %v7877 = vpop.permute.xlu0 %7876
        %7878 = vrot.lane.b32.xlu0 %v6746, 24
        %v7879 = vpop.permute.xlu0 %7878
        %7880 = vrot.lane.b32.xlu0 %v6747, 24
        %v7881 = vpop.permute.xlu0 %7880
        %7882 = vrot.lane.b32.xlu0 %v6748, 24
        %v7883 = vpop.permute.xlu0 %7882
        %7884 = vrot.lane.b32.xlu0 %v6749, 24
        %v7885 = vpop.permute.xlu0 %7884
        %7886 = vrot.lane.b32.xlu0 %v6750, 24
        %v7887 = vpop.permute.xlu0 %7886
        %7888 = vrot.lane.b32.xlu0 %v6751, 24
        %v7889 = vpop.permute.xlu0 %7888
        %7890 = vrot.lane.b32.xlu0 %v6752, 24
        %v7891 = vpop.permute.xlu0 %7890
        %7892 = vrot.lane.b32.xlu0 %v6753, 24
        %v7893 = vpop.permute.xlu0 %7892
        %7894 = vrot.lane.b32.xlu0 %v6754, 24
        %v7895 = vpop.permute.xlu0 %7894
        %7896 = vrot.lane.b32.xlu0 %v6755, 24
        %v7897 = vpop.permute.xlu0 %7896
        %7898 = vrot.lane.b32.xlu0 %v6756, 24
        %v7899 = vpop.permute.xlu0 %7898
        %7900 = vrot.lane.b32.xlu0 %v6757, 24
        %v7901 = vpop.permute.xlu0 %7900
        %7902 = vrot.lane.b32.xlu0 %v6758, 24
        %v7903 = vpop.permute.xlu0 %7902
        %7904 = vrot.lane.b32.xlu0 %v6759, 24
        %v7905 = vpop.permute.xlu0 %7904
        %7906 = vrot.lane.b32.xlu0 %v6760, 24
        %v7907 = vpop.permute.xlu0 %7906
        %7908 = vrot.lane.b32.xlu0 %v6761, 24
        %v7909 = vpop.permute.xlu0 %7908
        %7910 = vrot.lane.b32.xlu0 %v6762, 24
        %v7911 = vpop.permute.xlu0 %7910
        %7912 = vrot.lane.b32.xlu0 %v6763, 24
        %v7913 = vpop.permute.xlu0 %7912
        %7914 = vrot.lane.b32.xlu0 %v6764, 24
        %v7915 = vpop.permute.xlu0 %7914
        %7916 = vrot.lane.b32.xlu0 %v6765, 24
        %v7917 = vpop.permute.xlu0 %7916
        %7918 = vrot.lane.b32.xlu0 %v6766, 24
        %v7919 = vpop.permute.xlu0 %7918
        %7920 = vrot.lane.b32.xlu0 %v6767, 24
        %v7921 = vpop.permute.xlu0 %7920
        %7922 = vrot.lane.b32.xlu0 %v6768, 24
        %v7923 = vpop.permute.xlu0 %7922
        %7924 = vrot.lane.b32.xlu0 %v6769, 24
        %v7925 = vpop.permute.xlu0 %7924
        %7926 = vrot.lane.b32.xlu0 %v6770, 24
        %v7927 = vpop.permute.xlu0 %7926
        %7928 = vrot.lane.b32.xlu0 %v6771, 24
        %v7929 = vpop.permute.xlu0 %7928
        %7930 = vrot.lane.b32.xlu0 %v6772, 24
        %v7931 = vpop.permute.xlu0 %7930
        %7932 = vrot.lane.b32.xlu0 %v6773, 24
        %v7933 = vpop.permute.xlu0 %7932
        %7934 = vrot.lane.b32.xlu0 %v6774, 24
        %v7935 = vpop.permute.xlu0 %7934
        %7936 = vrot.lane.b32.xlu0 %v6775, 24
        %v7937 = vpop.permute.xlu0 %7936
        %7938 = vrot.lane.b32.xlu0 %v6776, 24
        %v7939 = vpop.permute.xlu0 %7938
        %7940 = vrot.lane.b32.xlu0 %v6777, 24
        %v7941 = vpop.permute.xlu0 %7940
        %7942 = vrot.lane.b32.xlu0 %v6778, 24
        %v7943 = vpop.permute.xlu0 %7942
        %7944 = vrot.lane.b32.xlu0 %v6779, 24
        %v7945 = vpop.permute.xlu0 %7944
        %7946 = vrot.lane.b32.xlu0 %v6780, 24
        %v7947 = vpop.permute.xlu0 %7946
        %7948 = vrot.lane.b32.xlu0 %v6781, 24
        %v7949 = vpop.permute.xlu0 %7948
        %7950 = vrot.lane.b32.xlu0 %v7426, 24
        %v7951 = vpop.permute.xlu0 %7950
        %7952 = vrot.lane.b32.xlu0 %v7427, 24
        %v7953 = vpop.permute.xlu0 %7952
        %7954 = vrot.lane.b32.xlu0 %v7828, 24
        %v7955 = vpop.permute.xlu0 %7954
        %7956 = vrot.lane.b32.xlu0 %v7829, 24
        %v7957 = vpop.permute.xlu0 %7956
        %v7958 = vunpack.c.l.b16 %v6541
        %v7959 = vunpack.c.l.b16 %v6551
        %v7960 = vunpack.c.l.b16 %v6561
        %v7961 = vunpack.c.l.b16 %v6571
        %v7962 = vpack.c.b16 %v7959, %v7958
        %v7963 = vpack.c.b16 %v7961, %v7960
        %7964 = vrot.lane.b32.xlu0 %v6914, 28
        %v7965 = vpop.permute.xlu0 %7964
        %7966 = vrot.lane.b32.xlu0 %v6915, 28
        %v7967 = vpop.permute.xlu0 %7966
        %7968 = vrot.lane.b32.xlu0 %v6916, 28
        %v7969 = vpop.permute.xlu0 %7968
        %7970 = vrot.lane.b32.xlu0 %v6917, 28
        %v7971 = vpop.permute.xlu0 %7970
        %7972 = vrot.lane.b32.xlu0 %v6918, 28
        %v7973 = vpop.permute.xlu0 %7972
        %7974 = vrot.lane.b32.xlu0 %v6919, 28
        %v7975 = vpop.permute.xlu0 %7974
        %7976 = vrot.lane.b32.xlu0 %v6920, 28
        %v7977 = vpop.permute.xlu0 %7976
        %7978 = vrot.lane.b32.xlu0 %v6921, 28
        %v7979 = vpop.permute.xlu0 %7978
        %7980 = vrot.lane.b32.xlu0 %v6922, 28
        %v7981 = vpop.permute.xlu0 %7980
        %7982 = vrot.lane.b32.xlu0 %v6923, 28
        %v7983 = vpop.permute.xlu0 %7982
        %7984 = vrot.lane.b32.xlu0 %v6924, 28
        %v7985 = vpop.permute.xlu0 %7984
        %7986 = vrot.lane.b32.xlu0 %v6925, 28
        %v7987 = vpop.permute.xlu0 %7986
        %7988 = vrot.lane.b32.xlu0 %v6926, 28
        %v7989 = vpop.permute.xlu0 %7988
        %7990 = vrot.lane.b32.xlu0 %v6927, 28
        %v7991 = vpop.permute.xlu0 %7990
        %7992 = vrot.lane.b32.xlu0 %v6928, 28
        %v7993 = vpop.permute.xlu0 %7992
        %7994 = vrot.lane.b32.xlu0 %v6929, 28
        %v7995 = vpop.permute.xlu0 %7994
        %7996 = vrot.lane.b32.xlu0 %v6930, 28
        %v7997 = vpop.permute.xlu0 %7996
        %7998 = vrot.lane.b32.xlu0 %v6931, 28
        %v7999 = vpop.permute.xlu0 %7998
        %8000 = vrot.lane.b32.xlu0 %v6932, 28
        %v8001 = vpop.permute.xlu0 %8000
        %8002 = vrot.lane.b32.xlu0 %v6933, 28
        %v8003 = vpop.permute.xlu0 %8002
        %8004 = vrot.lane.b32.xlu0 %v6934, 28
        %v8005 = vpop.permute.xlu0 %8004
        %8006 = vrot.lane.b32.xlu0 %v6935, 28
        %v8007 = vpop.permute.xlu0 %8006
        %8008 = vrot.lane.b32.xlu0 %v6936, 28
        %v8009 = vpop.permute.xlu0 %8008
        %8010 = vrot.lane.b32.xlu0 %v6937, 28
        %v8011 = vpop.permute.xlu0 %8010
        %8012 = vrot.lane.b32.xlu0 %v6938, 28
        %v8013 = vpop.permute.xlu0 %8012
        %8014 = vrot.lane.b32.xlu0 %v6939, 28
        %v8015 = vpop.permute.xlu0 %8014
        %8016 = vrot.lane.b32.xlu0 %v6940, 28
        %v8017 = vpop.permute.xlu0 %8016
        %8018 = vrot.lane.b32.xlu0 %v6941, 28
        %v8019 = vpop.permute.xlu0 %8018
        %8020 = vrot.lane.b32.xlu0 %v6942, 28
        %v8021 = vpop.permute.xlu0 %8020
        %8022 = vrot.lane.b32.xlu0 %v6943, 28
        %v8023 = vpop.permute.xlu0 %8022
        %8024 = vrot.lane.b32.xlu0 %v6944, 28
        %v8025 = vpop.permute.xlu0 %8024
        %8026 = vrot.lane.b32.xlu0 %v6945, 28
        %v8027 = vpop.permute.xlu0 %8026
        %8028 = vrot.lane.b32.xlu0 %v6946, 28
        %v8029 = vpop.permute.xlu0 %8028
        %8030 = vrot.lane.b32.xlu0 %v6947, 28
        %v8031 = vpop.permute.xlu0 %8030
        %8032 = vrot.lane.b32.xlu0 %v6948, 28
        %v8033 = vpop.permute.xlu0 %8032
        %8034 = vrot.lane.b32.xlu0 %v6949, 28
        %v8035 = vpop.permute.xlu0 %8034
        %8036 = vrot.lane.b32.xlu0 %v6950, 28
        %v8037 = vpop.permute.xlu0 %8036
        %8038 = vrot.lane.b32.xlu0 %v6951, 28
        %v8039 = vpop.permute.xlu0 %8038
        %8040 = vrot.lane.b32.xlu0 %v6952, 28
        %v8041 = vpop.permute.xlu0 %8040
        %8042 = vrot.lane.b32.xlu0 %v6953, 28
        %v8043 = vpop.permute.xlu0 %8042
        %8044 = vrot.lane.b32.xlu0 %v6954, 28
        %v8045 = vpop.permute.xlu0 %8044
        %8046 = vrot.lane.b32.xlu0 %v6955, 28
        %v8047 = vpop.permute.xlu0 %8046
        %8048 = vrot.lane.b32.xlu0 %v6956, 28
        %v8049 = vpop.permute.xlu0 %8048
        %8050 = vrot.lane.b32.xlu0 %v6957, 28
        %v8051 = vpop.permute.xlu0 %8050
        %8052 = vrot.lane.b32.xlu0 %v6958, 28
        %v8053 = vpop.permute.xlu0 %8052
        %8054 = vrot.lane.b32.xlu0 %v6959, 28
        %v8055 = vpop.permute.xlu0 %8054
        %8056 = vrot.lane.b32.xlu0 %v6960, 28
        %v8057 = vpop.permute.xlu0 %8056
        %8058 = vrot.lane.b32.xlu0 %v6961, 28
        %v8059 = vpop.permute.xlu0 %8058
        %8060 = vrot.lane.b32.xlu0 %v6962, 28
        %v8061 = vpop.permute.xlu0 %8060
        %8062 = vrot.lane.b32.xlu0 %v6963, 28
        %v8063 = vpop.permute.xlu0 %8062
        %8064 = vrot.lane.b32.xlu0 %v6964, 28
        %v8065 = vpop.permute.xlu0 %8064
        %8066 = vrot.lane.b32.xlu0 %v6965, 28
        %v8067 = vpop.permute.xlu0 %8066
        %8068 = vrot.lane.b32.xlu0 %v6966, 28
        %v8069 = vpop.permute.xlu0 %8068
        %8070 = vrot.lane.b32.xlu0 %v6967, 28
        %v8071 = vpop.permute.xlu0 %8070
        %8072 = vrot.lane.b32.xlu0 %v6968, 28
        %v8073 = vpop.permute.xlu0 %8072
        %8074 = vrot.lane.b32.xlu0 %v6969, 28
        %v8075 = vpop.permute.xlu0 %8074
        %8076 = vrot.lane.b32.xlu0 %v6970, 28
        %v8077 = vpop.permute.xlu0 %8076
        %8078 = vrot.lane.b32.xlu0 %v6971, 28
        %v8079 = vpop.permute.xlu0 %8078
        %8080 = vrot.lane.b32.xlu0 %v6972, 28
        %v8081 = vpop.permute.xlu0 %8080
        %8082 = vrot.lane.b32.xlu0 %v6973, 28
        %v8083 = vpop.permute.xlu0 %8082
        %8084 = vrot.lane.b32.xlu0 %v7560, 28
        %v8085 = vpop.permute.xlu0 %8084
        %8086 = vrot.lane.b32.xlu0 %v7561, 28
        %v8087 = vpop.permute.xlu0 %8086
        %8088 = vrot.lane.b32.xlu0 %v7962, 28
        %v8089 = vpop.permute.xlu0 %8088
        %8090 = vrot.lane.b32.xlu0 %v7963, 28
        %v8091 = vpop.permute.xlu0 %8090
        %v8092 = vunpack.c.l.b16 %v6580
        %v8093 = vunpack.c.l.b16 %v6583
        %v8094 = vunpack.c.l.b16 %v6586
        %v8095 = vunpack.c.l.b16 %v6589
        %v8096 = vpack.c.b16 %v8093, %v8092
        %v8097 = vpack.c.b16 %v8095, %v8094
        %8098 = vrot.lane.b32.xlu0 %v7234, 32
        %v8099 = vpop.permute.xlu0 %8098
        %8100 = vrot.lane.b32.xlu0 %v7235, 32
        %v8101 = vpop.permute.xlu0 %8100
        %8102 = vrot.lane.b32.xlu0 %v7236, 32
        %v8103 = vpop.permute.xlu0 %8102
        %8104 = vrot.lane.b32.xlu0 %v7237, 32
        %v8105 = vpop.permute.xlu0 %8104
        %8106 = vrot.lane.b32.xlu0 %v7238, 32
        %v8107 = vpop.permute.xlu0 %8106
        %8108 = vrot.lane.b32.xlu0 %v7239, 32
        %v8109 = vpop.permute.xlu0 %8108
        %8110 = vrot.lane.b32.xlu0 %v7240, 32
        %v8111 = vpop.permute.xlu0 %8110
        %8112 = vrot.lane.b32.xlu0 %v7241, 32
        %v8113 = vpop.permute.xlu0 %8112
        %8114 = vrot.lane.b32.xlu0 %v7242, 32
        %v8115 = vpop.permute.xlu0 %8114
        %8116 = vrot.lane.b32.xlu0 %v7243, 32
        %v8117 = vpop.permute.xlu0 %8116
        %8118 = vrot.lane.b32.xlu0 %v7244, 32
        %v8119 = vpop.permute.xlu0 %8118
        %8120 = vrot.lane.b32.xlu0 %v7245, 32
        %v8121 = vpop.permute.xlu0 %8120
        %8122 = vrot.lane.b32.xlu0 %v7246, 32
        %v8123 = vpop.permute.xlu0 %8122
        %8124 = vrot.lane.b32.xlu0 %v7247, 32
        %v8125 = vpop.permute.xlu0 %8124
        %8126 = vrot.lane.b32.xlu0 %v7248, 32
        %v8127 = vpop.permute.xlu0 %8126
        %8128 = vrot.lane.b32.xlu0 %v7249, 32
        %v8129 = vpop.permute.xlu0 %8128
        %8130 = vrot.lane.b32.xlu0 %v7250, 32
        %v8131 = vpop.permute.xlu0 %8130
        %8132 = vrot.lane.b32.xlu0 %v7251, 32
        %v8133 = vpop.permute.xlu0 %8132
        %8134 = vrot.lane.b32.xlu0 %v7252, 32
        %v8135 = vpop.permute.xlu0 %8134
        %8136 = vrot.lane.b32.xlu0 %v7253, 32
        %v8137 = vpop.permute.xlu0 %8136
        %8138 = vrot.lane.b32.xlu0 %v7254, 32
        %v8139 = vpop.permute.xlu0 %8138
        %8140 = vrot.lane.b32.xlu0 %v7255, 32
        %v8141 = vpop.permute.xlu0 %8140
        %8142 = vrot.lane.b32.xlu0 %v7256, 32
        %v8143 = vpop.permute.xlu0 %8142
        %8144 = vrot.lane.b32.xlu0 %v7257, 32
        %v8145 = vpop.permute.xlu0 %8144
        %8146 = vrot.lane.b32.xlu0 %v7258, 32
        %v8147 = vpop.permute.xlu0 %8146
        %8148 = vrot.lane.b32.xlu0 %v7259, 32
        %v8149 = vpop.permute.xlu0 %8148
        %8150 = vrot.lane.b32.xlu0 %v7260, 32
        %v8151 = vpop.permute.xlu0 %8150
        %8152 = vrot.lane.b32.xlu0 %v7261, 32
        %v8153 = vpop.permute.xlu0 %8152
        %8154 = vrot.lane.b32.xlu0 %v7262, 32
        %v8155 = vpop.permute.xlu0 %8154
        %8156 = vrot.lane.b32.xlu0 %v7263, 32
        %v8157 = vpop.permute.xlu0 %8156
        %8158 = vrot.lane.b32.xlu0 %v7264, 32
        %v8159 = vpop.permute.xlu0 %8158
        %8160 = vrot.lane.b32.xlu0 %v7265, 32
        %v8161 = vpop.permute.xlu0 %8160
        %8162 = vrot.lane.b32.xlu0 %v7266, 32
        %v8163 = vpop.permute.xlu0 %8162
        %8164 = vrot.lane.b32.xlu0 %v7267, 32
        %v8165 = vpop.permute.xlu0 %8164
        %8166 = vrot.lane.b32.xlu0 %v7268, 32
        %v8167 = vpop.permute.xlu0 %8166
        %8168 = vrot.lane.b32.xlu0 %v7269, 32
        %v8169 = vpop.permute.xlu0 %8168
        %8170 = vrot.lane.b32.xlu0 %v7270, 32
        %v8171 = vpop.permute.xlu0 %8170
        %8172 = vrot.lane.b32.xlu0 %v7271, 32
        %v8173 = vpop.permute.xlu0 %8172
        %8174 = vrot.lane.b32.xlu0 %v7272, 32
        %v8175 = vpop.permute.xlu0 %8174
        %8176 = vrot.lane.b32.xlu0 %v7273, 32
        %v8177 = vpop.permute.xlu0 %8176
        %8178 = vrot.lane.b32.xlu0 %v7274, 32
        %v8179 = vpop.permute.xlu0 %8178
        %8180 = vrot.lane.b32.xlu0 %v7275, 32
        %v8181 = vpop.permute.xlu0 %8180
        %8182 = vrot.lane.b32.xlu0 %v7276, 32
        %v8183 = vpop.permute.xlu0 %8182
        %8184 = vrot.lane.b32.xlu0 %v7277, 32
        %v8185 = vpop.permute.xlu0 %8184
        %8186 = vrot.lane.b32.xlu0 %v7278, 32
        %v8187 = vpop.permute.xlu0 %8186
        %8188 = vrot.lane.b32.xlu0 %v7279, 32
        %v8189 = vpop.permute.xlu0 %8188
        %8190 = vrot.lane.b32.xlu0 %v7280, 32
        %v8191 = vpop.permute.xlu0 %8190
        %8192 = vrot.lane.b32.xlu0 %v7281, 32
        %v8193 = vpop.permute.xlu0 %8192
        %8194 = vrot.lane.b32.xlu0 %v7282, 32
        %v8195 = vpop.permute.xlu0 %8194
        %8196 = vrot.lane.b32.xlu0 %v7283, 32
        %v8197 = vpop.permute.xlu0 %8196
        %8198 = vrot.lane.b32.xlu0 %v7284, 32
        %v8199 = vpop.permute.xlu0 %8198
        %8200 = vrot.lane.b32.xlu0 %v7285, 32
        %v8201 = vpop.permute.xlu0 %8200
        %8202 = vrot.lane.b32.xlu0 %v7286, 32
        %v8203 = vpop.permute.xlu0 %8202
        %8204 = vrot.lane.b32.xlu0 %v7287, 32
        %v8205 = vpop.permute.xlu0 %8204
        %8206 = vrot.lane.b32.xlu0 %v7288, 32
        %v8207 = vpop.permute.xlu0 %8206
        %8208 = vrot.lane.b32.xlu0 %v7289, 32
        %v8209 = vpop.permute.xlu0 %8208
        %8210 = vrot.lane.b32.xlu0 %v7290, 32
        %v8211 = vpop.permute.xlu0 %8210
        %8212 = vrot.lane.b32.xlu0 %v7291, 32
        %v8213 = vpop.permute.xlu0 %8212
        %8214 = vrot.lane.b32.xlu0 %v7292, 32
        %v8215 = vpop.permute.xlu0 %8214
        %8216 = vrot.lane.b32.xlu0 %v7293, 32
        %v8217 = vpop.permute.xlu0 %8216
        %8218 = vrot.lane.b32.xlu0 %v7694, 32
        %v8219 = vpop.permute.xlu0 %8218
        %8220 = vrot.lane.b32.xlu0 %v7695, 32
        %v8221 = vpop.permute.xlu0 %8220
        %8222 = vrot.lane.b32.xlu0 %v8096, 32
        %v8223 = vpop.permute.xlu0 %8222
        %8224 = vrot.lane.b32.xlu0 %v8097, 32
        %v8225 = vpop.permute.xlu0 %8224
        %v8228 = vsel %vm3439, %v6718, %v6975
        %v8231 = vsel %vm3439, %v6719, %v6977
        %v8234 = vsel %vm3439, %v6720, %v6979
        %v8237 = vsel %vm3439, %v6721, %v6981
        %v8240 = vsel %vm3439, %v6722, %v6983
        %v8243 = vsel %vm3439, %v6723, %v6985
        %v8246 = vsel %vm3439, %v6724, %v6987
        %v8249 = vsel %vm3439, %v6725, %v6989
        %v8252 = vsel %vm3439, %v6726, %v6991
        %v8255 = vsel %vm3439, %v6727, %v6993
        %v8258 = vsel %vm3439, %v6728, %v6995
        %v8261 = vsel %vm3439, %v6729, %v6997
        %v8264 = vsel %vm3439, %v6730, %v6999
        %v8267 = vsel %vm3439, %v6731, %v7001
        %v8270 = vsel %vm3439, %v6732, %v7003
        %v8273 = vsel %vm3439, %v6733, %v7005
        %v8276 = vsel %vm3439, %v6734, %v7007
        %v8279 = vsel %vm3439, %v6735, %v7009
        %v8282 = vsel %vm3439, %v6736, %v7011
        %v8285 = vsel %vm3439, %v6737, %v7013
        %v8288 = vsel %vm3439, %v6738, %v7015
        %v8291 = vsel %vm3439, %v6739, %v7017
        %v8294 = vsel %vm3439, %v6740, %v7019
        %v8297 = vsel %vm3439, %v6741, %v7021
        %v8300 = vsel %vm3439, %v6742, %v7023
        %v8303 = vsel %vm3439, %v6743, %v7025
        %v8306 = vsel %vm3439, %v6744, %v7027
        %v8309 = vsel %vm3439, %v6745, %v7029
        %v8312 = vsel %vm3439, %v6746, %v7031
        %v8315 = vsel %vm3439, %v6747, %v7033
        %v8318 = vsel %vm3439, %v6748, %v7035
        %v8321 = vsel %vm3439, %v6749, %v7037
        %v8324 = vsel %vm3439, %v6750, %v7039
        %v8327 = vsel %vm3439, %v6751, %v7041
        %v8330 = vsel %vm3439, %v6752, %v7043
        %v8333 = vsel %vm3439, %v6753, %v7045
        %v8336 = vsel %vm3439, %v6754, %v7047
        %v8339 = vsel %vm3439, %v6755, %v7049
        %v8342 = vsel %vm3439, %v6756, %v7051
        %v8345 = vsel %vm3439, %v6757, %v7053
        %v8348 = vsel %vm3439, %v6758, %v7055
        %v8351 = vsel %vm3439, %v6759, %v7057
        %v8354 = vsel %vm3439, %v6760, %v7059
        %v8357 = vsel %vm3439, %v6761, %v7061
        %v8360 = vsel %vm3439, %v6762, %v7063
        %v8363 = vsel %vm3439, %v6763, %v7065
        %v8366 = vsel %vm3439, %v6764, %v7067
        %v8369 = vsel %vm3439, %v6765, %v7069
        %v8372 = vsel %vm3439, %v6766, %v7071
        %v8375 = vsel %vm3439, %v6767, %v7073
        %v8378 = vsel %vm3439, %v6768, %v7075
        %v8381 = vsel %vm3439, %v6769, %v7077
        %v8384 = vsel %vm3439, %v6770, %v7079
        %v8387 = vsel %vm3439, %v6771, %v7081
        %v8390 = vsel %vm3439, %v6772, %v7083
        %v8393 = vsel %vm3439, %v6773, %v7085
        %v8396 = vsel %vm3439, %v6774, %v7087
        %v8399 = vsel %vm3439, %v6775, %v7089
        %v8402 = vsel %vm3439, %v6776, %v7091
        %v8405 = vsel %vm3439, %v6777, %v7093
        %v8408 = vsel %vm3439, %v6778, %v7095
        %v8411 = vsel %vm3439, %v6779, %v7097
        %v8414 = vsel %vm3439, %v6780, %v7099
        %v8417 = vsel %vm3439, %v6781, %v7101
        %v8419 = vsel %vm3568, %v8228, %v7295
        %v8421 = vsel %vm3568, %v8231, %v7297
        %v8423 = vsel %vm3568, %v8234, %v7299
        %v8425 = vsel %vm3568, %v8237, %v7301
        %v8427 = vsel %vm3568, %v8240, %v7303
        %v8429 = vsel %vm3568, %v8243, %v7305
        %v8431 = vsel %vm3568, %v8246, %v7307
        %v8433 = vsel %vm3568, %v8249, %v7309
        %v8435 = vsel %vm3568, %v8252, %v7311
        %v8437 = vsel %vm3568, %v8255, %v7313
        %v8439 = vsel %vm3568, %v8258, %v7315
        %v8441 = vsel %vm3568, %v8261, %v7317
        %v8443 = vsel %vm3568, %v8264, %v7319
        %v8445 = vsel %vm3568, %v8267, %v7321
        %v8447 = vsel %vm3568, %v8270, %v7323
        %v8449 = vsel %vm3568, %v8273, %v7325
        %v8451 = vsel %vm3568, %v8276, %v7327
        %v8453 = vsel %vm3568, %v8279, %v7329
        %v8455 = vsel %vm3568, %v8282, %v7331
        %v8457 = vsel %vm3568, %v8285, %v7333
        %v8459 = vsel %vm3568, %v8288, %v7335
        %v8461 = vsel %vm3568, %v8291, %v7337
        %v8463 = vsel %vm3568, %v8294, %v7339
        %v8465 = vsel %vm3568, %v8297, %v7341
        %v8467 = vsel %vm3568, %v8300, %v7343
        %v8469 = vsel %vm3568, %v8303, %v7345
        %v8471 = vsel %vm3568, %v8306, %v7347
        %v8473 = vsel %vm3568, %v8309, %v7349
        %v8475 = vsel %vm3568, %v8312, %v7351
        %v8477 = vsel %vm3568, %v8315, %v7353
        %v8479 = vsel %vm3568, %v8318, %v7355
        %v8481 = vsel %vm3568, %v8321, %v7357
        %v8483 = vsel %vm3568, %v8324, %v7359
        %v8485 = vsel %vm3568, %v8327, %v7361
        %v8487 = vsel %vm3568, %v8330, %v7363
        %v8489 = vsel %vm3568, %v8333, %v7365
        %v8491 = vsel %vm3568, %v8336, %v7367
        %v8493 = vsel %vm3568, %v8339, %v7369
        %v8495 = vsel %vm3568, %v8342, %v7371
        %v8497 = vsel %vm3568, %v8345, %v7373
        %v8499 = vsel %vm3568, %v8348, %v7375
        %v8501 = vsel %vm3568, %v8351, %v7377
        %v8503 = vsel %vm3568, %v8354, %v7379
        %v8505 = vsel %vm3568, %v8357, %v7381
        %v8507 = vsel %vm3568, %v8360, %v7383
        %v8509 = vsel %vm3568, %v8363, %v7385
        %v8511 = vsel %vm3568, %v8366, %v7387
        %v8513 = vsel %vm3568, %v8369, %v7389
        %v8515 = vsel %vm3568, %v8372, %v7391
        %v8517 = vsel %vm3568, %v8375, %v7393
        %v8519 = vsel %vm3568, %v8378, %v7395
        %v8521 = vsel %vm3568, %v8381, %v7397
        %v8523 = vsel %vm3568, %v8384, %v7399
        %v8525 = vsel %vm3568, %v8387, %v7401
        %v8527 = vsel %vm3568, %v8390, %v7403
        %v8529 = vsel %vm3568, %v8393, %v7405
        %v8531 = vsel %vm3568, %v8396, %v7407
        %v8533 = vsel %vm3568, %v8399, %v7409
        %v8535 = vsel %vm3568, %v8402, %v7411
        %v8537 = vsel %vm3568, %v8405, %v7413
        %v8539 = vsel %vm3568, %v8408, %v7415
        %v8541 = vsel %vm3568, %v8411, %v7417
        %v8543 = vsel %vm3568, %v8414, %v7419
        %v8545 = vsel %vm3568, %v8417, %v7421
        %v8547 = vsel %vm3697, %v8419, %v7429
        %v8549 = vsel %vm3697, %v8421, %v7431
        %v8551 = vsel %vm3697, %v8423, %v7433
        %v8553 = vsel %vm3697, %v8425, %v7435
        %v8555 = vsel %vm3697, %v8427, %v7437
        %v8557 = vsel %vm3697, %v8429, %v7439
        %v8559 = vsel %vm3697, %v8431, %v7441
        %v8561 = vsel %vm3697, %v8433, %v7443
        %v8563 = vsel %vm3697, %v8435, %v7445
        %v8565 = vsel %vm3697, %v8437, %v7447
        %v8567 = vsel %vm3697, %v8439, %v7449
        %v8569 = vsel %vm3697, %v8441, %v7451
        %v8571 = vsel %vm3697, %v8443, %v7453
        %v8573 = vsel %vm3697, %v8445, %v7455
        %v8575 = vsel %vm3697, %v8447, %v7457
        %v8577 = vsel %vm3697, %v8449, %v7459
        %v8579 = vsel %vm3697, %v8451, %v7461
        %v8581 = vsel %vm3697, %v8453, %v7463
        %v8583 = vsel %vm3697, %v8455, %v7465
        %v8585 = vsel %vm3697, %v8457, %v7467
        %v8587 = vsel %vm3697, %v8459, %v7469
        %v8589 = vsel %vm3697, %v8461, %v7471
        %v8591 = vsel %vm3697, %v8463, %v7473
        %v8593 = vsel %vm3697, %v8465, %v7475
        %v8595 = vsel %vm3697, %v8467, %v7477
        %v8597 = vsel %vm3697, %v8469, %v7479
        %v8599 = vsel %vm3697, %v8471, %v7481
        %v8601 = vsel %vm3697, %v8473, %v7483
        %v8603 = vsel %vm3697, %v8475, %v7485
        %v8605 = vsel %vm3697, %v8477, %v7487
        %v8607 = vsel %vm3697, %v8479, %v7489
        %v8609 = vsel %vm3697, %v8481, %v7491
        %v8611 = vsel %vm3697, %v8483, %v7493
        %v8613 = vsel %vm3697, %v8485, %v7495
        %v8615 = vsel %vm3697, %v8487, %v7497
        %v8617 = vsel %vm3697, %v8489, %v7499
        %v8619 = vsel %vm3697, %v8491, %v7501
        %v8621 = vsel %vm3697, %v8493, %v7503
        %v8623 = vsel %vm3697, %v8495, %v7505
        %v8625 = vsel %vm3697, %v8497, %v7507
        %v8627 = vsel %vm3697, %v8499, %v7509
        %v8629 = vsel %vm3697, %v8501, %v7511
        %v8631 = vsel %vm3697, %v8503, %v7513
        %v8633 = vsel %vm3697, %v8505, %v7515
        %v8635 = vsel %vm3697, %v8507, %v7517
        %v8637 = vsel %vm3697, %v8509, %v7519
        %v8639 = vsel %vm3697, %v8511, %v7521
        %v8641 = vsel %vm3697, %v8513, %v7523
        %v8643 = vsel %vm3697, %v8515, %v7525
        %v8645 = vsel %vm3697, %v8517, %v7527
        %v8647 = vsel %vm3697, %v8519, %v7529
        %v8649 = vsel %vm3697, %v8521, %v7531
        %v8651 = vsel %vm3697, %v8523, %v7533
        %v8653 = vsel %vm3697, %v8525, %v7535
        %v8655 = vsel %vm3697, %v8527, %v7537
        %v8657 = vsel %vm3697, %v8529, %v7539
        %v8659 = vsel %vm3697, %v8531, %v7541
        %v8661 = vsel %vm3697, %v8533, %v7543
        %v8663 = vsel %vm3697, %v8535, %v7545
        %v8665 = vsel %vm3697, %v8537, %v7547
        %v8667 = vsel %vm3697, %v8539, %v7549
        %v8669 = vsel %vm3697, %v8541, %v7551
        %v8671 = vsel %vm3697, %v8543, %v7553
        %v8673 = vsel %vm3697, %v8545, %v7555
        %v8675 = vsel %vm3826, %v8547, %v7563
        %v8677 = vsel %vm3826, %v8549, %v7565
        %v8679 = vsel %vm3826, %v8551, %v7567
        %v8681 = vsel %vm3826, %v8553, %v7569
        %v8683 = vsel %vm3826, %v8555, %v7571
        %v8685 = vsel %vm3826, %v8557, %v7573
        %v8687 = vsel %vm3826, %v8559, %v7575
        %v8689 = vsel %vm3826, %v8561, %v7577
        %v8691 = vsel %vm3826, %v8563, %v7579
        %v8693 = vsel %vm3826, %v8565, %v7581
        %v8695 = vsel %vm3826, %v8567, %v7583
        %v8697 = vsel %vm3826, %v8569, %v7585
        %v8699 = vsel %vm3826, %v8571, %v7587
        %v8701 = vsel %vm3826, %v8573, %v7589
        %v8703 = vsel %vm3826, %v8575, %v7591
        %v8705 = vsel %vm3826, %v8577, %v7593
        %v8707 = vsel %vm3826, %v8579, %v7595
        %v8709 = vsel %vm3826, %v8581, %v7597
        %v8711 = vsel %vm3826, %v8583, %v7599
        %v8713 = vsel %vm3826, %v8585, %v7601
        %v8715 = vsel %vm3826, %v8587, %v7603
        %v8717 = vsel %vm3826, %v8589, %v7605
        %v8719 = vsel %vm3826, %v8591, %v7607
        %v8721 = vsel %vm3826, %v8593, %v7609
        %v8723 = vsel %vm3826, %v8595, %v7611
        %v8725 = vsel %vm3826, %v8597, %v7613
        %v8727 = vsel %vm3826, %v8599, %v7615
        %v8729 = vsel %vm3826, %v8601, %v7617
        %v8731 = vsel %vm3826, %v8603, %v7619
        %v8733 = vsel %vm3826, %v8605, %v7621
        %v8735 = vsel %vm3826, %v8607, %v7623
        %v8737 = vsel %vm3826, %v8609, %v7625
        %v8739 = vsel %vm3826, %v8611, %v7627
        %v8741 = vsel %vm3826, %v8613, %v7629
        %v8743 = vsel %vm3826, %v8615, %v7631
        %v8745 = vsel %vm3826, %v8617, %v7633
        %v8747 = vsel %vm3826, %v8619, %v7635
        %v8749 = vsel %vm3826, %v8621, %v7637
        %v8751 = vsel %vm3826, %v8623, %v7639
        %v8753 = vsel %vm3826, %v8625, %v7641
        %v8755 = vsel %vm3826, %v8627, %v7643
        %v8757 = vsel %vm3826, %v8629, %v7645
        %v8759 = vsel %vm3826, %v8631, %v7647
        %v8761 = vsel %vm3826, %v8633, %v7649
        %v8763 = vsel %vm3826, %v8635, %v7651
        %v8765 = vsel %vm3826, %v8637, %v7653
        %v8767 = vsel %vm3826, %v8639, %v7655
        %v8769 = vsel %vm3826, %v8641, %v7657
        %v8771 = vsel %vm3826, %v8643, %v7659
        %v8773 = vsel %vm3826, %v8645, %v7661
        %v8775 = vsel %vm3826, %v8647, %v7663
        %v8777 = vsel %vm3826, %v8649, %v7665
        %v8779 = vsel %vm3826, %v8651, %v7667
        %v8781 = vsel %vm3826, %v8653, %v7669
        %v8783 = vsel %vm3826, %v8655, %v7671
        %v8785 = vsel %vm3826, %v8657, %v7673
        %v8787 = vsel %vm3826, %v8659, %v7675
        %v8789 = vsel %vm3826, %v8661, %v7677
        %v8791 = vsel %vm3826, %v8663, %v7679
        %v8793 = vsel %vm3826, %v8665, %v7681
        %v8795 = vsel %vm3826, %v8667, %v7683
        %v8797 = vsel %vm3826, %v8669, %v7685
        %v8799 = vsel %vm3826, %v8671, %v7687
        %v8801 = vsel %vm3826, %v8673, %v7689
        %v8803 = vsel %vm3955, %v8675, %v7697
        %v8805 = vsel %vm3955, %v8677, %v7699
        %v8807 = vsel %vm3955, %v8679, %v7701
        %v8809 = vsel %vm3955, %v8681, %v7703
        %v8811 = vsel %vm3955, %v8683, %v7705
        %v8813 = vsel %vm3955, %v8685, %v7707
        %v8815 = vsel %vm3955, %v8687, %v7709
        %v8817 = vsel %vm3955, %v8689, %v7711
        %v8819 = vsel %vm3955, %v8691, %v7713
        %v8821 = vsel %vm3955, %v8693, %v7715
        %v8823 = vsel %vm3955, %v8695, %v7717
        %v8825 = vsel %vm3955, %v8697, %v7719
        %v8827 = vsel %vm3955, %v8699, %v7721
        %v8829 = vsel %vm3955, %v8701, %v7723
        %v8831 = vsel %vm3955, %v8703, %v7725
        %v8833 = vsel %vm3955, %v8705, %v7727
        %v8835 = vsel %vm3955, %v8707, %v7729
        %v8837 = vsel %vm3955, %v8709, %v7731
        %v8839 = vsel %vm3955, %v8711, %v7733
        %v8841 = vsel %vm3955, %v8713, %v7735
        %v8843 = vsel %vm3955, %v8715, %v7737
        %v8845 = vsel %vm3955, %v8717, %v7739
        %v8847 = vsel %vm3955, %v8719, %v7741
        %v8849 = vsel %vm3955, %v8721, %v7743
        %v8851 = vsel %vm3955, %v8723, %v7745
        %v8853 = vsel %vm3955, %v8725, %v7747
        %v8855 = vsel %vm3955, %v8727, %v7749
        %v8857 = vsel %vm3955, %v8729, %v7751
        %v8859 = vsel %vm3955, %v8731, %v7753
        %v8861 = vsel %vm3955, %v8733, %v7755
        %v8863 = vsel %vm3955, %v8735, %v7757
        %v8865 = vsel %vm3955, %v8737, %v7759
        %v8867 = vsel %vm3955, %v8739, %v7761
        %v8869 = vsel %vm3955, %v8741, %v7763
        %v8871 = vsel %vm3955, %v8743, %v7765
        %v8873 = vsel %vm3955, %v8745, %v7767
        %v8875 = vsel %vm3955, %v8747, %v7769
        %v8877 = vsel %vm3955, %v8749, %v7771
        %v8879 = vsel %vm3955, %v8751, %v7773
        %v8881 = vsel %vm3955, %v8753, %v7775
        %v8883 = vsel %vm3955, %v8755, %v7777
        %v8885 = vsel %vm3955, %v8757, %v7779
        %v8887 = vsel %vm3955, %v8759, %v7781
        %v8889 = vsel %vm3955, %v8761, %v7783
        %v8891 = vsel %vm3955, %v8763, %v7785
        %v8893 = vsel %vm3955, %v8765, %v7787
        %v8895 = vsel %vm3955, %v8767, %v7789
        %v8897 = vsel %vm3955, %v8769, %v7791
        %v8899 = vsel %vm3955, %v8771, %v7793
        %v8901 = vsel %vm3955, %v8773, %v7795
        %v8903 = vsel %vm3955, %v8775, %v7797
        %v8905 = vsel %vm3955, %v8777, %v7799
        %v8907 = vsel %vm3955, %v8779, %v7801
        %v8909 = vsel %vm3955, %v8781, %v7803
        %v8911 = vsel %vm3955, %v8783, %v7805
        %v8913 = vsel %vm3955, %v8785, %v7807
        %v8915 = vsel %vm3955, %v8787, %v7809
        %v8917 = vsel %vm3955, %v8789, %v7811
        %v8919 = vsel %vm3955, %v8791, %v7813
        %v8921 = vsel %vm3955, %v8793, %v7815
        %v8923 = vsel %vm3955, %v8795, %v7817
        %v8925 = vsel %vm3955, %v8797, %v7819
        %v8927 = vsel %vm3955, %v8799, %v7821
        %v8929 = vsel %vm3955, %v8801, %v7823
        %v8931 = vsel %vm4084, %v8803, %v7831
        %v8933 = vsel %vm4084, %v8805, %v7833
        %v8935 = vsel %vm4084, %v8807, %v7835
        %v8937 = vsel %vm4084, %v8809, %v7837
        %v8939 = vsel %vm4084, %v8811, %v7839
        %v8941 = vsel %vm4084, %v8813, %v7841
        %v8943 = vsel %vm4084, %v8815, %v7843
        %v8945 = vsel %vm4084, %v8817, %v7845
        %v8947 = vsel %vm4084, %v8819, %v7847
        %v8949 = vsel %vm4084, %v8821, %v7849
        %v8951 = vsel %vm4084, %v8823, %v7851
        %v8953 = vsel %vm4084, %v8825, %v7853
        %v8955 = vsel %vm4084, %v8827, %v7855
        %v8957 = vsel %vm4084, %v8829, %v7857
        %v8959 = vsel %vm4084, %v8831, %v7859
        %v8961 = vsel %vm4084, %v8833, %v7861
        %v8963 = vsel %vm4084, %v8835, %v7863
        %v8965 = vsel %vm4084, %v8837, %v7865
        %v8967 = vsel %vm4084, %v8839, %v7867
        %v8969 = vsel %vm4084, %v8841, %v7869
        %v8971 = vsel %vm4084, %v8843, %v7871
        %v8973 = vsel %vm4084, %v8845, %v7873
        %v8975 = vsel %vm4084, %v8847, %v7875
        %v8977 = vsel %vm4084, %v8849, %v7877
        %v8979 = vsel %vm4084, %v8851, %v7879
        %v8981 = vsel %vm4084, %v8853, %v7881
        %v8983 = vsel %vm4084, %v8855, %v7883
        %v8985 = vsel %vm4084, %v8857, %v7885
        %v8987 = vsel %vm4084, %v8859, %v7887
        %v8989 = vsel %vm4084, %v8861, %v7889
        %v8991 = vsel %vm4084, %v8863, %v7891
        %v8993 = vsel %vm4084, %v8865, %v7893
        %v8995 = vsel %vm4084, %v8867, %v7895
        %v8997 = vsel %vm4084, %v8869, %v7897
        %v8999 = vsel %vm4084, %v8871, %v7899
        %v9001 = vsel %vm4084, %v8873, %v7901
        %v9003 = vsel %vm4084, %v8875, %v7903
        %v9005 = vsel %vm4084, %v8877, %v7905
        %v9007 = vsel %vm4084, %v8879, %v7907
        %v9009 = vsel %vm4084, %v8881, %v7909
        %v9011 = vsel %vm4084, %v8883, %v7911
        %v9013 = vsel %vm4084, %v8885, %v7913
        %v9015 = vsel %vm4084, %v8887, %v7915
        %v9017 = vsel %vm4084, %v8889, %v7917
        %v9019 = vsel %vm4084, %v8891, %v7919
        %v9021 = vsel %vm4084, %v8893, %v7921
        %v9023 = vsel %vm4084, %v8895, %v7923
        %v9025 = vsel %vm4084, %v8897, %v7925
        %v9027 = vsel %vm4084, %v8899, %v7927
        %v9029 = vsel %vm4084, %v8901, %v7929
        %v9031 = vsel %vm4084, %v8903, %v7931
        %v9033 = vsel %vm4084, %v8905, %v7933
        %v9035 = vsel %vm4084, %v8907, %v7935
        %v9037 = vsel %vm4084, %v8909, %v7937
        %v9039 = vsel %vm4084, %v8911, %v7939
        %v9041 = vsel %vm4084, %v8913, %v7941
        %v9043 = vsel %vm4084, %v8915, %v7943
        %v9045 = vsel %vm4084, %v8917, %v7945
        %v9047 = vsel %vm4084, %v8919, %v7947
        %v9049 = vsel %vm4084, %v8921, %v7949
        %v9051 = vsel %vm4084, %v8923, %v7951
        %v9053 = vsel %vm4084, %v8925, %v7953
        %v9055 = vsel %vm4084, %v8927, %v7955
        %v9057 = vsel %vm4084, %v8929, %v7957
        %v9059 = vsel %vm4213, %v8931, %v7965
        %v9061 = vsel %vm4213, %v8933, %v7967
        %v9063 = vsel %vm4213, %v8935, %v7969
        %v9065 = vsel %vm4213, %v8937, %v7971
        %v9067 = vsel %vm4213, %v8939, %v7973
        %v9069 = vsel %vm4213, %v8941, %v7975
        %v9071 = vsel %vm4213, %v8943, %v7977
        %v9073 = vsel %vm4213, %v8945, %v7979
        %v9075 = vsel %vm4213, %v8947, %v7981
        %v9077 = vsel %vm4213, %v8949, %v7983
        %v9079 = vsel %vm4213, %v8951, %v7985
        %v9081 = vsel %vm4213, %v8953, %v7987
        %v9083 = vsel %vm4213, %v8955, %v7989
        %v9085 = vsel %vm4213, %v8957, %v7991
        %v9087 = vsel %vm4213, %v8959, %v7993
        %v9089 = vsel %vm4213, %v8961, %v7995
        %v9091 = vsel %vm4213, %v8963, %v7997
        %v9093 = vsel %vm4213, %v8965, %v7999
        %v9095 = vsel %vm4213, %v8967, %v8001
        %v9097 = vsel %vm4213, %v8969, %v8003
        %v9099 = vsel %vm4213, %v8971, %v8005
        %v9101 = vsel %vm4213, %v8973, %v8007
        %v9103 = vsel %vm4213, %v8975, %v8009
        %v9105 = vsel %vm4213, %v8977, %v8011
        %v9107 = vsel %vm4213, %v8979, %v8013
        %v9109 = vsel %vm4213, %v8981, %v8015
        %v9111 = vsel %vm4213, %v8983, %v8017
        %v9113 = vsel %vm4213, %v8985, %v8019
        %v9115 = vsel %vm4213, %v8987, %v8021
        %v9117 = vsel %vm4213, %v8989, %v8023
        %v9119 = vsel %vm4213, %v8991, %v8025
        %v9121 = vsel %vm4213, %v8993, %v8027
        %v9123 = vsel %vm4213, %v8995, %v8029
        %v9125 = vsel %vm4213, %v8997, %v8031
        %v9127 = vsel %vm4213, %v8999, %v8033
        %v9129 = vsel %vm4213, %v9001, %v8035
        %v9131 = vsel %vm4213, %v9003, %v8037
        %v9133 = vsel %vm4213, %v9005, %v8039
        %v9135 = vsel %vm4213, %v9007, %v8041
        %v9137 = vsel %vm4213, %v9009, %v8043
        %v9139 = vsel %vm4213, %v9011, %v8045
        %v9141 = vsel %vm4213, %v9013, %v8047
        %v9143 = vsel %vm4213, %v9015, %v8049
        %v9145 = vsel %vm4213, %v9017, %v8051
        %v9147 = vsel %vm4213, %v9019, %v8053
        %v9149 = vsel %vm4213, %v9021, %v8055
        %v9151 = vsel %vm4213, %v9023, %v8057
        %v9153 = vsel %vm4213, %v9025, %v8059
        %v9155 = vsel %vm4213, %v9027, %v8061
        %v9157 = vsel %vm4213, %v9029, %v8063
        %v9159 = vsel %vm4213, %v9031, %v8065
        %v9161 = vsel %vm4213, %v9033, %v8067
        %v9163 = vsel %vm4213, %v9035, %v8069
        %v9165 = vsel %vm4213, %v9037, %v8071
        %v9167 = vsel %vm4213, %v9039, %v8073
        %v9169 = vsel %vm4213, %v9041, %v8075
        %v9171 = vsel %vm4213, %v9043, %v8077
        %v9173 = vsel %vm4213, %v9045, %v8079
        %v9175 = vsel %vm4213, %v9047, %v8081
        %v9177 = vsel %vm4213, %v9049, %v8083
        %v9179 = vsel %vm4213, %v9051, %v8085
        %v9181 = vsel %vm4213, %v9053, %v8087
        %v9183 = vsel %vm4213, %v9055, %v8089
        %v9185 = vsel %vm4213, %v9057, %v8091
        %v9187 = vsel %vm4342, %v9059, %v8099
        %v9189 = vsel %vm4342, %v9061, %v8101
        %v9191 = vsel %vm4342, %v9063, %v8103
        %v9193 = vsel %vm4342, %v9065, %v8105
        %v9195 = vsel %vm4342, %v9067, %v8107
        %v9197 = vsel %vm4342, %v9069, %v8109
        %v9199 = vsel %vm4342, %v9071, %v8111
        %v9201 = vsel %vm4342, %v9073, %v8113
        %v9203 = vsel %vm4342, %v9075, %v8115
        %v9205 = vsel %vm4342, %v9077, %v8117
        %v9207 = vsel %vm4342, %v9079, %v8119
        %v9209 = vsel %vm4342, %v9081, %v8121
        %v9211 = vsel %vm4342, %v9083, %v8123
        %v9213 = vsel %vm4342, %v9085, %v8125
        %v9215 = vsel %vm4342, %v9087, %v8127
        %v9217 = vsel %vm4342, %v9089, %v8129
        %v9219 = vsel %vm4342, %v9091, %v8131
        %v9221 = vsel %vm4342, %v9093, %v8133
        %v9223 = vsel %vm4342, %v9095, %v8135
        %v9225 = vsel %vm4342, %v9097, %v8137
        %v9227 = vsel %vm4342, %v9099, %v8139
        %v9229 = vsel %vm4342, %v9101, %v8141
        %v9231 = vsel %vm4342, %v9103, %v8143
        %v9233 = vsel %vm4342, %v9105, %v8145
        %v9235 = vsel %vm4342, %v9107, %v8147
        %v9237 = vsel %vm4342, %v9109, %v8149
        %v9239 = vsel %vm4342, %v9111, %v8151
        %v9241 = vsel %vm4342, %v9113, %v8153
        %v9243 = vsel %vm4342, %v9115, %v8155
        %v9245 = vsel %vm4342, %v9117, %v8157
        %v9247 = vsel %vm4342, %v9119, %v8159
        %v9249 = vsel %vm4342, %v9121, %v8161
        %v9251 = vsel %vm4342, %v9123, %v8163
        %v9253 = vsel %vm4342, %v9125, %v8165
        %v9255 = vsel %vm4342, %v9127, %v8167
        %v9257 = vsel %vm4342, %v9129, %v8169
        %v9259 = vsel %vm4342, %v9131, %v8171
        %v9261 = vsel %vm4342, %v9133, %v8173
        %v9263 = vsel %vm4342, %v9135, %v8175
        %v9265 = vsel %vm4342, %v9137, %v8177
        %v9267 = vsel %vm4342, %v9139, %v8179
        %v9269 = vsel %vm4342, %v9141, %v8181
        %v9271 = vsel %vm4342, %v9143, %v8183
        %v9273 = vsel %vm4342, %v9145, %v8185
        %v9275 = vsel %vm4342, %v9147, %v8187
        %v9277 = vsel %vm4342, %v9149, %v8189
        %v9279 = vsel %vm4342, %v9151, %v8191
        %v9281 = vsel %vm4342, %v9153, %v8193
        %v9283 = vsel %vm4342, %v9155, %v8195
        %v9285 = vsel %vm4342, %v9157, %v8197
        %v9287 = vsel %vm4342, %v9159, %v8199
        %v9289 = vsel %vm4342, %v9161, %v8201
        %v9291 = vsel %vm4342, %v9163, %v8203
        %v9293 = vsel %vm4342, %v9165, %v8205
        %v9295 = vsel %vm4342, %v9167, %v8207
        %v9297 = vsel %vm4342, %v9169, %v8209
        %v9299 = vsel %vm4342, %v9171, %v8211
        %v9301 = vsel %vm4342, %v9173, %v8213
        %v9303 = vsel %vm4342, %v9175, %v8215
        %v9305 = vsel %vm4342, %v9177, %v8217
        %v9307 = vsel %vm4342, %v9179, %v8219
        %v9309 = vsel %vm4342, %v9181, %v8221
        %v9311 = vsel %vm4342, %v9183, %v8223
        %v9313 = vsel %vm4342, %v9185, %v8225
        %v9314 = vld [vmem:[%s6] sm:$0xf]
        %v9315 = vld [vmem:[%s6 + $0x4] sm:$0xf]
        %v9316 = vld [vmem:[%s6 + $0x8] sm:$0xf]
        %v9317 = vld [vmem:[%s6 + $0xc] sm:$0xf]
        %v9318 = vld [vmem:[%s6 + $0x10] sm:$0x3]
        %v9324 = vunpack.c.l.b16 %v9314
        %v9325 = vunpack.c.l.b16 %v9315
        %v9326 = vunpack.c.l.b16 %v9316
        %v9327 = vunpack.c.l.b16 %v9317
        %v9328 = vunpack.c.l.b16 %v9318
        %v9329 = vpack.c.b16 %v9325, %v9324
        %v9330 = vpack.c.b16 %v9327, %v9326
        %v9331 = vpack.c.b16 %v9328, %v9328
        %vm9334 = vcmask 293888
        %v9335 = vsel %vm9334, %v9187, 0
        %v9337 = vsel %vm9334, %v9189, 0
        %v9339 = vsel %vm9334, %v9191, 0
        %v9341 = vsel %vm9334, %v9193, 0
        %v9343 = vsel %vm9334, %v9195, 0
        %v9345 = vsel %vm9334, %v9197, 0
        %v9347 = vsel %vm9334, %v9199, 0
        %v9349 = vsel %vm9334, %v9201, 0
        %v9351 = vsel %vm9334, %v9203, 0
        %v9353 = vsel %vm9334, %v9205, 0
        %v9355 = vsel %vm9334, %v9207, 0
        %v9357 = vsel %vm9334, %v9209, 0
        %v9359 = vsel %vm9334, %v9211, 0
        %v9361 = vsel %vm9334, %v9213, 0
        %v9363 = vsel %vm9334, %v9215, 0
        %v9365 = vsel %vm9334, %v9217, 0
        %v9367 = vsel %vm9334, %v9219, 0
        %v9369 = vsel %vm9334, %v9221, 0
        %v9371 = vsel %vm9334, %v9223, 0
        %v9373 = vsel %vm9334, %v9225, 0
        %v9375 = vsel %vm9334, %v9227, 0
        %v9377 = vsel %vm9334, %v9229, 0
        %v9379 = vsel %vm9334, %v9231, 0
        %v9381 = vsel %vm9334, %v9233, 0
        %v9383 = vsel %vm9334, %v9235, 0
        %v9385 = vsel %vm9334, %v9237, 0
        %v9387 = vsel %vm9334, %v9239, 0
        %v9389 = vsel %vm9334, %v9241, 0
        %v9391 = vsel %vm9334, %v9243, 0
        %v9393 = vsel %vm9334, %v9245, 0
        %v9395 = vsel %vm9334, %v9247, 0
        %v9397 = vsel %vm9334, %v9249, 0
        %v9399 = vsel %vm9334, %v9251, 0
        %v9401 = vsel %vm9334, %v9253, 0
        %v9403 = vsel %vm9334, %v9255, 0
        %v9405 = vsel %vm9334, %v9257, 0
        %v9407 = vsel %vm9334, %v9259, 0
        %v9409 = vsel %vm9334, %v9261, 0
        %v9411 = vsel %vm9334, %v9263, 0
        %v9413 = vsel %vm9334, %v9265, 0
        %v9415 = vsel %vm9334, %v9267, 0
        %v9417 = vsel %vm9334, %v9269, 0
        %v9419 = vsel %vm9334, %v9271, 0
        %v9421 = vsel %vm9334, %v9273, 0
        %v9423 = vsel %vm9334, %v9275, 0
        %v9425 = vsel %vm9334, %v9277, 0
        %v9427 = vsel %vm9334, %v9279, 0
        %v9429 = vsel %vm9334, %v9281, 0
        %v9431 = vsel %vm9334, %v9283, 0
        %v9433 = vsel %vm9334, %v9285, 0
        %v9435 = vsel %vm9334, %v9287, 0
        %v9437 = vsel %vm9334, %v9289, 0
        %v9439 = vsel %vm9334, %v9291, 0
        %v9441 = vsel %vm9334, %v9293, 0
        %v9443 = vsel %vm9334, %v9295, 0
        %v9445 = vsel %vm9334, %v9297, 0
        %v9447 = vsel %vm9334, %v9299, 0
        %v9449 = vsel %vm9334, %v9301, 0
        %v9451 = vsel %vm9334, %v9303, 0
        %v9453 = vsel %vm9334, %v9305, 0
        %v9455 = vsel %vm9334, %v9307, 0
        %v9457 = vsel %vm9334, %v9309, 0
        %v9459 = vsel %vm9334, %v9311, 0
        %v9461 = vsel %vm9334, %v9313, 0
        %vm9463 = vcmask 1041408
        %v9465 = vsel %vm9463, %v9331, 0
        %9467 = vmatprep.subr.bf16.mxu0 0
        %9468 = vmatpush1.bf16.msra.mxu0 0
        %9469 = vmatprep.subr.bf16.mxu0 0
        %9470 = vmatpush1.bf16.msra.mxu0 0
        %9471 = vmatprep.subr.bf16.mxu0 0
        %9472 = vmatpush1.bf16.msra.mxu0 0
        %9473 = vmatprep.subr.bf16.mxu0 0
        %9474 = vmatpush1.bf16.msra.mxu0 0
        %9475 = vmatprep.subr.bf16.mxu0 0
        %9476 = vmatpush1.bf16.msra.mxu0 0
        %9477 = vmatprep.subr.bf16.mxu0 0
        %9478 = vmatpush1.bf16.msra.mxu0 %v9465
        %9479 = vmatprep.subr.bf16.mxu0 0
        %9480 = vmatpush1.bf16.msra.mxu0 %v9330
        %9481 = vmatprep.subr.bf16.mxu0 0
        %9482 = vmatpush1.bf16.msra.mxu0 %v9329
        %9483 = vmatprep.subr.bf16.mxu0 0
        %9484 = vmatpush2.bf16.msra.mxu0 0
        %9485 = vmatprep.subr.bf16.mxu0 0
        %9486 = vmatpush2.bf16.msra.mxu0 0
        %9487 = vmatprep.subr.bf16.mxu0 0
        %9488 = vmatpush2.bf16.msra.mxu0 0
        %9489 = vmatprep.subr.bf16.mxu0 0
        %9490 = vmatpush2.bf16.msra.mxu0 0
        %9491 = vmatprep.subr.bf16.mxu0 0
        %9492 = vmatpush2.bf16.msra.mxu0 0
        %9493 = vmatprep.subr.bf16.mxu0 0
        %9494 = vmatpush2.bf16.msra.mxu0 0
        %9495 = vmatprep.subr.bf16.mxu0 0
        %9496 = vmatpush2.bf16.msra.mxu0 0
        %9497 = vmatprep.subr.bf16.mxu0 0
        %9498 = vmatpush2.bf16.msra.mxu0 0
        %9499 = vmatprep.mubr.bf16.mxu0 0
        %9500 = vmatmul.mubr.bf16.gmra.mxu0 %v9335
        %v9501 = vpop.f32.mrf.mxu0
        %v9502 = vadd.f32 0.0, %v9501
        %v9503 = vpop.f32.mrf.mxu0
        %v9504 = vpop.f32.mrf.mxu0
        %v9505 = vadd.f32 0.0, %v9504
        %v9506 = vpop.f32.mrf.mxu0
        %9507 = vmatprep.mubr.bf16.mxu0 0
        %9508 = vmatmul.mubr.bf16.gmra.mxu0 %v9337
        %v9509 = vpop.f32.mrf.mxu0
        %v9510 = vadd.f32 0.0, %v9509
        %v9511 = vpop.f32.mrf.mxu0
        %v9512 = vpop.f32.mrf.mxu0
        %v9513 = vadd.f32 0.0, %v9512
        %v9514 = vpop.f32.mrf.mxu0
        %9515 = vmatprep.mubr.bf16.mxu0 0
        %9516 = vmatmul.mubr.bf16.gmra.mxu0 %v9339
        %v9517 = vpop.f32.mrf.mxu0
        %v9518 = vadd.f32 0.0, %v9517
        %v9519 = vpop.f32.mrf.mxu0
        %v9520 = vpop.f32.mrf.mxu0
        %v9521 = vadd.f32 0.0, %v9520
        %v9522 = vpop.f32.mrf.mxu0
        %9523 = vmatprep.mubr.bf16.mxu0 0
        %9524 = vmatmul.mubr.bf16.gmra.mxu0 %v9341
        %v9525 = vpop.f32.mrf.mxu0
        %v9526 = vadd.f32 0.0, %v9525
        %v9527 = vpop.f32.mrf.mxu0
        %v9528 = vpop.f32.mrf.mxu0
        %v9529 = vadd.f32 0.0, %v9528
        %v9530 = vpop.f32.mrf.mxu0
        %9531 = vmatprep.mubr.bf16.mxu0 0
        %9532 = vmatmul.mubr.bf16.gmra.mxu0 %v9343
        %v9533 = vpop.f32.mrf.mxu0
        %v9534 = vadd.f32 0.0, %v9533
        %v9535 = vpop.f32.mrf.mxu0
        %v9536 = vpop.f32.mrf.mxu0
        %v9537 = vadd.f32 0.0, %v9536
        %v9538 = vpop.f32.mrf.mxu0
        %9539 = vmatprep.mubr.bf16.mxu0 0
        %9540 = vmatmul.mubr.bf16.gmra.mxu0 %v9345
        %v9541 = vpop.f32.mrf.mxu0
        %v9542 = vadd.f32 0.0, %v9541
        %v9543 = vpop.f32.mrf.mxu0
        %v9544 = vpop.f32.mrf.mxu0
        %v9545 = vadd.f32 0.0, %v9544
        %v9546 = vpop.f32.mrf.mxu0
        %9547 = vmatprep.mubr.bf16.mxu0 0
        %9548 = vmatmul.mubr.bf16.gmra.mxu0 %v9347
        %v9549 = vpop.f32.mrf.mxu0
        %v9550 = vadd.f32 0.0, %v9549
        %v9551 = vpop.f32.mrf.mxu0
        %v9552 = vpop.f32.mrf.mxu0
        %v9553 = vadd.f32 0.0, %v9552
        %v9554 = vpop.f32.mrf.mxu0
        %9555 = vmatprep.mubr.bf16.mxu0 0
        %9556 = vmatmul.mubr.bf16.gmra.mxu0 %v9349
        %v9557 = vpop.f32.mrf.mxu0
        %v9558 = vadd.f32 0.0, %v9557
        %v9559 = vpop.f32.mrf.mxu0
        %v9560 = vpop.f32.mrf.mxu0
        %v9561 = vadd.f32 0.0, %v9560
        %v9562 = vpop.f32.mrf.mxu0
        %9563 = vmatprep.mubr.bf16.mxu0 0
        %9564 = vmatmul.mubr.bf16.gmra.mxu0 %v9351
        %v9565 = vpop.f32.mrf.mxu0
        %v9566 = vadd.f32 0.0, %v9565
        %v9567 = vpop.f32.mrf.mxu0
        %v9568 = vpop.f32.mrf.mxu0
        %v9569 = vadd.f32 0.0, %v9568
        %v9570 = vpop.f32.mrf.mxu0
        %9571 = vmatprep.mubr.bf16.mxu0 0
        %9572 = vmatmul.mubr.bf16.gmra.mxu0 %v9353
        %v9573 = vpop.f32.mrf.mxu0
        %v9574 = vadd.f32 0.0, %v9573
        %v9575 = vpop.f32.mrf.mxu0
        %v9576 = vpop.f32.mrf.mxu0
        %v9577 = vadd.f32 0.0, %v9576
        %v9578 = vpop.f32.mrf.mxu0
        %9579 = vmatprep.mubr.bf16.mxu0 0
        %9580 = vmatmul.mubr.bf16.gmra.mxu0 %v9355
        %v9581 = vpop.f32.mrf.mxu0
        %v9582 = vadd.f32 0.0, %v9581
        %v9583 = vpop.f32.mrf.mxu0
        %v9584 = vpop.f32.mrf.mxu0
        %v9585 = vadd.f32 0.0, %v9584
        %v9586 = vpop.f32.mrf.mxu0
        %9587 = vmatprep.mubr.bf16.mxu0 0
        %9588 = vmatmul.mubr.bf16.gmra.mxu0 %v9357
        %v9589 = vpop.f32.mrf.mxu0
        %v9590 = vadd.f32 0.0, %v9589
        %v9591 = vpop.f32.mrf.mxu0
        %v9592 = vpop.f32.mrf.mxu0
        %v9593 = vadd.f32 0.0, %v9592
        %v9594 = vpop.f32.mrf.mxu0
        %9595 = vmatprep.mubr.bf16.mxu0 0
        %9596 = vmatmul.mubr.bf16.gmra.mxu0 %v9359
        %v9597 = vpop.f32.mrf.mxu0
        %v9598 = vadd.f32 0.0, %v9597
        %v9599 = vpop.f32.mrf.mxu0
        %v9600 = vpop.f32.mrf.mxu0
        %v9601 = vadd.f32 0.0, %v9600
        %v9602 = vpop.f32.mrf.mxu0
        %9603 = vmatprep.mubr.bf16.mxu0 0
        %9604 = vmatmul.mubr.bf16.gmra.mxu0 %v9361
        %v9605 = vpop.f32.mrf.mxu0
        %v9606 = vadd.f32 0.0, %v9605
        %v9607 = vpop.f32.mrf.mxu0
        %v9608 = vpop.f32.mrf.mxu0
        %v9609 = vadd.f32 0.0, %v9608
        %v9610 = vpop.f32.mrf.mxu0
        %9611 = vmatprep.mubr.bf16.mxu0 0
        %9612 = vmatmul.mubr.bf16.gmra.mxu0 %v9363
        %v9613 = vpop.f32.mrf.mxu0
        %v9614 = vadd.f32 0.0, %v9613
        %v9615 = vpop.f32.mrf.mxu0
        %v9616 = vpop.f32.mrf.mxu0
        %v9617 = vadd.f32 0.0, %v9616
        %v9618 = vpop.f32.mrf.mxu0
        %9619 = vmatprep.mubr.bf16.mxu0 0
        %9620 = vmatmul.mubr.bf16.gmra.mxu0 %v9365
        %v9621 = vpop.f32.mrf.mxu0
        %v9622 = vadd.f32 0.0, %v9621
        %v9623 = vpop.f32.mrf.mxu0
        %v9624 = vpop.f32.mrf.mxu0
        %v9625 = vadd.f32 0.0, %v9624
        %v9626 = vpop.f32.mrf.mxu0
        %9627 = vmatprep.mubr.bf16.mxu0 0
        %9628 = vmatmul.mubr.bf16.gmra.mxu0 %v9367
        %v9629 = vpop.f32.mrf.mxu0
        %v9630 = vadd.f32 0.0, %v9629
        %v9631 = vpop.f32.mrf.mxu0
        %v9632 = vpop.f32.mrf.mxu0
        %v9633 = vadd.f32 0.0, %v9632
        %v9634 = vpop.f32.mrf.mxu0
        %9635 = vmatprep.mubr.bf16.mxu0 0
        %9636 = vmatmul.mubr.bf16.gmra.mxu0 %v9369
        %v9637 = vpop.f32.mrf.mxu0
        %v9638 = vadd.f32 0.0, %v9637
        %v9639 = vpop.f32.mrf.mxu0
        %v9640 = vpop.f32.mrf.mxu0
        %v9641 = vadd.f32 0.0, %v9640
        %v9642 = vpop.f32.mrf.mxu0
        %9643 = vmatprep.mubr.bf16.mxu0 0
        %9644 = vmatmul.mubr.bf16.gmra.mxu0 %v9371
        %v9645 = vpop.f32.mrf.mxu0
        %v9646 = vadd.f32 0.0, %v9645
        %v9647 = vpop.f32.mrf.mxu0
        %v9648 = vpop.f32.mrf.mxu0
        %v9649 = vadd.f32 0.0, %v9648
        %v9650 = vpop.f32.mrf.mxu0
        %9651 = vmatprep.mubr.bf16.mxu0 0
        %9652 = vmatmul.mubr.bf16.gmra.mxu0 %v9373
        %v9653 = vpop.f32.mrf.mxu0
        %v9654 = vadd.f32 0.0, %v9653
        %v9655 = vpop.f32.mrf.mxu0
        %v9656 = vpop.f32.mrf.mxu0
        %v9657 = vadd.f32 0.0, %v9656
        %v9658 = vpop.f32.mrf.mxu0
        %9659 = vmatprep.mubr.bf16.mxu0 0
        %9660 = vmatmul.mubr.bf16.gmra.mxu0 %v9375
        %v9661 = vpop.f32.mrf.mxu0
        %v9662 = vadd.f32 0.0, %v9661
        %v9663 = vpop.f32.mrf.mxu0
        %v9664 = vpop.f32.mrf.mxu0
        %v9665 = vadd.f32 0.0, %v9664
        %v9666 = vpop.f32.mrf.mxu0
        %9667 = vmatprep.mubr.bf16.mxu0 0
        %9668 = vmatmul.mubr.bf16.gmra.mxu0 %v9377
        %v9669 = vpop.f32.mrf.mxu0
        %v9670 = vadd.f32 0.0, %v9669
        %v9671 = vpop.f32.mrf.mxu0
        %v9672 = vpop.f32.mrf.mxu0
        %v9673 = vadd.f32 0.0, %v9672
        %v9674 = vpop.f32.mrf.mxu0
        %9675 = vmatprep.mubr.bf16.mxu0 0
        %9676 = vmatmul.mubr.bf16.gmra.mxu0 %v9379
        %v9677 = vpop.f32.mrf.mxu0
        %v9678 = vadd.f32 0.0, %v9677
        %v9679 = vpop.f32.mrf.mxu0
        %v9680 = vpop.f32.mrf.mxu0
        %v9681 = vadd.f32 0.0, %v9680
        %v9682 = vpop.f32.mrf.mxu0
        %9683 = vmatprep.mubr.bf16.mxu0 0
        %9684 = vmatmul.mubr.bf16.gmra.mxu0 %v9381
        %v9685 = vpop.f32.mrf.mxu0
        %v9686 = vadd.f32 0.0, %v9685
        %v9687 = vpop.f32.mrf.mxu0
        %v9688 = vpop.f32.mrf.mxu0
        %v9689 = vadd.f32 0.0, %v9688
        %v9690 = vpop.f32.mrf.mxu0
        %9691 = vmatprep.mubr.bf16.mxu0 0
        %9692 = vmatmul.mubr.bf16.gmra.mxu0 %v9383
        %v9693 = vpop.f32.mrf.mxu0
        %v9694 = vadd.f32 0.0, %v9693
        %v9695 = vpop.f32.mrf.mxu0
        %v9696 = vpop.f32.mrf.mxu0
        %v9697 = vadd.f32 0.0, %v9696
        %v9698 = vpop.f32.mrf.mxu0
        %9699 = vmatprep.mubr.bf16.mxu0 0
        %9700 = vmatmul.mubr.bf16.gmra.mxu0 %v9385
        %v9701 = vpop.f32.mrf.mxu0
        %v9702 = vadd.f32 0.0, %v9701
        %v9703 = vpop.f32.mrf.mxu0
        %v9704 = vpop.f32.mrf.mxu0
        %v9705 = vadd.f32 0.0, %v9704
        %v9706 = vpop.f32.mrf.mxu0
        %9707 = vmatprep.mubr.bf16.mxu0 0
        %9708 = vmatmul.mubr.bf16.gmra.mxu0 %v9387
        %v9709 = vpop.f32.mrf.mxu0
        %v9710 = vadd.f32 0.0, %v9709
        %v9711 = vpop.f32.mrf.mxu0
        %v9712 = vpop.f32.mrf.mxu0
        %v9713 = vadd.f32 0.0, %v9712
        %v9714 = vpop.f32.mrf.mxu0
        %9715 = vmatprep.mubr.bf16.mxu0 0
        %9716 = vmatmul.mubr.bf16.gmra.mxu0 %v9389
        %v9717 = vpop.f32.mrf.mxu0
        %v9718 = vadd.f32 0.0, %v9717
        %v9719 = vpop.f32.mrf.mxu0
        %v9720 = vpop.f32.mrf.mxu0
        %v9721 = vadd.f32 0.0, %v9720
        %v9722 = vpop.f32.mrf.mxu0
        %9723 = vmatprep.mubr.bf16.mxu0 0
        %9724 = vmatmul.mubr.bf16.gmra.mxu0 %v9391
        %v9725 = vpop.f32.mrf.mxu0
        %v9726 = vadd.f32 0.0, %v9725
        %v9727 = vpop.f32.mrf.mxu0
        %v9728 = vpop.f32.mrf.mxu0
        %v9729 = vadd.f32 0.0, %v9728
        %v9730 = vpop.f32.mrf.mxu0
        %9731 = vmatprep.mubr.bf16.mxu0 0
        %9732 = vmatmul.mubr.bf16.gmra.mxu0 %v9393
        %v9733 = vpop.f32.mrf.mxu0
        %v9734 = vadd.f32 0.0, %v9733
        %v9735 = vpop.f32.mrf.mxu0
        %v9736 = vpop.f32.mrf.mxu0
        %v9737 = vadd.f32 0.0, %v9736
        %v9738 = vpop.f32.mrf.mxu0
        %9739 = vmatprep.mubr.bf16.mxu0 0
        %9740 = vmatmul.mubr.bf16.gmra.mxu0 %v9395
        %v9741 = vpop.f32.mrf.mxu0
        %v9742 = vadd.f32 0.0, %v9741
        %v9743 = vpop.f32.mrf.mxu0
        %v9744 = vpop.f32.mrf.mxu0
        %v9745 = vadd.f32 0.0, %v9744
        %v9746 = vpop.f32.mrf.mxu0
        %9747 = vmatprep.mubr.bf16.mxu0 0
        %9748 = vmatmul.mubr.bf16.gmra.mxu0 %v9397
        %v9749 = vpop.f32.mrf.mxu0
        %v9750 = vadd.f32 0.0, %v9749
        %v9751 = vpop.f32.mrf.mxu0
        %v9752 = vpop.f32.mrf.mxu0
        %v9753 = vadd.f32 0.0, %v9752
        %v9754 = vpop.f32.mrf.mxu0
        %9755 = vmatprep.mubr.bf16.mxu0 0
        %9756 = vmatmul.mubr.bf16.gmra.mxu0 %v9399
        %v9757 = vpop.f32.mrf.mxu0
        %v9758 = vadd.f32 0.0, %v9757
        %v9759 = vpop.f32.mrf.mxu0
        %v9760 = vpop.f32.mrf.mxu0
        %v9761 = vadd.f32 0.0, %v9760
        %v9762 = vpop.f32.mrf.mxu0
        %9763 = vmatprep.mubr.bf16.mxu0 0
        %9764 = vmatmul.mubr.bf16.gmra.mxu0 %v9401
        %v9765 = vpop.f32.mrf.mxu0
        %v9766 = vadd.f32 0.0, %v9765
        %v9767 = vpop.f32.mrf.mxu0
        %v9768 = vpop.f32.mrf.mxu0
        %v9769 = vadd.f32 0.0, %v9768
        %v9770 = vpop.f32.mrf.mxu0
        %9771 = vmatprep.mubr.bf16.mxu0 0
        %9772 = vmatmul.mubr.bf16.gmra.mxu0 %v9403
        %v9773 = vpop.f32.mrf.mxu0
        %v9774 = vadd.f32 0.0, %v9773
        %v9775 = vpop.f32.mrf.mxu0
        %v9776 = vpop.f32.mrf.mxu0
        %v9777 = vadd.f32 0.0, %v9776
        %v9778 = vpop.f32.mrf.mxu0
        %9779 = vmatprep.mubr.bf16.mxu0 0
        %9780 = vmatmul.mubr.bf16.gmra.mxu0 %v9405
        %v9781 = vpop.f32.mrf.mxu0
        %v9782 = vadd.f32 0.0, %v9781
        %v9783 = vpop.f32.mrf.mxu0
        %v9784 = vpop.f32.mrf.mxu0
        %v9785 = vadd.f32 0.0, %v9784
        %v9786 = vpop.f32.mrf.mxu0
        %9787 = vmatprep.mubr.bf16.mxu0 0
        %9788 = vmatmul.mubr.bf16.gmra.mxu0 %v9407
        %v9789 = vpop.f32.mrf.mxu0
        %v9790 = vadd.f32 0.0, %v9789
        %v9791 = vpop.f32.mrf.mxu0
        %v9792 = vpop.f32.mrf.mxu0
        %v9793 = vadd.f32 0.0, %v9792
        %v9794 = vpop.f32.mrf.mxu0
        %9795 = vmatprep.mubr.bf16.mxu0 0
        %9796 = vmatmul.mubr.bf16.gmra.mxu0 %v9409
        %v9797 = vpop.f32.mrf.mxu0
        %v9798 = vadd.f32 0.0, %v9797
        %v9799 = vpop.f32.mrf.mxu0
        %v9800 = vpop.f32.mrf.mxu0
        %v9801 = vadd.f32 0.0, %v9800
        %v9802 = vpop.f32.mrf.mxu0
        %9803 = vmatprep.mubr.bf16.mxu0 0
        %9804 = vmatmul.mubr.bf16.gmra.mxu0 %v9411
        %v9805 = vpop.f32.mrf.mxu0
        %v9806 = vadd.f32 0.0, %v9805
        %v9807 = vpop.f32.mrf.mxu0
        %v9808 = vpop.f32.mrf.mxu0
        %v9809 = vadd.f32 0.0, %v9808
        %v9810 = vpop.f32.mrf.mxu0
        %9811 = vmatprep.mubr.bf16.mxu0 0
        %9812 = vmatmul.mubr.bf16.gmra.mxu0 %v9413
        %v9813 = vpop.f32.mrf.mxu0
        %v9814 = vadd.f32 0.0, %v9813
        %v9815 = vpop.f32.mrf.mxu0
        %v9816 = vpop.f32.mrf.mxu0
        %v9817 = vadd.f32 0.0, %v9816
        %v9818 = vpop.f32.mrf.mxu0
        %9819 = vmatprep.mubr.bf16.mxu0 0
        %9820 = vmatmul.mubr.bf16.gmra.mxu0 %v9415
        %v9821 = vpop.f32.mrf.mxu0
        %v9822 = vadd.f32 0.0, %v9821
        %v9823 = vpop.f32.mrf.mxu0
        %v9824 = vpop.f32.mrf.mxu0
        %v9825 = vadd.f32 0.0, %v9824
        %v9826 = vpop.f32.mrf.mxu0
        %9827 = vmatprep.mubr.bf16.mxu0 0
        %9828 = vmatmul.mubr.bf16.gmra.mxu0 %v9417
        %v9829 = vpop.f32.mrf.mxu0
        %v9830 = vadd.f32 0.0, %v9829
        %v9831 = vpop.f32.mrf.mxu0
        %v9832 = vpop.f32.mrf.mxu0
        %v9833 = vadd.f32 0.0, %v9832
        %v9834 = vpop.f32.mrf.mxu0
        %9835 = vmatprep.mubr.bf16.mxu0 0
        %9836 = vmatmul.mubr.bf16.gmra.mxu0 %v9419
        %v9837 = vpop.f32.mrf.mxu0
        %v9838 = vadd.f32 0.0, %v9837
        %v9839 = vpop.f32.mrf.mxu0
        %v9840 = vpop.f32.mrf.mxu0
        %v9841 = vadd.f32 0.0, %v9840
        %v9842 = vpop.f32.mrf.mxu0
        %9843 = vmatprep.mubr.bf16.mxu0 0
        %9844 = vmatmul.mubr.bf16.gmra.mxu0 %v9421
        %v9845 = vpop.f32.mrf.mxu0
        %v9846 = vadd.f32 0.0, %v9845
        %v9847 = vpop.f32.mrf.mxu0
        %v9848 = vpop.f32.mrf.mxu0
        %v9849 = vadd.f32 0.0, %v9848
        %v9850 = vpop.f32.mrf.mxu0
        %9851 = vmatprep.mubr.bf16.mxu0 0
        %9852 = vmatmul.mubr.bf16.gmra.mxu0 %v9423
        %v9853 = vpop.f32.mrf.mxu0
        %v9854 = vadd.f32 0.0, %v9853
        %v9855 = vpop.f32.mrf.mxu0
        %v9856 = vpop.f32.mrf.mxu0
        %v9857 = vadd.f32 0.0, %v9856
        %v9858 = vpop.f32.mrf.mxu0
        %9859 = vmatprep.mubr.bf16.mxu0 0
        %9860 = vmatmul.mubr.bf16.gmra.mxu0 %v9425
        %v9861 = vpop.f32.mrf.mxu0
        %v9862 = vadd.f32 0.0, %v9861
        %v9863 = vpop.f32.mrf.mxu0
        %v9864 = vpop.f32.mrf.mxu0
        %v9865 = vadd.f32 0.0, %v9864
        %v9866 = vpop.f32.mrf.mxu0
        %9867 = vmatprep.mubr.bf16.mxu0 0
        %9868 = vmatmul.mubr.bf16.gmra.mxu0 %v9427
        %v9869 = vpop.f32.mrf.mxu0
        %v9870 = vadd.f32 0.0, %v9869
        %v9871 = vpop.f32.mrf.mxu0
        %v9872 = vpop.f32.mrf.mxu0
        %v9873 = vadd.f32 0.0, %v9872
        %v9874 = vpop.f32.mrf.mxu0
        %9875 = vmatprep.mubr.bf16.mxu0 0
        %9876 = vmatmul.mubr.bf16.gmra.mxu0 %v9429
        %v9877 = vpop.f32.mrf.mxu0
        %v9878 = vadd.f32 0.0, %v9877
        %v9879 = vpop.f32.mrf.mxu0
        %v9880 = vpop.f32.mrf.mxu0
        %v9881 = vadd.f32 0.0, %v9880
        %v9882 = vpop.f32.mrf.mxu0
        %9883 = vmatprep.mubr.bf16.mxu0 0
        %9884 = vmatmul.mubr.bf16.gmra.mxu0 %v9431
        %v9885 = vpop.f32.mrf.mxu0
        %v9886 = vadd.f32 0.0, %v9885
        %v9887 = vpop.f32.mrf.mxu0
        %v9888 = vpop.f32.mrf.mxu0
        %v9889 = vadd.f32 0.0, %v9888
        %v9890 = vpop.f32.mrf.mxu0
        %9891 = vmatprep.mubr.bf16.mxu0 0
        %9892 = vmatmul.mubr.bf16.gmra.mxu0 %v9433
        %v9893 = vpop.f32.mrf.mxu0
        %v9894 = vadd.f32 0.0, %v9893
        %v9895 = vpop.f32.mrf.mxu0
        %v9896 = vpop.f32.mrf.mxu0
        %v9897 = vadd.f32 0.0, %v9896
        %v9898 = vpop.f32.mrf.mxu0
        %9899 = vmatprep.mubr.bf16.mxu0 0
        %9900 = vmatmul.mubr.bf16.gmra.mxu0 %v9435
        %v9901 = vpop.f32.mrf.mxu0
        %v9902 = vadd.f32 0.0, %v9901
        %v9903 = vpop.f32.mrf.mxu0
        %v9904 = vpop.f32.mrf.mxu0
        %v9905 = vadd.f32 0.0, %v9904
        %v9906 = vpop.f32.mrf.mxu0
        %9907 = vmatprep.mubr.bf16.mxu0 0
        %9908 = vmatmul.mubr.bf16.gmra.mxu0 %v9437
        %v9909 = vpop.f32.mrf.mxu0
        %v9910 = vadd.f32 0.0, %v9909
        %v9911 = vpop.f32.mrf.mxu0
        %v9912 = vpop.f32.mrf.mxu0
        %v9913 = vadd.f32 0.0, %v9912
        %v9914 = vpop.f32.mrf.mxu0
        %9915 = vmatprep.mubr.bf16.mxu0 0
        %9916 = vmatmul.mubr.bf16.gmra.mxu0 %v9439
        %v9917 = vpop.f32.mrf.mxu0
        %v9918 = vadd.f32 0.0, %v9917
        %v9919 = vpop.f32.mrf.mxu0
        %v9920 = vpop.f32.mrf.mxu0
        %v9921 = vadd.f32 0.0, %v9920
        %v9922 = vpop.f32.mrf.mxu0
        %9923 = vmatprep.mubr.bf16.mxu0 0
        %9924 = vmatmul.mubr.bf16.gmra.mxu0 %v9441
        %v9925 = vpop.f32.mrf.mxu0
        %v9926 = vadd.f32 0.0, %v9925
        %v9927 = vpop.f32.mrf.mxu0
        %v9928 = vpop.f32.mrf.mxu0
        %v9929 = vadd.f32 0.0, %v9928
        %v9930 = vpop.f32.mrf.mxu0
        %9931 = vmatprep.mubr.bf16.mxu0 0
        %9932 = vmatmul.mubr.bf16.gmra.mxu0 %v9443
        %v9933 = vpop.f32.mrf.mxu0
        %v9934 = vadd.f32 0.0, %v9933
        %v9935 = vpop.f32.mrf.mxu0
        %v9936 = vpop.f32.mrf.mxu0
        %v9937 = vadd.f32 0.0, %v9936
        %v9938 = vpop.f32.mrf.mxu0
        %9939 = vmatprep.mubr.bf16.mxu0 0
        %9940 = vmatmul.mubr.bf16.gmra.mxu0 %v9445
        %v9941 = vpop.f32.mrf.mxu0
        %v9942 = vadd.f32 0.0, %v9941
        %v9943 = vpop.f32.mrf.mxu0
        %v9944 = vpop.f32.mrf.mxu0
        %v9945 = vadd.f32 0.0, %v9944
        %v9946 = vpop.f32.mrf.mxu0
        %9947 = vmatprep.mubr.bf16.mxu0 0
        %9948 = vmatmul.mubr.bf16.gmra.mxu0 %v9447
        %v9949 = vpop.f32.mrf.mxu0
        %v9950 = vadd.f32 0.0, %v9949
        %v9951 = vpop.f32.mrf.mxu0
        %v9952 = vpop.f32.mrf.mxu0
        %v9953 = vadd.f32 0.0, %v9952
        %v9954 = vpop.f32.mrf.mxu0
        %9955 = vmatprep.mubr.bf16.mxu0 0
        %9956 = vmatmul.mubr.bf16.gmra.mxu0 %v9449
        %v9957 = vpop.f32.mrf.mxu0
        %v9958 = vadd.f32 0.0, %v9957
        %v9959 = vpop.f32.mrf.mxu0
        %v9960 = vpop.f32.mrf.mxu0
        %v9961 = vadd.f32 0.0, %v9960
        %v9962 = vpop.f32.mrf.mxu0
        %9963 = vmatprep.mubr.bf16.mxu0 0
        %9964 = vmatmul.mubr.bf16.gmra.mxu0 %v9451
        %v9965 = vpop.f32.mrf.mxu0
        %v9966 = vadd.f32 0.0, %v9965
        %v9967 = vpop.f32.mrf.mxu0
        %v9968 = vpop.f32.mrf.mxu0
        %v9969 = vadd.f32 0.0, %v9968
        %v9970 = vpop.f32.mrf.mxu0
        %9971 = vmatprep.mubr.bf16.mxu0 0
        %9972 = vmatmul.mubr.bf16.gmra.mxu0 %v9453
        %v9973 = vpop.f32.mrf.mxu0
        %v9974 = vadd.f32 0.0, %v9973
        %v9975 = vpop.f32.mrf.mxu0
        %v9976 = vpop.f32.mrf.mxu0
        %v9977 = vadd.f32 0.0, %v9976
        %v9978 = vpop.f32.mrf.mxu0
        %9979 = vmatprep.mubr.bf16.mxu0 0
        %9980 = vmatmul.mubr.bf16.gmra.mxu0 %v9455
        %v9981 = vpop.f32.mrf.mxu0
        %v9982 = vadd.f32 0.0, %v9981
        %v9983 = vpop.f32.mrf.mxu0
        %v9984 = vpop.f32.mrf.mxu0
        %v9985 = vadd.f32 0.0, %v9984
        %v9986 = vpop.f32.mrf.mxu0
        %9987 = vmatprep.mubr.bf16.mxu0 0
        %9988 = vmatmul.mubr.bf16.gmra.mxu0 %v9457
        %v9989 = vpop.f32.mrf.mxu0
        %v9990 = vadd.f32 0.0, %v9989
        %v9991 = vpop.f32.mrf.mxu0
        %v9992 = vpop.f32.mrf.mxu0
        %v9993 = vadd.f32 0.0, %v9992
        %v9994 = vpop.f32.mrf.mxu0
        %9995 = vmatprep.mubr.bf16.mxu0 0
        %9996 = vmatmul.mubr.bf16.gmra.mxu0 %v9459
        %v9997 = vpop.f32.mrf.mxu0
        %v9998 = vadd.f32 0.0, %v9997
        %v9999 = vpop.f32.mrf.mxu0
        %v10000 = vpop.f32.mrf.mxu0
        %v10001 = vadd.f32 0.0, %v10000
        %v10002 = vpop.f32.mrf.mxu0
        %10003 = vmatprep.mubr.bf16.mxu0 0
        %10004 = vmatmul.mubr.bf16.gmra.mxu0 %v9461
        %v10005 = vpop.f32.mrf.mxu0
        %v10006 = vadd.f32 0.0, %v10005
        %v10007 = vpop.f32.mrf.mxu0
        %v10008 = vpop.f32.mrf.mxu0
        %v10009 = vadd.f32 0.0, %v10008
        %v10010 = vpop.f32.mrf.mxu0
        %10011 = vdwg.mxu0
        %v10017 = vunpack.c.l.b16 %v4471
        %v10018 = vunpack.c.l.b16 %v4472
        %v10019 = vunpack.c.l.b16 %v4473
        %v10020 = vunpack.c.l.b16 %v4474
        %v10021 = vunpack.c.l.b16 %v4475
        %v10022 = vpack.c.b16 %v10018, %v10017
        %v10023 = vpack.c.b16 %v10020, %v10019
        %v10024 = vpack.c.b16 %v10021, %v10021
        %v10027 = vsel %vm9334, %v4344, 0
        %v10029 = vsel %vm9334, %v4346, 0
        %v10031 = vsel %vm9334, %v4348, 0
        %v10033 = vsel %vm9334, %v4350, 0
        %v10035 = vsel %vm9334, %v4352, 0
        %v10037 = vsel %vm9334, %v4354, 0
        %v10039 = vsel %vm9334, %v4356, 0
        %v10041 = vsel %vm9334, %v4358, 0
        %v10043 = vsel %vm9334, %v4360, 0
        %v10045 = vsel %vm9334, %v4362, 0
        %v10047 = vsel %vm9334, %v4364, 0
        %v10049 = vsel %vm9334, %v4366, 0
        %v10051 = vsel %vm9334, %v4368, 0
        %v10053 = vsel %vm9334, %v4370, 0
        %v10055 = vsel %vm9334, %v4372, 0
        %v10057 = vsel %vm9334, %v4374, 0
        %v10059 = vsel %vm9334, %v4376, 0
        %v10061 = vsel %vm9334, %v4378, 0
        %v10063 = vsel %vm9334, %v4380, 0
        %v10065 = vsel %vm9334, %v4382, 0
        %v10067 = vsel %vm9334, %v4384, 0
        %v10069 = vsel %vm9334, %v4386, 0
        %v10071 = vsel %vm9334, %v4388, 0
        %v10073 = vsel %vm9334, %v4390, 0
        %v10075 = vsel %vm9334, %v4392, 0
        %v10077 = vsel %vm9334, %v4394, 0
        %v10079 = vsel %vm9334, %v4396, 0
        %v10081 = vsel %vm9334, %v4398, 0
        %v10083 = vsel %vm9334, %v4400, 0
        %v10085 = vsel %vm9334, %v4402, 0
        %v10087 = vsel %vm9334, %v4404, 0
        %v10089 = vsel %vm9334, %v4406, 0
        %v10091 = vsel %vm9334, %v4408, 0
        %v10093 = vsel %vm9334, %v4410, 0
        %v10095 = vsel %vm9334, %v4412, 0
        %v10097 = vsel %vm9334, %v4414, 0
        %v10099 = vsel %vm9334, %v4416, 0
        %v10101 = vsel %vm9334, %v4418, 0
        %v10103 = vsel %vm9334, %v4420, 0
        %v10105 = vsel %vm9334, %v4422, 0
        %v10107 = vsel %vm9334, %v4424, 0
        %v10109 = vsel %vm9334, %v4426, 0
        %v10111 = vsel %vm9334, %v4428, 0
        %v10113 = vsel %vm9334, %v4430, 0
        %v10115 = vsel %vm9334, %v4432, 0
        %v10117 = vsel %vm9334, %v4434, 0
        %v10119 = vsel %vm9334, %v4436, 0
        %v10121 = vsel %vm9334, %v4438, 0
        %v10123 = vsel %vm9334, %v4440, 0
        %v10125 = vsel %vm9334, %v4442, 0
        %v10127 = vsel %vm9334, %v4444, 0
        %v10129 = vsel %vm9334, %v4446, 0
        %v10131 = vsel %vm9334, %v4448, 0
        %v10133 = vsel %vm9334, %v4450, 0
        %v10135 = vsel %vm9334, %v4452, 0
        %v10137 = vsel %vm9334, %v4454, 0
        %v10139 = vsel %vm9334, %v4456, 0
        %v10141 = vsel %vm9334, %v4458, 0
        %v10143 = vsel %vm9334, %v4460, 0
        %v10145 = vsel %vm9334, %v4462, 0
        %v10147 = vsel %vm9334, %v4464, 0
        %v10149 = vsel %vm9334, %v4466, 0
        %v10151 = vsel %vm9334, %v4468, 0
        %v10153 = vsel %vm9334, %v4470, 0
        %v10156 = vsel %vm9463, %v10024, 0
        %10158 = vmatprep.subr.bf16.mxu0 0
        %10159 = vmatpush1.bf16.msra.mxu0 0
        %10160 = vmatprep.subr.bf16.mxu0 0
        %10161 = vmatpush1.bf16.msra.mxu0 0
        %10162 = vmatprep.subr.bf16.mxu0 0
        %10163 = vmatpush1.bf16.msra.mxu0 0
        %10164 = vmatprep.subr.bf16.mxu0 0
        %10165 = vmatpush1.bf16.msra.mxu0 0
        %10166 = vmatprep.subr.bf16.mxu0 0
        %10167 = vmatpush1.bf16.msra.mxu0 0
        %10168 = vmatprep.subr.bf16.mxu0 0
        %10169 = vmatpush1.bf16.msra.mxu0 %v10156
        %10170 = vmatprep.subr.bf16.mxu0 0
        %10171 = vmatpush1.bf16.msra.mxu0 %v10023
        %10172 = vmatprep.subr.bf16.mxu0 0
        %10173 = vmatpush1.bf16.msra.mxu0 %v10022
        %10174 = vmatprep.subr.bf16.mxu0 0
        %10175 = vmatpush2.bf16.msra.mxu0 0
        %10176 = vmatprep.subr.bf16.mxu0 0
        %10177 = vmatpush2.bf16.msra.mxu0 0
        %10178 = vmatprep.subr.bf16.mxu0 0
        %10179 = vmatpush2.bf16.msra.mxu0 0
        %10180 = vmatprep.subr.bf16.mxu0 0
        %10181 = vmatpush2.bf16.msra.mxu0 0
        %10182 = vmatprep.subr.bf16.mxu0 0
        %10183 = vmatpush2.bf16.msra.mxu0 0
        %10184 = vmatprep.subr.bf16.mxu0 0
        %10185 = vmatpush2.bf16.msra.mxu0 0
        %10186 = vmatprep.subr.bf16.mxu0 0
        %10187 = vmatpush2.bf16.msra.mxu0 0
        %10188 = vmatprep.subr.bf16.mxu0 0
        %10189 = vmatpush2.bf16.msra.mxu0 0
        %10190 = vmatprep.mubr.bf16.mxu0 0
        %10191 = vmatmul.mubr.bf16.gmra.mxu0 %v10027
        %v10192 = vpop.f32.mrf.mxu0
        %v10193 = vadd.f32 %v9502, %v10192
        %v10194 = vpop.f32.mrf.mxu0
        %v10195 = vpop.f32.mrf.mxu0
        %v10196 = vadd.f32 %v9505, %v10195
        %v10197 = vpop.f32.mrf.mxu0
        %10198 = vmatprep.mubr.bf16.mxu0 0
        %10199 = vmatmul.mubr.bf16.gmra.mxu0 %v10029
        %v10200 = vpop.f32.mrf.mxu0
        %v10201 = vadd.f32 %v9510, %v10200
        %v10202 = vpop.f32.mrf.mxu0
        %v10203 = vpop.f32.mrf.mxu0
        %v10204 = vadd.f32 %v9513, %v10203
        %v10205 = vpop.f32.mrf.mxu0
        %10206 = vmatprep.mubr.bf16.mxu0 0
        %10207 = vmatmul.mubr.bf16.gmra.mxu0 %v10031
        %v10208 = vpop.f32.mrf.mxu0
        %v10209 = vadd.f32 %v9518, %v10208
        %v10210 = vpop.f32.mrf.mxu0
        %v10211 = vpop.f32.mrf.mxu0
        %v10212 = vadd.f32 %v9521, %v10211
        %v10213 = vpop.f32.mrf.mxu0
        %10214 = vmatprep.mubr.bf16.mxu0 0
        %10215 = vmatmul.mubr.bf16.gmra.mxu0 %v10033
        %v10216 = vpop.f32.mrf.mxu0
        %v10217 = vadd.f32 %v9526, %v10216
        %v10218 = vpop.f32.mrf.mxu0
        %v10219 = vpop.f32.mrf.mxu0
        %v10220 = vadd.f32 %v9529, %v10219
        %v10221 = vpop.f32.mrf.mxu0
        %10222 = vmatprep.mubr.bf16.mxu0 0
        %10223 = vmatmul.mubr.bf16.gmra.mxu0 %v10035
        %v10224 = vpop.f32.mrf.mxu0
        %v10225 = vadd.f32 %v9534, %v10224
        %v10226 = vpop.f32.mrf.mxu0
        %v10227 = vpop.f32.mrf.mxu0
        %v10228 = vadd.f32 %v9537, %v10227
        %v10229 = vpop.f32.mrf.mxu0
        %10230 = vmatprep.mubr.bf16.mxu0 0
        %10231 = vmatmul.mubr.bf16.gmra.mxu0 %v10037
        %v10232 = vpop.f32.mrf.mxu0
        %v10233 = vadd.f32 %v9542, %v10232
        %v10234 = vpop.f32.mrf.mxu0
        %v10235 = vpop.f32.mrf.mxu0
        %v10236 = vadd.f32 %v9545, %v10235
        %v10237 = vpop.f32.mrf.mxu0
        %10238 = vmatprep.mubr.bf16.mxu0 0
        %10239 = vmatmul.mubr.bf16.gmra.mxu0 %v10039
        %v10240 = vpop.f32.mrf.mxu0
        %v10241 = vadd.f32 %v9550, %v10240
        %v10242 = vpop.f32.mrf.mxu0
        %v10243 = vpop.f32.mrf.mxu0
        %v10244 = vadd.f32 %v9553, %v10243
        %v10245 = vpop.f32.mrf.mxu0
        %10246 = vmatprep.mubr.bf16.mxu0 0
        %10247 = vmatmul.mubr.bf16.gmra.mxu0 %v10041
        %v10248 = vpop.f32.mrf.mxu0
        %v10249 = vadd.f32 %v9558, %v10248
        %v10250 = vpop.f32.mrf.mxu0
        %v10251 = vpop.f32.mrf.mxu0
        %v10252 = vadd.f32 %v9561, %v10251
        %v10253 = vpop.f32.mrf.mxu0
        %10254 = vmatprep.mubr.bf16.mxu0 0
        %10255 = vmatmul.mubr.bf16.gmra.mxu0 %v10043
        %v10256 = vpop.f32.mrf.mxu0
        %v10257 = vadd.f32 %v9566, %v10256
        %v10258 = vpop.f32.mrf.mxu0
        %v10259 = vpop.f32.mrf.mxu0
        %v10260 = vadd.f32 %v9569, %v10259
        %v10261 = vpop.f32.mrf.mxu0
        %10262 = vmatprep.mubr.bf16.mxu0 0
        %10263 = vmatmul.mubr.bf16.gmra.mxu0 %v10045
        %v10264 = vpop.f32.mrf.mxu0
        %v10265 = vadd.f32 %v9574, %v10264
        %v10266 = vpop.f32.mrf.mxu0
        %v10267 = vpop.f32.mrf.mxu0
        %v10268 = vadd.f32 %v9577, %v10267
        %v10269 = vpop.f32.mrf.mxu0
        %10270 = vmatprep.mubr.bf16.mxu0 0
        %10271 = vmatmul.mubr.bf16.gmra.mxu0 %v10047
        %v10272 = vpop.f32.mrf.mxu0
        %v10273 = vadd.f32 %v9582, %v10272
        %v10274 = vpop.f32.mrf.mxu0
        %v10275 = vpop.f32.mrf.mxu0
        %v10276 = vadd.f32 %v9585, %v10275
        %v10277 = vpop.f32.mrf.mxu0
        %10278 = vmatprep.mubr.bf16.mxu0 0
        %10279 = vmatmul.mubr.bf16.gmra.mxu0 %v10049
        %v10280 = vpop.f32.mrf.mxu0
        %v10281 = vadd.f32 %v9590, %v10280
        %v10282 = vpop.f32.mrf.mxu0
        %v10283 = vpop.f32.mrf.mxu0
        %v10284 = vadd.f32 %v9593, %v10283
        %v10285 = vpop.f32.mrf.mxu0
        %10286 = vmatprep.mubr.bf16.mxu0 0
        %10287 = vmatmul.mubr.bf16.gmra.mxu0 %v10051
        %v10288 = vpop.f32.mrf.mxu0
        %v10289 = vadd.f32 %v9598, %v10288
        %v10290 = vpop.f32.mrf.mxu0
        %v10291 = vpop.f32.mrf.mxu0
        %v10292 = vadd.f32 %v9601, %v10291
        %v10293 = vpop.f32.mrf.mxu0
        %10294 = vmatprep.mubr.bf16.mxu0 0
        %10295 = vmatmul.mubr.bf16.gmra.mxu0 %v10053
        %v10296 = vpop.f32.mrf.mxu0
        %v10297 = vadd.f32 %v9606, %v10296
        %v10298 = vpop.f32.mrf.mxu0
        %v10299 = vpop.f32.mrf.mxu0
        %v10300 = vadd.f32 %v9609, %v10299
        %v10301 = vpop.f32.mrf.mxu0
        %10302 = vmatprep.mubr.bf16.mxu0 0
        %10303 = vmatmul.mubr.bf16.gmra.mxu0 %v10055
        %v10304 = vpop.f32.mrf.mxu0
        %v10305 = vadd.f32 %v9614, %v10304
        %v10306 = vpop.f32.mrf.mxu0
        %v10307 = vpop.f32.mrf.mxu0
        %v10308 = vadd.f32 %v9617, %v10307
        %v10309 = vpop.f32.mrf.mxu0
        %10310 = vmatprep.mubr.bf16.mxu0 0
        %10311 = vmatmul.mubr.bf16.gmra.mxu0 %v10057
        %v10312 = vpop.f32.mrf.mxu0
        %v10313 = vadd.f32 %v9622, %v10312
        %v10314 = vpop.f32.mrf.mxu0
        %v10315 = vpop.f32.mrf.mxu0
        %v10316 = vadd.f32 %v9625, %v10315
        %v10317 = vpop.f32.mrf.mxu0
        %10318 = vmatprep.mubr.bf16.mxu0 0
        %10319 = vmatmul.mubr.bf16.gmra.mxu0 %v10059
        %v10320 = vpop.f32.mrf.mxu0
        %v10321 = vadd.f32 %v9630, %v10320
        %v10322 = vpop.f32.mrf.mxu0
        %v10323 = vpop.f32.mrf.mxu0
        %v10324 = vadd.f32 %v9633, %v10323
        %v10325 = vpop.f32.mrf.mxu0
        %10326 = vmatprep.mubr.bf16.mxu0 0
        %10327 = vmatmul.mubr.bf16.gmra.mxu0 %v10061
        %v10328 = vpop.f32.mrf.mxu0
        %v10329 = vadd.f32 %v9638, %v10328
        %v10330 = vpop.f32.mrf.mxu0
        %v10331 = vpop.f32.mrf.mxu0
        %v10332 = vadd.f32 %v9641, %v10331
        %v10333 = vpop.f32.mrf.mxu0
        %10334 = vmatprep.mubr.bf16.mxu0 0
        %10335 = vmatmul.mubr.bf16.gmra.mxu0 %v10063
        %v10336 = vpop.f32.mrf.mxu0
        %v10337 = vadd.f32 %v9646, %v10336
        %v10338 = vpop.f32.mrf.mxu0
        %v10339 = vpop.f32.mrf.mxu0
        %v10340 = vadd.f32 %v9649, %v10339
        %v10341 = vpop.f32.mrf.mxu0
        %10342 = vmatprep.mubr.bf16.mxu0 0
        %10343 = vmatmul.mubr.bf16.gmra.mxu0 %v10065
        %v10344 = vpop.f32.mrf.mxu0
        %v10345 = vadd.f32 %v9654, %v10344
        %v10346 = vpop.f32.mrf.mxu0
        %v10347 = vpop.f32.mrf.mxu0
        %v10348 = vadd.f32 %v9657, %v10347
        %v10349 = vpop.f32.mrf.mxu0
        %10350 = vmatprep.mubr.bf16.mxu0 0
        %10351 = vmatmul.mubr.bf16.gmra.mxu0 %v10067
        %v10352 = vpop.f32.mrf.mxu0
        %v10353 = vadd.f32 %v9662, %v10352
        %v10354 = vpop.f32.mrf.mxu0
        %v10355 = vpop.f32.mrf.mxu0
        %v10356 = vadd.f32 %v9665, %v10355
        %v10357 = vpop.f32.mrf.mxu0
        %10358 = vmatprep.mubr.bf16.mxu0 0
        %10359 = vmatmul.mubr.bf16.gmra.mxu0 %v10069
        %v10360 = vpop.f32.mrf.mxu0
        %v10361 = vadd.f32 %v9670, %v10360
        %v10362 = vpop.f32.mrf.mxu0
        %v10363 = vpop.f32.mrf.mxu0
        %v10364 = vadd.f32 %v9673, %v10363
        %v10365 = vpop.f32.mrf.mxu0
        %10366 = vmatprep.mubr.bf16.mxu0 0
        %10367 = vmatmul.mubr.bf16.gmra.mxu0 %v10071
        %v10368 = vpop.f32.mrf.mxu0
        %v10369 = vadd.f32 %v9678, %v10368
        %v10370 = vpop.f32.mrf.mxu0
        %v10371 = vpop.f32.mrf.mxu0
        %v10372 = vadd.f32 %v9681, %v10371
        %v10373 = vpop.f32.mrf.mxu0
        %10374 = vmatprep.mubr.bf16.mxu0 0
        %10375 = vmatmul.mubr.bf16.gmra.mxu0 %v10073
        %v10376 = vpop.f32.mrf.mxu0
        %v10377 = vadd.f32 %v9686, %v10376
        %v10378 = vpop.f32.mrf.mxu0
        %v10379 = vpop.f32.mrf.mxu0
        %v10380 = vadd.f32 %v9689, %v10379
        %v10381 = vpop.f32.mrf.mxu0
        %10382 = vmatprep.mubr.bf16.mxu0 0
        %10383 = vmatmul.mubr.bf16.gmra.mxu0 %v10075
        %v10384 = vpop.f32.mrf.mxu0
        %v10385 = vadd.f32 %v9694, %v10384
        %v10386 = vpop.f32.mrf.mxu0
        %v10387 = vpop.f32.mrf.mxu0
        %v10388 = vadd.f32 %v9697, %v10387
        %v10389 = vpop.f32.mrf.mxu0
        %10390 = vmatprep.mubr.bf16.mxu0 0
        %10391 = vmatmul.mubr.bf16.gmra.mxu0 %v10077
        %v10392 = vpop.f32.mrf.mxu0
        %v10393 = vadd.f32 %v9702, %v10392
        %v10394 = vpop.f32.mrf.mxu0
        %v10395 = vpop.f32.mrf.mxu0
        %v10396 = vadd.f32 %v9705, %v10395
        %v10397 = vpop.f32.mrf.mxu0
        %10398 = vmatprep.mubr.bf16.mxu0 0
        %10399 = vmatmul.mubr.bf16.gmra.mxu0 %v10079
        %v10400 = vpop.f32.mrf.mxu0
        %v10401 = vadd.f32 %v9710, %v10400
        %v10402 = vpop.f32.mrf.mxu0
        %v10403 = vpop.f32.mrf.mxu0
        %v10404 = vadd.f32 %v9713, %v10403
        %v10405 = vpop.f32.mrf.mxu0
        %10406 = vmatprep.mubr.bf16.mxu0 0
        %10407 = vmatmul.mubr.bf16.gmra.mxu0 %v10081
        %v10408 = vpop.f32.mrf.mxu0
        %v10409 = vadd.f32 %v9718, %v10408
        %v10410 = vpop.f32.mrf.mxu0
        %v10411 = vpop.f32.mrf.mxu0
        %v10412 = vadd.f32 %v9721, %v10411
        %v10413 = vpop.f32.mrf.mxu0
        %10414 = vmatprep.mubr.bf16.mxu0 0
        %10415 = vmatmul.mubr.bf16.gmra.mxu0 %v10083
        %v10416 = vpop.f32.mrf.mxu0
        %v10417 = vadd.f32 %v9726, %v10416
        %v10418 = vpop.f32.mrf.mxu0
        %v10419 = vpop.f32.mrf.mxu0
        %v10420 = vadd.f32 %v9729, %v10419
        %v10421 = vpop.f32.mrf.mxu0
        %10422 = vmatprep.mubr.bf16.mxu0 0
        %10423 = vmatmul.mubr.bf16.gmra.mxu0 %v10085
        %v10424 = vpop.f32.mrf.mxu0
        %v10425 = vadd.f32 %v9734, %v10424
        %v10426 = vpop.f32.mrf.mxu0
        %v10427 = vpop.f32.mrf.mxu0
        %v10428 = vadd.f32 %v9737, %v10427
        %v10429 = vpop.f32.mrf.mxu0
        %10430 = vmatprep.mubr.bf16.mxu0 0
        %10431 = vmatmul.mubr.bf16.gmra.mxu0 %v10087
        %v10432 = vpop.f32.mrf.mxu0
        %v10433 = vadd.f32 %v9742, %v10432
        %v10434 = vpop.f32.mrf.mxu0
        %v10435 = vpop.f32.mrf.mxu0
        %v10436 = vadd.f32 %v9745, %v10435
        %v10437 = vpop.f32.mrf.mxu0
        %10438 = vmatprep.mubr.bf16.mxu0 0
        %10439 = vmatmul.mubr.bf16.gmra.mxu0 %v10089
        %v10440 = vpop.f32.mrf.mxu0
        %v10441 = vadd.f32 %v9750, %v10440
        %v10442 = vpop.f32.mrf.mxu0
        %v10443 = vpop.f32.mrf.mxu0
        %v10444 = vadd.f32 %v9753, %v10443
        %v10445 = vpop.f32.mrf.mxu0
        %10446 = vmatprep.mubr.bf16.mxu0 0
        %10447 = vmatmul.mubr.bf16.gmra.mxu0 %v10091
        %v10448 = vpop.f32.mrf.mxu0
        %v10449 = vadd.f32 %v9758, %v10448
        %v10450 = vpop.f32.mrf.mxu0
        %v10451 = vpop.f32.mrf.mxu0
        %v10452 = vadd.f32 %v9761, %v10451
        %v10453 = vpop.f32.mrf.mxu0
        %10454 = vmatprep.mubr.bf16.mxu0 0
        %10455 = vmatmul.mubr.bf16.gmra.mxu0 %v10093
        %v10456 = vpop.f32.mrf.mxu0
        %v10457 = vadd.f32 %v9766, %v10456
        %v10458 = vpop.f32.mrf.mxu0
        %v10459 = vpop.f32.mrf.mxu0
        %v10460 = vadd.f32 %v9769, %v10459
        %v10461 = vpop.f32.mrf.mxu0
        %10462 = vmatprep.mubr.bf16.mxu0 0
        %10463 = vmatmul.mubr.bf16.gmra.mxu0 %v10095
        %v10464 = vpop.f32.mrf.mxu0
        %v10465 = vadd.f32 %v9774, %v10464
        %v10466 = vpop.f32.mrf.mxu0
        %v10467 = vpop.f32.mrf.mxu0
        %v10468 = vadd.f32 %v9777, %v10467
        %v10469 = vpop.f32.mrf.mxu0
        %10470 = vmatprep.mubr.bf16.mxu0 0
        %10471 = vmatmul.mubr.bf16.gmra.mxu0 %v10097
        %v10472 = vpop.f32.mrf.mxu0
        %v10473 = vadd.f32 %v9782, %v10472
        %v10474 = vpop.f32.mrf.mxu0
        %v10475 = vpop.f32.mrf.mxu0
        %v10476 = vadd.f32 %v9785, %v10475
        %v10477 = vpop.f32.mrf.mxu0
        %10478 = vmatprep.mubr.bf16.mxu0 0
        %10479 = vmatmul.mubr.bf16.gmra.mxu0 %v10099
        %v10480 = vpop.f32.mrf.mxu0
        %v10481 = vadd.f32 %v9790, %v10480
        %v10482 = vpop.f32.mrf.mxu0
        %v10483 = vpop.f32.mrf.mxu0
        %v10484 = vadd.f32 %v9793, %v10483
        %v10485 = vpop.f32.mrf.mxu0
        %10486 = vmatprep.mubr.bf16.mxu0 0
        %10487 = vmatmul.mubr.bf16.gmra.mxu0 %v10101
        %v10488 = vpop.f32.mrf.mxu0
        %v10489 = vadd.f32 %v9798, %v10488
        %v10490 = vpop.f32.mrf.mxu0
        %v10491 = vpop.f32.mrf.mxu0
        %v10492 = vadd.f32 %v9801, %v10491
        %v10493 = vpop.f32.mrf.mxu0
        %10494 = vmatprep.mubr.bf16.mxu0 0
        %10495 = vmatmul.mubr.bf16.gmra.mxu0 %v10103
        %v10496 = vpop.f32.mrf.mxu0
        %v10497 = vadd.f32 %v9806, %v10496
        %v10498 = vpop.f32.mrf.mxu0
        %v10499 = vpop.f32.mrf.mxu0
        %v10500 = vadd.f32 %v9809, %v10499
        %v10501 = vpop.f32.mrf.mxu0
        %10502 = vmatprep.mubr.bf16.mxu0 0
        %10503 = vmatmul.mubr.bf16.gmra.mxu0 %v10105
        %v10504 = vpop.f32.mrf.mxu0
        %v10505 = vadd.f32 %v9814, %v10504
        %v10506 = vpop.f32.mrf.mxu0
        %v10507 = vpop.f32.mrf.mxu0
        %v10508 = vadd.f32 %v9817, %v10507
        %v10509 = vpop.f32.mrf.mxu0
        %10510 = vmatprep.mubr.bf16.mxu0 0
        %10511 = vmatmul.mubr.bf16.gmra.mxu0 %v10107
        %v10512 = vpop.f32.mrf.mxu0
        %v10513 = vadd.f32 %v9822, %v10512
        %v10514 = vpop.f32.mrf.mxu0
        %v10515 = vpop.f32.mrf.mxu0
        %v10516 = vadd.f32 %v9825, %v10515
        %v10517 = vpop.f32.mrf.mxu0
        %10518 = vmatprep.mubr.bf16.mxu0 0
        %10519 = vmatmul.mubr.bf16.gmra.mxu0 %v10109
        %v10520 = vpop.f32.mrf.mxu0
        %v10521 = vadd.f32 %v9830, %v10520
        %v10522 = vpop.f32.mrf.mxu0
        %v10523 = vpop.f32.mrf.mxu0
        %v10524 = vadd.f32 %v9833, %v10523
        %v10525 = vpop.f32.mrf.mxu0
        %10526 = vmatprep.mubr.bf16.mxu0 0
        %10527 = vmatmul.mubr.bf16.gmra.mxu0 %v10111
        %v10528 = vpop.f32.mrf.mxu0
        %v10529 = vadd.f32 %v9838, %v10528
        %v10530 = vpop.f32.mrf.mxu0
        %v10531 = vpop.f32.mrf.mxu0
        %v10532 = vadd.f32 %v9841, %v10531
        %v10533 = vpop.f32.mrf.mxu0
        %10534 = vmatprep.mubr.bf16.mxu0 0
        %10535 = vmatmul.mubr.bf16.gmra.mxu0 %v10113
        %v10536 = vpop.f32.mrf.mxu0
        %v10537 = vadd.f32 %v9846, %v10536
        %v10538 = vpop.f32.mrf.mxu0
        %v10539 = vpop.f32.mrf.mxu0
        %v10540 = vadd.f32 %v9849, %v10539
        %v10541 = vpop.f32.mrf.mxu0
        %10542 = vmatprep.mubr.bf16.mxu0 0
        %10543 = vmatmul.mubr.bf16.gmra.mxu0 %v10115
        %v10544 = vpop.f32.mrf.mxu0
        %v10545 = vadd.f32 %v9854, %v10544
        %v10546 = vpop.f32.mrf.mxu0
        %v10547 = vpop.f32.mrf.mxu0
        %v10548 = vadd.f32 %v9857, %v10547
        %v10549 = vpop.f32.mrf.mxu0
        %10550 = vmatprep.mubr.bf16.mxu0 0
        %10551 = vmatmul.mubr.bf16.gmra.mxu0 %v10117
        %v10552 = vpop.f32.mrf.mxu0
        %v10553 = vadd.f32 %v9862, %v10552
        %v10554 = vpop.f32.mrf.mxu0
        %v10555 = vpop.f32.mrf.mxu0
        %v10556 = vadd.f32 %v9865, %v10555
        %v10557 = vpop.f32.mrf.mxu0
        %10558 = vmatprep.mubr.bf16.mxu0 0
        %10559 = vmatmul.mubr.bf16.gmra.mxu0 %v10119
        %v10560 = vpop.f32.mrf.mxu0
        %v10561 = vadd.f32 %v9870, %v10560
        %v10562 = vpop.f32.mrf.mxu0
        %v10563 = vpop.f32.mrf.mxu0
        %v10564 = vadd.f32 %v9873, %v10563
        %v10565 = vpop.f32.mrf.mxu0
        %10566 = vmatprep.mubr.bf16.mxu0 0
        %10567 = vmatmul.mubr.bf16.gmra.mxu0 %v10121
        %v10568 = vpop.f32.mrf.mxu0
        %v10569 = vadd.f32 %v9878, %v10568
        %v10570 = vpop.f32.mrf.mxu0
        %v10571 = vpop.f32.mrf.mxu0
        %v10572 = vadd.f32 %v9881, %v10571
        %v10573 = vpop.f32.mrf.mxu0
        %10574 = vmatprep.mubr.bf16.mxu0 0
        %10575 = vmatmul.mubr.bf16.gmra.mxu0 %v10123
        %v10576 = vpop.f32.mrf.mxu0
        %v10577 = vadd.f32 %v9886, %v10576
        %v10578 = vpop.f32.mrf.mxu0
        %v10579 = vpop.f32.mrf.mxu0
        %v10580 = vadd.f32 %v9889, %v10579
        %v10581 = vpop.f32.mrf.mxu0
        %10582 = vmatprep.mubr.bf16.mxu0 0
        %10583 = vmatmul.mubr.bf16.gmra.mxu0 %v10125
        %v10584 = vpop.f32.mrf.mxu0
        %v10585 = vadd.f32 %v9894, %v10584
        %v10586 = vpop.f32.mrf.mxu0
        %v10587 = vpop.f32.mrf.mxu0
        %v10588 = vadd.f32 %v9897, %v10587
        %v10589 = vpop.f32.mrf.mxu0
        %10590 = vmatprep.mubr.bf16.mxu0 0
        %10591 = vmatmul.mubr.bf16.gmra.mxu0 %v10127
        %v10592 = vpop.f32.mrf.mxu0
        %v10593 = vadd.f32 %v9902, %v10592
        %v10594 = vpop.f32.mrf.mxu0
        %v10595 = vpop.f32.mrf.mxu0
        %v10596 = vadd.f32 %v9905, %v10595
        %v10597 = vpop.f32.mrf.mxu0
        %10598 = vmatprep.mubr.bf16.mxu0 0
        %10599 = vmatmul.mubr.bf16.gmra.mxu0 %v10129
        %v10600 = vpop.f32.mrf.mxu0
        %v10601 = vadd.f32 %v9910, %v10600
        %v10602 = vpop.f32.mrf.mxu0
        %v10603 = vpop.f32.mrf.mxu0
        %v10604 = vadd.f32 %v9913, %v10603
        %v10605 = vpop.f32.mrf.mxu0
        %10606 = vmatprep.mubr.bf16.mxu0 0
        %10607 = vmatmul.mubr.bf16.gmra.mxu0 %v10131
        %v10608 = vpop.f32.mrf.mxu0
        %v10609 = vadd.f32 %v9918, %v10608
        %v10610 = vpop.f32.mrf.mxu0
        %v10611 = vpop.f32.mrf.mxu0
        %v10612 = vadd.f32 %v9921, %v10611
        %v10613 = vpop.f32.mrf.mxu0
        %10614 = vmatprep.mubr.bf16.mxu0 0
        %10615 = vmatmul.mubr.bf16.gmra.mxu0 %v10133
        %v10616 = vpop.f32.mrf.mxu0
        %v10617 = vadd.f32 %v9926, %v10616
        %v10618 = vpop.f32.mrf.mxu0
        %v10619 = vpop.f32.mrf.mxu0
        %v10620 = vadd.f32 %v9929, %v10619
        %v10621 = vpop.f32.mrf.mxu0
        %10622 = vmatprep.mubr.bf16.mxu0 0
        %10623 = vmatmul.mubr.bf16.gmra.mxu0 %v10135
        %v10624 = vpop.f32.mrf.mxu0
        %v10625 = vadd.f32 %v9934, %v10624
        %v10626 = vpop.f32.mrf.mxu0
        %v10627 = vpop.f32.mrf.mxu0
        %v10628 = vadd.f32 %v9937, %v10627
        %v10629 = vpop.f32.mrf.mxu0
        %10630 = vmatprep.mubr.bf16.mxu0 0
        %10631 = vmatmul.mubr.bf16.gmra.mxu0 %v10137
        %v10632 = vpop.f32.mrf.mxu0
        %v10633 = vadd.f32 %v9942, %v10632
        %v10634 = vpop.f32.mrf.mxu0
        %v10635 = vpop.f32.mrf.mxu0
        %v10636 = vadd.f32 %v9945, %v10635
        %v10637 = vpop.f32.mrf.mxu0
        %10638 = vmatprep.mubr.bf16.mxu0 0
        %10639 = vmatmul.mubr.bf16.gmra.mxu0 %v10139
        %v10640 = vpop.f32.mrf.mxu0
        %v10641 = vadd.f32 %v9950, %v10640
        %v10642 = vpop.f32.mrf.mxu0
        %v10643 = vpop.f32.mrf.mxu0
        %v10644 = vadd.f32 %v9953, %v10643
        %v10645 = vpop.f32.mrf.mxu0
        %10646 = vmatprep.mubr.bf16.mxu0 0
        %10647 = vmatmul.mubr.bf16.gmra.mxu0 %v10141
        %v10648 = vpop.f32.mrf.mxu0
        %v10649 = vadd.f32 %v9958, %v10648
        %v10650 = vpop.f32.mrf.mxu0
        %v10651 = vpop.f32.mrf.mxu0
        %v10652 = vadd.f32 %v9961, %v10651
        %v10653 = vpop.f32.mrf.mxu0
        %10654 = vmatprep.mubr.bf16.mxu0 0
        %10655 = vmatmul.mubr.bf16.gmra.mxu0 %v10143
        %v10656 = vpop.f32.mrf.mxu0
        %v10657 = vadd.f32 %v9966, %v10656
        %v10658 = vpop.f32.mrf.mxu0
        %v10659 = vpop.f32.mrf.mxu0
        %v10660 = vadd.f32 %v9969, %v10659
        %v10661 = vpop.f32.mrf.mxu0
        %10662 = vmatprep.mubr.bf16.mxu0 0
        %10663 = vmatmul.mubr.bf16.gmra.mxu0 %v10145
        %v10664 = vpop.f32.mrf.mxu0
        %v10665 = vadd.f32 %v9974, %v10664
        %v10666 = vpop.f32.mrf.mxu0
        %v10667 = vpop.f32.mrf.mxu0
        %v10668 = vadd.f32 %v9977, %v10667
        %v10669 = vpop.f32.mrf.mxu0
        %10670 = vmatprep.mubr.bf16.mxu0 0
        %10671 = vmatmul.mubr.bf16.gmra.mxu0 %v10147
        %v10672 = vpop.f32.mrf.mxu0
        %v10673 = vadd.f32 %v9982, %v10672
        %v10674 = vpop.f32.mrf.mxu0
        %v10675 = vpop.f32.mrf.mxu0
        %v10676 = vadd.f32 %v9985, %v10675
        %v10677 = vpop.f32.mrf.mxu0
        %10678 = vmatprep.mubr.bf16.mxu0 0
        %10679 = vmatmul.mubr.bf16.gmra.mxu0 %v10149
        %v10680 = vpop.f32.mrf.mxu0
        %v10681 = vadd.f32 %v9990, %v10680
        %v10682 = vpop.f32.mrf.mxu0
        %v10683 = vpop.f32.mrf.mxu0
        %v10684 = vadd.f32 %v9993, %v10683
        %v10685 = vpop.f32.mrf.mxu0
        %10686 = vmatprep.mubr.bf16.mxu0 0
        %10687 = vmatmul.mubr.bf16.gmra.mxu0 %v10151
        %v10688 = vpop.f32.mrf.mxu0
        %v10689 = vadd.f32 %v9998, %v10688
        %v10690 = vpop.f32.mrf.mxu0
        %v10691 = vpop.f32.mrf.mxu0
        %v10692 = vadd.f32 %v10001, %v10691
        %v10693 = vpop.f32.mrf.mxu0
        %10694 = vmatprep.mubr.bf16.mxu0 0
        %10695 = vmatmul.mubr.bf16.gmra.mxu0 %v10153
        %v10696 = vpop.f32.mrf.mxu0
        %v10697 = vadd.f32 %v10006, %v10696
        %v10698 = vpop.f32.mrf.mxu0
        %v10699 = vpop.f32.mrf.mxu0
        %v10700 = vadd.f32 %v10009, %v10699
        %v10701 = vpop.f32.mrf.mxu0
        %10702 = vdwg.mxu0
        %v10703 = vld [vmem:[%s7] sm:$0x1]
        %v10705 = vlaneseq
        %v10706 = vshrl.u32 %v10705, 7
        %v10707 = vsub.s32 0, %v10706
        %v10708 = vrot.slane %v10703, %v10707
        %v10710 = vadd.f32 %v10193, %v10708
        %v10711 = vadd.f32 %v10196, %v10708
        %v10712 = vadd.f32 %v10201, %v10708
        %v10713 = vadd.f32 %v10204, %v10708
        %v10714 = vadd.f32 %v10209, %v10708
        %v10715 = vadd.f32 %v10212, %v10708
        %v10716 = vadd.f32 %v10217, %v10708
        %v10717 = vadd.f32 %v10220, %v10708
        %v10718 = vadd.f32 %v10225, %v10708
        %v10719 = vadd.f32 %v10228, %v10708
        %v10720 = vadd.f32 %v10233, %v10708
        %v10721 = vadd.f32 %v10236, %v10708
        %v10722 = vadd.f32 %v10241, %v10708
        %v10723 = vadd.f32 %v10244, %v10708
        %v10724 = vadd.f32 %v10249, %v10708
        %v10725 = vadd.f32 %v10252, %v10708
        %v10726 = vadd.f32 %v10257, %v10708
        %v10727 = vadd.f32 %v10260, %v10708
        %v10728 = vadd.f32 %v10265, %v10708
        %v10729 = vadd.f32 %v10268, %v10708
        %v10730 = vadd.f32 %v10273, %v10708
        %v10731 = vadd.f32 %v10276, %v10708
        %v10732 = vadd.f32 %v10281, %v10708
        %v10733 = vadd.f32 %v10284, %v10708
        %v10734 = vadd.f32 %v10289, %v10708
        %v10735 = vadd.f32 %v10292, %v10708
        %v10736 = vadd.f32 %v10297, %v10708
        %v10737 = vadd.f32 %v10300, %v10708
        %v10738 = vadd.f32 %v10305, %v10708
        %v10739 = vadd.f32 %v10308, %v10708
        %v10740 = vadd.f32 %v10313, %v10708
        %v10741 = vadd.f32 %v10316, %v10708
        %v10742 = vadd.f32 %v10321, %v10708
        %v10743 = vadd.f32 %v10324, %v10708
        %v10744 = vadd.f32 %v10329, %v10708
        %v10745 = vadd.f32 %v10332, %v10708
        %v10746 = vadd.f32 %v10337, %v10708
        %v10747 = vadd.f32 %v10340, %v10708
        %v10748 = vadd.f32 %v10345, %v10708
        %v10749 = vadd.f32 %v10348, %v10708
        %v10750 = vadd.f32 %v10353, %v10708
        %v10751 = vadd.f32 %v10356, %v10708
        %v10752 = vadd.f32 %v10361, %v10708
        %v10753 = vadd.f32 %v10364, %v10708
        %v10754 = vadd.f32 %v10369, %v10708
        %v10755 = vadd.f32 %v10372, %v10708
        %v10756 = vadd.f32 %v10377, %v10708
        %v10757 = vadd.f32 %v10380, %v10708
        %v10758 = vadd.f32 %v10385, %v10708
        %v10759 = vadd.f32 %v10388, %v10708
        %v10760 = vadd.f32 %v10393, %v10708
        %v10761 = vadd.f32 %v10396, %v10708
        %v10762 = vadd.f32 %v10401, %v10708
        %v10763 = vadd.f32 %v10404, %v10708
        %v10764 = vadd.f32 %v10409, %v10708
        %v10765 = vadd.f32 %v10412, %v10708
        %v10766 = vadd.f32 %v10417, %v10708
        %v10767 = vadd.f32 %v10420, %v10708
        %v10768 = vadd.f32 %v10425, %v10708
        %v10769 = vadd.f32 %v10428, %v10708
        %v10770 = vadd.f32 %v10433, %v10708
        %v10771 = vadd.f32 %v10436, %v10708
        %v10772 = vadd.f32 %v10441, %v10708
        %v10773 = vadd.f32 %v10444, %v10708
        %v10774 = vadd.f32 %v10449, %v10708
        %v10775 = vadd.f32 %v10452, %v10708
        %v10776 = vadd.f32 %v10457, %v10708
        %v10777 = vadd.f32 %v10460, %v10708
        %v10778 = vadd.f32 %v10465, %v10708
        %v10779 = vadd.f32 %v10468, %v10708
        %v10780 = vadd.f32 %v10473, %v10708
        %v10781 = vadd.f32 %v10476, %v10708
        %v10782 = vadd.f32 %v10481, %v10708
        %v10783 = vadd.f32 %v10484, %v10708
        %v10784 = vadd.f32 %v10489, %v10708
        %v10785 = vadd.f32 %v10492, %v10708
        %v10786 = vadd.f32 %v10497, %v10708
        %v10787 = vadd.f32 %v10500, %v10708
        %v10788 = vadd.f32 %v10505, %v10708
        %v10789 = vadd.f32 %v10508, %v10708
        %v10790 = vadd.f32 %v10513, %v10708
        %v10791 = vadd.f32 %v10516, %v10708
        %v10792 = vadd.f32 %v10521, %v10708
        %v10793 = vadd.f32 %v10524, %v10708
        %v10794 = vadd.f32 %v10529, %v10708
        %v10795 = vadd.f32 %v10532, %v10708
        %v10796 = vadd.f32 %v10537, %v10708
        %v10797 = vadd.f32 %v10540, %v10708
        %v10798 = vadd.f32 %v10545, %v10708
        %v10799 = vadd.f32 %v10548, %v10708
        %v10800 = vadd.f32 %v10553, %v10708
        %v10801 = vadd.f32 %v10556, %v10708
        %v10802 = vadd.f32 %v10561, %v10708
        %v10803 = vadd.f32 %v10564, %v10708
        %v10804 = vadd.f32 %v10569, %v10708
        %v10805 = vadd.f32 %v10572, %v10708
        %v10806 = vadd.f32 %v10577, %v10708
        %v10807 = vadd.f32 %v10580, %v10708
        %v10808 = vadd.f32 %v10585, %v10708
        %v10809 = vadd.f32 %v10588, %v10708
        %v10810 = vadd.f32 %v10593, %v10708
        %v10811 = vadd.f32 %v10596, %v10708
        %v10812 = vadd.f32 %v10601, %v10708
        %v10813 = vadd.f32 %v10604, %v10708
        %v10814 = vadd.f32 %v10609, %v10708
        %v10815 = vadd.f32 %v10612, %v10708
        %v10816 = vadd.f32 %v10617, %v10708
        %v10817 = vadd.f32 %v10620, %v10708
        %v10818 = vadd.f32 %v10625, %v10708
        %v10819 = vadd.f32 %v10628, %v10708
        %v10820 = vadd.f32 %v10633, %v10708
        %v10821 = vadd.f32 %v10636, %v10708
        %v10822 = vadd.f32 %v10641, %v10708
        %v10823 = vadd.f32 %v10644, %v10708
        %v10824 = vadd.f32 %v10649, %v10708
        %v10825 = vadd.f32 %v10652, %v10708
        %v10826 = vadd.f32 %v10657, %v10708
        %v10827 = vadd.f32 %v10660, %v10708
        %v10828 = vadd.f32 %v10665, %v10708
        %v10829 = vadd.f32 %v10668, %v10708
        %v10830 = vadd.f32 %v10673, %v10708
        %v10831 = vadd.f32 %v10676, %v10708
        %v10832 = vadd.f32 %v10681, %v10708
        %v10833 = vadd.f32 %v10684, %v10708
        %v10834 = vadd.f32 %v10689, %v10708
        %v10835 = vadd.f32 %v10692, %v10708
        %v10836 = vadd.f32 %v10697, %v10708
        %v10837 = vadd.f32 %v10700, %v10708
        %v10838 = vld [vmem:[#allocation2] sm:$0x1]
        %v10839 = vsel %vm3568, %v10710, 0.0
        %v10840 = vsel %vm3568, %v10711, 0.0
        %v10841 = vadd.f32 %v10839, %v10840
        %v10842 = vsel %vm3568, %v10712, 0.0
        %v10843 = vadd.f32 %v10841, %v10842
        %v10844 = vsel %vm3568, %v10713, 0.0
        %v10845 = vadd.f32 %v10843, %v10844
        %v10846 = vsel %vm3568, %v10714, 0.0
        %v10847 = vadd.f32 %v10845, %v10846
        %v10848 = vsel %vm3568, %v10715, 0.0
        %v10849 = vadd.f32 %v10847, %v10848
        %v10850 = vsel %vm3568, %v10716, 0.0
        %v10851 = vadd.f32 %v10849, %v10850
        %v10852 = vsel %vm3568, %v10717, 0.0
        %v10853 = vadd.f32 %v10851, %v10852
        %v10854 = vsel %vm3568, %v10718, 0.0
        %v10855 = vadd.f32 %v10853, %v10854
        %v10856 = vsel %vm3568, %v10719, 0.0
        %v10857 = vadd.f32 %v10855, %v10856
        %v10858 = vsel %vm3568, %v10720, 0.0
        %v10859 = vadd.f32 %v10857, %v10858
        %v10860 = vsel %vm3568, %v10721, 0.0
        %v10861 = vadd.f32 %v10859, %v10860
        %v10862 = vsel %vm3568, %v10722, 0.0
        %v10863 = vadd.f32 %v10861, %v10862
        %v10864 = vsel %vm3568, %v10723, 0.0
        %v10865 = vadd.f32 %v10863, %v10864
        %v10866 = vsel %vm3568, %v10724, 0.0
        %v10867 = vadd.f32 %v10865, %v10866
        %v10868 = vsel %vm3568, %v10725, 0.0
        %v10869 = vadd.f32 %v10867, %v10868
        %v10870 = vsel %vm3568, %v10726, 0.0
        %v10871 = vadd.f32 %v10869, %v10870
        %v10872 = vsel %vm3568, %v10727, 0.0
        %v10873 = vadd.f32 %v10871, %v10872
        %v10874 = vsel %vm3568, %v10728, 0.0
        %v10875 = vadd.f32 %v10873, %v10874
        %v10876 = vsel %vm3568, %v10729, 0.0
        %v10877 = vadd.f32 %v10875, %v10876
        %v10878 = vsel %vm3568, %v10730, 0.0
        %v10879 = vadd.f32 %v10877, %v10878
        %v10880 = vsel %vm3568, %v10731, 0.0
        %v10881 = vadd.f32 %v10879, %v10880
        %v10882 = vsel %vm3568, %v10732, 0.0
        %v10883 = vadd.f32 %v10881, %v10882
        %v10884 = vsel %vm3568, %v10733, 0.0
        %v10885 = vadd.f32 %v10883, %v10884
        %v10886 = vsel %vm3568, %v10734, 0.0
        %v10887 = vadd.f32 %v10885, %v10886
        %v10888 = vsel %vm3568, %v10735, 0.0
        %v10889 = vadd.f32 %v10887, %v10888
        %v10890 = vsel %vm3568, %v10736, 0.0
        %v10891 = vadd.f32 %v10889, %v10890
        %v10892 = vsel %vm3568, %v10737, 0.0
        %v10893 = vadd.f32 %v10891, %v10892
        %v10894 = vsel %vm3568, %v10738, 0.0
        %v10895 = vadd.f32 %v10893, %v10894
        %v10896 = vsel %vm3568, %v10739, 0.0
        %v10897 = vadd.f32 %v10895, %v10896
        %v10898 = vsel %vm3568, %v10740, 0.0
        %v10899 = vadd.f32 %v10897, %v10898
        %v10900 = vsel %vm3568, %v10741, 0.0
        %v10901 = vadd.f32 %v10899, %v10900
        %v10902 = vsel %vm3568, %v10742, 0.0
        %v10903 = vadd.f32 %v10901, %v10902
        %v10904 = vsel %vm3568, %v10743, 0.0
        %v10905 = vadd.f32 %v10903, %v10904
        %v10906 = vsel %vm3568, %v10744, 0.0
        %v10907 = vadd.f32 %v10905, %v10906
        %v10908 = vsel %vm3568, %v10745, 0.0
        %v10909 = vadd.f32 %v10907, %v10908
        %v10910 = vsel %vm3568, %v10746, 0.0
        %v10911 = vadd.f32 %v10909, %v10910
        %v10912 = vsel %vm3568, %v10747, 0.0
        %v10913 = vadd.f32 %v10911, %v10912
        %v10914 = vsel %vm3568, %v10748, 0.0
        %v10915 = vadd.f32 %v10913, %v10914
        %v10916 = vsel %vm3568, %v10749, 0.0
        %v10917 = vadd.f32 %v10915, %v10916
        %v10918 = vsel %vm3568, %v10750, 0.0
        %v10919 = vadd.f32 %v10917, %v10918
        %v10920 = vsel %vm3568, %v10751, 0.0
        %v10921 = vadd.f32 %v10919, %v10920
        %v10922 = vsel %vm3568, %v10752, 0.0
        %v10923 = vadd.f32 %v10921, %v10922
        %v10924 = vsel %vm3568, %v10753, 0.0
        %v10925 = vadd.f32 %v10923, %v10924
        %v10926 = vsel %vm3568, %v10754, 0.0
        %v10927 = vadd.f32 %v10925, %v10926
        %v10928 = vsel %vm3568, %v10755, 0.0
        %v10929 = vadd.f32 %v10927, %v10928
        %v10930 = vsel %vm3568, %v10756, 0.0
        %v10931 = vadd.f32 %v10929, %v10930
        %v10932 = vsel %vm3568, %v10757, 0.0
        %v10933 = vadd.f32 %v10931, %v10932
        %v10934 = vsel %vm3568, %v10758, 0.0
        %v10935 = vadd.f32 %v10933, %v10934
        %v10936 = vsel %vm3568, %v10759, 0.0
        %v10937 = vadd.f32 %v10935, %v10936
        %v10938 = vsel %vm3568, %v10760, 0.0
        %v10939 = vadd.f32 %v10937, %v10938
        %v10940 = vsel %vm3568, %v10761, 0.0
        %v10941 = vadd.f32 %v10939, %v10940
        %v10942 = vsel %vm3568, %v10762, 0.0
        %v10943 = vadd.f32 %v10941, %v10942
        %v10944 = vsel %vm3568, %v10763, 0.0
        %v10945 = vadd.f32 %v10943, %v10944
        %v10946 = vsel %vm3568, %v10764, 0.0
        %v10947 = vadd.f32 %v10945, %v10946
        %v10948 = vsel %vm3568, %v10765, 0.0
        %v10949 = vadd.f32 %v10947, %v10948
        %v10950 = vsel %vm3568, %v10766, 0.0
        %v10951 = vadd.f32 %v10949, %v10950
        %v10952 = vsel %vm3568, %v10767, 0.0
        %v10953 = vadd.f32 %v10951, %v10952
        %v10954 = vsel %vm3568, %v10768, 0.0
        %v10955 = vadd.f32 %v10953, %v10954
        %v10956 = vsel %vm3568, %v10769, 0.0
        %v10957 = vadd.f32 %v10955, %v10956
        %v10958 = vsel %vm3568, %v10770, 0.0
        %v10959 = vadd.f32 %v10957, %v10958
        %v10960 = vsel %vm3568, %v10771, 0.0
        %v10961 = vadd.f32 %v10959, %v10960
        %v10962 = vsel %vm3568, %v10772, 0.0
        %v10963 = vadd.f32 %v10961, %v10962
        %v10964 = vsel %vm3568, %v10773, 0.0
        %v10965 = vadd.f32 %v10963, %v10964
        %v10966 = vsel %vm3568, %v10774, 0.0
        %v10967 = vadd.f32 %v10965, %v10966
        %v10968 = vsel %vm3568, %v10775, 0.0
        %v10969 = vadd.f32 %v10967, %v10968
        %v10970 = vsel %vm3568, %v10776, 0.0
        %v10971 = vadd.f32 %v10969, %v10970
        %v10972 = vsel %vm3568, %v10777, 0.0
        %v10973 = vadd.f32 %v10971, %v10972
        %v10974 = vsel %vm3568, %v10778, 0.0
        %v10975 = vadd.f32 %v10973, %v10974
        %v10976 = vsel %vm3568, %v10779, 0.0
        %v10977 = vadd.f32 %v10975, %v10976
        %v10978 = vsel %vm3568, %v10780, 0.0
        %v10979 = vadd.f32 %v10977, %v10978
        %v10980 = vsel %vm3568, %v10781, 0.0
        %v10981 = vadd.f32 %v10979, %v10980
        %v10982 = vsel %vm3568, %v10782, 0.0
        %v10983 = vadd.f32 %v10981, %v10982
        %v10984 = vsel %vm3568, %v10783, 0.0
        %v10985 = vadd.f32 %v10983, %v10984
        %v10986 = vsel %vm3568, %v10784, 0.0
        %v10987 = vadd.f32 %v10985, %v10986
        %v10988 = vsel %vm3568, %v10785, 0.0
        %v10989 = vadd.f32 %v10987, %v10988
        %v10990 = vsel %vm3568, %v10786, 0.0
        %v10991 = vadd.f32 %v10989, %v10990
        %v10992 = vsel %vm3568, %v10787, 0.0
        %v10993 = vadd.f32 %v10991, %v10992
        %v10994 = vsel %vm3568, %v10788, 0.0
        %v10995 = vadd.f32 %v10993, %v10994
        %v10996 = vsel %vm3568, %v10789, 0.0
        %v10997 = vadd.f32 %v10995, %v10996
        %v10998 = vsel %vm3568, %v10790, 0.0
        %v10999 = vadd.f32 %v10997, %v10998
        %v11000 = vsel %vm3568, %v10791, 0.0
        %v11001 = vadd.f32 %v10999, %v11000
        %v11002 = vsel %vm3568, %v10792, 0.0
        %v11003 = vadd.f32 %v11001, %v11002
        %v11004 = vsel %vm3568, %v10793, 0.0
        %v11005 = vadd.f32 %v11003, %v11004
        %v11006 = vsel %vm3568, %v10794, 0.0
        %v11007 = vadd.f32 %v11005, %v11006
        %v11008 = vsel %vm3568, %v10795, 0.0
        %v11009 = vadd.f32 %v11007, %v11008
        %v11010 = vsel %vm3568, %v10796, 0.0
        %v11011 = vadd.f32 %v11009, %v11010
        %v11012 = vsel %vm3568, %v10797, 0.0
        %v11013 = vadd.f32 %v11011, %v11012
        %v11014 = vsel %vm3568, %v10798, 0.0
        %v11015 = vadd.f32 %v11013, %v11014
        %v11016 = vsel %vm3568, %v10799, 0.0
        %v11017 = vadd.f32 %v11015, %v11016
        %v11018 = vsel %vm3568, %v10800, 0.0
        %v11019 = vadd.f32 %v11017, %v11018
        %v11020 = vsel %vm3568, %v10801, 0.0
        %v11021 = vadd.f32 %v11019, %v11020
        %v11022 = vsel %vm3568, %v10802, 0.0
        %v11023 = vadd.f32 %v11021, %v11022
        %v11024 = vsel %vm3568, %v10803, 0.0
        %v11025 = vadd.f32 %v11023, %v11024
        %v11026 = vsel %vm3568, %v10804, 0.0
        %v11027 = vadd.f32 %v11025, %v11026
        %v11028 = vsel %vm3568, %v10805, 0.0
        %v11029 = vadd.f32 %v11027, %v11028
        %v11030 = vsel %vm3568, %v10806, 0.0
        %v11031 = vadd.f32 %v11029, %v11030
        %v11032 = vsel %vm3568, %v10807, 0.0
        %v11033 = vadd.f32 %v11031, %v11032
        %v11034 = vsel %vm3568, %v10808, 0.0
        %v11035 = vadd.f32 %v11033, %v11034
        %v11036 = vsel %vm3568, %v10809, 0.0
        %v11037 = vadd.f32 %v11035, %v11036
        %v11038 = vsel %vm3568, %v10810, 0.0
        %v11039 = vadd.f32 %v11037, %v11038
        %v11040 = vsel %vm3568, %v10811, 0.0
        %v11041 = vadd.f32 %v11039, %v11040
        %v11042 = vsel %vm3568, %v10812, 0.0
        %v11043 = vadd.f32 %v11041, %v11042
        %v11044 = vsel %vm3568, %v10813, 0.0
        %v11045 = vadd.f32 %v11043, %v11044
        %v11046 = vsel %vm3568, %v10814, 0.0
        %v11047 = vadd.f32 %v11045, %v11046
        %v11048 = vsel %vm3568, %v10815, 0.0
        %v11049 = vadd.f32 %v11047, %v11048
        %v11050 = vsel %vm3568, %v10816, 0.0
        %v11051 = vadd.f32 %v11049, %v11050
        %v11052 = vsel %vm3568, %v10817, 0.0
        %v11053 = vadd.f32 %v11051, %v11052
        %v11054 = vsel %vm3568, %v10818, 0.0
        %v11055 = vadd.f32 %v11053, %v11054
        %v11056 = vsel %vm3568, %v10819, 0.0
        %v11057 = vadd.f32 %v11055, %v11056
        %v11058 = vsel %vm3568, %v10820, 0.0
        %v11059 = vadd.f32 %v11057, %v11058
        %v11060 = vsel %vm3568, %v10821, 0.0
        %v11061 = vadd.f32 %v11059, %v11060
        %v11062 = vsel %vm3568, %v10822, 0.0
        %v11063 = vadd.f32 %v11061, %v11062
        %v11064 = vsel %vm3568, %v10823, 0.0
        %v11065 = vadd.f32 %v11063, %v11064
        %v11066 = vsel %vm3568, %v10824, 0.0
        %v11067 = vadd.f32 %v11065, %v11066
        %v11068 = vsel %vm3568, %v10825, 0.0
        %v11069 = vadd.f32 %v11067, %v11068
        %v11070 = vsel %vm3568, %v10826, 0.0
        %v11071 = vadd.f32 %v11069, %v11070
        %v11072 = vsel %vm3568, %v10827, 0.0
        %v11073 = vadd.f32 %v11071, %v11072
        %v11074 = vsel %vm3568, %v10828, 0.0
        %v11075 = vadd.f32 %v11073, %v11074
        %v11076 = vsel %vm3568, %v10829, 0.0
        %v11077 = vadd.f32 %v11075, %v11076
        %v11078 = vsel %vm3568, %v10830, 0.0
        %v11079 = vadd.f32 %v11077, %v11078
        %v11080 = vsel %vm3568, %v10831, 0.0
        %v11081 = vadd.f32 %v11079, %v11080
        %v11082 = vsel %vm3568, %v10832, 0.0
        %v11083 = vadd.f32 %v11081, %v11082
        %v11084 = vsel %vm3568, %v10833, 0.0
        %v11085 = vadd.f32 %v11083, %v11084
        %v11086 = vsel %vm3568, %v10834, 0.0
        %v11087 = vadd.f32 %v11085, %v11086
        %v11088 = vsel %vm3568, %v10835, 0.0
        %v11089 = vadd.f32 %v11087, %v11088
        %v11090 = vsel %vm3568, %v10836, 0.0
        %v11091 = vadd.f32 %v11089, %v11090
        %v11092 = vsel %vm3568, %v10837, 0.0
        %v11093 = vadd.f32 %v11091, %v11092
        %v11094 = vrot.slane %v11093, 4
        %v11095 = vadd.f32 %v11093, %v11094
        %v11096 = vrot.slane %v11095, 2
        %v11097 = vadd.f32 %v11095, %v11096
        %v11098 = vrot.slane %v11097, 1
        %v11099 = vadd.f32 %v11097, %v11098
        %v11100 = vadd.f32 %v10838, %v11099
        %vm11101 = vcmask 57344
        %11102 = vst.msk [vmem:[#allocation2] sm:$0x1] %vm11101, %v11100
        %v11103 = vld [vmem:[#allocation3] sm:$0x1]
        %v11104 = vmul.f32 %v10710, %v10710
        %v11105 = vmul.f32 %v10711, %v10711
        %v11106 = vmul.f32 %v10712, %v10712
        %v11107 = vmul.f32 %v10713, %v10713
        %v11108 = vmul.f32 %v10714, %v10714
        %v11109 = vmul.f32 %v10715, %v10715
        %v11110 = vmul.f32 %v10716, %v10716
        %v11111 = vmul.f32 %v10717, %v10717
        %v11112 = vmul.f32 %v10718, %v10718
        %v11113 = vmul.f32 %v10719, %v10719
        %v11114 = vmul.f32 %v10720, %v10720
        %v11115 = vmul.f32 %v10721, %v10721
        %v11116 = vmul.f32 %v10722, %v10722
        %v11117 = vmul.f32 %v10723, %v10723
        %v11118 = vmul.f32 %v10724, %v10724
        %v11119 = vmul.f32 %v10725, %v10725
        %v11120 = vmul.f32 %v10726, %v10726
        %v11121 = vmul.f32 %v10727, %v10727
        %v11122 = vmul.f32 %v10728, %v10728
        %v11123 = vmul.f32 %v10729, %v10729
        %v11124 = vmul.f32 %v10730, %v10730
        %v11125 = vmul.f32 %v10731, %v10731
        %v11126 = vmul.f32 %v10732, %v10732
        %v11127 = vmul.f32 %v10733, %v10733
        %v11128 = vmul.f32 %v10734, %v10734
        %v11129 = vmul.f32 %v10735, %v10735
        %v11130 = vmul.f32 %v10736, %v10736
        %v11131 = vmul.f32 %v10737, %v10737
        %v11132 = vmul.f32 %v10738, %v10738
        %v11133 = vmul.f32 %v10739, %v10739
        %v11134 = vmul.f32 %v10740, %v10740
        %v11135 = vmul.f32 %v10741, %v10741
        %v11136 = vmul.f32 %v10742, %v10742
        %v11137 = vmul.f32 %v10743, %v10743
        %v11138 = vmul.f32 %v10744, %v10744
        %v11139 = vmul.f32 %v10745, %v10745
        %v11140 = vmul.f32 %v10746, %v10746
        %v11141 = vmul.f32 %v10747, %v10747
        %v11142 = vmul.f32 %v10748, %v10748
        %v11143 = vmul.f32 %v10749, %v10749
        %v11144 = vmul.f32 %v10750, %v10750
        %v11145 = vmul.f32 %v10751, %v10751
        %v11146 = vmul.f32 %v10752, %v10752
        %v11147 = vmul.f32 %v10753, %v10753
        %v11148 = vmul.f32 %v10754, %v10754
        %v11149 = vmul.f32 %v10755, %v10755
        %v11150 = vmul.f32 %v10756, %v10756
        %v11151 = vmul.f32 %v10757, %v10757
        %v11152 = vmul.f32 %v10758, %v10758
        %v11153 = vmul.f32 %v10759, %v10759
        %v11154 = vmul.f32 %v10760, %v10760
        %v11155 = vmul.f32 %v10761, %v10761
        %v11156 = vmul.f32 %v10762, %v10762
        %v11157 = vmul.f32 %v10763, %v10763
        %v11158 = vmul.f32 %v10764, %v10764
        %v11159 = vmul.f32 %v10765, %v10765
        %v11160 = vmul.f32 %v10766, %v10766
        %v11161 = vmul.f32 %v10767, %v10767
        %v11162 = vmul.f32 %v10768, %v10768
        %v11163 = vmul.f32 %v10769, %v10769
        %v11164 = vmul.f32 %v10770, %v10770
        %v11165 = vmul.f32 %v10771, %v10771
        %v11166 = vmul.f32 %v10772, %v10772
        %v11167 = vmul.f32 %v10773, %v10773
        %v11168 = vmul.f32 %v10774, %v10774
        %v11169 = vmul.f32 %v10775, %v10775
        %v11170 = vmul.f32 %v10776, %v10776
        %v11171 = vmul.f32 %v10777, %v10777
        %v11172 = vmul.f32 %v10778, %v10778
        %v11173 = vmul.f32 %v10779, %v10779
        %v11174 = vmul.f32 %v10780, %v10780
        %v11175 = vmul.f32 %v10781, %v10781
        %v11176 = vmul.f32 %v10782, %v10782
        %v11177 = vmul.f32 %v10783, %v10783
        %v11178 = vmul.f32 %v10784, %v10784
        %v11179 = vmul.f32 %v10785, %v10785
        %v11180 = vmul.f32 %v10786, %v10786
        %v11181 = vmul.f32 %v10787, %v10787
        %v11182 = vmul.f32 %v10788, %v10788
        %v11183 = vmul.f32 %v10789, %v10789
        %v11184 = vmul.f32 %v10790, %v10790
        %v11185 = vmul.f32 %v10791, %v10791
        %v11186 = vmul.f32 %v10792, %v10792
        %v11187 = vmul.f32 %v10793, %v10793
        %v11188 = vmul.f32 %v10794, %v10794
        %v11189 = vmul.f32 %v10795, %v10795
        %v11190 = vmul.f32 %v10796, %v10796
        %v11191 = vmul.f32 %v10797, %v10797
        %v11192 = vmul.f32 %v10798, %v10798
        %v11193 = vmul.f32 %v10799, %v10799
        %v11194 = vmul.f32 %v10800, %v10800
        %v11195 = vmul.f32 %v10801, %v10801
        %v11196 = vmul.f32 %v10802, %v10802
        %v11197 = vmul.f32 %v10803, %v10803
        %v11198 = vmul.f32 %v10804, %v10804
        %v11199 = vmul.f32 %v10805, %v10805
        %v11200 = vmul.f32 %v10806, %v10806
        %v11201 = vmul.f32 %v10807, %v10807
        %v11202 = vmul.f32 %v10808, %v10808
        %v11203 = vmul.f32 %v10809, %v10809
        %v11204 = vmul.f32 %v10810, %v10810
        %v11205 = vmul.f32 %v10811, %v10811
        %v11206 = vmul.f32 %v10812, %v10812
        %v11207 = vmul.f32 %v10813, %v10813
        %v11208 = vmul.f32 %v10814, %v10814
        %v11209 = vmul.f32 %v10815, %v10815
        %v11210 = vmul.f32 %v10816, %v10816
        %v11211 = vmul.f32 %v10817, %v10817
        %v11212 = vmul.f32 %v10818, %v10818
        %v11213 = vmul.f32 %v10819, %v10819
        %v11214 = vmul.f32 %v10820, %v10820
        %v11215 = vmul.f32 %v10821, %v10821
        %v11216 = vmul.f32 %v10822, %v10822
        %v11217 = vmul.f32 %v10823, %v10823
        %v11218 = vmul.f32 %v10824, %v10824
        %v11219 = vmul.f32 %v10825, %v10825
        %v11220 = vmul.f32 %v10826, %v10826
        %v11221 = vmul.f32 %v10827, %v10827
        %v11222 = vmul.f32 %v10828, %v10828
        %v11223 = vmul.f32 %v10829, %v10829
        %v11224 = vmul.f32 %v10830, %v10830
        %v11225 = vmul.f32 %v10831, %v10831
        %v11226 = vmul.f32 %v10832, %v10832
        %v11227 = vmul.f32 %v10833, %v10833
        %v11228 = vmul.f32 %v10834, %v10834
        %v11229 = vmul.f32 %v10835, %v10835
        %v11230 = vmul.f32 %v10836, %v10836
        %v11231 = vmul.f32 %v10837, %v10837
        %v11232 = vsel %vm3568, %v11104, 0.0
        %v11233 = vsel %vm3568, %v11105, 0.0
        %v11234 = vadd.f32 %v11232, %v11233
        %v11235 = vsel %vm3568, %v11106, 0.0
        %v11236 = vadd.f32 %v11234, %v11235
        %v11237 = vsel %vm3568, %v11107, 0.0
        %v11238 = vadd.f32 %v11236, %v11237
        %v11239 = vsel %vm3568, %v11108, 0.0
        %v11240 = vadd.f32 %v11238, %v11239
        %v11241 = vsel %vm3568, %v11109, 0.0
        %v11242 = vadd.f32 %v11240, %v11241
        %v11243 = vsel %vm3568, %v11110, 0.0
        %v11244 = vadd.f32 %v11242, %v11243
        %v11245 = vsel %vm3568, %v11111, 0.0
        %v11246 = vadd.f32 %v11244, %v11245
        %v11247 = vsel %vm3568, %v11112, 0.0
        %v11248 = vadd.f32 %v11246, %v11247
        %v11249 = vsel %vm3568, %v11113, 0.0
        %v11250 = vadd.f32 %v11248, %v11249
        %v11251 = vsel %vm3568, %v11114, 0.0
        %v11252 = vadd.f32 %v11250, %v11251
        %v11253 = vsel %vm3568, %v11115, 0.0
        %v11254 = vadd.f32 %v11252, %v11253
        %v11255 = vsel %vm3568, %v11116, 0.0
        %v11256 = vadd.f32 %v11254, %v11255
        %v11257 = vsel %vm3568, %v11117, 0.0
        %v11258 = vadd.f32 %v11256, %v11257
        %v11259 = vsel %vm3568, %v11118, 0.0
        %v11260 = vadd.f32 %v11258, %v11259
        %v11261 = vsel %vm3568, %v11119, 0.0
        %v11262 = vadd.f32 %v11260, %v11261
        %v11263 = vsel %vm3568, %v11120, 0.0
        %v11264 = vadd.f32 %v11262, %v11263
        %v11265 = vsel %vm3568, %v11121, 0.0
        %v11266 = vadd.f32 %v11264, %v11265
        %v11267 = vsel %vm3568, %v11122, 0.0
        %v11268 = vadd.f32 %v11266, %v11267
        %v11269 = vsel %vm3568, %v11123, 0.0
        %v11270 = vadd.f32 %v11268, %v11269
        %v11271 = vsel %vm3568, %v11124, 0.0
        %v11272 = vadd.f32 %v11270, %v11271
        %v11273 = vsel %vm3568, %v11125, 0.0
        %v11274 = vadd.f32 %v11272, %v11273
        %v11275 = vsel %vm3568, %v11126, 0.0
        %v11276 = vadd.f32 %v11274, %v11275
        %v11277 = vsel %vm3568, %v11127, 0.0
        %v11278 = vadd.f32 %v11276, %v11277
        %v11279 = vsel %vm3568, %v11128, 0.0
        %v11280 = vadd.f32 %v11278, %v11279
        %v11281 = vsel %vm3568, %v11129, 0.0
        %v11282 = vadd.f32 %v11280, %v11281
        %v11283 = vsel %vm3568, %v11130, 0.0
        %v11284 = vadd.f32 %v11282, %v11283
        %v11285 = vsel %vm3568, %v11131, 0.0
        %v11286 = vadd.f32 %v11284, %v11285
        %v11287 = vsel %vm3568, %v11132, 0.0
        %v11288 = vadd.f32 %v11286, %v11287
        %v11289 = vsel %vm3568, %v11133, 0.0
        %v11290 = vadd.f32 %v11288, %v11289
        %v11291 = vsel %vm3568, %v11134, 0.0
        %v11292 = vadd.f32 %v11290, %v11291
        %v11293 = vsel %vm3568, %v11135, 0.0
        %v11294 = vadd.f32 %v11292, %v11293
        %v11295 = vsel %vm3568, %v11136, 0.0
        %v11296 = vadd.f32 %v11294, %v11295
        %v11297 = vsel %vm3568, %v11137, 0.0
        %v11298 = vadd.f32 %v11296, %v11297
        %v11299 = vsel %vm3568, %v11138, 0.0
        %v11300 = vadd.f32 %v11298, %v11299
        %v11301 = vsel %vm3568, %v11139, 0.0
        %v11302 = vadd.f32 %v11300, %v11301
        %v11303 = vsel %vm3568, %v11140, 0.0
        %v11304 = vadd.f32 %v11302, %v11303
        %v11305 = vsel %vm3568, %v11141, 0.0
        %v11306 = vadd.f32 %v11304, %v11305
        %v11307 = vsel %vm3568, %v11142, 0.0
        %v11308 = vadd.f32 %v11306, %v11307
        %v11309 = vsel %vm3568, %v11143, 0.0
        %v11310 = vadd.f32 %v11308, %v11309
        %v11311 = vsel %vm3568, %v11144, 0.0
        %v11312 = vadd.f32 %v11310, %v11311
        %v11313 = vsel %vm3568, %v11145, 0.0
        %v11314 = vadd.f32 %v11312, %v11313
        %v11315 = vsel %vm3568, %v11146, 0.0
        %v11316 = vadd.f32 %v11314, %v11315
        %v11317 = vsel %vm3568, %v11147, 0.0
        %v11318 = vadd.f32 %v11316, %v11317
        %v11319 = vsel %vm3568, %v11148, 0.0
        %v11320 = vadd.f32 %v11318, %v11319
        %v11321 = vsel %vm3568, %v11149, 0.0
        %v11322 = vadd.f32 %v11320, %v11321
        %v11323 = vsel %vm3568, %v11150, 0.0
        %v11324 = vadd.f32 %v11322, %v11323
        %v11325 = vsel %vm3568, %v11151, 0.0
        %v11326 = vadd.f32 %v11324, %v11325
        %v11327 = vsel %vm3568, %v11152, 0.0
        %v11328 = vadd.f32 %v11326, %v11327
        %v11329 = vsel %vm3568, %v11153, 0.0
        %v11330 = vadd.f32 %v11328, %v11329
        %v11331 = vsel %vm3568, %v11154, 0.0
        %v11332 = vadd.f32 %v11330, %v11331
        %v11333 = vsel %vm3568, %v11155, 0.0
        %v11334 = vadd.f32 %v11332, %v11333
        %v11335 = vsel %vm3568, %v11156, 0.0
        %v11336 = vadd.f32 %v11334, %v11335
        %v11337 = vsel %vm3568, %v11157, 0.0
        %v11338 = vadd.f32 %v11336, %v11337
        %v11339 = vsel %vm3568, %v11158, 0.0
        %v11340 = vadd.f32 %v11338, %v11339
        %v11341 = vsel %vm3568, %v11159, 0.0
        %v11342 = vadd.f32 %v11340, %v11341
        %v11343 = vsel %vm3568, %v11160, 0.0
        %v11344 = vadd.f32 %v11342, %v11343
        %v11345 = vsel %vm3568, %v11161, 0.0
        %v11346 = vadd.f32 %v11344, %v11345
        %v11347 = vsel %vm3568, %v11162, 0.0
        %v11348 = vadd.f32 %v11346, %v11347
        %v11349 = vsel %vm3568, %v11163, 0.0
        %v11350 = vadd.f32 %v11348, %v11349
        %v11351 = vsel %vm3568, %v11164, 0.0
        %v11352 = vadd.f32 %v11350, %v11351
        %v11353 = vsel %vm3568, %v11165, 0.0
        %v11354 = vadd.f32 %v11352, %v11353
        %v11355 = vsel %vm3568, %v11166, 0.0
        %v11356 = vadd.f32 %v11354, %v11355
        %v11357 = vsel %vm3568, %v11167, 0.0
        %v11358 = vadd.f32 %v11356, %v11357
        %v11359 = vsel %vm3568, %v11168, 0.0
        %v11360 = vadd.f32 %v11358, %v11359
        %v11361 = vsel %vm3568, %v11169, 0.0
        %v11362 = vadd.f32 %v11360, %v11361
        %v11363 = vsel %vm3568, %v11170, 0.0
        %v11364 = vadd.f32 %v11362, %v11363
        %v11365 = vsel %vm3568, %v11171, 0.0
        %v11366 = vadd.f32 %v11364, %v11365
        %v11367 = vsel %vm3568, %v11172, 0.0
        %v11368 = vadd.f32 %v11366, %v11367
        %v11369 = vsel %vm3568, %v11173, 0.0
        %v11370 = vadd.f32 %v11368, %v11369
        %v11371 = vsel %vm3568, %v11174, 0.0
        %v11372 = vadd.f32 %v11370, %v11371
        %v11373 = vsel %vm3568, %v11175, 0.0
        %v11374 = vadd.f32 %v11372, %v11373
        %v11375 = vsel %vm3568, %v11176, 0.0
        %v11376 = vadd.f32 %v11374, %v11375
        %v11377 = vsel %vm3568, %v11177, 0.0
        %v11378 = vadd.f32 %v11376, %v11377
        %v11379 = vsel %vm3568, %v11178, 0.0
        %v11380 = vadd.f32 %v11378, %v11379
        %v11381 = vsel %vm3568, %v11179, 0.0
        %v11382 = vadd.f32 %v11380, %v11381
        %v11383 = vsel %vm3568, %v11180, 0.0
        %v11384 = vadd.f32 %v11382, %v11383
        %v11385 = vsel %vm3568, %v11181, 0.0
        %v11386 = vadd.f32 %v11384, %v11385
        %v11387 = vsel %vm3568, %v11182, 0.0
        %v11388 = vadd.f32 %v11386, %v11387
        %v11389 = vsel %vm3568, %v11183, 0.0
        %v11390 = vadd.f32 %v11388, %v11389
        %v11391 = vsel %vm3568, %v11184, 0.0
        %v11392 = vadd.f32 %v11390, %v11391
        %v11393 = vsel %vm3568, %v11185, 0.0
        %v11394 = vadd.f32 %v11392, %v11393
        %v11395 = vsel %vm3568, %v11186, 0.0
        %v11396 = vadd.f32 %v11394, %v11395
        %v11397 = vsel %vm3568, %v11187, 0.0
        %v11398 = vadd.f32 %v11396, %v11397
        %v11399 = vsel %vm3568, %v11188, 0.0
        %v11400 = vadd.f32 %v11398, %v11399
        %v11401 = vsel %vm3568, %v11189, 0.0
        %v11402 = vadd.f32 %v11400, %v11401
        %v11403 = vsel %vm3568, %v11190, 0.0
        %v11404 = vadd.f32 %v11402, %v11403
        %v11405 = vsel %vm3568, %v11191, 0.0
        %v11406 = vadd.f32 %v11404, %v11405
        %v11407 = vsel %vm3568, %v11192, 0.0
        %v11408 = vadd.f32 %v11406, %v11407
        %v11409 = vsel %vm3568, %v11193, 0.0
        %v11410 = vadd.f32 %v11408, %v11409
        %v11411 = vsel %vm3568, %v11194, 0.0
        %v11412 = vadd.f32 %v11410, %v11411
        %v11413 = vsel %vm3568, %v11195, 0.0
        %v11414 = vadd.f32 %v11412, %v11413
        %v11415 = vsel %vm3568, %v11196, 0.0
        %v11416 = vadd.f32 %v11414, %v11415
        %v11417 = vsel %vm3568, %v11197, 0.0
        %v11418 = vadd.f32 %v11416, %v11417
        %v11419 = vsel %vm3568, %v11198, 0.0
        %v11420 = vadd.f32 %v11418, %v11419
        %v11421 = vsel %vm3568, %v11199, 0.0
        %v11422 = vadd.f32 %v11420, %v11421
        %v11423 = vsel %vm3568, %v11200, 0.0
        %v11424 = vadd.f32 %v11422, %v11423
        %v11425 = vsel %vm3568, %v11201, 0.0
        %v11426 = vadd.f32 %v11424, %v11425
        %v11427 = vsel %vm3568, %v11202, 0.0
        %v11428 = vadd.f32 %v11426, %v11427
        %v11429 = vsel %vm3568, %v11203, 0.0
        %v11430 = vadd.f32 %v11428, %v11429
        %v11431 = vsel %vm3568, %v11204, 0.0
        %v11432 = vadd.f32 %v11430, %v11431
        %v11433 = vsel %vm3568, %v11205, 0.0
        %v11434 = vadd.f32 %v11432, %v11433
        %v11435 = vsel %vm3568, %v11206, 0.0
        %v11436 = vadd.f32 %v11434, %v11435
        %v11437 = vsel %vm3568, %v11207, 0.0
        %v11438 = vadd.f32 %v11436, %v11437
        %v11439 = vsel %vm3568, %v11208, 0.0
        %v11440 = vadd.f32 %v11438, %v11439
        %v11441 = vsel %vm3568, %v11209, 0.0
        %v11442 = vadd.f32 %v11440, %v11441
        %v11443 = vsel %vm3568, %v11210, 0.0
        %v11444 = vadd.f32 %v11442, %v11443
        %v11445 = vsel %vm3568, %v11211, 0.0
        %v11446 = vadd.f32 %v11444, %v11445
        %v11447 = vsel %vm3568, %v11212, 0.0
        %v11448 = vadd.f32 %v11446, %v11447
        %v11449 = vsel %vm3568, %v11213, 0.0
        %v11450 = vadd.f32 %v11448, %v11449
        %v11451 = vsel %vm3568, %v11214, 0.0
        %v11452 = vadd.f32 %v11450, %v11451
        %v11453 = vsel %vm3568, %v11215, 0.0
        %v11454 = vadd.f32 %v11452, %v11453
        %v11455 = vsel %vm3568, %v11216, 0.0
        %v11456 = vadd.f32 %v11454, %v11455
        %v11457 = vsel %vm3568, %v11217, 0.0
        %v11458 = vadd.f32 %v11456, %v11457
        %v11459 = vsel %vm3568, %v11218, 0.0
        %v11460 = vadd.f32 %v11458, %v11459
        %v11461 = vsel %vm3568, %v11219, 0.0
        %v11462 = vadd.f32 %v11460, %v11461
        %v11463 = vsel %vm3568, %v11220, 0.0
        %v11464 = vadd.f32 %v11462, %v11463
        %v11465 = vsel %vm3568, %v11221, 0.0
        %v11466 = vadd.f32 %v11464, %v11465
        %v11467 = vsel %vm3568, %v11222, 0.0
        %v11468 = vadd.f32 %v11466, %v11467
        %v11469 = vsel %vm3568, %v11223, 0.0
        %v11470 = vadd.f32 %v11468, %v11469
        %v11471 = vsel %vm3568, %v11224, 0.0
        %v11472 = vadd.f32 %v11470, %v11471
        %v11473 = vsel %vm3568, %v11225, 0.0
        %v11474 = vadd.f32 %v11472, %v11473
        %v11475 = vsel %vm3568, %v11226, 0.0
        %v11476 = vadd.f32 %v11474, %v11475
        %v11477 = vsel %vm3568, %v11227, 0.0
        %v11478 = vadd.f32 %v11476, %v11477
        %v11479 = vsel %vm3568, %v11228, 0.0
        %v11480 = vadd.f32 %v11478, %v11479
        %v11481 = vsel %vm3568, %v11229, 0.0
        %v11482 = vadd.f32 %v11480, %v11481
        %v11483 = vsel %vm3568, %v11230, 0.0
        %v11484 = vadd.f32 %v11482, %v11483
        %v11485 = vsel %vm3568, %v11231, 0.0
        %v11486 = vadd.f32 %v11484, %v11485
        %v11487 = vrot.slane %v11486, 4
        %v11488 = vadd.f32 %v11486, %v11487
        %v11489 = vrot.slane %v11488, 2
        %v11490 = vadd.f32 %v11488, %v11489
        %v11491 = vrot.slane %v11490, 1
        %v11492 = vadd.f32 %v11490, %v11491
        %v11493 = vadd.f32 %v11103, %v11492
        %11494 = vst.msk [vmem:[#allocation3] sm:$0x1] %vm11101, %v11493
        // Predicated region
        $region57: #{tpu_custom_call.1} parent=51 // pred_check
          %p11495 = pneg %p495
        $region58: #{tpu_custom_call.1} parent=51 // pred_check_branch
          %11497 = sbr.rel (%p11495) target = $region60
        $region59: #{tpu_custom_call.1} parent=51 // pred_region
          %v11498 = vld [vmem:[#allocation2] sm:$0x1]
          %v11499 = vld [vmem:[#allocation3] sm:$0x1]
          %v11501 = vlaneseq
          %v11502 = vshrl.u32 %v11501, 7
          %v11503 = vsub.s32 0, %v11502
          %v11504 = vrot.slane %v11499, %v11503
          %vm11506 = vcmask 1040384
          %v11507 = vsel %vm11506, %v11498, %v11504
          %vm11508 = vcmask 58368
          %11509 = vst.msk [vmem:[%s438] sm:$0x3] %vm11508, %v11507
        $region60: #{tpu_custom_call.1} parent=51 // pred_fallthru
          _
        %s11510 = sand.u32 %s251, 1
        %s11511 = scalar_lea.sflag [#allocation5], %s11510
        %s11512 = sand.u32 %s251, 1
        %s11513 = smul.addr %s11512, 2
        %s11514 = scalar_lea.vmem [#allocation4], %s11513
        // Predicated region
        $region61: #{tpu_custom_call.1} parent=51 // pred_check
          %p11515 = pneg %p261
        $region62: #{tpu_custom_call.1} parent=51 // pred_check_branch
          %11517 = sbr.rel (%p11515) target = $region64
        $region63: #{tpu_custom_call.1} parent=51 // pred_region
          %s11519 = ssub.s32 32, 32
          %11520 = vsyncadd %s11511, %s11519
          %s11521 = smul.addr %s26, 32
          %s11522 = scalar_lea.hbm %s8, %s11521
          %s11524 = sshll.u32 %s11514, 4
          %s11525 = int_to_ptr.vmem [resolvable:$true] %s11524
          %11527 = dma.vmem_to_hbm [thread:$0]  %s11525, 32, %s11522, %s11511
        $region64: #{tpu_custom_call.1} parent=51 // pred_fallthru
          _
      $region52: #{tpu_custom_call.1} parent=5 // pred_fallthru
        _
      %p11528 = scmp.le.s32.totalorder 2, %s17
      // Predicated region
      $region65: #{tpu_custom_call.1} parent=5 // pred_check
        %p11529 = pneg %p11528
      $region66: #{tpu_custom_call.1} parent=5 // pred_check_branch
        %11531 = sbr.rel (%p11529) target = $region68
      $region67: #{tpu_custom_call.1} parent=5 // pred_region
        %s11532 = ssub.s32 %s17, 2
        // Predicated region
        $region69: #{tpu_custom_call.1} parent=67 // pred_check
          %p11533 = pneg %p267
        $region70: #{tpu_custom_call.1} parent=67 // pred_check_branch
          %11535 = sbr.rel (%p11533) target = $region72
        $region71: #{tpu_custom_call.1} parent=67 // pred_region
          %s11536 = sand.u32 %s252, 1
          %s11537 = scalar_lea.sflag [#allocation5], %s11536
          %s11538 = sand.u32 %s252, 1
          %s11539 = smul.addr %s11538, 2
          %s11540 = scalar_lea.vmem [#allocation4], %s11539
          %11541 = dma.done %s11537, 32
        $region72: #{tpu_custom_call.1} parent=67 // pred_fallthru
          _
      $region68: #{tpu_custom_call.1} parent=5 // pred_fallthru
        _
    $region6: #{tpu_custom_call.1} parent=1 // loop_footer
      %s21 = sadd.s32 1, %s17
    $region7: #{tpu_custom_call.1} parent=1 // loop_footer_branch
      %16 = sbr.rel target = $region3
    $region8: #{tpu_custom_call.1} parent=1 // loop_exit
      _
    %11542 = vsyncpa [#allocation5], 1
    %s11543 = scalar_lea.sflag [#allocation5], 1
    %11544 = vsyncpa %s11543, 1

</llo_original>
